<compile_context>
chip_gen: v7x
topology: tpu7x:2x2x1
jax: 0.10.0
libtpu: 0.0.40
codegen_flags: <defaults>
</compile_context>

<pallas_src>
import math
from functools import partial

import jax
import jax.numpy as jnp
from jax.experimental import pallas as pl
from jax.experimental.pallas import tpu as pltpu


# ----------------------------------------------------------------------------
# The fused kernel: one grid step == B images, everything stays on-chip.
# Input block layout: rows = b*32 + h, lanes = w  (b = image within the block).
# ----------------------------------------------------------------------------
def _lenet_kernel(x_ref, m1_ref, b1_ref, s1w_ref, m2_ref, b2_ref, s2w_ref,
                  w1p_ref, fb1_ref, w2_ref, fb2_ref, w3_ref, fb3_ref, o_ref):
    f32, bf16 = jnp.float32, jnp.bfloat16

    def dot(a, b):
        # bf16 operands, f32 accumulation (fast MXU path on v6e/v7x).
        return jnp.dot(a.astype(bf16), b, preferred_element_type=f32)

    x = x_ref[...]                     # (R, 32), R = B*32
    R = x.shape[0]
    B = R // 32

    # ---- conv1 (1->6, 5x5, valid) + bias + ReLU ------------------------------
    # Tap i over H is a row shift by i; taps over W are folded into the banded
    # (Toeplitz) weights m1[i] (32 -> 28*6 lanes).  5 independent dots, tree sum.
    L1 = R - 4
    t = [dot(x[i:i + L1, :], m1_ref[i]) for i in range(5)]
    h1 = jnp.maximum((t[0] + t[1]) + (t[2] + t[3]) + t[4] + b1_ref[...], 0.0)
    # h1: (L1, 168); valid rows r = b*32 + x_out, x_out < 28; lanes = w_out*6 + c.

    # ---- 2x2 max-pool, stride 2 ---------------------------------------------
    # Width: two 0/1 selection matmuls + max; height: shifted-slice max
    # (pooled row y stays at physical row b*32 + 2y - no row compaction).
    mw = jnp.maximum(dot(h1, s1w_ref[0]), dot(h1, s1w_ref[1]))      # (L1, 84)
    L2 = L1 - 1
    p1 = jnp.maximum(mw[0:L2, :], mw[1:1 + L2, :])                  # (L2, 84)

    # ---- conv2 (6->16, 5x5, valid) + bias + ReLU ------------------------------
    # Tap i over pooled H is a physical row shift by 2*i.
    L3 = L2 - 8
    u = [dot(p1[2 * i:2 * i + L3, :], m2_ref[i]) for i in range(5)]
    h2 = jnp.maximum((u[0] + u[1]) + (u[2] + u[3]) + u[4] + b2_ref[...], 0.0)
    # h2: (L3, 160); valid rows r = b*32 + 2*v_out, v_out < 10; lanes = w*16 + co.

    # ---- 2x2 max-pool, stride 2 ----------------------------------------------
    mw2 = jnp.maximum(dot(h2, s2w_ref[0]), dot(h2, s2w_ref[1]))     # (L3, 80)
    L4 = L3 - 2
    p2 = jnp.maximum(mw2[0:L4, :], mw2[2:2 + L4, :])                # (L4, 80)
    # p2: valid rows r = b*32 + 4*uu, uu < 5; lanes = v*16 + co.

    # ---- fc1 (400->120) + ReLU -----------------------------------------------
    # Gather the 5 pooled rows per image with 0/1 selection matmuls built from
    # iotas (rows b*32 + 4*uu -> row b), then contract against the pre-permuted
    # fc1 weight chunk for that pooled-height index.
    rows = jax.lax.broadcasted_iota(jnp.int32, (B, L4), 0)
    cols = jax.lax.broadcasted_iota(jnp.int32, (B, L4), 1)
    p2b = p2.astype(bf16)
    acc = jnp.zeros((B, 120), f32)
    for uu in range(5):
        sel = (cols == rows * 32 + 4 * uu).astype(bf16)             # (B, L4)
        g = jnp.dot(sel, p2b, preferred_element_type=f32)           # (B, 80)
        acc = acc + dot(g, w1p_ref[uu])                             # (B, 120)
    z = jnp.maximum(acc + fb1_ref[...], 0.0)

    # ---- fc2 (+ReLU), fc3 -----------------------------------------------------
    z = jnp.maximum(dot(z, w2_ref[...]) + fb2_ref[...], 0.0)        # (B, 84)
    z = dot(z, w3_ref[...]) + fb3_ref[...]                          # (B, 10)

    o_ref[...] = z.astype(o_ref.dtype)


# ----------------------------------------------------------------------------
# One-time weight packing (done at init, not per forward call).
# ----------------------------------------------------------------------------
def _pool_w_select(w, c):
    """(2, w*c, (w//2)*c) 0/1 matrices: phase p picks lane (2v+p)*c + ch."""
    wp = w // 2
    rows = jnp.arange(w * c)
    cols = jnp.arange(wp * c)
    rx, rc = rows // c, rows % c
    cx, cc = cols // c, cols % c
    sel = []
    for phase in (0, 1):
        m = (rx[:, None] == 2 * cx[None, :] + phase) & (rc[:, None] == cc[None, :])
        sel.append(m.astype(jnp.float32))
    return jnp.stack(sel, axis=0)


def prepare_kernel_params(p):
    """Pack PyTorch-layout parameters into the kernel's matmul operands."""
    f32, bf16 = jnp.float32, jnp.bfloat16
    w1, b1 = p["conv1_w"], p["conv1_b"]            # (6,1,5,5), (6,)
    w2, b2 = p["conv2_w"], p["conv2_b"]            # (16,6,5,5), (16,)

    # conv1 banded matrices: M1[i, w_in, x*6 + c] = w1[c, 0, i, w_in - x]
    w1_ijc = jnp.transpose(w1[:, 0], (1, 2, 0))    # (i, j, c)
    i_ = jnp.arange(5)[:, None, None, None]
    w_ = jnp.arange(32)[None, :, None, None]
    x_ = jnp.arange(28)[None, None, :, None]
    c_ = jnp.arange(6)[None, None, None, :]
    j_ = w_ - x_
    m1 = jnp.where((j_ >= 0) & (j_ <= 4),
                   w1_ijc[i_, jnp.clip(j_, 0, 4), c_], 0.0)
    m1 = m1.reshape(5, 32, 28 * 6).astype(bf16)
    bb1 = jnp.tile(b1, 28).reshape(1, 28 * 6).astype(f32)

    # conv2 banded matrices: M2[i, v*6 + cin, x*16 + co] = w2[co, cin, i, v - x]
    w2_ijco = jnp.transpose(w2, (2, 3, 1, 0))      # (i, j, cin, co)
    i_ = jnp.arange(5)[:, None, None, None, None]
    v_ = jnp.arange(14)[None, :, None, None, None]
    ci_ = jnp.arange(6)[None, None, :, None, None]
    x2_ = jnp.arange(10)[None, None, None, :, None]
    co_ = jnp.arange(16)[None, None, None, None, :]
    j_ = v_ - x2_
    m2 = jnp.where((j_ >= 0) & (j_ <= 4),
                   w2_ijco[i_, jnp.clip(j_, 0, 4), ci_, co_], 0.0)
    m2 = m2.reshape(5, 14 * 6, 10 * 16).astype(bf16)
    bb2 = jnp.tile(b2, 10).reshape(1, 10 * 16).astype(f32)

    # fc1 weight permuted to the kernel's (h, w, c) flatten order:
    # W1p[u, v*16 + c, o] = fc1_w[o, c*25 + u*5 + v]
    fw1 = p["fc1_w"].reshape(120, 16, 5, 5)
    w1p = jnp.transpose(fw1, (2, 3, 1, 0)).reshape(5, 5 * 16, 120).astype(bf16)

    return {
        "m1": m1, "b1": bb1, "s1w": _pool_w_select(28, 6).astype(bf16),
        "m2": m2, "b2": bb2, "s2w": _pool_w_select(10, 16).astype(bf16),
        "w1p": w1p, "fb1": p["fc1_b"].reshape(1, 120).astype(f32),
        "w2": p["fc2_w"].T.astype(bf16), "fb2": p["fc2_b"].reshape(1, 84).astype(f32),
        "w3": p["fc3_w"].T.astype(bf16), "fb3": p["fc3_b"].reshape(1, 10).astype(f32),
    }


# ----------------------------------------------------------------------------
# Forward pass: single pallas_call, grid over blocks of `block_images` images.
# ----------------------------------------------------------------------------
@partial(jax.jit, static_argnames=("block_images",))
def net_forward(x, kp, block_images=16):
    n = x.shape[0]
    B = block_images                               # must be a multiple of 8
    n_pad = ((n + B - 1) // B) * B
    x2 = x.reshape(n, 32, 32).astype(jnp.float32)
    if n_pad != n:
        x2 = jnp.pad(x2, ((0, n_pad - n), (0, 0), (0, 0)))
    xr = x2.reshape(n_pad * 32, 32)                # rows = image*32 + h (free reshape)
    R = B * 32

    weight_args = (kp["m1"], kp["b1"], kp["s1w"], kp["m2"], kp["b2"], kp["s2w"],
                   kp["w1p"], kp["fb1"], kp["w2"], kp["fb2"], kp["w3"], kp["fb3"])

    def full_spec(a):
        nd = a.ndim
        return pl.BlockSpec(a.shape, lambda i, _nd=nd: (0,) * _nd)

    in_specs = [pl.BlockSpec((R, 32), lambda i: (i, 0))]
    in_specs += [full_spec(a) for a in weight_args]

    out = pl.pallas_call(
        _lenet_kernel,
        out_shape=jax.ShapeDtypeStruct((n_pad, 10), jnp.float32),
        grid=(n_pad // B,),
        in_specs=in_specs,
        out_specs=pl.BlockSpec((B, 10), lambda i: (i, 0)),
        compiler_params=pltpu.CompilerParams(
            dimension_semantics=("parallel",)),
    )(xr, *weight_args)
    return out[:n]


# ----------------------------------------------------------------------------
# Parameters (PyTorch-style uniform(-1/sqrt(fan_in), +1/sqrt(fan_in)))
# ----------------------------------------------------------------------------
def init_params(key):
    keys = jax.random.split(key, 10)

    def u(k, shape, fan_in):
        bound = 1.0 / math.sqrt(fan_in)
        return jax.random.uniform(k, shape, jnp.float32, -bound, bound)

    return {
        "conv1_w": u(keys[0], (6, 1, 5, 5), 1 * 5 * 5),
        "conv1_b": u(keys[1], (6,), 1 * 5 * 5),
        "conv2_w": u(keys[2], (16, 6, 5, 5), 6 * 5 * 5),
        "conv2_b": u(keys[3], (16,), 6 * 5 * 5),
        "fc1_w": u(keys[4], (120, 400), 400),
        "fc1_b": u(keys[5], (120,), 400),
        "fc2_w": u(keys[6], (84, 120), 120),
        "fc2_b": u(keys[7], (84,), 120),
        "fc3_w": u(keys[8], (10, 84), 84),
        "fc3_b": u(keys[9], (10,), 84),
    }


# ----------------------------------------------------------------------------
# Pure-JAX reference (mirrors Net.forward) for the correctness check.
# ----------------------------------------------------------------------------
def _reference_forward(x, p):
    n = x.shape[0]

    def conv(inp, w, b):
        co, ci, k, _ = w.shape
        _, _, h, ww = inp.shape
        ho, wo = h - k + 1, ww - k + 1
        patches = [inp[:, :, i:i + ho, j:j + wo] for i in range(k) for j in range(k)]
        pch = jnp.stack(patches, 0).reshape(k, k, n, ci, ho, wo)
        pch = pch.transpose(2, 4, 5, 3, 0, 1).reshape(n * ho * wo, ci * k * k)
        y = pch @ w.reshape(co, ci * k * k).T + b
        return y.reshape(n, ho, wo, co).transpose(0, 3, 1, 2)

    def pool(v):
        return jnp.maximum(jnp.maximum(v[:, :, 0::2, 0::2], v[:, :, 0::2, 1::2]),
                           jnp.maximum(v[:, :, 1::2, 0::2], v[:, :, 1::2, 1::2]))

    y = pool(jax.nn.relu(conv(x, p["conv1_w"], p["conv1_b"])))
    y = pool(jax.nn.relu(conv(y, p["conv2_w"], p["conv2_b"])))
    y = y.reshape(n, 16 * 5 * 5)
    y = jax.nn.relu(y @ p["fc1_w"].T + p["fc1_b"])
    y = jax.nn.relu(y @ p["fc2_w"].T + p["fc2_b"])
    return y @ p["fc3_w"].T + p["fc3_b"]


if __name__ == "__main__":
    key = jax.random.PRNGKey(0)
    k_x, k_p = jax.random.split(key)
    # LeNet geometry requires 32x32 single-channel input.  n=37 exercises a
    # multi-step grid plus the ragged (n % block_images != 0) padding path.
    n = 37
    x = jax.random.normal(k_x, (n, 1, 32, 32), jnp.float32)
    params = init_params(k_p)
    kparams = prepare_kernel_params(params)

    out = net_forward(x, kparams)
    out = jax.block_until_ready(out)
    assert out.shape == (n, 10) and out.dtype == jnp.float32

    ref = _reference_forward(x, params)
    err = float(jnp.max(jnp.abs(out - ref)))
    # bf16 matmul operands with f32 accumulation; expected error << 5e-2.
    assert err < 5e-2, f"mismatch vs reference: max abs err {err}"
    print("KERNEL_OK")
</pallas_src>

<mosaic_0001>
module attributes {stable_mosaic.version = 11 : i64} {
  func.func @_lenet_kernel(%arg0: i32, %arg1: memref<512x32xf32, #tpu.memory_space<vmem>>, %arg2: memref<5x32x168xbf16, #tpu.memory_space<vmem>>, %arg3: memref<1x168xf32, #tpu.memory_space<vmem>>, %arg4: memref<2x168x84xbf16, #tpu.memory_space<vmem>>, %arg5: memref<5x84x160xbf16, #tpu.memory_space<vmem>>, %arg6: memref<1x160xf32, #tpu.memory_space<vmem>>, %arg7: memref<2x160x80xbf16, #tpu.memory_space<vmem>>, %arg8: memref<5x80x120xbf16, #tpu.memory_space<vmem>>, %arg9: memref<1x120xf32, #tpu.memory_space<vmem>>, %arg10: memref<120x84xbf16, #tpu.memory_space<vmem>>, %arg11: memref<1x84xf32, #tpu.memory_space<vmem>>, %arg12: memref<84x10xbf16, #tpu.memory_space<vmem>>, %arg13: memref<1x10xf32, #tpu.memory_space<vmem>>, %arg14: memref<16x10xf32, #tpu.memory_space<vmem>>) attributes {dimension_semantics = [#tpu.dimension_semantics<parallel>], iteration_bounds = array<i64: 3>, scalar_prefetch = 0 : i64, scratch_operands = 0 : i64, tpu.core_type = #tpu.core_type<tc>, window_params = [{transform_indices = @transform_0, window_bounds = array<i64: 512, 32>}, {pipeline_mode = #tpu.pipeline_mode<synchronous>, transform_indices = @transform_1, window_bounds = array<i64: 5, 32, 168>}, {pipeline_mode = #tpu.pipeline_mode<synchronous>, transform_indices = @transform_2, window_bounds = array<i64: 1, 168>}, {pipeline_mode = #tpu.pipeline_mode<synchronous>, transform_indices = @transform_3, window_bounds = array<i64: 2, 168, 84>}, {pipeline_mode = #tpu.pipeline_mode<synchronous>, transform_indices = @transform_4, window_bounds = array<i64: 5, 84, 160>}, {pipeline_mode = #tpu.pipeline_mode<synchronous>, transform_indices = @transform_5, window_bounds = array<i64: 1, 160>}, {pipeline_mode = #tpu.pipeline_mode<synchronous>, transform_indices = @transform_6, window_bounds = array<i64: 2, 160, 80>}, {pipeline_mode = #tpu.pipeline_mode<synchronous>, transform_indices = @transform_7, window_bounds = array<i64: 5, 80, 120>}, {pipeline_mode = #tpu.pipeline_mode<synchronous>, transform_indices = @transform_8, window_bounds = array<i64: 1, 120>}, {pipeline_mode = #tpu.pipeline_mode<synchronous>, transform_indices = @transform_9, window_bounds = array<i64: 120, 84>}, {pipeline_mode = #tpu.pipeline_mode<synchronous>, transform_indices = @transform_10, window_bounds = array<i64: 1, 84>}, {pipeline_mode = #tpu.pipeline_mode<synchronous>, transform_indices = @transform_11, window_bounds = array<i64: 84, 10>}, {pipeline_mode = #tpu.pipeline_mode<synchronous>, transform_indices = @transform_12, window_bounds = array<i64: 1, 10>}, {transform_indices = @transform_13, window_bounds = array<i64: 16, 10>}]} {
    %c0 = arith.constant 0 : index
    %c0_0 = arith.constant 0 : index
    %0 = vector.load %arg1[%c0, %c0_0] : memref<512x32xf32, #tpu.memory_space<vmem>>, vector<512x32xf32>
    %1 = vector.extract_strided_slice %0 {offsets = [0, 0], sizes = [508, 32], strides = [1, 1]} : vector<512x32xf32> to vector<508x32xf32>
    %c0_1 = arith.constant 0 : index
    %c0_2 = arith.constant 0 : index
    %c0_3 = arith.constant 0 : index
    %2 = vector.load %arg2[%c0_1, %c0_2, %c0_3] : memref<5x32x168xbf16, #tpu.memory_space<vmem>>, vector<1x32x168xbf16>
    %3 = vector.shape_cast %2 : vector<1x32x168xbf16> to vector<32x168xbf16>
    %4 = arith.truncf %1 : vector<508x32xf32> to vector<508x32xbf16>
    %cst = arith.constant dense<0.000000e+00> : vector<508x168xf32>
    %5 = tpu.matmul %4, %3, %cst {dimension_numbers = #tpu.dot_dimension_numbers<[1], [0], [0], [1], [0, 0, 1, 1], [], []>} : vector<508x32xbf16>, vector<32x168xbf16>, vector<508x168xf32> -> vector<508x168xf32>
    %6 = vector.extract_strided_slice %0 {offsets = [1, 0], sizes = [508, 32], strides = [1, 1]} : vector<512x32xf32> to vector<508x32xf32>
    %c1 = arith.constant 1 : index
    %c0_4 = arith.constant 0 : index
    %c0_5 = arith.constant 0 : index
    %7 = vector.load %arg2[%c1, %c0_4, %c0_5] : memref<5x32x168xbf16, #tpu.memory_space<vmem>>, vector<1x32x168xbf16>
    %8 = vector.shape_cast %7 : vector<1x32x168xbf16> to vector<32x168xbf16>
    %9 = arith.truncf %6 : vector<508x32xf32> to vector<508x32xbf16>
    %cst_6 = arith.constant dense<0.000000e+00> : vector<508x168xf32>
    %10 = tpu.matmul %9, %8, %cst_6 {dimension_numbers = #tpu.dot_dimension_numbers<[1], [0], [0], [1], [0, 0, 1, 1], [], []>} : vector<508x32xbf16>, vector<32x168xbf16>, vector<508x168xf32> -> vector<508x168xf32>
    %11 = vector.extract_strided_slice %0 {offsets = [2, 0], sizes = [508, 32], strides = [1, 1]} : vector<512x32xf32> to vector<508x32xf32>
    %c2 = arith.constant 2 : index
    %c0_7 = arith.constant 0 : index
    %c0_8 = arith.constant 0 : index
    %12 = vector.load %arg2[%c2, %c0_7, %c0_8] : memref<5x32x168xbf16, #tpu.memory_space<vmem>>, vector<1x32x168xbf16>
    %13 = vector.shape_cast %12 : vector<1x32x168xbf16> to vector<32x168xbf16>
    %14 = arith.truncf %11 : vector<508x32xf32> to vector<508x32xbf16>
    %cst_9 = arith.constant dense<0.000000e+00> : vector<508x168xf32>
    %15 = tpu.matmul %14, %13, %cst_9 {dimension_numbers = #tpu.dot_dimension_numbers<[1], [0], [0], [1], [0, 0, 1, 1], [], []>} : vector<508x32xbf16>, vector<32x168xbf16>, vector<508x168xf32> -> vector<508x168xf32>
    %16 = vector.extract_strided_slice %0 {offsets = [3, 0], sizes = [508, 32], strides = [1, 1]} : vector<512x32xf32> to vector<508x32xf32>
    %c3 = arith.constant 3 : index
    %c0_10 = arith.constant 0 : index
    %c0_11 = arith.constant 0 : index
    %17 = vector.load %arg2[%c3, %c0_10, %c0_11] : memref<5x32x168xbf16, #tpu.memory_space<vmem>>, vector<1x32x168xbf16>
    %18 = vector.shape_cast %17 : vector<1x32x168xbf16> to vector<32x168xbf16>
    %19 = arith.truncf %16 : vector<508x32xf32> to vector<508x32xbf16>
    %cst_12 = arith.constant dense<0.000000e+00> : vector<508x168xf32>
    %20 = tpu.matmul %19, %18, %cst_12 {dimension_numbers = #tpu.dot_dimension_numbers<[1], [0], [0], [1], [0, 0, 1, 1], [], []>} : vector<508x32xbf16>, vector<32x168xbf16>, vector<508x168xf32> -> vector<508x168xf32>
    %21 = vector.extract_strided_slice %0 {offsets = [4, 0], sizes = [508, 32], strides = [1, 1]} : vector<512x32xf32> to vector<508x32xf32>
    %c4 = arith.constant 4 : index
    %c0_13 = arith.constant 0 : index
    %c0_14 = arith.constant 0 : index
    %22 = vector.load %arg2[%c4, %c0_13, %c0_14] : memref<5x32x168xbf16, #tpu.memory_space<vmem>>, vector<1x32x168xbf16>
    %23 = vector.shape_cast %22 : vector<1x32x168xbf16> to vector<32x168xbf16>
    %24 = arith.truncf %21 : vector<508x32xf32> to vector<508x32xbf16>
    %cst_15 = arith.constant dense<0.000000e+00> : vector<508x168xf32>
    %25 = tpu.matmul %24, %23, %cst_15 {dimension_numbers = #tpu.dot_dimension_numbers<[1], [0], [0], [1], [0, 0, 1, 1], [], []>} : vector<508x32xbf16>, vector<32x168xbf16>, vector<508x168xf32> -> vector<508x168xf32>
    %26 = arith.addf %5, %10 : vector<508x168xf32>
    %27 = arith.addf %15, %20 : vector<508x168xf32>
    %28 = arith.addf %26, %27 : vector<508x168xf32>
    %29 = arith.addf %28, %25 : vector<508x168xf32>
    %c0_16 = arith.constant 0 : index
    %c0_17 = arith.constant 0 : index
    %30 = vector.load %arg3[%c0_16, %c0_17] : memref<1x168xf32, #tpu.memory_space<vmem>>, vector<1x168xf32>
    %31 = vector.broadcast %30 : vector<1x168xf32> to vector<508x168xf32>
    %32 = arith.addf %29, %31 : vector<508x168xf32>
    %cst_18 = arith.constant 0.000000e+00 : f32
    %33 = vector.broadcast %cst_18 : f32 to vector<508x168xf32>
    %34 = arith.maximumf %32, %33 : vector<508x168xf32>
    %c0_19 = arith.constant 0 : index
    %c0_20 = arith.constant 0 : index
    %c0_21 = arith.constant 0 : index
    %35 = vector.load %arg4[%c0_19, %c0_20, %c0_21] : memref<2x168x84xbf16, #tpu.memory_space<vmem>>, vector<1x168x84xbf16>
    %36 = vector.shape_cast %35 : vector<1x168x84xbf16> to vector<168x84xbf16>
    %37 = arith.truncf %34 : vector<508x168xf32> to vector<508x168xbf16>
    %cst_22 = arith.constant dense<0.000000e+00> : vector<508x84xf32>
    %38 = tpu.matmul %37, %36, %cst_22 {dimension_numbers = #tpu.dot_dimension_numbers<[1], [0], [0], [1], [0, 0, 1, 1], [], []>} : vector<508x168xbf16>, vector<168x84xbf16>, vector<508x84xf32> -> vector<508x84xf32>
    %c1_23 = arith.constant 1 : index
    %c0_24 = arith.constant 0 : index
    %c0_25 = arith.constant 0 : index
    %39 = vector.load %arg4[%c1_23, %c0_24, %c0_25] : memref<2x168x84xbf16, #tpu.memory_space<vmem>>, vector<1x168x84xbf16>
    %40 = vector.shape_cast %39 : vector<1x168x84xbf16> to vector<168x84xbf16>
    %41 = arith.truncf %34 : vector<508x168xf32> to vector<508x168xbf16>
    %cst_26 = arith.constant dense<0.000000e+00> : vector<508x84xf32>
    %42 = tpu.matmul %41, %40, %cst_26 {dimension_numbers = #tpu.dot_dimension_numbers<[1], [0], [0], [1], [0, 0, 1, 1], [], []>} : vector<508x168xbf16>, vector<168x84xbf16>, vector<508x84xf32> -> vector<508x84xf32>
    %43 = arith.maximumf %38, %42 : vector<508x84xf32>
    %44 = vector.extract_strided_slice %43 {offsets = [0, 0], sizes = [507, 84], strides = [1, 1]} : vector<508x84xf32> to vector<507x84xf32>
    %45 = vector.extract_strided_slice %43 {offsets = [1, 0], sizes = [507, 84], strides = [1, 1]} : vector<508x84xf32> to vector<507x84xf32>
    %46 = arith.maximumf %44, %45 : vector<507x84xf32>
    %47 = vector.extract_strided_slice %46 {offsets = [0, 0], sizes = [499, 84], strides = [1, 1]} : vector<507x84xf32> to vector<499x84xf32>
    %c0_27 = arith.constant 0 : index
    %c0_28 = arith.constant 0 : index
    %c0_29 = arith.constant 0 : index
    %48 = vector.load %arg5[%c0_27, %c0_28, %c0_29] : memref<5x84x160xbf16, #tpu.memory_space<vmem>>, vector<1x84x160xbf16>
    %49 = vector.shape_cast %48 : vector<1x84x160xbf16> to vector<84x160xbf16>
    %50 = arith.truncf %47 : vector<499x84xf32> to vector<499x84xbf16>
    %cst_30 = arith.constant dense<0.000000e+00> : vector<499x160xf32>
    %51 = tpu.matmul %50, %49, %cst_30 {dimension_numbers = #tpu.dot_dimension_numbers<[1], [0], [0], [1], [0, 0, 1, 1], [], []>} : vector<499x84xbf16>, vector<84x160xbf16>, vector<499x160xf32> -> vector<499x160xf32>
    %52 = vector.extract_strided_slice %46 {offsets = [2, 0], sizes = [499, 84], strides = [1, 1]} : vector<507x84xf32> to vector<499x84xf32>
    %c1_31 = arith.constant 1 : index
    %c0_32 = arith.constant 0 : index
    %c0_33 = arith.constant 0 : index
    %53 = vector.load %arg5[%c1_31, %c0_32, %c0_33] : memref<5x84x160xbf16, #tpu.memory_space<vmem>>, vector<1x84x160xbf16>
    %54 = vector.shape_cast %53 : vector<1x84x160xbf16> to vector<84x160xbf16>
    %55 = arith.truncf %52 : vector<499x84xf32> to vector<499x84xbf16>
    %cst_34 = arith.constant dense<0.000000e+00> : vector<499x160xf32>
    %56 = tpu.matmul %55, %54, %cst_34 {dimension_numbers = #tpu.dot_dimension_numbers<[1], [0], [0], [1], [0, 0, 1, 1], [], []>} : vector<499x84xbf16>, vector<84x160xbf16>, vector<499x160xf32> -> vector<499x160xf32>
    %57 = vector.extract_strided_slice %46 {offsets = [4, 0], sizes = [499, 84], strides = [1, 1]} : vector<507x84xf32> to vector<499x84xf32>
    %c2_35 = arith.constant 2 : index
    %c0_36 = arith.constant 0 : index
    %c0_37 = arith.constant 0 : index
    %58 = vector.load %arg5[%c2_35, %c0_36, %c0_37] : memref<5x84x160xbf16, #tpu.memory_space<vmem>>, vector<1x84x160xbf16>
    %59 = vector.shape_cast %58 : vector<1x84x160xbf16> to vector<84x160xbf16>
    %60 = arith.truncf %57 : vector<499x84xf32> to vector<499x84xbf16>
    %cst_38 = arith.constant dense<0.000000e+00> : vector<499x160xf32>
    %61 = tpu.matmul %60, %59, %cst_38 {dimension_numbers = #tpu.dot_dimension_numbers<[1], [0], [0], [1], [0, 0, 1, 1], [], []>} : vector<499x84xbf16>, vector<84x160xbf16>, vector<499x160xf32> -> vector<499x160xf32>
    %62 = vector.extract_strided_slice %46 {offsets = [6, 0], sizes = [499, 84], strides = [1, 1]} : vector<507x84xf32> to vector<499x84xf32>
    %c3_39 = arith.constant 3 : index
    %c0_40 = arith.constant 0 : index
    %c0_41 = arith.constant 0 : index
    %63 = vector.load %arg5[%c3_39, %c0_40, %c0_41] : memref<5x84x160xbf16, #tpu.memory_space<vmem>>, vector<1x84x160xbf16>
    %64 = vector.shape_cast %63 : vector<1x84x160xbf16> to vector<84x160xbf16>
    %65 = arith.truncf %62 : vector<499x84xf32> to vector<499x84xbf16>
    %cst_42 = arith.constant dense<0.000000e+00> : vector<499x160xf32>
    %66 = tpu.matmul %65, %64, %cst_42 {dimension_numbers = #tpu.dot_dimension_numbers<[1], [0], [0], [1], [0, 0, 1, 1], [], []>} : vector<499x84xbf16>, vector<84x160xbf16>, vector<499x160xf32> -> vector<499x160xf32>
    %67 = vector.extract_strided_slice %46 {offsets = [8, 0], sizes = [499, 84], strides = [1, 1]} : vector<507x84xf32> to vector<499x84xf32>
    %c4_43 = arith.constant 4 : index
    %c0_44 = arith.constant 0 : index
    %c0_45 = arith.constant 0 : index
    %68 = vector.load %arg5[%c4_43, %c0_44, %c0_45] : memref<5x84x160xbf16, #tpu.memory_space<vmem>>, vector<1x84x160xbf16>
    %69 = vector.shape_cast %68 : vector<1x84x160xbf16> to vector<84x160xbf16>
    %70 = arith.truncf %67 : vector<499x84xf32> to vector<499x84xbf16>
    %cst_46 = arith.constant dense<0.000000e+00> : vector<499x160xf32>
    %71 = tpu.matmul %70, %69, %cst_46 {dimension_numbers = #tpu.dot_dimension_numbers<[1], [0], [0], [1], [0, 0, 1, 1], [], []>} : vector<499x84xbf16>, vector<84x160xbf16>, vector<499x160xf32> -> vector<499x160xf32>
    %72 = arith.addf %51, %56 : vector<499x160xf32>
    %73 = arith.addf %61, %66 : vector<499x160xf32>
    %74 = arith.addf %72, %73 : vector<499x160xf32>
    %75 = arith.addf %74, %71 : vector<499x160xf32>
    %c0_47 = arith.constant 0 : index
    %c0_48 = arith.constant 0 : index
    %76 = vector.load %arg6[%c0_47, %c0_48] : memref<1x160xf32, #tpu.memory_space<vmem>>, vector<1x160xf32>
    %77 = vector.broadcast %76 : vector<1x160xf32> to vector<499x160xf32>
    %78 = arith.addf %75, %77 : vector<499x160xf32>
    %cst_49 = arith.constant 0.000000e+00 : f32
    %79 = vector.broadcast %cst_49 : f32 to vector<499x160xf32>
    %80 = arith.maximumf %78, %79 : vector<499x160xf32>
    %c0_50 = arith.constant 0 : index
    %c0_51 = arith.constant 0 : index
    %c0_52 = arith.constant 0 : index
    %81 = vector.load %arg7[%c0_50, %c0_51, %c0_52] : memref<2x160x80xbf16, #tpu.memory_space<vmem>>, vector<1x160x80xbf16>
    %82 = vector.shape_cast %81 : vector<1x160x80xbf16> to vector<160x80xbf16>
    %83 = arith.truncf %80 : vector<499x160xf32> to vector<499x160xbf16>
    %cst_53 = arith.constant dense<0.000000e+00> : vector<499x80xf32>
    %84 = tpu.matmul %83, %82, %cst_53 {dimension_numbers = #tpu.dot_dimension_numbers<[1], [0], [0], [1], [0, 0, 1, 1], [], []>} : vector<499x160xbf16>, vector<160x80xbf16>, vector<499x80xf32> -> vector<499x80xf32>
    %c1_54 = arith.constant 1 : index
    %c0_55 = arith.constant 0 : index
    %c0_56 = arith.constant 0 : index
    %85 = vector.load %arg7[%c1_54, %c0_55, %c0_56] : memref<2x160x80xbf16, #tpu.memory_space<vmem>>, vector<1x160x80xbf16>
    %86 = vector.shape_cast %85 : vector<1x160x80xbf16> to vector<160x80xbf16>
    %87 = arith.truncf %80 : vector<499x160xf32> to vector<499x160xbf16>
    %cst_57 = arith.constant dense<0.000000e+00> : vector<499x80xf32>
    %88 = tpu.matmul %87, %86, %cst_57 {dimension_numbers = #tpu.dot_dimension_numbers<[1], [0], [0], [1], [0, 0, 1, 1], [], []>} : vector<499x160xbf16>, vector<160x80xbf16>, vector<499x80xf32> -> vector<499x80xf32>
    %89 = arith.maximumf %84, %88 : vector<499x80xf32>
    %90 = vector.extract_strided_slice %89 {offsets = [0, 0], sizes = [497, 80], strides = [1, 1]} : vector<499x80xf32> to vector<497x80xf32>
    %91 = vector.extract_strided_slice %89 {offsets = [2, 0], sizes = [497, 80], strides = [1, 1]} : vector<499x80xf32> to vector<497x80xf32>
    %92 = arith.maximumf %90, %91 : vector<497x80xf32>
    %93 = tpu.iota {dimensions = array<i32: 0>} : vector<16x497xi32>
    %94 = tpu.iota {dimensions = array<i32: 1>} : vector<16x497xi32>
    %95 = arith.truncf %92 : vector<497x80xf32> to vector<497x80xbf16>
    %cst_58 = arith.constant 0.000000e+00 : f32
    %96 = vector.broadcast %cst_58 : f32 to vector<16x120xf32>
    %c32_i32 = arith.constant 32 : i32
    %97 = vector.broadcast %c32_i32 : i32 to vector<16x497xi32>
    %98 = arith.muli %93, %97 : vector<16x497xi32>
    %c0_i32 = arith.constant 0 : i32
    %99 = vector.broadcast %c0_i32 : i32 to vector<16x497xi32>
    %100 = arith.addi %98, %99 : vector<16x497xi32>
    %101 = arith.cmpi eq, %94, %100 : vector<16x497xi32>
    %102 = arith.extui %101 : vector<16x497xi1> to vector<16x497xi32>
    %103 = arith.sitofp %102 : vector<16x497xi32> to vector<16x497xf32>
    %104 = arith.truncf %103 : vector<16x497xf32> to vector<16x497xbf16>
    %cst_59 = arith.constant dense<0.000000e+00> : vector<16x80xf32>
    %105 = tpu.matmul %104, %95, %cst_59 {dimension_numbers = #tpu.dot_dimension_numbers<[1], [0], [0], [1], [0, 0, 1, 1], [], []>} : vector<16x497xbf16>, vector<497x80xbf16>, vector<16x80xf32> -> vector<16x80xf32>
    %c0_60 = arith.constant 0 : index
    %c0_61 = arith.constant 0 : index
    %c0_62 = arith.constant 0 : index
    %106 = vector.load %arg8[%c0_60, %c0_61, %c0_62] : memref<5x80x120xbf16, #tpu.memory_space<vmem>>, vector<1x80x120xbf16>
    %107 = vector.shape_cast %106 : vector<1x80x120xbf16> to vector<80x120xbf16>
    %108 = arith.truncf %105 : vector<16x80xf32> to vector<16x80xbf16>
    %cst_63 = arith.constant dense<0.000000e+00> : vector<16x120xf32>
    %109 = tpu.matmul %108, %107, %cst_63 {dimension_numbers = #tpu.dot_dimension_numbers<[1], [0], [0], [1], [0, 0, 1, 1], [], []>} : vector<16x80xbf16>, vector<80x120xbf16>, vector<16x120xf32> -> vector<16x120xf32>
    %110 = arith.addf %96, %109 : vector<16x120xf32>
    %c32_i32_64 = arith.constant 32 : i32
    %111 = vector.broadcast %c32_i32_64 : i32 to vector<16x497xi32>
    %112 = arith.muli %93, %111 : vector<16x497xi32>
    %c4_i32 = arith.constant 4 : i32
    %113 = vector.broadcast %c4_i32 : i32 to vector<16x497xi32>
    %114 = arith.addi %112, %113 : vector<16x497xi32>
    %115 = arith.cmpi eq, %94, %114 : vector<16x497xi32>
    %116 = arith.extui %115 : vector<16x497xi1> to vector<16x497xi32>
    %117 = arith.sitofp %116 : vector<16x497xi32> to vector<16x497xf32>
    %118 = arith.truncf %117 : vector<16x497xf32> to vector<16x497xbf16>
    %cst_65 = arith.constant dense<0.000000e+00> : vector<16x80xf32>
    %119 = tpu.matmul %118, %95, %cst_65 {dimension_numbers = #tpu.dot_dimension_numbers<[1], [0], [0], [1], [0, 0, 1, 1], [], []>} : vector<16x497xbf16>, vector<497x80xbf16>, vector<16x80xf32> -> vector<16x80xf32>
    %c1_66 = arith.constant 1 : index
    %c0_67 = arith.constant 0 : index
    %c0_68 = arith.constant 0 : index
    %120 = vector.load %arg8[%c1_66, %c0_67, %c0_68] : memref<5x80x120xbf16, #tpu.memory_space<vmem>>, vector<1x80x120xbf16>
    %121 = vector.shape_cast %120 : vector<1x80x120xbf16> to vector<80x120xbf16>
    %122 = arith.truncf %119 : vector<16x80xf32> to vector<16x80xbf16>
    %cst_69 = arith.constant dense<0.000000e+00> : vector<16x120xf32>
    %123 = tpu.matmul %122, %121, %cst_69 {dimension_numbers = #tpu.dot_dimension_numbers<[1], [0], [0], [1], [0, 0, 1, 1], [], []>} : vector<16x80xbf16>, vector<80x120xbf16>, vector<16x120xf32> -> vector<16x120xf32>
    %124 = arith.addf %110, %123 : vector<16x120xf32>
    %c32_i32_70 = arith.constant 32 : i32
    %125 = vector.broadcast %c32_i32_70 : i32 to vector<16x497xi32>
    %126 = arith.muli %93, %125 : vector<16x497xi32>
    %c8_i32 = arith.constant 8 : i32
    %127 = vector.broadcast %c8_i32 : i32 to vector<16x497xi32>
    %128 = arith.addi %126, %127 : vector<16x497xi32>
    %129 = arith.cmpi eq, %94, %128 : vector<16x497xi32>
    %130 = arith.extui %129 : vector<16x497xi1> to vector<16x497xi32>
    %131 = arith.sitofp %130 : vector<16x497xi32> to vector<16x497xf32>
    %132 = arith.truncf %131 : vector<16x497xf32> to vector<16x497xbf16>
    %cst_71 = arith.constant dense<0.000000e+00> : vector<16x80xf32>
    %133 = tpu.matmul %132, %95, %cst_71 {dimension_numbers = #tpu.dot_dimension_numbers<[1], [0], [0], [1], [0, 0, 1, 1], [], []>} : vector<16x497xbf16>, vector<497x80xbf16>, vector<16x80xf32> -> vector<16x80xf32>
    %c2_72 = arith.constant 2 : index
    %c0_73 = arith.constant 0 : index
    %c0_74 = arith.constant 0 : index
    %134 = vector.load %arg8[%c2_72, %c0_73, %c0_74] : memref<5x80x120xbf16, #tpu.memory_space<vmem>>, vector<1x80x120xbf16>
    %135 = vector.shape_cast %134 : vector<1x80x120xbf16> to vector<80x120xbf16>
    %136 = arith.truncf %133 : vector<16x80xf32> to vector<16x80xbf16>
    %cst_75 = arith.constant dense<0.000000e+00> : vector<16x120xf32>
    %137 = tpu.matmul %136, %135, %cst_75 {dimension_numbers = #tpu.dot_dimension_numbers<[1], [0], [0], [1], [0, 0, 1, 1], [], []>} : vector<16x80xbf16>, vector<80x120xbf16>, vector<16x120xf32> -> vector<16x120xf32>
    %138 = arith.addf %124, %137 : vector<16x120xf32>
    %c32_i32_76 = arith.constant 32 : i32
    %139 = vector.broadcast %c32_i32_76 : i32 to vector<16x497xi32>
    %140 = arith.muli %93, %139 : vector<16x497xi32>
    %c12_i32 = arith.constant 12 : i32
    %141 = vector.broadcast %c12_i32 : i32 to vector<16x497xi32>
    %142 = arith.addi %140, %141 : vector<16x497xi32>
    %143 = arith.cmpi eq, %94, %142 : vector<16x497xi32>
    %144 = arith.extui %143 : vector<16x497xi1> to vector<16x497xi32>
    %145 = arith.sitofp %144 : vector<16x497xi32> to vector<16x497xf32>
    %146 = arith.truncf %145 : vector<16x497xf32> to vector<16x497xbf16>
    %cst_77 = arith.constant dense<0.000000e+00> : vector<16x80xf32>
    %147 = tpu.matmul %146, %95, %cst_77 {dimension_numbers = #tpu.dot_dimension_numbers<[1], [0], [0], [1], [0, 0, 1, 1], [], []>} : vector<16x497xbf16>, vector<497x80xbf16>, vector<16x80xf32> -> vector<16x80xf32>
    %c3_78 = arith.constant 3 : index
    %c0_79 = arith.constant 0 : index
    %c0_80 = arith.constant 0 : index
    %148 = vector.load %arg8[%c3_78, %c0_79, %c0_80] : memref<5x80x120xbf16, #tpu.memory_space<vmem>>, vector<1x80x120xbf16>
    %149 = vector.shape_cast %148 : vector<1x80x120xbf16> to vector<80x120xbf16>
    %150 = arith.truncf %147 : vector<16x80xf32> to vector<16x80xbf16>
    %cst_81 = arith.constant dense<0.000000e+00> : vector<16x120xf32>
    %151 = tpu.matmul %150, %149, %cst_81 {dimension_numbers = #tpu.dot_dimension_numbers<[1], [0], [0], [1], [0, 0, 1, 1], [], []>} : vector<16x80xbf16>, vector<80x120xbf16>, vector<16x120xf32> -> vector<16x120xf32>
    %152 = arith.addf %138, %151 : vector<16x120xf32>
    %c32_i32_82 = arith.constant 32 : i32
    %153 = vector.broadcast %c32_i32_82 : i32 to vector<16x497xi32>
    %154 = arith.muli %93, %153 : vector<16x497xi32>
    %c16_i32 = arith.constant 16 : i32
    %155 = vector.broadcast %c16_i32 : i32 to vector<16x497xi32>
    %156 = arith.addi %154, %155 : vector<16x497xi32>
    %157 = arith.cmpi eq, %94, %156 : vector<16x497xi32>
    %158 = arith.extui %157 : vector<16x497xi1> to vector<16x497xi32>
    %159 = arith.sitofp %158 : vector<16x497xi32> to vector<16x497xf32>
    %160 = arith.truncf %159 : vector<16x497xf32> to vector<16x497xbf16>
    %cst_83 = arith.constant dense<0.000000e+00> : vector<16x80xf32>
    %161 = tpu.matmul %160, %95, %cst_83 {dimension_numbers = #tpu.dot_dimension_numbers<[1], [0], [0], [1], [0, 0, 1, 1], [], []>} : vector<16x497xbf16>, vector<497x80xbf16>, vector<16x80xf32> -> vector<16x80xf32>
    %c4_84 = arith.constant 4 : index
    %c0_85 = arith.constant 0 : index
    %c0_86 = arith.constant 0 : index
    %162 = vector.load %arg8[%c4_84, %c0_85, %c0_86] : memref<5x80x120xbf16, #tpu.memory_space<vmem>>, vector<1x80x120xbf16>
    %163 = vector.shape_cast %162 : vector<1x80x120xbf16> to vector<80x120xbf16>
    %164 = arith.truncf %161 : vector<16x80xf32> to vector<16x80xbf16>
    %cst_87 = arith.constant dense<0.000000e+00> : vector<16x120xf32>
    %165 = tpu.matmul %164, %163, %cst_87 {dimension_numbers = #tpu.dot_dimension_numbers<[1], [0], [0], [1], [0, 0, 1, 1], [], []>} : vector<16x80xbf16>, vector<80x120xbf16>, vector<16x120xf32> -> vector<16x120xf32>
    %166 = arith.addf %152, %165 : vector<16x120xf32>
    %c0_88 = arith.constant 0 : index
    %c0_89 = arith.constant 0 : index
    %167 = vector.load %arg9[%c0_88, %c0_89] : memref<1x120xf32, #tpu.memory_space<vmem>>, vector<1x120xf32>
    %168 = vector.broadcast %167 : vector<1x120xf32> to vector<16x120xf32>
    %169 = arith.addf %166, %168 : vector<16x120xf32>
    %cst_90 = arith.constant 0.000000e+00 : f32
    %170 = vector.broadcast %cst_90 : f32 to vector<16x120xf32>
    %171 = arith.maximumf %169, %170 : vector<16x120xf32>
    %c0_91 = arith.constant 0 : index
    %c0_92 = arith.constant 0 : index
    %172 = vector.load %arg10[%c0_91, %c0_92] : memref<120x84xbf16, #tpu.memory_space<vmem>>, vector<120x84xbf16>
    %173 = arith.truncf %171 : vector<16x120xf32> to vector<16x120xbf16>
    %cst_93 = arith.constant dense<0.000000e+00> : vector<16x84xf32>
    %174 = tpu.matmul %173, %172, %cst_93 {dimension_numbers = #tpu.dot_dimension_numbers<[1], [0], [0], [1], [0, 0, 1, 1], [], []>} : vector<16x120xbf16>, vector<120x84xbf16>, vector<16x84xf32> -> vector<16x84xf32>
    %c0_94 = arith.constant 0 : index
    %c0_95 = arith.constant 0 : index
    %175 = vector.load %arg11[%c0_94, %c0_95] : memref<1x84xf32, #tpu.memory_space<vmem>>, vector<1x84xf32>
    %176 = vector.broadcast %175 : vector<1x84xf32> to vector<16x84xf32>
    %177 = arith.addf %174, %176 : vector<16x84xf32>
    %cst_96 = arith.constant 0.000000e+00 : f32
    %178 = vector.broadcast %cst_96 : f32 to vector<16x84xf32>
    %179 = arith.maximumf %177, %178 : vector<16x84xf32>
    %c0_97 = arith.constant 0 : index
    %c0_98 = arith.constant 0 : index
    %180 = vector.load %arg12[%c0_97, %c0_98] : memref<84x10xbf16, #tpu.memory_space<vmem>>, vector<84x10xbf16>
    %181 = arith.truncf %179 : vector<16x84xf32> to vector<16x84xbf16>
    %cst_99 = arith.constant dense<0.000000e+00> : vector<16x10xf32>
    %182 = tpu.matmul %181, %180, %cst_99 {dimension_numbers = #tpu.dot_dimension_numbers<[1], [0], [0], [1], [0, 0, 1, 1], [], []>} : vector<16x84xbf16>, vector<84x10xbf16>, vector<16x10xf32> -> vector<16x10xf32>
    %c0_100 = arith.constant 0 : index
    %c0_101 = arith.constant 0 : index
    %183 = vector.load %arg13[%c0_100, %c0_101] : memref<1x10xf32, #tpu.memory_space<vmem>>, vector<1x10xf32>
    %184 = vector.broadcast %183 : vector<1x10xf32> to vector<16x10xf32>
    %185 = arith.addf %182, %184 : vector<16x10xf32>
    %c0_102 = arith.constant 0 : index
    %c0_103 = arith.constant 0 : index
    %186 = vector.load %arg14[%c0_102, %c0_103] : memref<16x10xf32, #tpu.memory_space<vmem>>, vector<16x10xf32>
    tpu.vector_store %arg14[%c0_102, %c0_103], %185 {strides = array<i32>} : memref<16x10xf32, #tpu.memory_space<vmem>>, vector<16x10xf32>,
    return
  }
  func.func @transform_0(%arg0: i32) -> (i32, i32) {
    %c0_i32 = arith.constant 0 : i32
    %c0_i32_0 = arith.constant 0 : i32
    return %arg0, %c0_i32 : i32, i32
  }
  func.func @transform_1(%arg0: i32) -> (i32, i32, i32) {
    %c0_i32 = arith.constant 0 : i32
    %c0_i32_0 = arith.constant 0 : i32
    %c0_i32_1 = arith.constant 0 : i32
    %c0_i32_2 = arith.constant 0 : i32
    return %c0_i32, %c0_i32_0, %c0_i32_1 : i32, i32, i32
  }
  func.func @transform_2(%arg0: i32) -> (i32, i32) {
    %c0_i32 = arith.constant 0 : i32
    %c0_i32_0 = arith.constant 0 : i32
    %c0_i32_1 = arith.constant 0 : i32
    return %c0_i32, %c0_i32_0 : i32, i32
  }
  func.func @transform_3(%arg0: i32) -> (i32, i32, i32) {
    %c0_i32 = arith.constant 0 : i32
    %c0_i32_0 = arith.constant 0 : i32
    %c0_i32_1 = arith.constant 0 : i32
    %c0_i32_2 = arith.constant 0 : i32
    return %c0_i32, %c0_i32_0, %c0_i32_1 : i32, i32, i32
  }
  func.func @transform_4(%arg0: i32) -> (i32, i32, i32) {
    %c0_i32 = arith.constant 0 : i32
    %c0_i32_0 = arith.constant 0 : i32
    %c0_i32_1 = arith.constant 0 : i32
    %c0_i32_2 = arith.constant 0 : i32
    return %c0_i32, %c0_i32_0, %c0_i32_1 : i32, i32, i32
  }
  func.func @transform_5(%arg0: i32) -> (i32, i32) {
    %c0_i32 = arith.constant 0 : i32
    %c0_i32_0 = arith.constant 0 : i32
    %c0_i32_1 = arith.constant 0 : i32
    return %c0_i32, %c0_i32_0 : i32, i32
  }
  func.func @transform_6(%arg0: i32) -> (i32, i32, i32) {
    %c0_i32 = arith.constant 0 : i32
    %c0_i32_0 = arith.constant 0 : i32
    %c0_i32_1 = arith.constant 0 : i32
    %c0_i32_2 = arith.constant 0 : i32
    return %c0_i32, %c0_i32_0, %c0_i32_1 : i32, i32, i32
  }
  func.func @transform_7(%arg0: i32) -> (i32, i32, i32) {
    %c0_i32 = arith.constant 0 : i32
    %c0_i32_0 = arith.constant 0 : i32
    %c0_i32_1 = arith.constant 0 : i32
    %c0_i32_2 = arith.constant 0 : i32
    return %c0_i32, %c0_i32_0, %c0_i32_1 : i32, i32, i32
  }
  func.func @transform_8(%arg0: i32) -> (i32, i32) {
    %c0_i32 = arith.constant 0 : i32
    %c0_i32_0 = arith.constant 0 : i32
    %c0_i32_1 = arith.constant 0 : i32
    return %c0_i32, %c0_i32_0 : i32, i32
  }
  func.func @transform_9(%arg0: i32) -> (i32, i32) {
    %c0_i32 = arith.constant 0 : i32
    %c0_i32_0 = arith.constant 0 : i32
    %c0_i32_1 = arith.constant 0 : i32
    return %c0_i32, %c0_i32_0 : i32, i32
  }
  func.func @transform_10(%arg0: i32) -> (i32, i32) {
    %c0_i32 = arith.constant 0 : i32
    %c0_i32_0 = arith.constant 0 : i32
    %c0_i32_1 = arith.constant 0 : i32
    return %c0_i32, %c0_i32_0 : i32, i32
  }
  func.func @transform_11(%arg0: i32) -> (i32, i32) {
    %c0_i32 = arith.constant 0 : i32
    %c0_i32_0 = arith.constant 0 : i32
    %c0_i32_1 = arith.constant 0 : i32
    return %c0_i32, %c0_i32_0 : i32, i32
  }
  func.func @transform_12(%arg0: i32) -> (i32, i32) {
    %c0_i32 = arith.constant 0 : i32
    %c0_i32_0 = arith.constant 0 : i32
    %c0_i32_1 = arith.constant 0 : i32
    return %c0_i32, %c0_i32_0 : i32, i32
  }
  func.func @transform_13(%arg0: i32) -> (i32, i32) {
    %c0_i32 = arith.constant 0 : i32
    %c0_i32_0 = arith.constant 0 : i32
    return %arg0, %c0_i32 : i32, i32
  }
}

</mosaic_0001>

<llo_original>
// kernel: net_forward.1
$region0: #{net_forward.1}
  #allocation0 [shape = 'u32[]', space=smem, size = 0x4, offset = 0x4, fixed_abs, tag = 'smem constant byte address 0x4 - core index']
  #allocation1 [shape = 'u32[144,128]{1,0:T(1,128)}', space=vmem, size = 0x12000, scoped, tag = 'internal scratch']
  %s0 = inlined_call_operand.vmem [shape: f32[1536,32], index: 0, kind: input, shape index: {}]
  %s1 = inlined_call_operand.vmem [shape: bf16[5,32,168], index: 1, kind: input, shape index: {}]
  %s2 = inlined_call_operand.vmem [shape: f32[1,168], index: 2, kind: input, shape index: {}]
  %s3 = inlined_call_operand.vmem [shape: bf16[2,168,84], index: 3, kind: input, shape index: {}]
  %s4 = inlined_call_operand.vmem [shape: bf16[5,84,160], index: 4, kind: input, shape index: {}]
  %s5 = inlined_call_operand.vmem [shape: f32[1,160], index: 5, kind: input, shape index: {}]
  %s6 = inlined_call_operand.vmem [shape: bf16[2,160,80], index: 6, kind: input, shape index: {}]
  %s7 = inlined_call_operand.vmem [shape: bf16[5,80,120], index: 7, kind: input, shape index: {}]
  %s8 = inlined_call_operand.vmem [shape: f32[1,120], index: 8, kind: input, shape index: {}]
  %s9 = inlined_call_operand.vmem [shape: bf16[120,84], index: 9, kind: input, shape index: {}]
  %s10 = inlined_call_operand.vmem [shape: f32[1,84], index: 10, kind: input, shape index: {}]
  %s11 = inlined_call_operand.vmem [shape: bf16[84,10], index: 11, kind: input, shape index: {}]
  %s12 = inlined_call_operand.vmem [shape: f32[1,10], index: 12, kind: input, shape index: {}]
  %s13 = inlined_call_operand.vmem [shape: f32[48,10], index: 13, kind: output, shape index: {}]
  %s14 = sld [smem:[#allocation0]]
  $region85: #{net_forward.1} parent=0
    _
  %s16 = ssub.s32 1, %s14
  %s17 = scalar_select 0, %s16, %s14
  loop: start=0, step=1, limit=5
  $region2: #{net_forward.1} parent=0 // loop_pre_header
    _
  $region3: #{net_forward.1} parent=0 // loop_header
    %s19 = sphi 0, %s23
    %p20 = scmp.ge.s32.totalorder %s19, 5
    %s29 = sphi 0, %s31
    %s32 = sphi 0, %s29
    %s33 = sphi 0, %s32
    %s49 = sphi 0, %s33
    %s53 = sphi 0, %s53
    %s55 = sphi 0, %s53
    %s56 = sphi 0, %s55
    %s70 = sphi 0, %s56
    %s74 = sphi 0, %s74
    %s76 = sphi 0, %s74
    %s77 = sphi 0, %s76
    %s91 = sphi 0, %s77
    %s95 = sphi 0, %s95
    %s97 = sphi 0, %s95
    %s98 = sphi 0, %s97
    %s112 = sphi 0, %s98
    %s116 = sphi 0, %s116
    %s118 = sphi 0, %s116
    %s119 = sphi 0, %s118
    %s133 = sphi 0, %s119
    %s137 = sphi 0, %s137
    %s139 = sphi 0, %s137
    %s140 = sphi 0, %s139
    %s154 = sphi 0, %s140
    %s158 = sphi 0, %s158
    %s160 = sphi 0, %s158
    %s161 = sphi 0, %s160
    %s175 = sphi 0, %s161
    %s179 = sphi 0, %s179
    %s181 = sphi 0, %s179
    %s182 = sphi 0, %s181
    %s196 = sphi 0, %s182
    %s200 = sphi 0, %s200
    %s202 = sphi 0, %s200
    %s203 = sphi 0, %s202
    %s217 = sphi 0, %s203
    %s221 = sphi 0, %s221
    %s223 = sphi 0, %s221
    %s224 = sphi 0, %s223
    %s238 = sphi 0, %s224
    %s242 = sphi 0, %s242
    %s244 = sphi 0, %s242
    %s245 = sphi 0, %s244
    %s259 = sphi 0, %s245
    %s263 = sphi 0, %s263
    %s265 = sphi 0, %s263
    %s266 = sphi 0, %s265
    %s280 = sphi 0, %s266
    %s284 = sphi 0, %s284
    %s286 = sphi 0, %s284
    %s287 = sphi 0, %s286
    %s301 = sphi 0, %s287
    %s307 = sphi 0, %s309
    %s310 = sphi 0, %s307
    %s311 = sphi 0, %s310
    %s327 = sphi 0, %s311
  $region4: #{net_forward.1} parent=0 // loop_header_branch
    %22 = sbr.rel (%p20) target = $region8
  $region5: #{net_forward.1} parent=0 // loop_body
    %s24 = ssub.s32 %s19, 1
    %s25 = ssub.s32 %s19, 2
    %s26 = sadd.s32 %s19, 1
    %s27 = ssub.s32 %s19, %s26
    %p28 = scmp.eq.s32.totalorder %s27, 0
    %s30 = sadd.s32 %s29, 1
    %s31 = scalar_select %p28, %s29, %s30
    %p34 = pneg %p28
    %p35 = scmp.eq.s32.totalorder %s19, 2
    %p36 = por %p34, %p35
    %p37 = scmp.ne.s32.totalorder %s29, %s32
    %p38 = scmp.eq.s32.totalorder %s19, 0
    %p39 = por %p37, %p38
    %p40 = scmp.ne.s32.totalorder %s29, %s32
    %p41 = scmp.eq.s32.totalorder %s24, 2
    %p42 = por %p40, %p41
    %p43 = scmp.ne.s32.totalorder %s32, %s33
    %p44 = scmp.eq.s32.totalorder %s24, 0
    %p45 = por %p43, %p44
    %p46 = scmp.ne.s32.totalorder %s32, %s33
    %p47 = scmp.eq.s32.totalorder %s25, 2
    %p48 = por %p46, %p47
    %p50 = scmp.ne.s32.totalorder %s33, %s49
    %p51 = scmp.eq.s32.totalorder %s25, 0
    %p52 = por %p50, %p51
    %s54 = sadd.s32 %s53, 1
    %p57 = scmp.eq.s32.totalorder %s19, 2
    %p58 = scmp.ne.s32.totalorder %s53, %s55
    %p59 = scmp.eq.s32.totalorder %s19, 0
    %p60 = por %p58, %p59
    %p61 = scmp.ne.s32.totalorder %s53, %s55
    %p62 = scmp.eq.s32.totalorder %s24, 2
    %p63 = por %p61, %p62
    %p64 = scmp.ne.s32.totalorder %s55, %s56
    %p65 = scmp.eq.s32.totalorder %s24, 0
    %p66 = por %p64, %p65
    %p67 = scmp.ne.s32.totalorder %s55, %s56
    %p68 = scmp.eq.s32.totalorder %s25, 2
    %p69 = por %p67, %p68
    %p71 = scmp.ne.s32.totalorder %s56, %s70
    %p72 = scmp.eq.s32.totalorder %s25, 0
    %p73 = por %p71, %p72
    %s75 = sadd.s32 %s74, 1
    %p78 = scmp.eq.s32.totalorder %s19, 2
    %p79 = scmp.ne.s32.totalorder %s74, %s76
    %p80 = scmp.eq.s32.totalorder %s19, 0
    %p81 = por %p79, %p80
    %p82 = scmp.ne.s32.totalorder %s74, %s76
    %p83 = scmp.eq.s32.totalorder %s24, 2
    %p84 = por %p82, %p83
    %p85 = scmp.ne.s32.totalorder %s76, %s77
    %p86 = scmp.eq.s32.totalorder %s24, 0
    %p87 = por %p85, %p86
    %p88 = scmp.ne.s32.totalorder %s76, %s77
    %p89 = scmp.eq.s32.totalorder %s25, 2
    %p90 = por %p88, %p89
    %p92 = scmp.ne.s32.totalorder %s77, %s91
    %p93 = scmp.eq.s32.totalorder %s25, 0
    %p94 = por %p92, %p93
    %s96 = sadd.s32 %s95, 1
    %p99 = scmp.eq.s32.totalorder %s19, 2
    %p100 = scmp.ne.s32.totalorder %s95, %s97
    %p101 = scmp.eq.s32.totalorder %s19, 0
    %p102 = por %p100, %p101
    %p103 = scmp.ne.s32.totalorder %s95, %s97
    %p104 = scmp.eq.s32.totalorder %s24, 2
    %p105 = por %p103, %p104
    %p106 = scmp.ne.s32.totalorder %s97, %s98
    %p107 = scmp.eq.s32.totalorder %s24, 0
    %p108 = por %p106, %p107
    %p109 = scmp.ne.s32.totalorder %s97, %s98
    %p110 = scmp.eq.s32.totalorder %s25, 2
    %p111 = por %p109, %p110
    %p113 = scmp.ne.s32.totalorder %s98, %s112
    %p114 = scmp.eq.s32.totalorder %s25, 0
    %p115 = por %p113, %p114
    %s117 = sadd.s32 %s116, 1
    %p120 = scmp.eq.s32.totalorder %s19, 2
    %p121 = scmp.ne.s32.totalorder %s116, %s118
    %p122 = scmp.eq.s32.totalorder %s19, 0
    %p123 = por %p121, %p122
    %p124 = scmp.ne.s32.totalorder %s116, %s118
    %p125 = scmp.eq.s32.totalorder %s24, 2
    %p126 = por %p124, %p125
    %p127 = scmp.ne.s32.totalorder %s118, %s119
    %p128 = scmp.eq.s32.totalorder %s24, 0
    %p129 = por %p127, %p128
    %p130 = scmp.ne.s32.totalorder %s118, %s119
    %p131 = scmp.eq.s32.totalorder %s25, 2
    %p132 = por %p130, %p131
    %p134 = scmp.ne.s32.totalorder %s119, %s133
    %p135 = scmp.eq.s32.totalorder %s25, 0
    %p136 = por %p134, %p135
    %s138 = sadd.s32 %s137, 1
    %p141 = scmp.eq.s32.totalorder %s19, 2
    %p142 = scmp.ne.s32.totalorder %s137, %s139
    %p143 = scmp.eq.s32.totalorder %s19, 0
    %p144 = por %p142, %p143
    %p145 = scmp.ne.s32.totalorder %s137, %s139
    %p146 = scmp.eq.s32.totalorder %s24, 2
    %p147 = por %p145, %p146
    %p148 = scmp.ne.s32.totalorder %s139, %s140
    %p149 = scmp.eq.s32.totalorder %s24, 0
    %p150 = por %p148, %p149
    %p151 = scmp.ne.s32.totalorder %s139, %s140
    %p152 = scmp.eq.s32.totalorder %s25, 2
    %p153 = por %p151, %p152
    %p155 = scmp.ne.s32.totalorder %s140, %s154
    %p156 = scmp.eq.s32.totalorder %s25, 0
    %p157 = por %p155, %p156
    %s159 = sadd.s32 %s158, 1
    %p162 = scmp.eq.s32.totalorder %s19, 2
    %p163 = scmp.ne.s32.totalorder %s158, %s160
    %p164 = scmp.eq.s32.totalorder %s19, 0
    %p165 = por %p163, %p164
    %p166 = scmp.ne.s32.totalorder %s158, %s160
    %p167 = scmp.eq.s32.totalorder %s24, 2
    %p168 = por %p166, %p167
    %p169 = scmp.ne.s32.totalorder %s160, %s161
    %p170 = scmp.eq.s32.totalorder %s24, 0
    %p171 = por %p169, %p170
    %p172 = scmp.ne.s32.totalorder %s160, %s161
    %p173 = scmp.eq.s32.totalorder %s25, 2
    %p174 = por %p172, %p173
    %p176 = scmp.ne.s32.totalorder %s161, %s175
    %p177 = scmp.eq.s32.totalorder %s25, 0
    %p178 = por %p176, %p177
    %s180 = sadd.s32 %s179, 1
    %p183 = scmp.eq.s32.totalorder %s19, 2
    %p184 = scmp.ne.s32.totalorder %s179, %s181
    %p185 = scmp.eq.s32.totalorder %s19, 0
    %p186 = por %p184, %p185
    %p187 = scmp.ne.s32.totalorder %s179, %s181
    %p188 = scmp.eq.s32.totalorder %s24, 2
    %p189 = por %p187, %p188
    %p190 = scmp.ne.s32.totalorder %s181, %s182
    %p191 = scmp.eq.s32.totalorder %s24, 0
    %p192 = por %p190, %p191
    %p193 = scmp.ne.s32.totalorder %s181, %s182
    %p194 = scmp.eq.s32.totalorder %s25, 2
    %p195 = por %p193, %p194
    %p197 = scmp.ne.s32.totalorder %s182, %s196
    %p198 = scmp.eq.s32.totalorder %s25, 0
    %p199 = por %p197, %p198
    %s201 = sadd.s32 %s200, 1
    %p204 = scmp.eq.s32.totalorder %s19, 2
    %p205 = scmp.ne.s32.totalorder %s200, %s202
    %p206 = scmp.eq.s32.totalorder %s19, 0
    %p207 = por %p205, %p206
    %p208 = scmp.ne.s32.totalorder %s200, %s202
    %p209 = scmp.eq.s32.totalorder %s24, 2
    %p210 = por %p208, %p209
    %p211 = scmp.ne.s32.totalorder %s202, %s203
    %p212 = scmp.eq.s32.totalorder %s24, 0
    %p213 = por %p211, %p212
    %p214 = scmp.ne.s32.totalorder %s202, %s203
    %p215 = scmp.eq.s32.totalorder %s25, 2
    %p216 = por %p214, %p215
    %p218 = scmp.ne.s32.totalorder %s203, %s217
    %p219 = scmp.eq.s32.totalorder %s25, 0
    %p220 = por %p218, %p219
    %s222 = sadd.s32 %s221, 1
    %p225 = scmp.eq.s32.totalorder %s19, 2
    %p226 = scmp.ne.s32.totalorder %s221, %s223
    %p227 = scmp.eq.s32.totalorder %s19, 0
    %p228 = por %p226, %p227
    %p229 = scmp.ne.s32.totalorder %s221, %s223
    %p230 = scmp.eq.s32.totalorder %s24, 2
    %p231 = por %p229, %p230
    %p232 = scmp.ne.s32.totalorder %s223, %s224
    %p233 = scmp.eq.s32.totalorder %s24, 0
    %p234 = por %p232, %p233
    %p235 = scmp.ne.s32.totalorder %s223, %s224
    %p236 = scmp.eq.s32.totalorder %s25, 2
    %p237 = por %p235, %p236
    %p239 = scmp.ne.s32.totalorder %s224, %s238
    %p240 = scmp.eq.s32.totalorder %s25, 0
    %p241 = por %p239, %p240
    %s243 = sadd.s32 %s242, 1
    %p246 = scmp.eq.s32.totalorder %s19, 2
    %p247 = scmp.ne.s32.totalorder %s242, %s244
    %p248 = scmp.eq.s32.totalorder %s19, 0
    %p249 = por %p247, %p248
    %p250 = scmp.ne.s32.totalorder %s242, %s244
    %p251 = scmp.eq.s32.totalorder %s24, 2
    %p252 = por %p250, %p251
    %p253 = scmp.ne.s32.totalorder %s244, %s245
    %p254 = scmp.eq.s32.totalorder %s24, 0
    %p255 = por %p253, %p254
    %p256 = scmp.ne.s32.totalorder %s244, %s245
    %p257 = scmp.eq.s32.totalorder %s25, 2
    %p258 = por %p256, %p257
    %p260 = scmp.ne.s32.totalorder %s245, %s259
    %p261 = scmp.eq.s32.totalorder %s25, 0
    %p262 = por %p260, %p261
    %s264 = sadd.s32 %s263, 1
    %p267 = scmp.eq.s32.totalorder %s19, 2
    %p268 = scmp.ne.s32.totalorder %s263, %s265
    %p269 = scmp.eq.s32.totalorder %s19, 0
    %p270 = por %p268, %p269
    %p271 = scmp.ne.s32.totalorder %s263, %s265
    %p272 = scmp.eq.s32.totalorder %s24, 2
    %p273 = por %p271, %p272
    %p274 = scmp.ne.s32.totalorder %s265, %s266
    %p275 = scmp.eq.s32.totalorder %s24, 0
    %p276 = por %p274, %p275
    %p277 = scmp.ne.s32.totalorder %s265, %s266
    %p278 = scmp.eq.s32.totalorder %s25, 2
    %p279 = por %p277, %p278
    %p281 = scmp.ne.s32.totalorder %s266, %s280
    %p282 = scmp.eq.s32.totalorder %s25, 0
    %p283 = por %p281, %p282
    %s285 = sadd.s32 %s284, 1
    %p288 = scmp.eq.s32.totalorder %s19, 2
    %p289 = scmp.ne.s32.totalorder %s284, %s286
    %p290 = scmp.eq.s32.totalorder %s19, 0
    %p291 = por %p289, %p290
    %p292 = scmp.ne.s32.totalorder %s284, %s286
    %p293 = scmp.eq.s32.totalorder %s24, 2
    %p294 = por %p292, %p293
    %p295 = scmp.ne.s32.totalorder %s286, %s287
    %p296 = scmp.eq.s32.totalorder %s24, 0
    %p297 = por %p295, %p296
    %p298 = scmp.ne.s32.totalorder %s286, %s287
    %p299 = scmp.eq.s32.totalorder %s25, 2
    %p300 = por %p298, %p299
    %p302 = scmp.ne.s32.totalorder %s287, %s301
    %p303 = scmp.eq.s32.totalorder %s25, 0
    %p304 = por %p302, %p303
    %s305 = ssub.s32 %s19, %s26
    %p306 = scmp.eq.s32.totalorder %s305, 0
    %s308 = sadd.s32 %s307, 1
    %s309 = scalar_select %p306, %s307, %s308
    %p312 = pneg %p306
    %p313 = scmp.eq.s32.totalorder %s19, 2
    %p314 = por %p312, %p313
    %p315 = scmp.ne.s32.totalorder %s307, %s310
    %p316 = scmp.eq.s32.totalorder %s19, 0
    %p317 = por %p315, %p316
    %p318 = scmp.ne.s32.totalorder %s307, %s310
    %p319 = scmp.eq.s32.totalorder %s24, 2
    %p320 = por %p318, %p319
    %p321 = scmp.ne.s32.totalorder %s310, %s311
    %p322 = scmp.eq.s32.totalorder %s24, 0
    %p323 = por %p321, %p322
    %p324 = scmp.ne.s32.totalorder %s310, %s311
    %p325 = scmp.eq.s32.totalorder %s25, 2
    %p326 = por %p324, %p325
    %p328 = scmp.ne.s32.totalorder %s311, %s327
    %p329 = scmp.eq.s32.totalorder %s25, 0
    %p330 = por %p328, %p329
    %p331 = scmp.le.s32.totalorder 1, %s19
    %p332 = scmp.lt.s32.totalorder %s19, 4
    %p333 = pnand %p331, %p332
    %p334 = pneg %p333
    // Predicated region
    $region9: #{net_forward.1} parent=5 // pred_check
      _
    $region10: #{net_forward.1} parent=5 // pred_check_branch
      %336 = sbr.rel (%p333) target = $region12
    $region11: #{net_forward.1} parent=5 // pred_region
      %s337 = ssub.s32 %s19, 1
      // Predicated region
      $region13: #{net_forward.1} parent=11 // pred_check
        %p338 = pneg %p66
      $region14: #{net_forward.1} parent=11 // pred_check_branch
        %340 = sbr.rel (%p338) target = $region16
      $region15: #{net_forward.1} parent=11 // pred_region
        _
      $region16: #{net_forward.1} parent=11 // pred_fallthru
        _
      // Predicated region
      $region17: #{net_forward.1} parent=11 // pred_check
        %p341 = pneg %p87
      $region18: #{net_forward.1} parent=11 // pred_check_branch
        %343 = sbr.rel (%p341) target = $region20
      $region19: #{net_forward.1} parent=11 // pred_region
        _
      $region20: #{net_forward.1} parent=11 // pred_fallthru
        _
      // Predicated region
      $region21: #{net_forward.1} parent=11 // pred_check
        %p344 = pneg %p108
      $region22: #{net_forward.1} parent=11 // pred_check_branch
        %346 = sbr.rel (%p344) target = $region24
      $region23: #{net_forward.1} parent=11 // pred_region
        _
      $region24: #{net_forward.1} parent=11 // pred_fallthru
        _
      // Predicated region
      $region25: #{net_forward.1} parent=11 // pred_check
        %p347 = pneg %p129
      $region26: #{net_forward.1} parent=11 // pred_check_branch
        %349 = sbr.rel (%p347) target = $region28
      $region27: #{net_forward.1} parent=11 // pred_region
        _
      $region28: #{net_forward.1} parent=11 // pred_fallthru
        _
      // Predicated region
      $region29: #{net_forward.1} parent=11 // pred_check
        %p350 = pneg %p150
      $region30: #{net_forward.1} parent=11 // pred_check_branch
        %352 = sbr.rel (%p350) target = $region32
      $region31: #{net_forward.1} parent=11 // pred_region
        _
      $region32: #{net_forward.1} parent=11 // pred_fallthru
        _
      // Predicated region
      $region33: #{net_forward.1} parent=11 // pred_check
        %p353 = pneg %p171
      $region34: #{net_forward.1} parent=11 // pred_check_branch
        %355 = sbr.rel (%p353) target = $region36
      $region35: #{net_forward.1} parent=11 // pred_region
        _
      $region36: #{net_forward.1} parent=11 // pred_fallthru
        _
      // Predicated region
      $region37: #{net_forward.1} parent=11 // pred_check
        %p356 = pneg %p192
      $region38: #{net_forward.1} parent=11 // pred_check_branch
        %358 = sbr.rel (%p356) target = $region40
      $region39: #{net_forward.1} parent=11 // pred_region
        _
      $region40: #{net_forward.1} parent=11 // pred_fallthru
        _
      // Predicated region
      $region41: #{net_forward.1} parent=11 // pred_check
        %p359 = pneg %p213
      $region42: #{net_forward.1} parent=11 // pred_check_branch
        %361 = sbr.rel (%p359) target = $region44
      $region43: #{net_forward.1} parent=11 // pred_region
        _
      $region44: #{net_forward.1} parent=11 // pred_fallthru
        _
      // Predicated region
      $region45: #{net_forward.1} parent=11 // pred_check
        %p362 = pneg %p234
      $region46: #{net_forward.1} parent=11 // pred_check_branch
        %364 = sbr.rel (%p362) target = $region48
      $region47: #{net_forward.1} parent=11 // pred_region
        _
      $region48: #{net_forward.1} parent=11 // pred_fallthru
        _
      // Predicated region
      $region49: #{net_forward.1} parent=11 // pred_check
        %p365 = pneg %p255
      $region50: #{net_forward.1} parent=11 // pred_check_branch
        %367 = sbr.rel (%p365) target = $region52
      $region51: #{net_forward.1} parent=11 // pred_region
        _
      $region52: #{net_forward.1} parent=11 // pred_fallthru
        _
      // Predicated region
      $region53: #{net_forward.1} parent=11 // pred_check
        %p368 = pneg %p276
      $region54: #{net_forward.1} parent=11 // pred_check_branch
        %370 = sbr.rel (%p368) target = $region56
      $region55: #{net_forward.1} parent=11 // pred_region
        _
      $region56: #{net_forward.1} parent=11 // pred_fallthru
        _
      // Predicated region
      $region57: #{net_forward.1} parent=11 // pred_check
        %p371 = pneg %p297
      $region58: #{net_forward.1} parent=11 // pred_check_branch
        %373 = sbr.rel (%p371) target = $region60
      $region59: #{net_forward.1} parent=11 // pred_region
        _
      $region60: #{net_forward.1} parent=11 // pred_fallthru
        _
    $region12: #{net_forward.1} parent=5 // pred_fallthru
      _
    %p374 = scmp.lt.s32.totalorder %s19, 3
    // Predicated region
    $region61: #{net_forward.1} parent=5 // pred_check
      %p375 = pneg %p374
    $region62: #{net_forward.1} parent=5 // pred_check_branch
      %377 = sbr.rel (%p375) target = $region64
    $region63: #{net_forward.1} parent=5 // pred_region
      // Predicated region
      $region65: #{net_forward.1} parent=63 // pred_check
        %p378 = pneg %p39
      $region66: #{net_forward.1} parent=63 // pred_check_branch
        %380 = sbr.rel (%p378) target = $region68
      $region67: #{net_forward.1} parent=63 // pred_region
        %s381 = smul.u32 64, %s19
        %p382 = scmp.lt.s32.totalorder %s381, 191
        %s383 = scalar_select %p382, %s381, 191
        %s384 = smul.addr %s383, 8
        %s385 = scalar_lea.vmem %s0, %s384
        %s386 = smul.u32 64, %s19
      $region68: #{net_forward.1} parent=63 // pred_fallthru
        _
    $region64: #{net_forward.1} parent=5 // pred_fallthru
      _
    %p387 = scmp.le.s32.totalorder 1, %s19
    %p388 = scmp.lt.s32.totalorder %s19, 4
    %p389 = pnand %p387, %p388
    %p390 = pneg %p389
    // Predicated region
    $region69: #{net_forward.1} parent=5 // pred_check
      _
    $region70: #{net_forward.1} parent=5 // pred_check_branch
      %392 = sbr.rel (%p389) target = $region72
    $region71: #{net_forward.1} parent=5 // pred_region
      %s393 = ssub.s32 %s19, 1
      %s394 = smul.u32 64, %s24
      %p395 = scmp.lt.s32.totalorder %s394, 191
      %s396 = scalar_select %p395, %s394, 191
      %s397 = smul.addr %s396, 8
      %s398 = scalar_lea.vmem %s0, %s397
      %p399 = pneg %p45
      %p400 = pneg %p42
      %p401 = pneg %p66
      %p402 = pneg %p63
      %p403 = pneg %p87
      %p404 = pneg %p84
      %p405 = pneg %p108
      %p406 = pneg %p105
      %p407 = pneg %p129
      %p408 = pneg %p126
      %p409 = pneg %p150
      %p410 = pneg %p147
      %p411 = pneg %p171
      %p412 = pneg %p168
      %p413 = pneg %p192
      %p414 = pneg %p189
      %p415 = pneg %p213
      %p416 = pneg %p210
      %p417 = pneg %p234
      %p418 = pneg %p231
      %p419 = pneg %p255
      %p420 = pneg %p252
      %p421 = pneg %p276
      %p422 = pneg %p273
      %p423 = pneg %p297
      %p424 = pneg %p294
      %p425 = pneg %p323
      %p426 = pneg %p320
      %s427 = smul.u32 2, %s24
      %p428 = scmp.lt.s32.totalorder %s427, 5
      %s429 = scalar_select %p428, %s427, 5
      %s430 = smul.addr %s429, 8
      %s431 = scalar_lea.vmem %s13, %s430
      %s432 = smul.u32 64, %s24
      %p433 = scmp.lt.s32.totalorder %s432, 191
      %s434 = scalar_select %p433, %s432, 191
      %s435 = smul.addr %s434, 8
      %s436 = scalar_lea.vmem %s0, %s435
      %s437 = smul.u32 64, %s24
      %s438 = smul.u32 2, %s24
      %p439 = scmp.lt.s32.totalorder %s438, 5
      %s440 = scalar_select %p439, %s438, 5
      %s441 = smul.addr %s440, 8
      %s442 = scalar_lea.vmem %s13, %s441
      %s443 = smul.u32 2, %s24
      %v445 = vld [vmem:[%s436] sm:$0xff]
      %v446 = vld [vmem:[%s436 + $0x8] sm:$0xff]
      %v447 = vld [vmem:[%s436 + $0x10] sm:$0xff]
      %v448 = vld [vmem:[%s436 + $0x18] sm:$0xff]
      %v449 = vld [vmem:[%s436 + $0x20] sm:$0xff]
      %v450 = vld [vmem:[%s436 + $0x28] sm:$0xff]
      %v451 = vld [vmem:[%s436 + $0x30] sm:$0xff]
      %v452 = vld [vmem:[%s436 + $0x38] sm:$0xff]
      %v453 = vld [vmem:[%s436 + $0x40] sm:$0xff]
      %v454 = vld [vmem:[%s436 + $0x48] sm:$0xff]
      %v455 = vld [vmem:[%s436 + $0x50] sm:$0xff]
      %v456 = vld [vmem:[%s436 + $0x58] sm:$0xff]
      %v457 = vld [vmem:[%s436 + $0x60] sm:$0xff]
      %v458 = vld [vmem:[%s436 + $0x68] sm:$0xff]
      %v459 = vld [vmem:[%s436 + $0x70] sm:$0xff]
      %v460 = vld [vmem:[%s436 + $0x78] sm:$0xff]
      %v461 = vld [vmem:[%s436 + $0x80] sm:$0xff]
      %v462 = vld [vmem:[%s436 + $0x88] sm:$0xff]
      %v463 = vld [vmem:[%s436 + $0x90] sm:$0xff]
      %v464 = vld [vmem:[%s436 + $0x98] sm:$0xff]
      %v465 = vld [vmem:[%s436 + $0xa0] sm:$0xff]
      %v466 = vld [vmem:[%s436 + $0xa8] sm:$0xff]
      %v467 = vld [vmem:[%s436 + $0xb0] sm:$0xff]
      %v468 = vld [vmem:[%s436 + $0xb8] sm:$0xff]
      %v469 = vld [vmem:[%s436 + $0xc0] sm:$0xff]
      %v470 = vld [vmem:[%s436 + $0xc8] sm:$0xff]
      %v471 = vld [vmem:[%s436 + $0xd0] sm:$0xff]
      %v472 = vld [vmem:[%s436 + $0xd8] sm:$0xff]
      %v473 = vld [vmem:[%s436 + $0xe0] sm:$0xff]
      %v474 = vld [vmem:[%s436 + $0xe8] sm:$0xff]
      %v475 = vld [vmem:[%s436 + $0xf0] sm:$0xff]
      %v476 = vld [vmem:[%s436 + $0xf8] sm:$0xff]
      %v477 = vld [vmem:[%s436 + $0x100] sm:$0xff]
      %v478 = vld [vmem:[%s436 + $0x108] sm:$0xff]
      %v479 = vld [vmem:[%s436 + $0x110] sm:$0xff]
      %v480 = vld [vmem:[%s436 + $0x118] sm:$0xff]
      %v481 = vld [vmem:[%s436 + $0x120] sm:$0xff]
      %v482 = vld [vmem:[%s436 + $0x128] sm:$0xff]
      %v483 = vld [vmem:[%s436 + $0x130] sm:$0xff]
      %v484 = vld [vmem:[%s436 + $0x138] sm:$0xff]
      %v485 = vld [vmem:[%s436 + $0x140] sm:$0xff]
      %v486 = vld [vmem:[%s436 + $0x148] sm:$0xff]
      %v487 = vld [vmem:[%s436 + $0x150] sm:$0xff]
      %v488 = vld [vmem:[%s436 + $0x158] sm:$0xff]
      %v489 = vld [vmem:[%s436 + $0x160] sm:$0xff]
      %v490 = vld [vmem:[%s436 + $0x168] sm:$0xff]
      %v491 = vld [vmem:[%s436 + $0x170] sm:$0xff]
      %v492 = vld [vmem:[%s436 + $0x178] sm:$0xff]
      %v493 = vld [vmem:[%s436 + $0x180] sm:$0xff]
      %v494 = vld [vmem:[%s436 + $0x188] sm:$0xff]
      %v495 = vld [vmem:[%s436 + $0x190] sm:$0xff]
      %v496 = vld [vmem:[%s436 + $0x198] sm:$0xff]
      %v497 = vld [vmem:[%s436 + $0x1a0] sm:$0xff]
      %v498 = vld [vmem:[%s436 + $0x1a8] sm:$0xff]
      %v499 = vld [vmem:[%s436 + $0x1b0] sm:$0xff]
      %v500 = vld [vmem:[%s436 + $0x1b8] sm:$0xff]
      %v501 = vld [vmem:[%s436 + $0x1c0] sm:$0xff]
      %v502 = vld [vmem:[%s436 + $0x1c8] sm:$0xff]
      %v503 = vld [vmem:[%s436 + $0x1d0] sm:$0xff]
      %v504 = vld [vmem:[%s436 + $0x1d8] sm:$0xff]
      %v505 = vld [vmem:[%s436 + $0x1e0] sm:$0xff]
      %v506 = vld [vmem:[%s436 + $0x1e8] sm:$0xff]
      %v507 = vld [vmem:[%s436 + $0x1f0] sm:$0xff]
      %v508 = vld [vmem:[%s436 + $0x1f8] sm:$0xff]
      %v509 = vld [vmem:[%s1] sm:$0xff]
      %v510 = vld [vmem:[%s1 + $0x8] sm:$0xff]
      %v511 = vld [vmem:[%s1 + $0x10] sm:$0xff]
      %v512 = vld [vmem:[%s1 + $0x18] sm:$0xff]
      %v513 = vpack.c.bf16 %v446, %v445
      %v514 = vpack.c.bf16 %v448, %v447
      %v515 = vpack.c.bf16 %v450, %v449
      %v516 = vpack.c.bf16 %v452, %v451
      %v517 = vpack.c.bf16 %v454, %v453
      %v518 = vpack.c.bf16 %v456, %v455
      %v519 = vpack.c.bf16 %v458, %v457
      %v520 = vpack.c.bf16 %v460, %v459
      %v521 = vpack.c.bf16 %v462, %v461
      %v522 = vpack.c.bf16 %v464, %v463
      %v523 = vpack.c.bf16 %v466, %v465
      %v524 = vpack.c.bf16 %v468, %v467
      %v525 = vpack.c.bf16 %v470, %v469
      %v526 = vpack.c.bf16 %v472, %v471
      %v527 = vpack.c.bf16 %v474, %v473
      %v528 = vpack.c.bf16 %v476, %v475
      %v529 = vpack.c.bf16 %v478, %v477
      %v530 = vpack.c.bf16 %v480, %v479
      %v531 = vpack.c.bf16 %v482, %v481
      %v532 = vpack.c.bf16 %v484, %v483
      %v533 = vpack.c.bf16 %v486, %v485
      %v534 = vpack.c.bf16 %v488, %v487
      %v535 = vpack.c.bf16 %v490, %v489
      %v536 = vpack.c.bf16 %v492, %v491
      %v537 = vpack.c.bf16 %v494, %v493
      %v538 = vpack.c.bf16 %v496, %v495
      %v539 = vpack.c.bf16 %v498, %v497
      %v540 = vpack.c.bf16 %v500, %v499
      %v541 = vpack.c.bf16 %v502, %v501
      %v542 = vpack.c.bf16 %v504, %v503
      %v543 = vpack.c.bf16 %v506, %v505
      %v544 = vpack.c.bf16 %v508, %v507
      %s545 = scalar_lea.vmem %s1, 32
      %v546 = vld [vmem:[%s545] sm:$0xff]
      %v547 = vld [vmem:[%s545 + $0x8] sm:$0xff]
      %v548 = vld [vmem:[%s545 + $0x10] sm:$0xff]
      %v549 = vld [vmem:[%s545 + $0x18] sm:$0xff]
      %vm550 = vsmask.f32 7424
      %v552 = vshrl.u32 %v513, 16
      %v554 = vshll.u32 %v513, 16
      %v556 = vrot.slane %v554, 1
      %v557 = vor.u32 %v552, %v556
      %v559 = vshll.u32 %v514, 16
      %v561 = vrot.slane %v559, 1
      %v562 = vsel %vm550, %v557, %v561
      %v563 = vshrl.u32 %v514, 16
      %v565 = vor.u32 %v563, %v561
      %v567 = vshll.u32 %v515, 16
      %v569 = vrot.slane %v567, 1
      %v570 = vsel %vm550, %v565, %v569
      %v571 = vshrl.u32 %v515, 16
      %v573 = vor.u32 %v571, %v569
      %v575 = vshll.u32 %v516, 16
      %v577 = vrot.slane %v575, 1
      %v578 = vsel %vm550, %v573, %v577
      %v579 = vshrl.u32 %v516, 16
      %v581 = vor.u32 %v579, %v577
      %v583 = vshll.u32 %v517, 16
      %v585 = vrot.slane %v583, 1
      %v586 = vsel %vm550, %v581, %v585
      %v587 = vshrl.u32 %v517, 16
      %v589 = vor.u32 %v587, %v585
      %v591 = vshll.u32 %v518, 16
      %v593 = vrot.slane %v591, 1
      %v594 = vsel %vm550, %v589, %v593
      %v595 = vshrl.u32 %v518, 16
      %v597 = vor.u32 %v595, %v593
      %v599 = vshll.u32 %v519, 16
      %v601 = vrot.slane %v599, 1
      %v602 = vsel %vm550, %v597, %v601
      %v603 = vshrl.u32 %v519, 16
      %v605 = vor.u32 %v603, %v601
      %v607 = vshll.u32 %v520, 16
      %v609 = vrot.slane %v607, 1
      %v610 = vsel %vm550, %v605, %v609
      %v611 = vshrl.u32 %v520, 16
      %v613 = vor.u32 %v611, %v609
      %v615 = vshll.u32 %v521, 16
      %v617 = vrot.slane %v615, 1
      %v618 = vsel %vm550, %v613, %v617
      %v619 = vshrl.u32 %v521, 16
      %v621 = vor.u32 %v619, %v617
      %v623 = vshll.u32 %v522, 16
      %v625 = vrot.slane %v623, 1
      %v626 = vsel %vm550, %v621, %v625
      %v627 = vshrl.u32 %v522, 16
      %v629 = vor.u32 %v627, %v625
      %v631 = vshll.u32 %v523, 16
      %v633 = vrot.slane %v631, 1
      %v634 = vsel %vm550, %v629, %v633
      %v635 = vshrl.u32 %v523, 16
      %v637 = vor.u32 %v635, %v633
      %v639 = vshll.u32 %v524, 16
      %v641 = vrot.slane %v639, 1
      %v642 = vsel %vm550, %v637, %v641
      %v643 = vshrl.u32 %v524, 16
      %v645 = vor.u32 %v643, %v641
      %v647 = vshll.u32 %v525, 16
      %v649 = vrot.slane %v647, 1
      %v650 = vsel %vm550, %v645, %v649
      %v651 = vshrl.u32 %v525, 16
      %v653 = vor.u32 %v651, %v649
      %v655 = vshll.u32 %v526, 16
      %v657 = vrot.slane %v655, 1
      %v658 = vsel %vm550, %v653, %v657
      %v659 = vshrl.u32 %v526, 16
      %v661 = vor.u32 %v659, %v657
      %v663 = vshll.u32 %v527, 16
      %v665 = vrot.slane %v663, 1
      %v666 = vsel %vm550, %v661, %v665
      %v667 = vshrl.u32 %v527, 16
      %v669 = vor.u32 %v667, %v665
      %v671 = vshll.u32 %v528, 16
      %v673 = vrot.slane %v671, 1
      %v674 = vsel %vm550, %v669, %v673
      %v675 = vshrl.u32 %v528, 16
      %v677 = vor.u32 %v675, %v673
      %v679 = vshll.u32 %v529, 16
      %v681 = vrot.slane %v679, 1
      %v682 = vsel %vm550, %v677, %v681
      %v683 = vshrl.u32 %v529, 16
      %v685 = vor.u32 %v683, %v681
      %v687 = vshll.u32 %v530, 16
      %v689 = vrot.slane %v687, 1
      %v690 = vsel %vm550, %v685, %v689
      %v691 = vshrl.u32 %v530, 16
      %v693 = vor.u32 %v691, %v689
      %v695 = vshll.u32 %v531, 16
      %v697 = vrot.slane %v695, 1
      %v698 = vsel %vm550, %v693, %v697
      %v699 = vshrl.u32 %v531, 16
      %v701 = vor.u32 %v699, %v697
      %v703 = vshll.u32 %v532, 16
      %v705 = vrot.slane %v703, 1
      %v706 = vsel %vm550, %v701, %v705
      %v707 = vshrl.u32 %v532, 16
      %v709 = vor.u32 %v707, %v705
      %v711 = vshll.u32 %v533, 16
      %v713 = vrot.slane %v711, 1
      %v714 = vsel %vm550, %v709, %v713
      %v715 = vshrl.u32 %v533, 16
      %v717 = vor.u32 %v715, %v713
      %v719 = vshll.u32 %v534, 16
      %v721 = vrot.slane %v719, 1
      %v722 = vsel %vm550, %v717, %v721
      %v723 = vshrl.u32 %v534, 16
      %v725 = vor.u32 %v723, %v721
      %v727 = vshll.u32 %v535, 16
      %v729 = vrot.slane %v727, 1
      %v730 = vsel %vm550, %v725, %v729
      %v731 = vshrl.u32 %v535, 16
      %v733 = vor.u32 %v731, %v729
      %v735 = vshll.u32 %v536, 16
      %v737 = vrot.slane %v735, 1
      %v738 = vsel %vm550, %v733, %v737
      %v739 = vshrl.u32 %v536, 16
      %v741 = vor.u32 %v739, %v737
      %v743 = vshll.u32 %v537, 16
      %v745 = vrot.slane %v743, 1
      %v746 = vsel %vm550, %v741, %v745
      %v747 = vshrl.u32 %v537, 16
      %v749 = vor.u32 %v747, %v745
      %v751 = vshll.u32 %v538, 16
      %v753 = vrot.slane %v751, 1
      %v754 = vsel %vm550, %v749, %v753
      %v755 = vshrl.u32 %v538, 16
      %v757 = vor.u32 %v755, %v753
      %v759 = vshll.u32 %v539, 16
      %v761 = vrot.slane %v759, 1
      %v762 = vsel %vm550, %v757, %v761
      %v763 = vshrl.u32 %v539, 16
      %v765 = vor.u32 %v763, %v761
      %v767 = vshll.u32 %v540, 16
      %v769 = vrot.slane %v767, 1
      %v770 = vsel %vm550, %v765, %v769
      %v771 = vshrl.u32 %v540, 16
      %v773 = vor.u32 %v771, %v769
      %v775 = vshll.u32 %v541, 16
      %v777 = vrot.slane %v775, 1
      %v778 = vsel %vm550, %v773, %v777
      %v779 = vshrl.u32 %v541, 16
      %v781 = vor.u32 %v779, %v777
      %v783 = vshll.u32 %v542, 16
      %v785 = vrot.slane %v783, 1
      %v786 = vsel %vm550, %v781, %v785
      %v787 = vshrl.u32 %v542, 16
      %v789 = vor.u32 %v787, %v785
      %v791 = vshll.u32 %v543, 16
      %v793 = vrot.slane %v791, 1
      %v794 = vsel %vm550, %v789, %v793
      %v795 = vshrl.u32 %v543, 16
      %v797 = vor.u32 %v795, %v793
      %v799 = vshll.u32 %v544, 16
      %v801 = vrot.slane %v799, 1
      %v802 = vsel %vm550, %v797, %v801
      %v803 = vshrl.u32 %v544, 16
      %v805 = vor.u32 %v803, %v801
      %v810 = vunpack.c.l.b16 %v546
      %v811 = vunpack.c.h.b16 %v546
      %v812 = vunpack.c.l.b16 %v547
      %v813 = vunpack.c.h.b16 %v547
      %v814 = vunpack.c.l.b16 %v548
      %v815 = vunpack.c.h.b16 %v548
      %v816 = vunpack.c.l.b16 %v549
      %v817 = vunpack.c.h.b16 %v549
      %v818 = vpack.c.b16 %v812, %v810
      %v819 = vpack.c.b16 %v813, %v811
      %v820 = vpack.c.b16 %v816, %v814
      %v821 = vpack.c.b16 %v817, %v815
      %vm826 = vcmask 261120
      %v828 = vsel %vm826, %v562, 0
      %v831 = vsel %vm826, %v570, 0
      %v834 = vsel %vm826, %v578, 0
      %v837 = vsel %vm826, %v586, 0
      %v840 = vsel %vm826, %v594, 0
      %v843 = vsel %vm826, %v602, 0
      %v846 = vsel %vm826, %v610, 0
      %v849 = vsel %vm826, %v618, 0
      %v852 = vsel %vm826, %v626, 0
      %v855 = vsel %vm826, %v634, 0
      %v858 = vsel %vm826, %v642, 0
      %v861 = vsel %vm826, %v650, 0
      %v864 = vsel %vm826, %v658, 0
      %v867 = vsel %vm826, %v666, 0
      %v870 = vsel %vm826, %v674, 0
      %v873 = vsel %vm826, %v682, 0
      %v876 = vsel %vm826, %v690, 0
      %v879 = vsel %vm826, %v698, 0
      %v882 = vsel %vm826, %v706, 0
      %v885 = vsel %vm826, %v714, 0
      %v888 = vsel %vm826, %v722, 0
      %v891 = vsel %vm826, %v730, 0
      %v894 = vsel %vm826, %v738, 0
      %v897 = vsel %vm826, %v746, 0
      %v900 = vsel %vm826, %v754, 0
      %v903 = vsel %vm826, %v762, 0
      %v906 = vsel %vm826, %v770, 0
      %v909 = vsel %vm826, %v778, 0
      %v912 = vsel %vm826, %v786, 0
      %v915 = vsel %vm826, %v794, 0
      %v918 = vsel %vm826, %v802, 0
      %v921 = vsel %vm826, %v805, 0
      %923 = vmatprep.subr.bf16.mxu0 %v819
      %924 = vmatpush1.bf16.msra.mxu0 %v818
      %925 = vmatprep.subr.bf16.mxu0 %v821
      %926 = vmatpush1.bf16.msra.mxu0 %v820
      %927 = vmatprep.subr.bf16.mxu0 0
      %928 = vmatpush1.bf16.msra.mxu0 0
      %929 = vmatprep.subr.bf16.mxu0 0
      %930 = vmatpush1.bf16.msra.mxu0 0
      %931 = vmatprep.subr.bf16.mxu0 0
      %932 = vmatpush1.bf16.msra.mxu0 0
      %933 = vmatprep.subr.bf16.mxu0 0
      %934 = vmatpush1.bf16.msra.mxu0 0
      %935 = vmatprep.subr.bf16.mxu0 0
      %936 = vmatpush1.bf16.msra.mxu0 0
      %937 = vmatprep.subr.bf16.mxu0 0
      %938 = vmatpush1.bf16.msra.mxu0 0
      %939 = vmatprep.subr.bf16.mxu0 0
      %940 = vmatpush1.bf16.msra.mxu0 0
      %941 = vmatprep.subr.bf16.mxu0 0
      %942 = vmatpush1.bf16.msra.mxu0 0
      %943 = vmatprep.subr.bf16.mxu0 0
      %944 = vmatpush1.bf16.msra.mxu0 0
      %945 = vmatprep.subr.bf16.mxu0 0
      %946 = vmatpush1.bf16.msra.mxu0 0
      %947 = vmatprep.subr.bf16.mxu0 0
      %948 = vmatpush1.bf16.msra.mxu0 0
      %949 = vmatprep.subr.bf16.mxu0 0
      %950 = vmatpush1.bf16.msra.mxu0 0
      %951 = vmatprep.subr.bf16.mxu0 0
      %952 = vmatpush1.bf16.msra.mxu0 0
      %953 = vmatprep.subr.bf16.mxu0 0
      %954 = vmatpush1.bf16.msra.mxu0 0
      %955 = vmatprep.mubr.bf16.mxu0 0
      %956 = vmatmul.mubr.bf16.gmra.mrb[0].mxu0 %v828
      %v957 = vpop.f32.mrb[0].mxu0
      %v958 = vadd.f32 0.0, %v957
      %v959 = vpop.f32.mrb[0].mxu0
      %v960 = vadd.f32 0.0, %v959
      %v961 = vpop.f32.mrb[0].mxu0
      %v962 = vadd.f32 0.0, %v961
      %v963 = vpop.f32.mrb[0].mxu0
      %v964 = vadd.f32 0.0, %v963
      %965 = vmatprep.mubr.bf16.mxu0 0
      %966 = vmatmul.mubr.bf16.gmra.mrb[0].mxu0 %v831
      %v967 = vpop.f32.mrb[0].mxu0
      %v968 = vadd.f32 0.0, %v967
      %v969 = vpop.f32.mrb[0].mxu0
      %v970 = vadd.f32 0.0, %v969
      %v971 = vpop.f32.mrb[0].mxu0
      %v972 = vadd.f32 0.0, %v971
      %v973 = vpop.f32.mrb[0].mxu0
      %v974 = vadd.f32 0.0, %v973
      %975 = vmatprep.mubr.bf16.mxu0 0
      %976 = vmatmul.mubr.bf16.gmra.mrb[0].mxu0 %v834
      %v977 = vpop.f32.mrb[0].mxu0
      %v978 = vadd.f32 0.0, %v977
      %v979 = vpop.f32.mrb[0].mxu0
      %v980 = vadd.f32 0.0, %v979
      %v981 = vpop.f32.mrb[0].mxu0
      %v982 = vadd.f32 0.0, %v981
      %v983 = vpop.f32.mrb[0].mxu0
      %v984 = vadd.f32 0.0, %v983
      %985 = vmatprep.mubr.bf16.mxu0 0
      %986 = vmatmul.mubr.bf16.gmra.mrb[0].mxu0 %v837
      %v987 = vpop.f32.mrb[0].mxu0
      %v988 = vadd.f32 0.0, %v987
      %v989 = vpop.f32.mrb[0].mxu0
      %v990 = vadd.f32 0.0, %v989
      %v991 = vpop.f32.mrb[0].mxu0
      %v992 = vadd.f32 0.0, %v991
      %v993 = vpop.f32.mrb[0].mxu0
      %v994 = vadd.f32 0.0, %v993
      %995 = vmatprep.mubr.bf16.mxu0 0
      %996 = vmatmul.mubr.bf16.gmra.mrb[0].mxu0 %v840
      %v997 = vpop.f32.mrb[0].mxu0
      %v998 = vadd.f32 0.0, %v997
      %v999 = vpop.f32.mrb[0].mxu0
      %v1000 = vadd.f32 0.0, %v999
      %v1001 = vpop.f32.mrb[0].mxu0
      %v1002 = vadd.f32 0.0, %v1001
      %v1003 = vpop.f32.mrb[0].mxu0
      %v1004 = vadd.f32 0.0, %v1003
      %1005 = vmatprep.mubr.bf16.mxu0 0
      %1006 = vmatmul.mubr.bf16.gmra.mrb[0].mxu0 %v843
      %v1007 = vpop.f32.mrb[0].mxu0
      %v1008 = vadd.f32 0.0, %v1007
      %v1009 = vpop.f32.mrb[0].mxu0
      %v1010 = vadd.f32 0.0, %v1009
      %v1011 = vpop.f32.mrb[0].mxu0
      %v1012 = vadd.f32 0.0, %v1011
      %v1013 = vpop.f32.mrb[0].mxu0
      %v1014 = vadd.f32 0.0, %v1013
      %1015 = vmatprep.mubr.bf16.mxu0 0
      %1016 = vmatmul.mubr.bf16.gmra.mrb[0].mxu0 %v846
      %v1017 = vpop.f32.mrb[0].mxu0
      %v1018 = vadd.f32 0.0, %v1017
      %v1019 = vpop.f32.mrb[0].mxu0
      %v1020 = vadd.f32 0.0, %v1019
      %v1021 = vpop.f32.mrb[0].mxu0
      %v1022 = vadd.f32 0.0, %v1021
      %v1023 = vpop.f32.mrb[0].mxu0
      %v1024 = vadd.f32 0.0, %v1023
      %1025 = vmatprep.mubr.bf16.mxu0 0
      %1026 = vmatmul.mubr.bf16.gmra.mrb[0].mxu0 %v849
      %v1027 = vpop.f32.mrb[0].mxu0
      %v1028 = vadd.f32 0.0, %v1027
      %v1029 = vpop.f32.mrb[0].mxu0
      %v1030 = vadd.f32 0.0, %v1029
      %v1031 = vpop.f32.mrb[0].mxu0
      %v1032 = vadd.f32 0.0, %v1031
      %v1033 = vpop.f32.mrb[0].mxu0
      %v1034 = vadd.f32 0.0, %v1033
      %1035 = vmatprep.mubr.bf16.mxu0 0
      %1036 = vmatmul.mubr.bf16.gmra.mrb[0].mxu0 %v852
      %v1037 = vpop.f32.mrb[0].mxu0
      %v1038 = vadd.f32 0.0, %v1037
      %v1039 = vpop.f32.mrb[0].mxu0
      %v1040 = vadd.f32 0.0, %v1039
      %v1041 = vpop.f32.mrb[0].mxu0
      %v1042 = vadd.f32 0.0, %v1041
      %v1043 = vpop.f32.mrb[0].mxu0
      %v1044 = vadd.f32 0.0, %v1043
      %1045 = vmatprep.mubr.bf16.mxu0 0
      %1046 = vmatmul.mubr.bf16.gmra.mrb[0].mxu0 %v855
      %v1047 = vpop.f32.mrb[0].mxu0
      %v1048 = vadd.f32 0.0, %v1047
      %v1049 = vpop.f32.mrb[0].mxu0
      %v1050 = vadd.f32 0.0, %v1049
      %v1051 = vpop.f32.mrb[0].mxu0
      %v1052 = vadd.f32 0.0, %v1051
      %v1053 = vpop.f32.mrb[0].mxu0
      %v1054 = vadd.f32 0.0, %v1053
      %1055 = vmatprep.mubr.bf16.mxu0 0
      %1056 = vmatmul.mubr.bf16.gmra.mrb[0].mxu0 %v858
      %v1057 = vpop.f32.mrb[0].mxu0
      %v1058 = vadd.f32 0.0, %v1057
      %v1059 = vpop.f32.mrb[0].mxu0
      %v1060 = vadd.f32 0.0, %v1059
      %v1061 = vpop.f32.mrb[0].mxu0
      %v1062 = vadd.f32 0.0, %v1061
      %v1063 = vpop.f32.mrb[0].mxu0
      %v1064 = vadd.f32 0.0, %v1063
      %1065 = vmatprep.mubr.bf16.mxu0 0
      %1066 = vmatmul.mubr.bf16.gmra.mrb[0].mxu0 %v861
      %v1067 = vpop.f32.mrb[0].mxu0
      %v1068 = vadd.f32 0.0, %v1067
      %v1069 = vpop.f32.mrb[0].mxu0
      %v1070 = vadd.f32 0.0, %v1069
      %v1071 = vpop.f32.mrb[0].mxu0
      %v1072 = vadd.f32 0.0, %v1071
      %v1073 = vpop.f32.mrb[0].mxu0
      %v1074 = vadd.f32 0.0, %v1073
      %1075 = vmatprep.mubr.bf16.mxu0 0
      %1076 = vmatmul.mubr.bf16.gmra.mrb[0].mxu0 %v864
      %v1077 = vpop.f32.mrb[0].mxu0
      %v1078 = vadd.f32 0.0, %v1077
      %v1079 = vpop.f32.mrb[0].mxu0
      %v1080 = vadd.f32 0.0, %v1079
      %v1081 = vpop.f32.mrb[0].mxu0
      %v1082 = vadd.f32 0.0, %v1081
      %v1083 = vpop.f32.mrb[0].mxu0
      %v1084 = vadd.f32 0.0, %v1083
      %1085 = vmatprep.mubr.bf16.mxu0 0
      %1086 = vmatmul.mubr.bf16.gmra.mrb[0].mxu0 %v867
      %v1087 = vpop.f32.mrb[0].mxu0
      %v1088 = vadd.f32 0.0, %v1087
      %v1089 = vpop.f32.mrb[0].mxu0
      %v1090 = vadd.f32 0.0, %v1089
      %v1091 = vpop.f32.mrb[0].mxu0
      %v1092 = vadd.f32 0.0, %v1091
      %v1093 = vpop.f32.mrb[0].mxu0
      %v1094 = vadd.f32 0.0, %v1093
      %1095 = vmatprep.mubr.bf16.mxu0 0
      %1096 = vmatmul.mubr.bf16.gmra.mrb[0].mxu0 %v870
      %v1097 = vpop.f32.mrb[0].mxu0
      %v1098 = vadd.f32 0.0, %v1097
      %v1099 = vpop.f32.mrb[0].mxu0
      %v1100 = vadd.f32 0.0, %v1099
      %v1101 = vpop.f32.mrb[0].mxu0
      %v1102 = vadd.f32 0.0, %v1101
      %v1103 = vpop.f32.mrb[0].mxu0
      %v1104 = vadd.f32 0.0, %v1103
      %1105 = vmatprep.mubr.bf16.mxu0 0
      %1106 = vmatmul.mubr.bf16.gmra.mrb[0].mxu0 %v873
      %v1107 = vpop.f32.mrb[0].mxu0
      %v1108 = vadd.f32 0.0, %v1107
      %v1109 = vpop.f32.mrb[0].mxu0
      %v1110 = vadd.f32 0.0, %v1109
      %v1111 = vpop.f32.mrb[0].mxu0
      %v1112 = vadd.f32 0.0, %v1111
      %v1113 = vpop.f32.mrb[0].mxu0
      %v1114 = vadd.f32 0.0, %v1113
      %1115 = vmatprep.mubr.bf16.mxu0 0
      %1116 = vmatmul.mubr.bf16.gmra.mrb[0].mxu0 %v876
      %v1117 = vpop.f32.mrb[0].mxu0
      %v1118 = vadd.f32 0.0, %v1117
      %v1119 = vpop.f32.mrb[0].mxu0
      %v1120 = vadd.f32 0.0, %v1119
      %v1121 = vpop.f32.mrb[0].mxu0
      %v1122 = vadd.f32 0.0, %v1121
      %v1123 = vpop.f32.mrb[0].mxu0
      %v1124 = vadd.f32 0.0, %v1123
      %1125 = vmatprep.mubr.bf16.mxu0 0
      %1126 = vmatmul.mubr.bf16.gmra.mrb[0].mxu0 %v879
      %v1127 = vpop.f32.mrb[0].mxu0
      %v1128 = vadd.f32 0.0, %v1127
      %v1129 = vpop.f32.mrb[0].mxu0
      %v1130 = vadd.f32 0.0, %v1129
      %v1131 = vpop.f32.mrb[0].mxu0
      %v1132 = vadd.f32 0.0, %v1131
      %v1133 = vpop.f32.mrb[0].mxu0
      %v1134 = vadd.f32 0.0, %v1133
      %1135 = vmatprep.mubr.bf16.mxu0 0
      %1136 = vmatmul.mubr.bf16.gmra.mrb[0].mxu0 %v882
      %v1137 = vpop.f32.mrb[0].mxu0
      %v1138 = vadd.f32 0.0, %v1137
      %v1139 = vpop.f32.mrb[0].mxu0
      %v1140 = vadd.f32 0.0, %v1139
      %v1141 = vpop.f32.mrb[0].mxu0
      %v1142 = vadd.f32 0.0, %v1141
      %v1143 = vpop.f32.mrb[0].mxu0
      %v1144 = vadd.f32 0.0, %v1143
      %1145 = vmatprep.mubr.bf16.mxu0 0
      %1146 = vmatmul.mubr.bf16.gmra.mrb[0].mxu0 %v885
      %v1147 = vpop.f32.mrb[0].mxu0
      %v1148 = vadd.f32 0.0, %v1147
      %v1149 = vpop.f32.mrb[0].mxu0
      %v1150 = vadd.f32 0.0, %v1149
      %v1151 = vpop.f32.mrb[0].mxu0
      %v1152 = vadd.f32 0.0, %v1151
      %v1153 = vpop.f32.mrb[0].mxu0
      %v1154 = vadd.f32 0.0, %v1153
      %1155 = vmatprep.mubr.bf16.mxu0 0
      %1156 = vmatmul.mubr.bf16.gmra.mrb[0].mxu0 %v888
      %v1157 = vpop.f32.mrb[0].mxu0
      %v1158 = vadd.f32 0.0, %v1157
      %v1159 = vpop.f32.mrb[0].mxu0
      %v1160 = vadd.f32 0.0, %v1159
      %v1161 = vpop.f32.mrb[0].mxu0
      %v1162 = vadd.f32 0.0, %v1161
      %v1163 = vpop.f32.mrb[0].mxu0
      %v1164 = vadd.f32 0.0, %v1163
      %1165 = vmatprep.mubr.bf16.mxu0 0
      %1166 = vmatmul.mubr.bf16.gmra.mrb[0].mxu0 %v891
      %v1167 = vpop.f32.mrb[0].mxu0
      %v1168 = vadd.f32 0.0, %v1167
      %v1169 = vpop.f32.mrb[0].mxu0
      %v1170 = vadd.f32 0.0, %v1169
      %v1171 = vpop.f32.mrb[0].mxu0
      %v1172 = vadd.f32 0.0, %v1171
      %v1173 = vpop.f32.mrb[0].mxu0
      %v1174 = vadd.f32 0.0, %v1173
      %1175 = vmatprep.mubr.bf16.mxu0 0
      %1176 = vmatmul.mubr.bf16.gmra.mrb[0].mxu0 %v894
      %v1177 = vpop.f32.mrb[0].mxu0
      %v1178 = vadd.f32 0.0, %v1177
      %v1179 = vpop.f32.mrb[0].mxu0
      %v1180 = vadd.f32 0.0, %v1179
      %v1181 = vpop.f32.mrb[0].mxu0
      %v1182 = vadd.f32 0.0, %v1181
      %v1183 = vpop.f32.mrb[0].mxu0
      %v1184 = vadd.f32 0.0, %v1183
      %1185 = vmatprep.mubr.bf16.mxu0 0
      %1186 = vmatmul.mubr.bf16.gmra.mrb[0].mxu0 %v897
      %v1187 = vpop.f32.mrb[0].mxu0
      %v1188 = vadd.f32 0.0, %v1187
      %v1189 = vpop.f32.mrb[0].mxu0
      %v1190 = vadd.f32 0.0, %v1189
      %v1191 = vpop.f32.mrb[0].mxu0
      %v1192 = vadd.f32 0.0, %v1191
      %v1193 = vpop.f32.mrb[0].mxu0
      %v1194 = vadd.f32 0.0, %v1193
      %1195 = vmatprep.mubr.bf16.mxu0 0
      %1196 = vmatmul.mubr.bf16.gmra.mrb[0].mxu0 %v900
      %v1197 = vpop.f32.mrb[0].mxu0
      %v1198 = vadd.f32 0.0, %v1197
      %v1199 = vpop.f32.mrb[0].mxu0
      %v1200 = vadd.f32 0.0, %v1199
      %v1201 = vpop.f32.mrb[0].mxu0
      %v1202 = vadd.f32 0.0, %v1201
      %v1203 = vpop.f32.mrb[0].mxu0
      %v1204 = vadd.f32 0.0, %v1203
      %1205 = vmatprep.mubr.bf16.mxu0 0
      %1206 = vmatmul.mubr.bf16.gmra.mrb[0].mxu0 %v903
      %v1207 = vpop.f32.mrb[0].mxu0
      %v1208 = vadd.f32 0.0, %v1207
      %v1209 = vpop.f32.mrb[0].mxu0
      %v1210 = vadd.f32 0.0, %v1209
      %v1211 = vpop.f32.mrb[0].mxu0
      %v1212 = vadd.f32 0.0, %v1211
      %v1213 = vpop.f32.mrb[0].mxu0
      %v1214 = vadd.f32 0.0, %v1213
      %1215 = vmatprep.mubr.bf16.mxu0 0
      %1216 = vmatmul.mubr.bf16.gmra.mrb[0].mxu0 %v906
      %v1217 = vpop.f32.mrb[0].mxu0
      %v1218 = vadd.f32 0.0, %v1217
      %v1219 = vpop.f32.mrb[0].mxu0
      %v1220 = vadd.f32 0.0, %v1219
      %v1221 = vpop.f32.mrb[0].mxu0
      %v1222 = vadd.f32 0.0, %v1221
      %v1223 = vpop.f32.mrb[0].mxu0
      %v1224 = vadd.f32 0.0, %v1223
      %1225 = vmatprep.mubr.bf16.mxu0 0
      %1226 = vmatmul.mubr.bf16.gmra.mrb[0].mxu0 %v909
      %v1227 = vpop.f32.mrb[0].mxu0
      %v1228 = vadd.f32 0.0, %v1227
      %v1229 = vpop.f32.mrb[0].mxu0
      %v1230 = vadd.f32 0.0, %v1229
      %v1231 = vpop.f32.mrb[0].mxu0
      %v1232 = vadd.f32 0.0, %v1231
      %v1233 = vpop.f32.mrb[0].mxu0
      %v1234 = vadd.f32 0.0, %v1233
      %1235 = vmatprep.mubr.bf16.mxu0 0
      %1236 = vmatmul.mubr.bf16.gmra.mrb[0].mxu0 %v912
      %v1237 = vpop.f32.mrb[0].mxu0
      %v1238 = vadd.f32 0.0, %v1237
      %v1239 = vpop.f32.mrb[0].mxu0
      %v1240 = vadd.f32 0.0, %v1239
      %v1241 = vpop.f32.mrb[0].mxu0
      %v1242 = vadd.f32 0.0, %v1241
      %v1243 = vpop.f32.mrb[0].mxu0
      %v1244 = vadd.f32 0.0, %v1243
      %1245 = vmatprep.mubr.bf16.mxu0 0
      %1246 = vmatmul.mubr.bf16.gmra.mrb[0].mxu0 %v915
      %v1247 = vpop.f32.mrb[0].mxu0
      %v1248 = vadd.f32 0.0, %v1247
      %v1249 = vpop.f32.mrb[0].mxu0
      %v1250 = vadd.f32 0.0, %v1249
      %v1251 = vpop.f32.mrb[0].mxu0
      %v1252 = vadd.f32 0.0, %v1251
      %v1253 = vpop.f32.mrb[0].mxu0
      %v1254 = vadd.f32 0.0, %v1253
      %1255 = vmatprep.mubr.bf16.mxu0 0
      %1256 = vmatmul.mubr.bf16.gmra.mrb[0].mxu0 %v918
      %v1257 = vpop.f32.mrb[0].mxu0
      %v1258 = vadd.f32 0.0, %v1257
      %v1259 = vpop.f32.mrb[0].mxu0
      %v1260 = vadd.f32 0.0, %v1259
      %v1261 = vpop.f32.mrb[0].mxu0
      %v1262 = vadd.f32 0.0, %v1261
      %v1263 = vpop.f32.mrb[0].mxu0
      %v1264 = vadd.f32 0.0, %v1263
      %1265 = vmatprep.mubr.bf16.mxu0 0
      %1266 = vmatmul.mubr.bf16.gmra.mrb[0].mxu0 %v921
      %v1267 = vpop.f32.mrb[0].mxu0
      %v1268 = vadd.f32 0.0, %v1267
      %v1269 = vpop.f32.mrb[0].mxu0
      %v1270 = vadd.f32 0.0, %v1269
      %v1271 = vpop.f32.mrb[0].mxu0
      %v1272 = vadd.f32 0.0, %v1271
      %v1273 = vpop.f32.mrb[0].mxu0
      %v1274 = vadd.f32 0.0, %v1273
      %1275 = vdwg.mxu0
      %s1276 = scalar_lea.vmem %s1, 64
      %v1277 = vld [vmem:[%s1276] sm:$0xff]
      %v1278 = vld [vmem:[%s1276 + $0x8] sm:$0xff]
      %v1279 = vld [vmem:[%s1276 + $0x10] sm:$0xff]
      %v1280 = vld [vmem:[%s1276 + $0x18] sm:$0xff]
      %s1281 = scalar_lea.vmem %s1, 96
      %v1282 = vld [vmem:[%s1281] sm:$0xff]
      %v1283 = vld [vmem:[%s1281 + $0x8] sm:$0xff]
      %v1284 = vld [vmem:[%s1281 + $0x10] sm:$0xff]
      %v1285 = vld [vmem:[%s1281 + $0x18] sm:$0xff]
      %vm1286 = vsmask.f32 6400
      %v1287 = vrot.slane %v552, 1
      %v1288 = vrot.slane %v554, 2
      %v1289 = vor.u32 %v1287, %v1288
      %v1290 = vrot.slane %v563, 1
      %v1291 = vrot.slane %v559, 2
      %v1292 = vor.u32 %v1290, %v1291
      %v1293 = vsel %vm1286, %v1289, %v1292
      %v1294 = vrot.slane %v571, 1
      %v1295 = vrot.slane %v567, 2
      %v1296 = vor.u32 %v1294, %v1295
      %v1297 = vsel %vm1286, %v1292, %v1296
      %v1298 = vrot.slane %v579, 1
      %v1299 = vrot.slane %v575, 2
      %v1300 = vor.u32 %v1298, %v1299
      %v1301 = vsel %vm1286, %v1296, %v1300
      %v1302 = vrot.slane %v587, 1
      %v1303 = vrot.slane %v583, 2
      %v1304 = vor.u32 %v1302, %v1303
      %v1305 = vsel %vm1286, %v1300, %v1304
      %v1306 = vrot.slane %v595, 1
      %v1307 = vrot.slane %v591, 2
      %v1308 = vor.u32 %v1306, %v1307
      %v1309 = vsel %vm1286, %v1304, %v1308
      %v1310 = vrot.slane %v603, 1
      %v1311 = vrot.slane %v599, 2
      %v1312 = vor.u32 %v1310, %v1311
      %v1313 = vsel %vm1286, %v1308, %v1312
      %v1314 = vrot.slane %v611, 1
      %v1315 = vrot.slane %v607, 2
      %v1316 = vor.u32 %v1314, %v1315
      %v1317 = vsel %vm1286, %v1312, %v1316
      %v1318 = vrot.slane %v619, 1
      %v1319 = vrot.slane %v615, 2
      %v1320 = vor.u32 %v1318, %v1319
      %v1321 = vsel %vm1286, %v1316, %v1320
      %v1322 = vrot.slane %v627, 1
      %v1323 = vrot.slane %v623, 2
      %v1324 = vor.u32 %v1322, %v1323
      %v1325 = vsel %vm1286, %v1320, %v1324
      %v1326 = vrot.slane %v635, 1
      %v1327 = vrot.slane %v631, 2
      %v1328 = vor.u32 %v1326, %v1327
      %v1329 = vsel %vm1286, %v1324, %v1328
      %v1330 = vrot.slane %v643, 1
      %v1331 = vrot.slane %v639, 2
      %v1332 = vor.u32 %v1330, %v1331
      %v1333 = vsel %vm1286, %v1328, %v1332
      %v1334 = vrot.slane %v651, 1
      %v1335 = vrot.slane %v647, 2
      %v1336 = vor.u32 %v1334, %v1335
      %v1337 = vsel %vm1286, %v1332, %v1336
      %v1338 = vrot.slane %v659, 1
      %v1339 = vrot.slane %v655, 2
      %v1340 = vor.u32 %v1338, %v1339
      %v1341 = vsel %vm1286, %v1336, %v1340
      %v1342 = vrot.slane %v667, 1
      %v1343 = vrot.slane %v663, 2
      %v1344 = vor.u32 %v1342, %v1343
      %v1345 = vsel %vm1286, %v1340, %v1344
      %v1346 = vrot.slane %v675, 1
      %v1347 = vrot.slane %v671, 2
      %v1348 = vor.u32 %v1346, %v1347
      %v1349 = vsel %vm1286, %v1344, %v1348
      %v1350 = vrot.slane %v683, 1
      %v1351 = vrot.slane %v679, 2
      %v1352 = vor.u32 %v1350, %v1351
      %v1353 = vsel %vm1286, %v1348, %v1352
      %v1354 = vrot.slane %v691, 1
      %v1355 = vrot.slane %v687, 2
      %v1356 = vor.u32 %v1354, %v1355
      %v1357 = vsel %vm1286, %v1352, %v1356
      %v1358 = vrot.slane %v699, 1
      %v1359 = vrot.slane %v695, 2
      %v1360 = vor.u32 %v1358, %v1359
      %v1361 = vsel %vm1286, %v1356, %v1360
      %v1362 = vrot.slane %v707, 1
      %v1363 = vrot.slane %v703, 2
      %v1364 = vor.u32 %v1362, %v1363
      %v1365 = vsel %vm1286, %v1360, %v1364
      %v1366 = vrot.slane %v715, 1
      %v1367 = vrot.slane %v711, 2
      %v1368 = vor.u32 %v1366, %v1367
      %v1369 = vsel %vm1286, %v1364, %v1368
      %v1370 = vrot.slane %v723, 1
      %v1371 = vrot.slane %v719, 2
      %v1372 = vor.u32 %v1370, %v1371
      %v1373 = vsel %vm1286, %v1368, %v1372
      %v1374 = vrot.slane %v731, 1
      %v1375 = vrot.slane %v727, 2
      %v1376 = vor.u32 %v1374, %v1375
      %v1377 = vsel %vm1286, %v1372, %v1376
      %v1378 = vrot.slane %v739, 1
      %v1379 = vrot.slane %v735, 2
      %v1380 = vor.u32 %v1378, %v1379
      %v1381 = vsel %vm1286, %v1376, %v1380
      %v1382 = vrot.slane %v747, 1
      %v1383 = vrot.slane %v743, 2
      %v1384 = vor.u32 %v1382, %v1383
      %v1385 = vsel %vm1286, %v1380, %v1384
      %v1386 = vrot.slane %v755, 1
      %v1387 = vrot.slane %v751, 2
      %v1388 = vor.u32 %v1386, %v1387
      %v1389 = vsel %vm1286, %v1384, %v1388
      %v1390 = vrot.slane %v763, 1
      %v1391 = vrot.slane %v759, 2
      %v1392 = vor.u32 %v1390, %v1391
      %v1393 = vsel %vm1286, %v1388, %v1392
      %v1394 = vrot.slane %v771, 1
      %v1395 = vrot.slane %v767, 2
      %v1396 = vor.u32 %v1394, %v1395
      %v1397 = vsel %vm1286, %v1392, %v1396
      %v1398 = vrot.slane %v779, 1
      %v1399 = vrot.slane %v775, 2
      %v1400 = vor.u32 %v1398, %v1399
      %v1401 = vsel %vm1286, %v1396, %v1400
      %v1402 = vrot.slane %v787, 1
      %v1403 = vrot.slane %v783, 2
      %v1404 = vor.u32 %v1402, %v1403
      %v1405 = vsel %vm1286, %v1400, %v1404
      %v1406 = vrot.slane %v795, 1
      %v1407 = vrot.slane %v791, 2
      %v1408 = vor.u32 %v1406, %v1407
      %v1409 = vsel %vm1286, %v1404, %v1408
      %v1410 = vrot.slane %v803, 1
      %v1411 = vrot.slane %v799, 2
      %v1412 = vor.u32 %v1410, %v1411
      %v1413 = vsel %vm1286, %v1408, %v1412
      %v1418 = vunpack.c.l.b16 %v1282
      %v1419 = vunpack.c.h.b16 %v1282
      %v1420 = vunpack.c.l.b16 %v1283
      %v1421 = vunpack.c.h.b16 %v1283
      %v1422 = vunpack.c.l.b16 %v1284
      %v1423 = vunpack.c.h.b16 %v1284
      %v1424 = vunpack.c.l.b16 %v1285
      %v1425 = vunpack.c.h.b16 %v1285
      %v1426 = vpack.c.b16 %v1420, %v1418
      %v1427 = vpack.c.b16 %v1421, %v1419
      %v1428 = vpack.c.b16 %v1424, %v1422
      %v1429 = vpack.c.b16 %v1425, %v1423
      %v1435 = vsel %vm826, %v1293, 0
      %v1438 = vsel %vm826, %v1297, 0
      %v1441 = vsel %vm826, %v1301, 0
      %v1444 = vsel %vm826, %v1305, 0
      %v1447 = vsel %vm826, %v1309, 0
      %v1450 = vsel %vm826, %v1313, 0
      %v1453 = vsel %vm826, %v1317, 0
      %v1456 = vsel %vm826, %v1321, 0
      %v1459 = vsel %vm826, %v1325, 0
      %v1462 = vsel %vm826, %v1329, 0
      %v1465 = vsel %vm826, %v1333, 0
      %v1468 = vsel %vm826, %v1337, 0
      %v1471 = vsel %vm826, %v1341, 0
      %v1474 = vsel %vm826, %v1345, 0
      %v1477 = vsel %vm826, %v1349, 0
      %v1480 = vsel %vm826, %v1353, 0
      %v1483 = vsel %vm826, %v1357, 0
      %v1486 = vsel %vm826, %v1361, 0
      %v1489 = vsel %vm826, %v1365, 0
      %v1492 = vsel %vm826, %v1369, 0
      %v1495 = vsel %vm826, %v1373, 0
      %v1498 = vsel %vm826, %v1377, 0
      %v1501 = vsel %vm826, %v1381, 0
      %v1504 = vsel %vm826, %v1385, 0
      %v1507 = vsel %vm826, %v1389, 0
      %v1510 = vsel %vm826, %v1393, 0
      %v1513 = vsel %vm826, %v1397, 0
      %v1516 = vsel %vm826, %v1401, 0
      %v1519 = vsel %vm826, %v1405, 0
      %v1522 = vsel %vm826, %v1409, 0
      %v1525 = vsel %vm826, %v1413, 0
      %v1528 = vsel %vm826, %v1412, 0
      %1530 = vmatprep.subr.bf16.mxu0 %v1427
      %1531 = vmatpush1.bf16.msra.mxu0 %v1426
      %1532 = vmatprep.subr.bf16.mxu0 %v1429
      %1533 = vmatpush1.bf16.msra.mxu0 %v1428
      %1534 = vmatprep.subr.bf16.mxu0 0
      %1535 = vmatpush1.bf16.msra.mxu0 0
      %1536 = vmatprep.subr.bf16.mxu0 0
      %1537 = vmatpush1.bf16.msra.mxu0 0
      %1538 = vmatprep.subr.bf16.mxu0 0
      %1539 = vmatpush1.bf16.msra.mxu0 0
      %1540 = vmatprep.subr.bf16.mxu0 0
      %1541 = vmatpush1.bf16.msra.mxu0 0
      %1542 = vmatprep.subr.bf16.mxu0 0
      %1543 = vmatpush1.bf16.msra.mxu0 0
      %1544 = vmatprep.subr.bf16.mxu0 0
      %1545 = vmatpush1.bf16.msra.mxu0 0
      %1546 = vmatprep.subr.bf16.mxu0 0
      %1547 = vmatpush1.bf16.msra.mxu0 0
      %1548 = vmatprep.subr.bf16.mxu0 0
      %1549 = vmatpush1.bf16.msra.mxu0 0
      %1550 = vmatprep.subr.bf16.mxu0 0
      %1551 = vmatpush1.bf16.msra.mxu0 0
      %1552 = vmatprep.subr.bf16.mxu0 0
      %1553 = vmatpush1.bf16.msra.mxu0 0
      %1554 = vmatprep.subr.bf16.mxu0 0
      %1555 = vmatpush1.bf16.msra.mxu0 0
      %1556 = vmatprep.subr.bf16.mxu0 0
      %1557 = vmatpush1.bf16.msra.mxu0 0
      %1558 = vmatprep.subr.bf16.mxu0 0
      %1559 = vmatpush1.bf16.msra.mxu0 0
      %1560 = vmatprep.subr.bf16.mxu0 0
      %1561 = vmatpush1.bf16.msra.mxu0 0
      %1562 = vmatprep.mubr.bf16.mxu0 0
      %1563 = vmatmul.mubr.bf16.gmra.mrb[0].mxu0 %v1435
      %v1564 = vpop.f32.mrb[0].mxu0
      %v1565 = vadd.f32 0.0, %v1564
      %v1566 = vpop.f32.mrb[0].mxu0
      %v1567 = vadd.f32 0.0, %v1566
      %v1568 = vpop.f32.mrb[0].mxu0
      %v1569 = vadd.f32 0.0, %v1568
      %v1570 = vpop.f32.mrb[0].mxu0
      %v1571 = vadd.f32 0.0, %v1570
      %1572 = vmatprep.mubr.bf16.mxu0 0
      %1573 = vmatmul.mubr.bf16.gmra.mrb[0].mxu0 %v1438
      %v1574 = vpop.f32.mrb[0].mxu0
      %v1575 = vadd.f32 0.0, %v1574
      %v1576 = vpop.f32.mrb[0].mxu0
      %v1577 = vadd.f32 0.0, %v1576
      %v1578 = vpop.f32.mrb[0].mxu0
      %v1579 = vadd.f32 0.0, %v1578
      %v1580 = vpop.f32.mrb[0].mxu0
      %v1581 = vadd.f32 0.0, %v1580
      %1582 = vmatprep.mubr.bf16.mxu0 0
      %1583 = vmatmul.mubr.bf16.gmra.mrb[0].mxu0 %v1441
      %v1584 = vpop.f32.mrb[0].mxu0
      %v1585 = vadd.f32 0.0, %v1584
      %v1586 = vpop.f32.mrb[0].mxu0
      %v1587 = vadd.f32 0.0, %v1586
      %v1588 = vpop.f32.mrb[0].mxu0
      %v1589 = vadd.f32 0.0, %v1588
      %v1590 = vpop.f32.mrb[0].mxu0
      %v1591 = vadd.f32 0.0, %v1590
      %1592 = vmatprep.mubr.bf16.mxu0 0
      %1593 = vmatmul.mubr.bf16.gmra.mrb[0].mxu0 %v1444
      %v1594 = vpop.f32.mrb[0].mxu0
      %v1595 = vadd.f32 0.0, %v1594
      %v1596 = vpop.f32.mrb[0].mxu0
      %v1597 = vadd.f32 0.0, %v1596
      %v1598 = vpop.f32.mrb[0].mxu0
      %v1599 = vadd.f32 0.0, %v1598
      %v1600 = vpop.f32.mrb[0].mxu0
      %v1601 = vadd.f32 0.0, %v1600
      %1602 = vmatprep.mubr.bf16.mxu0 0
      %1603 = vmatmul.mubr.bf16.gmra.mrb[0].mxu0 %v1447
      %v1604 = vpop.f32.mrb[0].mxu0
      %v1605 = vadd.f32 0.0, %v1604
      %v1606 = vpop.f32.mrb[0].mxu0
      %v1607 = vadd.f32 0.0, %v1606
      %v1608 = vpop.f32.mrb[0].mxu0
      %v1609 = vadd.f32 0.0, %v1608
      %v1610 = vpop.f32.mrb[0].mxu0
      %v1611 = vadd.f32 0.0, %v1610
      %1612 = vmatprep.mubr.bf16.mxu0 0
      %1613 = vmatmul.mubr.bf16.gmra.mrb[0].mxu0 %v1450
      %v1614 = vpop.f32.mrb[0].mxu0
      %v1615 = vadd.f32 0.0, %v1614
      %v1616 = vpop.f32.mrb[0].mxu0
      %v1617 = vadd.f32 0.0, %v1616
      %v1618 = vpop.f32.mrb[0].mxu0
      %v1619 = vadd.f32 0.0, %v1618
      %v1620 = vpop.f32.mrb[0].mxu0
      %v1621 = vadd.f32 0.0, %v1620
      %1622 = vmatprep.mubr.bf16.mxu0 0
      %1623 = vmatmul.mubr.bf16.gmra.mrb[0].mxu0 %v1453
      %v1624 = vpop.f32.mrb[0].mxu0
      %v1625 = vadd.f32 0.0, %v1624
      %v1626 = vpop.f32.mrb[0].mxu0
      %v1627 = vadd.f32 0.0, %v1626
      %v1628 = vpop.f32.mrb[0].mxu0
      %v1629 = vadd.f32 0.0, %v1628
      %v1630 = vpop.f32.mrb[0].mxu0
      %v1631 = vadd.f32 0.0, %v1630
      %1632 = vmatprep.mubr.bf16.mxu0 0
      %1633 = vmatmul.mubr.bf16.gmra.mrb[0].mxu0 %v1456
      %v1634 = vpop.f32.mrb[0].mxu0
      %v1635 = vadd.f32 0.0, %v1634
      %v1636 = vpop.f32.mrb[0].mxu0
      %v1637 = vadd.f32 0.0, %v1636
      %v1638 = vpop.f32.mrb[0].mxu0
      %v1639 = vadd.f32 0.0, %v1638
      %v1640 = vpop.f32.mrb[0].mxu0
      %v1641 = vadd.f32 0.0, %v1640
      %1642 = vmatprep.mubr.bf16.mxu0 0
      %1643 = vmatmul.mubr.bf16.gmra.mrb[0].mxu0 %v1459
      %v1644 = vpop.f32.mrb[0].mxu0
      %v1645 = vadd.f32 0.0, %v1644
      %v1646 = vpop.f32.mrb[0].mxu0
      %v1647 = vadd.f32 0.0, %v1646
      %v1648 = vpop.f32.mrb[0].mxu0
      %v1649 = vadd.f32 0.0, %v1648
      %v1650 = vpop.f32.mrb[0].mxu0
      %v1651 = vadd.f32 0.0, %v1650
      %1652 = vmatprep.mubr.bf16.mxu0 0
      %1653 = vmatmul.mubr.bf16.gmra.mrb[0].mxu0 %v1462
      %v1654 = vpop.f32.mrb[0].mxu0
      %v1655 = vadd.f32 0.0, %v1654
      %v1656 = vpop.f32.mrb[0].mxu0
      %v1657 = vadd.f32 0.0, %v1656
      %v1658 = vpop.f32.mrb[0].mxu0
      %v1659 = vadd.f32 0.0, %v1658
      %v1660 = vpop.f32.mrb[0].mxu0
      %v1661 = vadd.f32 0.0, %v1660
      %1662 = vmatprep.mubr.bf16.mxu0 0
      %1663 = vmatmul.mubr.bf16.gmra.mrb[0].mxu0 %v1465
      %v1664 = vpop.f32.mrb[0].mxu0
      %v1665 = vadd.f32 0.0, %v1664
      %v1666 = vpop.f32.mrb[0].mxu0
      %v1667 = vadd.f32 0.0, %v1666
      %v1668 = vpop.f32.mrb[0].mxu0
      %v1669 = vadd.f32 0.0, %v1668
      %v1670 = vpop.f32.mrb[0].mxu0
      %v1671 = vadd.f32 0.0, %v1670
      %1672 = vmatprep.mubr.bf16.mxu0 0
      %1673 = vmatmul.mubr.bf16.gmra.mrb[0].mxu0 %v1468
      %v1674 = vpop.f32.mrb[0].mxu0
      %v1675 = vadd.f32 0.0, %v1674
      %v1676 = vpop.f32.mrb[0].mxu0
      %v1677 = vadd.f32 0.0, %v1676
      %v1678 = vpop.f32.mrb[0].mxu0
      %v1679 = vadd.f32 0.0, %v1678
      %v1680 = vpop.f32.mrb[0].mxu0
      %v1681 = vadd.f32 0.0, %v1680
      %1682 = vmatprep.mubr.bf16.mxu0 0
      %1683 = vmatmul.mubr.bf16.gmra.mrb[0].mxu0 %v1471
      %v1684 = vpop.f32.mrb[0].mxu0
      %v1685 = vadd.f32 0.0, %v1684
      %v1686 = vpop.f32.mrb[0].mxu0
      %v1687 = vadd.f32 0.0, %v1686
      %v1688 = vpop.f32.mrb[0].mxu0
      %v1689 = vadd.f32 0.0, %v1688
      %v1690 = vpop.f32.mrb[0].mxu0
      %v1691 = vadd.f32 0.0, %v1690
      %1692 = vmatprep.mubr.bf16.mxu0 0
      %1693 = vmatmul.mubr.bf16.gmra.mrb[0].mxu0 %v1474
      %v1694 = vpop.f32.mrb[0].mxu0
      %v1695 = vadd.f32 0.0, %v1694
      %v1696 = vpop.f32.mrb[0].mxu0
      %v1697 = vadd.f32 0.0, %v1696
      %v1698 = vpop.f32.mrb[0].mxu0
      %v1699 = vadd.f32 0.0, %v1698
      %v1700 = vpop.f32.mrb[0].mxu0
      %v1701 = vadd.f32 0.0, %v1700
      %1702 = vmatprep.mubr.bf16.mxu0 0
      %1703 = vmatmul.mubr.bf16.gmra.mrb[0].mxu0 %v1477
      %v1704 = vpop.f32.mrb[0].mxu0
      %v1705 = vadd.f32 0.0, %v1704
      %v1706 = vpop.f32.mrb[0].mxu0
      %v1707 = vadd.f32 0.0, %v1706
      %v1708 = vpop.f32.mrb[0].mxu0
      %v1709 = vadd.f32 0.0, %v1708
      %v1710 = vpop.f32.mrb[0].mxu0
      %v1711 = vadd.f32 0.0, %v1710
      %1712 = vmatprep.mubr.bf16.mxu0 0
      %1713 = vmatmul.mubr.bf16.gmra.mrb[0].mxu0 %v1480
      %v1714 = vpop.f32.mrb[0].mxu0
      %v1715 = vadd.f32 0.0, %v1714
      %v1716 = vpop.f32.mrb[0].mxu0
      %v1717 = vadd.f32 0.0, %v1716
      %v1718 = vpop.f32.mrb[0].mxu0
      %v1719 = vadd.f32 0.0, %v1718
      %v1720 = vpop.f32.mrb[0].mxu0
      %v1721 = vadd.f32 0.0, %v1720
      %1722 = vmatprep.mubr.bf16.mxu0 0
      %1723 = vmatmul.mubr.bf16.gmra.mrb[0].mxu0 %v1483
      %v1724 = vpop.f32.mrb[0].mxu0
      %v1725 = vadd.f32 0.0, %v1724
      %v1726 = vpop.f32.mrb[0].mxu0
      %v1727 = vadd.f32 0.0, %v1726
      %v1728 = vpop.f32.mrb[0].mxu0
      %v1729 = vadd.f32 0.0, %v1728
      %v1730 = vpop.f32.mrb[0].mxu0
      %v1731 = vadd.f32 0.0, %v1730
      %1732 = vmatprep.mubr.bf16.mxu0 0
      %1733 = vmatmul.mubr.bf16.gmra.mrb[0].mxu0 %v1486
      %v1734 = vpop.f32.mrb[0].mxu0
      %v1735 = vadd.f32 0.0, %v1734
      %v1736 = vpop.f32.mrb[0].mxu0
      %v1737 = vadd.f32 0.0, %v1736
      %v1738 = vpop.f32.mrb[0].mxu0
      %v1739 = vadd.f32 0.0, %v1738
      %v1740 = vpop.f32.mrb[0].mxu0
      %v1741 = vadd.f32 0.0, %v1740
      %1742 = vmatprep.mubr.bf16.mxu0 0
      %1743 = vmatmul.mubr.bf16.gmra.mrb[0].mxu0 %v1489
      %v1744 = vpop.f32.mrb[0].mxu0
      %v1745 = vadd.f32 0.0, %v1744
      %v1746 = vpop.f32.mrb[0].mxu0
      %v1747 = vadd.f32 0.0, %v1746
      %v1748 = vpop.f32.mrb[0].mxu0
      %v1749 = vadd.f32 0.0, %v1748
      %v1750 = vpop.f32.mrb[0].mxu0
      %v1751 = vadd.f32 0.0, %v1750
      %1752 = vmatprep.mubr.bf16.mxu0 0
      %1753 = vmatmul.mubr.bf16.gmra.mrb[0].mxu0 %v1492
      %v1754 = vpop.f32.mrb[0].mxu0
      %v1755 = vadd.f32 0.0, %v1754
      %v1756 = vpop.f32.mrb[0].mxu0
      %v1757 = vadd.f32 0.0, %v1756
      %v1758 = vpop.f32.mrb[0].mxu0
      %v1759 = vadd.f32 0.0, %v1758
      %v1760 = vpop.f32.mrb[0].mxu0
      %v1761 = vadd.f32 0.0, %v1760
      %1762 = vmatprep.mubr.bf16.mxu0 0
      %1763 = vmatmul.mubr.bf16.gmra.mrb[0].mxu0 %v1495
      %v1764 = vpop.f32.mrb[0].mxu0
      %v1765 = vadd.f32 0.0, %v1764
      %v1766 = vpop.f32.mrb[0].mxu0
      %v1767 = vadd.f32 0.0, %v1766
      %v1768 = vpop.f32.mrb[0].mxu0
      %v1769 = vadd.f32 0.0, %v1768
      %v1770 = vpop.f32.mrb[0].mxu0
      %v1771 = vadd.f32 0.0, %v1770
      %1772 = vmatprep.mubr.bf16.mxu0 0
      %1773 = vmatmul.mubr.bf16.gmra.mrb[0].mxu0 %v1498
      %v1774 = vpop.f32.mrb[0].mxu0
      %v1775 = vadd.f32 0.0, %v1774
      %v1776 = vpop.f32.mrb[0].mxu0
      %v1777 = vadd.f32 0.0, %v1776
      %v1778 = vpop.f32.mrb[0].mxu0
      %v1779 = vadd.f32 0.0, %v1778
      %v1780 = vpop.f32.mrb[0].mxu0
      %v1781 = vadd.f32 0.0, %v1780
      %1782 = vmatprep.mubr.bf16.mxu0 0
      %1783 = vmatmul.mubr.bf16.gmra.mrb[0].mxu0 %v1501
      %v1784 = vpop.f32.mrb[0].mxu0
      %v1785 = vadd.f32 0.0, %v1784
      %v1786 = vpop.f32.mrb[0].mxu0
      %v1787 = vadd.f32 0.0, %v1786
      %v1788 = vpop.f32.mrb[0].mxu0
      %v1789 = vadd.f32 0.0, %v1788
      %v1790 = vpop.f32.mrb[0].mxu0
      %v1791 = vadd.f32 0.0, %v1790
      %1792 = vmatprep.mubr.bf16.mxu0 0
      %1793 = vmatmul.mubr.bf16.gmra.mrb[0].mxu0 %v1504
      %v1794 = vpop.f32.mrb[0].mxu0
      %v1795 = vadd.f32 0.0, %v1794
      %v1796 = vpop.f32.mrb[0].mxu0
      %v1797 = vadd.f32 0.0, %v1796
      %v1798 = vpop.f32.mrb[0].mxu0
      %v1799 = vadd.f32 0.0, %v1798
      %v1800 = vpop.f32.mrb[0].mxu0
      %v1801 = vadd.f32 0.0, %v1800
      %1802 = vmatprep.mubr.bf16.mxu0 0
      %1803 = vmatmul.mubr.bf16.gmra.mrb[0].mxu0 %v1507
      %v1804 = vpop.f32.mrb[0].mxu0
      %v1805 = vadd.f32 0.0, %v1804
      %v1806 = vpop.f32.mrb[0].mxu0
      %v1807 = vadd.f32 0.0, %v1806
      %v1808 = vpop.f32.mrb[0].mxu0
      %v1809 = vadd.f32 0.0, %v1808
      %v1810 = vpop.f32.mrb[0].mxu0
      %v1811 = vadd.f32 0.0, %v1810
      %1812 = vmatprep.mubr.bf16.mxu0 0
      %1813 = vmatmul.mubr.bf16.gmra.mrb[0].mxu0 %v1510
      %v1814 = vpop.f32.mrb[0].mxu0
      %v1815 = vadd.f32 0.0, %v1814
      %v1816 = vpop.f32.mrb[0].mxu0
      %v1817 = vadd.f32 0.0, %v1816
      %v1818 = vpop.f32.mrb[0].mxu0
      %v1819 = vadd.f32 0.0, %v1818
      %v1820 = vpop.f32.mrb[0].mxu0
      %v1821 = vadd.f32 0.0, %v1820
      %1822 = vmatprep.mubr.bf16.mxu0 0
      %1823 = vmatmul.mubr.bf16.gmra.mrb[0].mxu0 %v1513
      %v1824 = vpop.f32.mrb[0].mxu0
      %v1825 = vadd.f32 0.0, %v1824
      %v1826 = vpop.f32.mrb[0].mxu0
      %v1827 = vadd.f32 0.0, %v1826
      %v1828 = vpop.f32.mrb[0].mxu0
      %v1829 = vadd.f32 0.0, %v1828
      %v1830 = vpop.f32.mrb[0].mxu0
      %v1831 = vadd.f32 0.0, %v1830
      %1832 = vmatprep.mubr.bf16.mxu0 0
      %1833 = vmatmul.mubr.bf16.gmra.mrb[0].mxu0 %v1516
      %v1834 = vpop.f32.mrb[0].mxu0
      %v1835 = vadd.f32 0.0, %v1834
      %v1836 = vpop.f32.mrb[0].mxu0
      %v1837 = vadd.f32 0.0, %v1836
      %v1838 = vpop.f32.mrb[0].mxu0
      %v1839 = vadd.f32 0.0, %v1838
      %v1840 = vpop.f32.mrb[0].mxu0
      %v1841 = vadd.f32 0.0, %v1840
      %1842 = vmatprep.mubr.bf16.mxu0 0
      %1843 = vmatmul.mubr.bf16.gmra.mrb[0].mxu0 %v1519
      %v1844 = vpop.f32.mrb[0].mxu0
      %v1845 = vadd.f32 0.0, %v1844
      %v1846 = vpop.f32.mrb[0].mxu0
      %v1847 = vadd.f32 0.0, %v1846
      %v1848 = vpop.f32.mrb[0].mxu0
      %v1849 = vadd.f32 0.0, %v1848
      %v1850 = vpop.f32.mrb[0].mxu0
      %v1851 = vadd.f32 0.0, %v1850
      %1852 = vmatprep.mubr.bf16.mxu0 0
      %1853 = vmatmul.mubr.bf16.gmra.mrb[0].mxu0 %v1522
      %v1854 = vpop.f32.mrb[0].mxu0
      %v1855 = vadd.f32 0.0, %v1854
      %v1856 = vpop.f32.mrb[0].mxu0
      %v1857 = vadd.f32 0.0, %v1856
      %v1858 = vpop.f32.mrb[0].mxu0
      %v1859 = vadd.f32 0.0, %v1858
      %v1860 = vpop.f32.mrb[0].mxu0
      %v1861 = vadd.f32 0.0, %v1860
      %1862 = vmatprep.mubr.bf16.mxu0 0
      %1863 = vmatmul.mubr.bf16.gmra.mrb[0].mxu0 %v1525
      %v1864 = vpop.f32.mrb[0].mxu0
      %v1865 = vadd.f32 0.0, %v1864
      %v1866 = vpop.f32.mrb[0].mxu0
      %v1867 = vadd.f32 0.0, %v1866
      %v1868 = vpop.f32.mrb[0].mxu0
      %v1869 = vadd.f32 0.0, %v1868
      %v1870 = vpop.f32.mrb[0].mxu0
      %v1871 = vadd.f32 0.0, %v1870
      %1872 = vmatprep.mubr.bf16.mxu0 0
      %1873 = vmatmul.mubr.bf16.gmra.mrb[0].mxu0 %v1528
      %v1874 = vpop.f32.mrb[0].mxu0
      %v1875 = vadd.f32 0.0, %v1874
      %v1876 = vpop.f32.mrb[0].mxu0
      %v1877 = vadd.f32 0.0, %v1876
      %v1878 = vpop.f32.mrb[0].mxu0
      %v1879 = vadd.f32 0.0, %v1878
      %v1880 = vpop.f32.mrb[0].mxu0
      %v1881 = vadd.f32 0.0, %v1880
      %1882 = vdwg.mxu0
      %s1883 = scalar_lea.vmem %s1, 128
      %v1884 = vld [vmem:[%s1883] sm:$0xff]
      %v1885 = vld [vmem:[%s1883 + $0x8] sm:$0xff]
      %v1886 = vld [vmem:[%s1883 + $0x10] sm:$0xff]
      %v1887 = vld [vmem:[%s1883 + $0x18] sm:$0xff]
      %vm1920 = vcmask 1045504
      %v1921 = vrot.slane %v513, 2
      %v1922 = vrot.slane %v514, 2
      %v1923 = vsel %vm1920, %v1921, %v1922
      %v1924 = vrot.slane %v515, 2
      %v1925 = vsel %vm1920, %v1922, %v1924
      %v1926 = vrot.slane %v516, 2
      %v1927 = vsel %vm1920, %v1924, %v1926
      %v1928 = vrot.slane %v517, 2
      %v1929 = vsel %vm1920, %v1926, %v1928
      %v1930 = vrot.slane %v518, 2
      %v1931 = vsel %vm1920, %v1928, %v1930
      %v1932 = vrot.slane %v519, 2
      %v1933 = vsel %vm1920, %v1930, %v1932
      %v1934 = vrot.slane %v520, 2
      %v1935 = vsel %vm1920, %v1932, %v1934
      %v1936 = vrot.slane %v521, 2
      %v1937 = vsel %vm1920, %v1934, %v1936
      %v1938 = vrot.slane %v522, 2
      %v1939 = vsel %vm1920, %v1936, %v1938
      %v1940 = vrot.slane %v523, 2
      %v1941 = vsel %vm1920, %v1938, %v1940
      %v1942 = vrot.slane %v524, 2
      %v1943 = vsel %vm1920, %v1940, %v1942
      %v1944 = vrot.slane %v525, 2
      %v1945 = vsel %vm1920, %v1942, %v1944
      %v1946 = vrot.slane %v526, 2
      %v1947 = vsel %vm1920, %v1944, %v1946
      %v1948 = vrot.slane %v527, 2
      %v1949 = vsel %vm1920, %v1946, %v1948
      %v1950 = vrot.slane %v528, 2
      %v1951 = vsel %vm1920, %v1948, %v1950
      %v1952 = vrot.slane %v529, 2
      %v1953 = vsel %vm1920, %v1950, %v1952
      %v1954 = vrot.slane %v530, 2
      %v1955 = vsel %vm1920, %v1952, %v1954
      %v1956 = vrot.slane %v531, 2
      %v1957 = vsel %vm1920, %v1954, %v1956
      %v1958 = vrot.slane %v532, 2
      %v1959 = vsel %vm1920, %v1956, %v1958
      %v1960 = vrot.slane %v533, 2
      %v1961 = vsel %vm1920, %v1958, %v1960
      %v1962 = vrot.slane %v534, 2
      %v1963 = vsel %vm1920, %v1960, %v1962
      %v1964 = vrot.slane %v535, 2
      %v1965 = vsel %vm1920, %v1962, %v1964
      %v1966 = vrot.slane %v536, 2
      %v1967 = vsel %vm1920, %v1964, %v1966
      %v1968 = vrot.slane %v537, 2
      %v1969 = vsel %vm1920, %v1966, %v1968
      %v1970 = vrot.slane %v538, 2
      %v1971 = vsel %vm1920, %v1968, %v1970
      %v1972 = vrot.slane %v539, 2
      %v1973 = vsel %vm1920, %v1970, %v1972
      %v1974 = vrot.slane %v540, 2
      %v1975 = vsel %vm1920, %v1972, %v1974
      %v1976 = vrot.slane %v541, 2
      %v1977 = vsel %vm1920, %v1974, %v1976
      %v1978 = vrot.slane %v542, 2
      %v1979 = vsel %vm1920, %v1976, %v1978
      %v1980 = vrot.slane %v543, 2
      %v1981 = vsel %vm1920, %v1978, %v1980
      %v1982 = vrot.slane %v544, 2
      %v1983 = vsel %vm1920, %v1980, %v1982
      %v1988 = vunpack.c.l.b16 %v1884
      %v1989 = vunpack.c.h.b16 %v1884
      %v1990 = vunpack.c.l.b16 %v1885
      %v1991 = vunpack.c.h.b16 %v1885
      %v1992 = vunpack.c.l.b16 %v1886
      %v1993 = vunpack.c.h.b16 %v1886
      %v1994 = vunpack.c.l.b16 %v1887
      %v1995 = vunpack.c.h.b16 %v1887
      %v1996 = vpack.c.b16 %v1990, %v1988
      %v1997 = vpack.c.b16 %v1991, %v1989
      %v1998 = vpack.c.b16 %v1994, %v1992
      %v1999 = vpack.c.b16 %v1995, %v1993
      %v2005 = vsel %vm826, %v1923, 0
      %v2008 = vsel %vm826, %v1925, 0
      %v2011 = vsel %vm826, %v1927, 0
      %v2014 = vsel %vm826, %v1929, 0
      %v2017 = vsel %vm826, %v1931, 0
      %v2020 = vsel %vm826, %v1933, 0
      %v2023 = vsel %vm826, %v1935, 0
      %v2026 = vsel %vm826, %v1937, 0
      %v2029 = vsel %vm826, %v1939, 0
      %v2032 = vsel %vm826, %v1941, 0
      %v2035 = vsel %vm826, %v1943, 0
      %v2038 = vsel %vm826, %v1945, 0
      %v2041 = vsel %vm826, %v1947, 0
      %v2044 = vsel %vm826, %v1949, 0
      %v2047 = vsel %vm826, %v1951, 0
      %v2050 = vsel %vm826, %v1953, 0
      %v2053 = vsel %vm826, %v1955, 0
      %v2056 = vsel %vm826, %v1957, 0
      %v2059 = vsel %vm826, %v1959, 0
      %v2062 = vsel %vm826, %v1961, 0
      %v2065 = vsel %vm826, %v1963, 0
      %v2068 = vsel %vm826, %v1965, 0
      %v2071 = vsel %vm826, %v1967, 0
      %v2074 = vsel %vm826, %v1969, 0
      %v2077 = vsel %vm826, %v1971, 0
      %v2080 = vsel %vm826, %v1973, 0
      %v2083 = vsel %vm826, %v1975, 0
      %v2086 = vsel %vm826, %v1977, 0
      %v2089 = vsel %vm826, %v1979, 0
      %v2092 = vsel %vm826, %v1981, 0
      %v2095 = vsel %vm826, %v1983, 0
      %v2098 = vsel %vm826, %v1982, 0
      %2100 = vmatprep.subr.bf16.mxu0 %v1997
      %2101 = vmatpush1.bf16.msra.mxu0 %v1996
      %2102 = vmatprep.subr.bf16.mxu0 %v1999
      %2103 = vmatpush1.bf16.msra.mxu0 %v1998
      %2104 = vmatprep.subr.bf16.mxu0 0
      %2105 = vmatpush1.bf16.msra.mxu0 0
      %2106 = vmatprep.subr.bf16.mxu0 0
      %2107 = vmatpush1.bf16.msra.mxu0 0
      %2108 = vmatprep.subr.bf16.mxu0 0
      %2109 = vmatpush1.bf16.msra.mxu0 0
      %2110 = vmatprep.subr.bf16.mxu0 0
      %2111 = vmatpush1.bf16.msra.mxu0 0
      %2112 = vmatprep.subr.bf16.mxu0 0
      %2113 = vmatpush1.bf16.msra.mxu0 0
      %2114 = vmatprep.subr.bf16.mxu0 0
      %2115 = vmatpush1.bf16.msra.mxu0 0
      %2116 = vmatprep.subr.bf16.mxu0 0
      %2117 = vmatpush1.bf16.msra.mxu0 0
      %2118 = vmatprep.subr.bf16.mxu0 0
      %2119 = vmatpush1.bf16.msra.mxu0 0
      %2120 = vmatprep.subr.bf16.mxu0 0
      %2121 = vmatpush1.bf16.msra.mxu0 0
      %2122 = vmatprep.subr.bf16.mxu0 0
      %2123 = vmatpush1.bf16.msra.mxu0 0
      %2124 = vmatprep.subr.bf16.mxu0 0
      %2125 = vmatpush1.bf16.msra.mxu0 0
      %2126 = vmatprep.subr.bf16.mxu0 0
      %2127 = vmatpush1.bf16.msra.mxu0 0
      %2128 = vmatprep.subr.bf16.mxu0 0
      %2129 = vmatpush1.bf16.msra.mxu0 0
      %2130 = vmatprep.subr.bf16.mxu0 0
      %2131 = vmatpush1.bf16.msra.mxu0 0
      %2132 = vmatprep.mubr.bf16.mxu0 0
      %2133 = vmatmul.mubr.bf16.gmra.mrb[0].mxu0 %v2005
      %v2134 = vpop.f32.mrb[0].mxu0
      %v2135 = vadd.f32 0.0, %v2134
      %v2136 = vpop.f32.mrb[0].mxu0
      %v2137 = vadd.f32 0.0, %v2136
      %v2138 = vpop.f32.mrb[0].mxu0
      %v2139 = vadd.f32 0.0, %v2138
      %v2140 = vpop.f32.mrb[0].mxu0
      %v2141 = vadd.f32 0.0, %v2140
      %2142 = vmatprep.mubr.bf16.mxu0 0
      %2143 = vmatmul.mubr.bf16.gmra.mrb[0].mxu0 %v2008
      %v2144 = vpop.f32.mrb[0].mxu0
      %v2145 = vadd.f32 0.0, %v2144
      %v2146 = vpop.f32.mrb[0].mxu0
      %v2147 = vadd.f32 0.0, %v2146
      %v2148 = vpop.f32.mrb[0].mxu0
      %v2149 = vadd.f32 0.0, %v2148
      %v2150 = vpop.f32.mrb[0].mxu0
      %v2151 = vadd.f32 0.0, %v2150
      %2152 = vmatprep.mubr.bf16.mxu0 0
      %2153 = vmatmul.mubr.bf16.gmra.mrb[0].mxu0 %v2011
      %v2154 = vpop.f32.mrb[0].mxu0
      %v2155 = vadd.f32 0.0, %v2154
      %v2156 = vpop.f32.mrb[0].mxu0
      %v2157 = vadd.f32 0.0, %v2156
      %v2158 = vpop.f32.mrb[0].mxu0
      %v2159 = vadd.f32 0.0, %v2158
      %v2160 = vpop.f32.mrb[0].mxu0
      %v2161 = vadd.f32 0.0, %v2160
      %2162 = vmatprep.mubr.bf16.mxu0 0
      %2163 = vmatmul.mubr.bf16.gmra.mrb[0].mxu0 %v2014
      %v2164 = vpop.f32.mrb[0].mxu0
      %v2165 = vadd.f32 0.0, %v2164
      %v2166 = vpop.f32.mrb[0].mxu0
      %v2167 = vadd.f32 0.0, %v2166
      %v2168 = vpop.f32.mrb[0].mxu0
      %v2169 = vadd.f32 0.0, %v2168
      %v2170 = vpop.f32.mrb[0].mxu0
      %v2171 = vadd.f32 0.0, %v2170
      %2172 = vmatprep.mubr.bf16.mxu0 0
      %2173 = vmatmul.mubr.bf16.gmra.mrb[0].mxu0 %v2017
      %v2174 = vpop.f32.mrb[0].mxu0
      %v2175 = vadd.f32 0.0, %v2174
      %v2176 = vpop.f32.mrb[0].mxu0
      %v2177 = vadd.f32 0.0, %v2176
      %v2178 = vpop.f32.mrb[0].mxu0
      %v2179 = vadd.f32 0.0, %v2178
      %v2180 = vpop.f32.mrb[0].mxu0
      %v2181 = vadd.f32 0.0, %v2180
      %2182 = vmatprep.mubr.bf16.mxu0 0
      %2183 = vmatmul.mubr.bf16.gmra.mrb[0].mxu0 %v2020
      %v2184 = vpop.f32.mrb[0].mxu0
      %v2185 = vadd.f32 0.0, %v2184
      %v2186 = vpop.f32.mrb[0].mxu0
      %v2187 = vadd.f32 0.0, %v2186
      %v2188 = vpop.f32.mrb[0].mxu0
      %v2189 = vadd.f32 0.0, %v2188
      %v2190 = vpop.f32.mrb[0].mxu0
      %v2191 = vadd.f32 0.0, %v2190
      %2192 = vmatprep.mubr.bf16.mxu0 0
      %2193 = vmatmul.mubr.bf16.gmra.mrb[0].mxu0 %v2023
      %v2194 = vpop.f32.mrb[0].mxu0
      %v2195 = vadd.f32 0.0, %v2194
      %v2196 = vpop.f32.mrb[0].mxu0
      %v2197 = vadd.f32 0.0, %v2196
      %v2198 = vpop.f32.mrb[0].mxu0
      %v2199 = vadd.f32 0.0, %v2198
      %v2200 = vpop.f32.mrb[0].mxu0
      %v2201 = vadd.f32 0.0, %v2200
      %2202 = vmatprep.mubr.bf16.mxu0 0
      %2203 = vmatmul.mubr.bf16.gmra.mrb[0].mxu0 %v2026
      %v2204 = vpop.f32.mrb[0].mxu0
      %v2205 = vadd.f32 0.0, %v2204
      %v2206 = vpop.f32.mrb[0].mxu0
      %v2207 = vadd.f32 0.0, %v2206
      %v2208 = vpop.f32.mrb[0].mxu0
      %v2209 = vadd.f32 0.0, %v2208
      %v2210 = vpop.f32.mrb[0].mxu0
      %v2211 = vadd.f32 0.0, %v2210
      %2212 = vmatprep.mubr.bf16.mxu0 0
      %2213 = vmatmul.mubr.bf16.gmra.mrb[0].mxu0 %v2029
      %v2214 = vpop.f32.mrb[0].mxu0
      %v2215 = vadd.f32 0.0, %v2214
      %v2216 = vpop.f32.mrb[0].mxu0
      %v2217 = vadd.f32 0.0, %v2216
      %v2218 = vpop.f32.mrb[0].mxu0
      %v2219 = vadd.f32 0.0, %v2218
      %v2220 = vpop.f32.mrb[0].mxu0
      %v2221 = vadd.f32 0.0, %v2220
      %2222 = vmatprep.mubr.bf16.mxu0 0
      %2223 = vmatmul.mubr.bf16.gmra.mrb[0].mxu0 %v2032
      %v2224 = vpop.f32.mrb[0].mxu0
      %v2225 = vadd.f32 0.0, %v2224
      %v2226 = vpop.f32.mrb[0].mxu0
      %v2227 = vadd.f32 0.0, %v2226
      %v2228 = vpop.f32.mrb[0].mxu0
      %v2229 = vadd.f32 0.0, %v2228
      %v2230 = vpop.f32.mrb[0].mxu0
      %v2231 = vadd.f32 0.0, %v2230
      %2232 = vmatprep.mubr.bf16.mxu0 0
      %2233 = vmatmul.mubr.bf16.gmra.mrb[0].mxu0 %v2035
      %v2234 = vpop.f32.mrb[0].mxu0
      %v2235 = vadd.f32 0.0, %v2234
      %v2236 = vpop.f32.mrb[0].mxu0
      %v2237 = vadd.f32 0.0, %v2236
      %v2238 = vpop.f32.mrb[0].mxu0
      %v2239 = vadd.f32 0.0, %v2238
      %v2240 = vpop.f32.mrb[0].mxu0
      %v2241 = vadd.f32 0.0, %v2240
      %2242 = vmatprep.mubr.bf16.mxu0 0
      %2243 = vmatmul.mubr.bf16.gmra.mrb[0].mxu0 %v2038
      %v2244 = vpop.f32.mrb[0].mxu0
      %v2245 = vadd.f32 0.0, %v2244
      %v2246 = vpop.f32.mrb[0].mxu0
      %v2247 = vadd.f32 0.0, %v2246
      %v2248 = vpop.f32.mrb[0].mxu0
      %v2249 = vadd.f32 0.0, %v2248
      %v2250 = vpop.f32.mrb[0].mxu0
      %v2251 = vadd.f32 0.0, %v2250
      %2252 = vmatprep.mubr.bf16.mxu0 0
      %2253 = vmatmul.mubr.bf16.gmra.mrb[0].mxu0 %v2041
      %v2254 = vpop.f32.mrb[0].mxu0
      %v2255 = vadd.f32 0.0, %v2254
      %v2256 = vpop.f32.mrb[0].mxu0
      %v2257 = vadd.f32 0.0, %v2256
      %v2258 = vpop.f32.mrb[0].mxu0
      %v2259 = vadd.f32 0.0, %v2258
      %v2260 = vpop.f32.mrb[0].mxu0
      %v2261 = vadd.f32 0.0, %v2260
      %2262 = vmatprep.mubr.bf16.mxu0 0
      %2263 = vmatmul.mubr.bf16.gmra.mrb[0].mxu0 %v2044
      %v2264 = vpop.f32.mrb[0].mxu0
      %v2265 = vadd.f32 0.0, %v2264
      %v2266 = vpop.f32.mrb[0].mxu0
      %v2267 = vadd.f32 0.0, %v2266
      %v2268 = vpop.f32.mrb[0].mxu0
      %v2269 = vadd.f32 0.0, %v2268
      %v2270 = vpop.f32.mrb[0].mxu0
      %v2271 = vadd.f32 0.0, %v2270
      %2272 = vmatprep.mubr.bf16.mxu0 0
      %2273 = vmatmul.mubr.bf16.gmra.mrb[0].mxu0 %v2047
      %v2274 = vpop.f32.mrb[0].mxu0
      %v2275 = vadd.f32 0.0, %v2274
      %v2276 = vpop.f32.mrb[0].mxu0
      %v2277 = vadd.f32 0.0, %v2276
      %v2278 = vpop.f32.mrb[0].mxu0
      %v2279 = vadd.f32 0.0, %v2278
      %v2280 = vpop.f32.mrb[0].mxu0
      %v2281 = vadd.f32 0.0, %v2280
      %2282 = vmatprep.mubr.bf16.mxu0 0
      %2283 = vmatmul.mubr.bf16.gmra.mrb[0].mxu0 %v2050
      %v2284 = vpop.f32.mrb[0].mxu0
      %v2285 = vadd.f32 0.0, %v2284
      %v2286 = vpop.f32.mrb[0].mxu0
      %v2287 = vadd.f32 0.0, %v2286
      %v2288 = vpop.f32.mrb[0].mxu0
      %v2289 = vadd.f32 0.0, %v2288
      %v2290 = vpop.f32.mrb[0].mxu0
      %v2291 = vadd.f32 0.0, %v2290
      %2292 = vmatprep.mubr.bf16.mxu0 0
      %2293 = vmatmul.mubr.bf16.gmra.mrb[0].mxu0 %v2053
      %v2294 = vpop.f32.mrb[0].mxu0
      %v2295 = vadd.f32 0.0, %v2294
      %v2296 = vpop.f32.mrb[0].mxu0
      %v2297 = vadd.f32 0.0, %v2296
      %v2298 = vpop.f32.mrb[0].mxu0
      %v2299 = vadd.f32 0.0, %v2298
      %v2300 = vpop.f32.mrb[0].mxu0
      %v2301 = vadd.f32 0.0, %v2300
      %2302 = vmatprep.mubr.bf16.mxu0 0
      %2303 = vmatmul.mubr.bf16.gmra.mrb[0].mxu0 %v2056
      %v2304 = vpop.f32.mrb[0].mxu0
      %v2305 = vadd.f32 0.0, %v2304
      %v2306 = vpop.f32.mrb[0].mxu0
      %v2307 = vadd.f32 0.0, %v2306
      %v2308 = vpop.f32.mrb[0].mxu0
      %v2309 = vadd.f32 0.0, %v2308
      %v2310 = vpop.f32.mrb[0].mxu0
      %v2311 = vadd.f32 0.0, %v2310
      %2312 = vmatprep.mubr.bf16.mxu0 0
      %2313 = vmatmul.mubr.bf16.gmra.mrb[0].mxu0 %v2059
      %v2314 = vpop.f32.mrb[0].mxu0
      %v2315 = vadd.f32 0.0, %v2314
      %v2316 = vpop.f32.mrb[0].mxu0
      %v2317 = vadd.f32 0.0, %v2316
      %v2318 = vpop.f32.mrb[0].mxu0
      %v2319 = vadd.f32 0.0, %v2318
      %v2320 = vpop.f32.mrb[0].mxu0
      %v2321 = vadd.f32 0.0, %v2320
      %2322 = vmatprep.mubr.bf16.mxu0 0
      %2323 = vmatmul.mubr.bf16.gmra.mrb[0].mxu0 %v2062
      %v2324 = vpop.f32.mrb[0].mxu0
      %v2325 = vadd.f32 0.0, %v2324
      %v2326 = vpop.f32.mrb[0].mxu0
      %v2327 = vadd.f32 0.0, %v2326
      %v2328 = vpop.f32.mrb[0].mxu0
      %v2329 = vadd.f32 0.0, %v2328
      %v2330 = vpop.f32.mrb[0].mxu0
      %v2331 = vadd.f32 0.0, %v2330
      %2332 = vmatprep.mubr.bf16.mxu0 0
      %2333 = vmatmul.mubr.bf16.gmra.mrb[0].mxu0 %v2065
      %v2334 = vpop.f32.mrb[0].mxu0
      %v2335 = vadd.f32 0.0, %v2334
      %v2336 = vpop.f32.mrb[0].mxu0
      %v2337 = vadd.f32 0.0, %v2336
      %v2338 = vpop.f32.mrb[0].mxu0
      %v2339 = vadd.f32 0.0, %v2338
      %v2340 = vpop.f32.mrb[0].mxu0
      %v2341 = vadd.f32 0.0, %v2340
      %2342 = vmatprep.mubr.bf16.mxu0 0
      %2343 = vmatmul.mubr.bf16.gmra.mrb[0].mxu0 %v2068
      %v2344 = vpop.f32.mrb[0].mxu0
      %v2345 = vadd.f32 0.0, %v2344
      %v2346 = vpop.f32.mrb[0].mxu0
      %v2347 = vadd.f32 0.0, %v2346
      %v2348 = vpop.f32.mrb[0].mxu0
      %v2349 = vadd.f32 0.0, %v2348
      %v2350 = vpop.f32.mrb[0].mxu0
      %v2351 = vadd.f32 0.0, %v2350
      %2352 = vmatprep.mubr.bf16.mxu0 0
      %2353 = vmatmul.mubr.bf16.gmra.mrb[0].mxu0 %v2071
      %v2354 = vpop.f32.mrb[0].mxu0
      %v2355 = vadd.f32 0.0, %v2354
      %v2356 = vpop.f32.mrb[0].mxu0
      %v2357 = vadd.f32 0.0, %v2356
      %v2358 = vpop.f32.mrb[0].mxu0
      %v2359 = vadd.f32 0.0, %v2358
      %v2360 = vpop.f32.mrb[0].mxu0
      %v2361 = vadd.f32 0.0, %v2360
      %2362 = vmatprep.mubr.bf16.mxu0 0
      %2363 = vmatmul.mubr.bf16.gmra.mrb[0].mxu0 %v2074
      %v2364 = vpop.f32.mrb[0].mxu0
      %v2365 = vadd.f32 0.0, %v2364
      %v2366 = vpop.f32.mrb[0].mxu0
      %v2367 = vadd.f32 0.0, %v2366
      %v2368 = vpop.f32.mrb[0].mxu0
      %v2369 = vadd.f32 0.0, %v2368
      %v2370 = vpop.f32.mrb[0].mxu0
      %v2371 = vadd.f32 0.0, %v2370
      %2372 = vmatprep.mubr.bf16.mxu0 0
      %2373 = vmatmul.mubr.bf16.gmra.mrb[0].mxu0 %v2077
      %v2374 = vpop.f32.mrb[0].mxu0
      %v2375 = vadd.f32 0.0, %v2374
      %v2376 = vpop.f32.mrb[0].mxu0
      %v2377 = vadd.f32 0.0, %v2376
      %v2378 = vpop.f32.mrb[0].mxu0
      %v2379 = vadd.f32 0.0, %v2378
      %v2380 = vpop.f32.mrb[0].mxu0
      %v2381 = vadd.f32 0.0, %v2380
      %2382 = vmatprep.mubr.bf16.mxu0 0
      %2383 = vmatmul.mubr.bf16.gmra.mrb[0].mxu0 %v2080
      %v2384 = vpop.f32.mrb[0].mxu0
      %v2385 = vadd.f32 0.0, %v2384
      %v2386 = vpop.f32.mrb[0].mxu0
      %v2387 = vadd.f32 0.0, %v2386
      %v2388 = vpop.f32.mrb[0].mxu0
      %v2389 = vadd.f32 0.0, %v2388
      %v2390 = vpop.f32.mrb[0].mxu0
      %v2391 = vadd.f32 0.0, %v2390
      %2392 = vmatprep.mubr.bf16.mxu0 0
      %2393 = vmatmul.mubr.bf16.gmra.mrb[0].mxu0 %v2083
      %v2394 = vpop.f32.mrb[0].mxu0
      %v2395 = vadd.f32 0.0, %v2394
      %v2396 = vpop.f32.mrb[0].mxu0
      %v2397 = vadd.f32 0.0, %v2396
      %v2398 = vpop.f32.mrb[0].mxu0
      %v2399 = vadd.f32 0.0, %v2398
      %v2400 = vpop.f32.mrb[0].mxu0
      %v2401 = vadd.f32 0.0, %v2400
      %2402 = vmatprep.mubr.bf16.mxu0 0
      %2403 = vmatmul.mubr.bf16.gmra.mrb[0].mxu0 %v2086
      %v2404 = vpop.f32.mrb[0].mxu0
      %v2405 = vadd.f32 0.0, %v2404
      %v2406 = vpop.f32.mrb[0].mxu0
      %v2407 = vadd.f32 0.0, %v2406
      %v2408 = vpop.f32.mrb[0].mxu0
      %v2409 = vadd.f32 0.0, %v2408
      %v2410 = vpop.f32.mrb[0].mxu0
      %v2411 = vadd.f32 0.0, %v2410
      %2412 = vmatprep.mubr.bf16.mxu0 0
      %2413 = vmatmul.mubr.bf16.gmra.mrb[0].mxu0 %v2089
      %v2414 = vpop.f32.mrb[0].mxu0
      %v2415 = vadd.f32 0.0, %v2414
      %v2416 = vpop.f32.mrb[0].mxu0
      %v2417 = vadd.f32 0.0, %v2416
      %v2418 = vpop.f32.mrb[0].mxu0
      %v2419 = vadd.f32 0.0, %v2418
      %v2420 = vpop.f32.mrb[0].mxu0
      %v2421 = vadd.f32 0.0, %v2420
      %2422 = vmatprep.mubr.bf16.mxu0 0
      %2423 = vmatmul.mubr.bf16.gmra.mrb[0].mxu0 %v2092
      %v2424 = vpop.f32.mrb[0].mxu0
      %v2425 = vadd.f32 0.0, %v2424
      %v2426 = vpop.f32.mrb[0].mxu0
      %v2427 = vadd.f32 0.0, %v2426
      %v2428 = vpop.f32.mrb[0].mxu0
      %v2429 = vadd.f32 0.0, %v2428
      %v2430 = vpop.f32.mrb[0].mxu0
      %v2431 = vadd.f32 0.0, %v2430
      %2432 = vmatprep.mubr.bf16.mxu0 0
      %2433 = vmatmul.mubr.bf16.gmra.mrb[0].mxu0 %v2095
      %v2434 = vpop.f32.mrb[0].mxu0
      %v2435 = vadd.f32 0.0, %v2434
      %v2436 = vpop.f32.mrb[0].mxu0
      %v2437 = vadd.f32 0.0, %v2436
      %v2438 = vpop.f32.mrb[0].mxu0
      %v2439 = vadd.f32 0.0, %v2438
      %v2440 = vpop.f32.mrb[0].mxu0
      %v2441 = vadd.f32 0.0, %v2440
      %2442 = vmatprep.mubr.bf16.mxu0 0
      %2443 = vmatmul.mubr.bf16.gmra.mrb[0].mxu0 %v2098
      %v2444 = vpop.f32.mrb[0].mxu0
      %v2445 = vadd.f32 0.0, %v2444
      %v2446 = vpop.f32.mrb[0].mxu0
      %v2447 = vadd.f32 0.0, %v2446
      %v2448 = vpop.f32.mrb[0].mxu0
      %v2449 = vadd.f32 0.0, %v2448
      %v2450 = vpop.f32.mrb[0].mxu0
      %v2451 = vadd.f32 0.0, %v2450
      %2452 = vdwg.mxu0
      %v2457 = vunpack.c.l.b16 %v509
      %v2458 = vunpack.c.h.b16 %v509
      %v2459 = vunpack.c.l.b16 %v510
      %v2460 = vunpack.c.h.b16 %v510
      %v2461 = vunpack.c.l.b16 %v511
      %v2462 = vunpack.c.h.b16 %v511
      %v2463 = vunpack.c.l.b16 %v512
      %v2464 = vunpack.c.h.b16 %v512
      %v2465 = vpack.c.b16 %v2459, %v2457
      %v2466 = vpack.c.b16 %v2460, %v2458
      %v2467 = vpack.c.b16 %v2463, %v2461
      %v2468 = vpack.c.b16 %v2464, %v2462
      %v2473 = vsel %vm826, %v513, 0
      %v2475 = vsel %vm826, %v514, 0
      %v2477 = vsel %vm826, %v515, 0
      %v2479 = vsel %vm826, %v516, 0
      %v2481 = vsel %vm826, %v517, 0
      %v2483 = vsel %vm826, %v518, 0
      %v2485 = vsel %vm826, %v519, 0
      %v2487 = vsel %vm826, %v520, 0
      %v2489 = vsel %vm826, %v521, 0
      %v2491 = vsel %vm826, %v522, 0
      %v2493 = vsel %vm826, %v523, 0
      %v2495 = vsel %vm826, %v524, 0
      %v2497 = vsel %vm826, %v525, 0
      %v2499 = vsel %vm826, %v526, 0
      %v2501 = vsel %vm826, %v527, 0
      %v2503 = vsel %vm826, %v528, 0
      %v2505 = vsel %vm826, %v529, 0
      %v2507 = vsel %vm826, %v530, 0
      %v2509 = vsel %vm826, %v531, 0
      %v2511 = vsel %vm826, %v532, 0
      %v2513 = vsel %vm826, %v533, 0
      %v2515 = vsel %vm826, %v534, 0
      %v2517 = vsel %vm826, %v535, 0
      %v2519 = vsel %vm826, %v536, 0
      %v2521 = vsel %vm826, %v537, 0
      %v2523 = vsel %vm826, %v538, 0
      %v2525 = vsel %vm826, %v539, 0
      %v2527 = vsel %vm826, %v540, 0
      %v2529 = vsel %vm826, %v541, 0
      %v2531 = vsel %vm826, %v542, 0
      %v2533 = vsel %vm826, %v543, 0
      %v2535 = vsel %vm826, %v544, 0
      %2537 = vmatprep.subr.bf16.mxu0 %v2466
      %2538 = vmatpush1.bf16.msra.mxu0 %v2465
      %2539 = vmatprep.subr.bf16.mxu0 %v2468
      %2540 = vmatpush1.bf16.msra.mxu0 %v2467
      %2541 = vmatprep.subr.bf16.mxu0 0
      %2542 = vmatpush1.bf16.msra.mxu0 0
      %2543 = vmatprep.subr.bf16.mxu0 0
      %2544 = vmatpush1.bf16.msra.mxu0 0
      %2545 = vmatprep.subr.bf16.mxu0 0
      %2546 = vmatpush1.bf16.msra.mxu0 0
      %2547 = vmatprep.subr.bf16.mxu0 0
      %2548 = vmatpush1.bf16.msra.mxu0 0
      %2549 = vmatprep.subr.bf16.mxu0 0
      %2550 = vmatpush1.bf16.msra.mxu0 0
      %2551 = vmatprep.subr.bf16.mxu0 0
      %2552 = vmatpush1.bf16.msra.mxu0 0
      %2553 = vmatprep.subr.bf16.mxu0 0
      %2554 = vmatpush1.bf16.msra.mxu0 0
      %2555 = vmatprep.subr.bf16.mxu0 0
      %2556 = vmatpush1.bf16.msra.mxu0 0
      %2557 = vmatprep.subr.bf16.mxu0 0
      %2558 = vmatpush1.bf16.msra.mxu0 0
      %2559 = vmatprep.subr.bf16.mxu0 0
      %2560 = vmatpush1.bf16.msra.mxu0 0
      %2561 = vmatprep.subr.bf16.mxu0 0
      %2562 = vmatpush1.bf16.msra.mxu0 0
      %2563 = vmatprep.subr.bf16.mxu0 0
      %2564 = vmatpush1.bf16.msra.mxu0 0
      %2565 = vmatprep.subr.bf16.mxu0 0
      %2566 = vmatpush1.bf16.msra.mxu0 0
      %2567 = vmatprep.subr.bf16.mxu0 0
      %2568 = vmatpush1.bf16.msra.mxu0 0
      %2569 = vmatprep.mubr.bf16.mxu0 0
      %2570 = vmatmul.mubr.bf16.gmra.mrb[0].mxu0 %v2473
      %v2571 = vpop.f32.mrb[0].mxu0
      %v2572 = vadd.f32 %v958, %v2571
      %v2573 = vpop.f32.mrb[0].mxu0
      %v2574 = vadd.f32 %v960, %v2573
      %v2575 = vpop.f32.mrb[0].mxu0
      %v2576 = vadd.f32 %v962, %v2575
      %v2577 = vpop.f32.mrb[0].mxu0
      %v2578 = vadd.f32 %v964, %v2577
      %2579 = vmatprep.mubr.bf16.mxu0 0
      %2580 = vmatmul.mubr.bf16.gmra.mrb[0].mxu0 %v2475
      %v2581 = vpop.f32.mrb[0].mxu0
      %v2582 = vadd.f32 %v968, %v2581
      %v2583 = vpop.f32.mrb[0].mxu0
      %v2584 = vadd.f32 %v970, %v2583
      %v2585 = vpop.f32.mrb[0].mxu0
      %v2586 = vadd.f32 %v972, %v2585
      %v2587 = vpop.f32.mrb[0].mxu0
      %v2588 = vadd.f32 %v974, %v2587
      %2589 = vmatprep.mubr.bf16.mxu0 0
      %2590 = vmatmul.mubr.bf16.gmra.mrb[0].mxu0 %v2477
      %v2591 = vpop.f32.mrb[0].mxu0
      %v2592 = vadd.f32 %v978, %v2591
      %v2593 = vpop.f32.mrb[0].mxu0
      %v2594 = vadd.f32 %v980, %v2593
      %v2595 = vpop.f32.mrb[0].mxu0
      %v2596 = vadd.f32 %v982, %v2595
      %v2597 = vpop.f32.mrb[0].mxu0
      %v2598 = vadd.f32 %v984, %v2597
      %2599 = vmatprep.mubr.bf16.mxu0 0
      %2600 = vmatmul.mubr.bf16.gmra.mrb[0].mxu0 %v2479
      %v2601 = vpop.f32.mrb[0].mxu0
      %v2602 = vadd.f32 %v988, %v2601
      %v2603 = vpop.f32.mrb[0].mxu0
      %v2604 = vadd.f32 %v990, %v2603
      %v2605 = vpop.f32.mrb[0].mxu0
      %v2606 = vadd.f32 %v992, %v2605
      %v2607 = vpop.f32.mrb[0].mxu0
      %v2608 = vadd.f32 %v994, %v2607
      %2609 = vmatprep.mubr.bf16.mxu0 0
      %2610 = vmatmul.mubr.bf16.gmra.mrb[0].mxu0 %v2481
      %v2611 = vpop.f32.mrb[0].mxu0
      %v2612 = vadd.f32 %v998, %v2611
      %v2613 = vpop.f32.mrb[0].mxu0
      %v2614 = vadd.f32 %v1000, %v2613
      %v2615 = vpop.f32.mrb[0].mxu0
      %v2616 = vadd.f32 %v1002, %v2615
      %v2617 = vpop.f32.mrb[0].mxu0
      %v2618 = vadd.f32 %v1004, %v2617
      %2619 = vmatprep.mubr.bf16.mxu0 0
      %2620 = vmatmul.mubr.bf16.gmra.mrb[0].mxu0 %v2483
      %v2621 = vpop.f32.mrb[0].mxu0
      %v2622 = vadd.f32 %v1008, %v2621
      %v2623 = vpop.f32.mrb[0].mxu0
      %v2624 = vadd.f32 %v1010, %v2623
      %v2625 = vpop.f32.mrb[0].mxu0
      %v2626 = vadd.f32 %v1012, %v2625
      %v2627 = vpop.f32.mrb[0].mxu0
      %v2628 = vadd.f32 %v1014, %v2627
      %2629 = vmatprep.mubr.bf16.mxu0 0
      %2630 = vmatmul.mubr.bf16.gmra.mrb[0].mxu0 %v2485
      %v2631 = vpop.f32.mrb[0].mxu0
      %v2632 = vadd.f32 %v1018, %v2631
      %v2633 = vpop.f32.mrb[0].mxu0
      %v2634 = vadd.f32 %v1020, %v2633
      %v2635 = vpop.f32.mrb[0].mxu0
      %v2636 = vadd.f32 %v1022, %v2635
      %v2637 = vpop.f32.mrb[0].mxu0
      %v2638 = vadd.f32 %v1024, %v2637
      %2639 = vmatprep.mubr.bf16.mxu0 0
      %2640 = vmatmul.mubr.bf16.gmra.mrb[0].mxu0 %v2487
      %v2641 = vpop.f32.mrb[0].mxu0
      %v2642 = vadd.f32 %v1028, %v2641
      %v2643 = vpop.f32.mrb[0].mxu0
      %v2644 = vadd.f32 %v1030, %v2643
      %v2645 = vpop.f32.mrb[0].mxu0
      %v2646 = vadd.f32 %v1032, %v2645
      %v2647 = vpop.f32.mrb[0].mxu0
      %v2648 = vadd.f32 %v1034, %v2647
      %2649 = vmatprep.mubr.bf16.mxu0 0
      %2650 = vmatmul.mubr.bf16.gmra.mrb[0].mxu0 %v2489
      %v2651 = vpop.f32.mrb[0].mxu0
      %v2652 = vadd.f32 %v1038, %v2651
      %v2653 = vpop.f32.mrb[0].mxu0
      %v2654 = vadd.f32 %v1040, %v2653
      %v2655 = vpop.f32.mrb[0].mxu0
      %v2656 = vadd.f32 %v1042, %v2655
      %v2657 = vpop.f32.mrb[0].mxu0
      %v2658 = vadd.f32 %v1044, %v2657
      %2659 = vmatprep.mubr.bf16.mxu0 0
      %2660 = vmatmul.mubr.bf16.gmra.mrb[0].mxu0 %v2491
      %v2661 = vpop.f32.mrb[0].mxu0
      %v2662 = vadd.f32 %v1048, %v2661
      %v2663 = vpop.f32.mrb[0].mxu0
      %v2664 = vadd.f32 %v1050, %v2663
      %v2665 = vpop.f32.mrb[0].mxu0
      %v2666 = vadd.f32 %v1052, %v2665
      %v2667 = vpop.f32.mrb[0].mxu0
      %v2668 = vadd.f32 %v1054, %v2667
      %2669 = vmatprep.mubr.bf16.mxu0 0
      %2670 = vmatmul.mubr.bf16.gmra.mrb[0].mxu0 %v2493
      %v2671 = vpop.f32.mrb[0].mxu0
      %v2672 = vadd.f32 %v1058, %v2671
      %v2673 = vpop.f32.mrb[0].mxu0
      %v2674 = vadd.f32 %v1060, %v2673
      %v2675 = vpop.f32.mrb[0].mxu0
      %v2676 = vadd.f32 %v1062, %v2675
      %v2677 = vpop.f32.mrb[0].mxu0
      %v2678 = vadd.f32 %v1064, %v2677
      %2679 = vmatprep.mubr.bf16.mxu0 0
      %2680 = vmatmul.mubr.bf16.gmra.mrb[0].mxu0 %v2495
      %v2681 = vpop.f32.mrb[0].mxu0
      %v2682 = vadd.f32 %v1068, %v2681
      %v2683 = vpop.f32.mrb[0].mxu0
      %v2684 = vadd.f32 %v1070, %v2683
      %v2685 = vpop.f32.mrb[0].mxu0
      %v2686 = vadd.f32 %v1072, %v2685
      %v2687 = vpop.f32.mrb[0].mxu0
      %v2688 = vadd.f32 %v1074, %v2687
      %2689 = vmatprep.mubr.bf16.mxu0 0
      %2690 = vmatmul.mubr.bf16.gmra.mrb[0].mxu0 %v2497
      %v2691 = vpop.f32.mrb[0].mxu0
      %v2692 = vadd.f32 %v1078, %v2691
      %v2693 = vpop.f32.mrb[0].mxu0
      %v2694 = vadd.f32 %v1080, %v2693
      %v2695 = vpop.f32.mrb[0].mxu0
      %v2696 = vadd.f32 %v1082, %v2695
      %v2697 = vpop.f32.mrb[0].mxu0
      %v2698 = vadd.f32 %v1084, %v2697
      %2699 = vmatprep.mubr.bf16.mxu0 0
      %2700 = vmatmul.mubr.bf16.gmra.mrb[0].mxu0 %v2499
      %v2701 = vpop.f32.mrb[0].mxu0
      %v2702 = vadd.f32 %v1088, %v2701
      %v2703 = vpop.f32.mrb[0].mxu0
      %v2704 = vadd.f32 %v1090, %v2703
      %v2705 = vpop.f32.mrb[0].mxu0
      %v2706 = vadd.f32 %v1092, %v2705
      %v2707 = vpop.f32.mrb[0].mxu0
      %v2708 = vadd.f32 %v1094, %v2707
      %2709 = vmatprep.mubr.bf16.mxu0 0
      %2710 = vmatmul.mubr.bf16.gmra.mrb[0].mxu0 %v2501
      %v2711 = vpop.f32.mrb[0].mxu0
      %v2712 = vadd.f32 %v1098, %v2711
      %v2713 = vpop.f32.mrb[0].mxu0
      %v2714 = vadd.f32 %v1100, %v2713
      %v2715 = vpop.f32.mrb[0].mxu0
      %v2716 = vadd.f32 %v1102, %v2715
      %v2717 = vpop.f32.mrb[0].mxu0
      %v2718 = vadd.f32 %v1104, %v2717
      %2719 = vmatprep.mubr.bf16.mxu0 0
      %2720 = vmatmul.mubr.bf16.gmra.mrb[0].mxu0 %v2503
      %v2721 = vpop.f32.mrb[0].mxu0
      %v2722 = vadd.f32 %v1108, %v2721
      %v2723 = vpop.f32.mrb[0].mxu0
      %v2724 = vadd.f32 %v1110, %v2723
      %v2725 = vpop.f32.mrb[0].mxu0
      %v2726 = vadd.f32 %v1112, %v2725
      %v2727 = vpop.f32.mrb[0].mxu0
      %v2728 = vadd.f32 %v1114, %v2727
      %2729 = vmatprep.mubr.bf16.mxu0 0
      %2730 = vmatmul.mubr.bf16.gmra.mrb[0].mxu0 %v2505
      %v2731 = vpop.f32.mrb[0].mxu0
      %v2732 = vadd.f32 %v1118, %v2731
      %v2733 = vpop.f32.mrb[0].mxu0
      %v2734 = vadd.f32 %v1120, %v2733
      %v2735 = vpop.f32.mrb[0].mxu0
      %v2736 = vadd.f32 %v1122, %v2735
      %v2737 = vpop.f32.mrb[0].mxu0
      %v2738 = vadd.f32 %v1124, %v2737
      %2739 = vmatprep.mubr.bf16.mxu0 0
      %2740 = vmatmul.mubr.bf16.gmra.mrb[0].mxu0 %v2507
      %v2741 = vpop.f32.mrb[0].mxu0
      %v2742 = vadd.f32 %v1128, %v2741
      %v2743 = vpop.f32.mrb[0].mxu0
      %v2744 = vadd.f32 %v1130, %v2743
      %v2745 = vpop.f32.mrb[0].mxu0
      %v2746 = vadd.f32 %v1132, %v2745
      %v2747 = vpop.f32.mrb[0].mxu0
      %v2748 = vadd.f32 %v1134, %v2747
      %2749 = vmatprep.mubr.bf16.mxu0 0
      %2750 = vmatmul.mubr.bf16.gmra.mrb[0].mxu0 %v2509
      %v2751 = vpop.f32.mrb[0].mxu0
      %v2752 = vadd.f32 %v1138, %v2751
      %v2753 = vpop.f32.mrb[0].mxu0
      %v2754 = vadd.f32 %v1140, %v2753
      %v2755 = vpop.f32.mrb[0].mxu0
      %v2756 = vadd.f32 %v1142, %v2755
      %v2757 = vpop.f32.mrb[0].mxu0
      %v2758 = vadd.f32 %v1144, %v2757
      %2759 = vmatprep.mubr.bf16.mxu0 0
      %2760 = vmatmul.mubr.bf16.gmra.mrb[0].mxu0 %v2511
      %v2761 = vpop.f32.mrb[0].mxu0
      %v2762 = vadd.f32 %v1148, %v2761
      %v2763 = vpop.f32.mrb[0].mxu0
      %v2764 = vadd.f32 %v1150, %v2763
      %v2765 = vpop.f32.mrb[0].mxu0
      %v2766 = vadd.f32 %v1152, %v2765
      %v2767 = vpop.f32.mrb[0].mxu0
      %v2768 = vadd.f32 %v1154, %v2767
      %2769 = vmatprep.mubr.bf16.mxu0 0
      %2770 = vmatmul.mubr.bf16.gmra.mrb[0].mxu0 %v2513
      %v2771 = vpop.f32.mrb[0].mxu0
      %v2772 = vadd.f32 %v1158, %v2771
      %v2773 = vpop.f32.mrb[0].mxu0
      %v2774 = vadd.f32 %v1160, %v2773
      %v2775 = vpop.f32.mrb[0].mxu0
      %v2776 = vadd.f32 %v1162, %v2775
      %v2777 = vpop.f32.mrb[0].mxu0
      %v2778 = vadd.f32 %v1164, %v2777
      %2779 = vmatprep.mubr.bf16.mxu0 0
      %2780 = vmatmul.mubr.bf16.gmra.mrb[0].mxu0 %v2515
      %v2781 = vpop.f32.mrb[0].mxu0
      %v2782 = vadd.f32 %v1168, %v2781
      %v2783 = vpop.f32.mrb[0].mxu0
      %v2784 = vadd.f32 %v1170, %v2783
      %v2785 = vpop.f32.mrb[0].mxu0
      %v2786 = vadd.f32 %v1172, %v2785
      %v2787 = vpop.f32.mrb[0].mxu0
      %v2788 = vadd.f32 %v1174, %v2787
      %2789 = vmatprep.mubr.bf16.mxu0 0
      %2790 = vmatmul.mubr.bf16.gmra.mrb[0].mxu0 %v2517
      %v2791 = vpop.f32.mrb[0].mxu0
      %v2792 = vadd.f32 %v1178, %v2791
      %v2793 = vpop.f32.mrb[0].mxu0
      %v2794 = vadd.f32 %v1180, %v2793
      %v2795 = vpop.f32.mrb[0].mxu0
      %v2796 = vadd.f32 %v1182, %v2795
      %v2797 = vpop.f32.mrb[0].mxu0
      %v2798 = vadd.f32 %v1184, %v2797
      %2799 = vmatprep.mubr.bf16.mxu0 0
      %2800 = vmatmul.mubr.bf16.gmra.mrb[0].mxu0 %v2519
      %v2801 = vpop.f32.mrb[0].mxu0
      %v2802 = vadd.f32 %v1188, %v2801
      %v2803 = vpop.f32.mrb[0].mxu0
      %v2804 = vadd.f32 %v1190, %v2803
      %v2805 = vpop.f32.mrb[0].mxu0
      %v2806 = vadd.f32 %v1192, %v2805
      %v2807 = vpop.f32.mrb[0].mxu0
      %v2808 = vadd.f32 %v1194, %v2807
      %2809 = vmatprep.mubr.bf16.mxu0 0
      %2810 = vmatmul.mubr.bf16.gmra.mrb[0].mxu0 %v2521
      %v2811 = vpop.f32.mrb[0].mxu0
      %v2812 = vadd.f32 %v1198, %v2811
      %v2813 = vpop.f32.mrb[0].mxu0
      %v2814 = vadd.f32 %v1200, %v2813
      %v2815 = vpop.f32.mrb[0].mxu0
      %v2816 = vadd.f32 %v1202, %v2815
      %v2817 = vpop.f32.mrb[0].mxu0
      %v2818 = vadd.f32 %v1204, %v2817
      %2819 = vmatprep.mubr.bf16.mxu0 0
      %2820 = vmatmul.mubr.bf16.gmra.mrb[0].mxu0 %v2523
      %v2821 = vpop.f32.mrb[0].mxu0
      %v2822 = vadd.f32 %v1208, %v2821
      %v2823 = vpop.f32.mrb[0].mxu0
      %v2824 = vadd.f32 %v1210, %v2823
      %v2825 = vpop.f32.mrb[0].mxu0
      %v2826 = vadd.f32 %v1212, %v2825
      %v2827 = vpop.f32.mrb[0].mxu0
      %v2828 = vadd.f32 %v1214, %v2827
      %2829 = vmatprep.mubr.bf16.mxu0 0
      %2830 = vmatmul.mubr.bf16.gmra.mrb[0].mxu0 %v2525
      %v2831 = vpop.f32.mrb[0].mxu0
      %v2832 = vadd.f32 %v1218, %v2831
      %v2833 = vpop.f32.mrb[0].mxu0
      %v2834 = vadd.f32 %v1220, %v2833
      %v2835 = vpop.f32.mrb[0].mxu0
      %v2836 = vadd.f32 %v1222, %v2835
      %v2837 = vpop.f32.mrb[0].mxu0
      %v2838 = vadd.f32 %v1224, %v2837
      %2839 = vmatprep.mubr.bf16.mxu0 0
      %2840 = vmatmul.mubr.bf16.gmra.mrb[0].mxu0 %v2527
      %v2841 = vpop.f32.mrb[0].mxu0
      %v2842 = vadd.f32 %v1228, %v2841
      %v2843 = vpop.f32.mrb[0].mxu0
      %v2844 = vadd.f32 %v1230, %v2843
      %v2845 = vpop.f32.mrb[0].mxu0
      %v2846 = vadd.f32 %v1232, %v2845
      %v2847 = vpop.f32.mrb[0].mxu0
      %v2848 = vadd.f32 %v1234, %v2847
      %2849 = vmatprep.mubr.bf16.mxu0 0
      %2850 = vmatmul.mubr.bf16.gmra.mrb[0].mxu0 %v2529
      %v2851 = vpop.f32.mrb[0].mxu0
      %v2852 = vadd.f32 %v1238, %v2851
      %v2853 = vpop.f32.mrb[0].mxu0
      %v2854 = vadd.f32 %v1240, %v2853
      %v2855 = vpop.f32.mrb[0].mxu0
      %v2856 = vadd.f32 %v1242, %v2855
      %v2857 = vpop.f32.mrb[0].mxu0
      %v2858 = vadd.f32 %v1244, %v2857
      %2859 = vmatprep.mubr.bf16.mxu0 0
      %2860 = vmatmul.mubr.bf16.gmra.mrb[0].mxu0 %v2531
      %v2861 = vpop.f32.mrb[0].mxu0
      %v2862 = vadd.f32 %v1248, %v2861
      %v2863 = vpop.f32.mrb[0].mxu0
      %v2864 = vadd.f32 %v1250, %v2863
      %v2865 = vpop.f32.mrb[0].mxu0
      %v2866 = vadd.f32 %v1252, %v2865
      %v2867 = vpop.f32.mrb[0].mxu0
      %v2868 = vadd.f32 %v1254, %v2867
      %2869 = vmatprep.mubr.bf16.mxu0 0
      %2870 = vmatmul.mubr.bf16.gmra.mrb[0].mxu0 %v2533
      %v2871 = vpop.f32.mrb[0].mxu0
      %v2872 = vadd.f32 %v1258, %v2871
      %v2873 = vpop.f32.mrb[0].mxu0
      %v2874 = vadd.f32 %v1260, %v2873
      %v2875 = vpop.f32.mrb[0].mxu0
      %v2876 = vadd.f32 %v1262, %v2875
      %v2877 = vpop.f32.mrb[0].mxu0
      %v2878 = vadd.f32 %v1264, %v2877
      %2879 = vmatprep.mubr.bf16.mxu0 0
      %2880 = vmatmul.mubr.bf16.gmra.mrb[0].mxu0 %v2535
      %v2881 = vpop.f32.mrb[0].mxu0
      %v2882 = vadd.f32 %v1268, %v2881
      %v2883 = vpop.f32.mrb[0].mxu0
      %v2884 = vadd.f32 %v1270, %v2883
      %v2885 = vpop.f32.mrb[0].mxu0
      %v2886 = vadd.f32 %v1272, %v2885
      %v2887 = vpop.f32.mrb[0].mxu0
      %v2888 = vadd.f32 %v1274, %v2887
      %2889 = vdwg.mxu0
      %vm2890 = vcmask 1046528
      %v2891 = vrot.slane %v513, 1
      %v2892 = vrot.slane %v514, 1
      %v2893 = vsel %vm2890, %v2891, %v2892
      %v2894 = vrot.slane %v515, 1
      %v2895 = vsel %vm2890, %v2892, %v2894
      %v2896 = vrot.slane %v516, 1
      %v2897 = vsel %vm2890, %v2894, %v2896
      %v2898 = vrot.slane %v517, 1
      %v2899 = vsel %vm2890, %v2896, %v2898
      %v2900 = vrot.slane %v518, 1
      %v2901 = vsel %vm2890, %v2898, %v2900
      %v2902 = vrot.slane %v519, 1
      %v2903 = vsel %vm2890, %v2900, %v2902
      %v2904 = vrot.slane %v520, 1
      %v2905 = vsel %vm2890, %v2902, %v2904
      %v2906 = vrot.slane %v521, 1
      %v2907 = vsel %vm2890, %v2904, %v2906
      %v2908 = vrot.slane %v522, 1
      %v2909 = vsel %vm2890, %v2906, %v2908
      %v2910 = vrot.slane %v523, 1
      %v2911 = vsel %vm2890, %v2908, %v2910
      %v2912 = vrot.slane %v524, 1
      %v2913 = vsel %vm2890, %v2910, %v2912
      %v2914 = vrot.slane %v525, 1
      %v2915 = vsel %vm2890, %v2912, %v2914
      %v2916 = vrot.slane %v526, 1
      %v2917 = vsel %vm2890, %v2914, %v2916
      %v2918 = vrot.slane %v527, 1
      %v2919 = vsel %vm2890, %v2916, %v2918
      %v2920 = vrot.slane %v528, 1
      %v2921 = vsel %vm2890, %v2918, %v2920
      %v2922 = vrot.slane %v529, 1
      %v2923 = vsel %vm2890, %v2920, %v2922
      %v2924 = vrot.slane %v530, 1
      %v2925 = vsel %vm2890, %v2922, %v2924
      %v2926 = vrot.slane %v531, 1
      %v2927 = vsel %vm2890, %v2924, %v2926
      %v2928 = vrot.slane %v532, 1
      %v2929 = vsel %vm2890, %v2926, %v2928
      %v2930 = vrot.slane %v533, 1
      %v2931 = vsel %vm2890, %v2928, %v2930
      %v2932 = vrot.slane %v534, 1
      %v2933 = vsel %vm2890, %v2930, %v2932
      %v2934 = vrot.slane %v535, 1
      %v2935 = vsel %vm2890, %v2932, %v2934
      %v2936 = vrot.slane %v536, 1
      %v2937 = vsel %vm2890, %v2934, %v2936
      %v2938 = vrot.slane %v537, 1
      %v2939 = vsel %vm2890, %v2936, %v2938
      %v2940 = vrot.slane %v538, 1
      %v2941 = vsel %vm2890, %v2938, %v2940
      %v2942 = vrot.slane %v539, 1
      %v2943 = vsel %vm2890, %v2940, %v2942
      %v2944 = vrot.slane %v540, 1
      %v2945 = vsel %vm2890, %v2942, %v2944
      %v2946 = vrot.slane %v541, 1
      %v2947 = vsel %vm2890, %v2944, %v2946
      %v2948 = vrot.slane %v542, 1
      %v2949 = vsel %vm2890, %v2946, %v2948
      %v2950 = vrot.slane %v543, 1
      %v2951 = vsel %vm2890, %v2948, %v2950
      %v2952 = vrot.slane %v544, 1
      %v2953 = vsel %vm2890, %v2950, %v2952
      %v2958 = vunpack.c.l.b16 %v1277
      %v2959 = vunpack.c.h.b16 %v1277
      %v2960 = vunpack.c.l.b16 %v1278
      %v2961 = vunpack.c.h.b16 %v1278
      %v2962 = vunpack.c.l.b16 %v1279
      %v2963 = vunpack.c.h.b16 %v1279
      %v2964 = vunpack.c.l.b16 %v1280
      %v2965 = vunpack.c.h.b16 %v1280
      %v2966 = vpack.c.b16 %v2960, %v2958
      %v2967 = vpack.c.b16 %v2961, %v2959
      %v2968 = vpack.c.b16 %v2964, %v2962
      %v2969 = vpack.c.b16 %v2965, %v2963
      %v2975 = vsel %vm826, %v2893, 0
      %v2978 = vsel %vm826, %v2895, 0
      %v2981 = vsel %vm826, %v2897, 0
      %v2984 = vsel %vm826, %v2899, 0
      %v2987 = vsel %vm826, %v2901, 0
      %v2990 = vsel %vm826, %v2903, 0
      %v2993 = vsel %vm826, %v2905, 0
      %v2996 = vsel %vm826, %v2907, 0
      %v2999 = vsel %vm826, %v2909, 0
      %v3002 = vsel %vm826, %v2911, 0
      %v3005 = vsel %vm826, %v2913, 0
      %v3008 = vsel %vm826, %v2915, 0
      %v3011 = vsel %vm826, %v2917, 0
      %v3014 = vsel %vm826, %v2919, 0
      %v3017 = vsel %vm826, %v2921, 0
      %v3020 = vsel %vm826, %v2923, 0
      %v3023 = vsel %vm826, %v2925, 0
      %v3026 = vsel %vm826, %v2927, 0
      %v3029 = vsel %vm826, %v2929, 0
      %v3032 = vsel %vm826, %v2931, 0
      %v3035 = vsel %vm826, %v2933, 0
      %v3038 = vsel %vm826, %v2935, 0
      %v3041 = vsel %vm826, %v2937, 0
      %v3044 = vsel %vm826, %v2939, 0
      %v3047 = vsel %vm826, %v2941, 0
      %v3050 = vsel %vm826, %v2943, 0
      %v3053 = vsel %vm826, %v2945, 0
      %v3056 = vsel %vm826, %v2947, 0
      %v3059 = vsel %vm826, %v2949, 0
      %v3062 = vsel %vm826, %v2951, 0
      %v3065 = vsel %vm826, %v2953, 0
      %v3068 = vsel %vm826, %v2952, 0
      %3070 = vmatprep.subr.bf16.mxu0 %v2967
      %3071 = vmatpush1.bf16.msra.mxu0 %v2966
      %3072 = vmatprep.subr.bf16.mxu0 %v2969
      %3073 = vmatpush1.bf16.msra.mxu0 %v2968
      %3074 = vmatprep.subr.bf16.mxu0 0
      %3075 = vmatpush1.bf16.msra.mxu0 0
      %3076 = vmatprep.subr.bf16.mxu0 0
      %3077 = vmatpush1.bf16.msra.mxu0 0
      %3078 = vmatprep.subr.bf16.mxu0 0
      %3079 = vmatpush1.bf16.msra.mxu0 0
      %3080 = vmatprep.subr.bf16.mxu0 0
      %3081 = vmatpush1.bf16.msra.mxu0 0
      %3082 = vmatprep.subr.bf16.mxu0 0
      %3083 = vmatpush1.bf16.msra.mxu0 0
      %3084 = vmatprep.subr.bf16.mxu0 0
      %3085 = vmatpush1.bf16.msra.mxu0 0
      %3086 = vmatprep.subr.bf16.mxu0 0
      %3087 = vmatpush1.bf16.msra.mxu0 0
      %3088 = vmatprep.subr.bf16.mxu0 0
      %3089 = vmatpush1.bf16.msra.mxu0 0
      %3090 = vmatprep.subr.bf16.mxu0 0
      %3091 = vmatpush1.bf16.msra.mxu0 0
      %3092 = vmatprep.subr.bf16.mxu0 0
      %3093 = vmatpush1.bf16.msra.mxu0 0
      %3094 = vmatprep.subr.bf16.mxu0 0
      %3095 = vmatpush1.bf16.msra.mxu0 0
      %3096 = vmatprep.subr.bf16.mxu0 0
      %3097 = vmatpush1.bf16.msra.mxu0 0
      %3098 = vmatprep.subr.bf16.mxu0 0
      %3099 = vmatpush1.bf16.msra.mxu0 0
      %3100 = vmatprep.subr.bf16.mxu0 0
      %3101 = vmatpush1.bf16.msra.mxu0 0
      %3102 = vmatprep.mubr.bf16.mxu0 0
      %3103 = vmatmul.mubr.bf16.gmra.mrb[0].mxu0 %v2975
      %v3104 = vpop.f32.mrb[0].mxu0
      %v3105 = vadd.f32 %v1565, %v3104
      %v3106 = vpop.f32.mrb[0].mxu0
      %v3107 = vadd.f32 %v1567, %v3106
      %v3108 = vpop.f32.mrb[0].mxu0
      %v3109 = vadd.f32 %v1569, %v3108
      %v3110 = vpop.f32.mrb[0].mxu0
      %v3111 = vadd.f32 %v1571, %v3110
      %3112 = vmatprep.mubr.bf16.mxu0 0
      %3113 = vmatmul.mubr.bf16.gmra.mrb[0].mxu0 %v2978
      %v3114 = vpop.f32.mrb[0].mxu0
      %v3115 = vadd.f32 %v1575, %v3114
      %v3116 = vpop.f32.mrb[0].mxu0
      %v3117 = vadd.f32 %v1577, %v3116
      %v3118 = vpop.f32.mrb[0].mxu0
      %v3119 = vadd.f32 %v1579, %v3118
      %v3120 = vpop.f32.mrb[0].mxu0
      %v3121 = vadd.f32 %v1581, %v3120
      %3122 = vmatprep.mubr.bf16.mxu0 0
      %3123 = vmatmul.mubr.bf16.gmra.mrb[0].mxu0 %v2981
      %v3124 = vpop.f32.mrb[0].mxu0
      %v3125 = vadd.f32 %v1585, %v3124
      %v3126 = vpop.f32.mrb[0].mxu0
      %v3127 = vadd.f32 %v1587, %v3126
      %v3128 = vpop.f32.mrb[0].mxu0
      %v3129 = vadd.f32 %v1589, %v3128
      %v3130 = vpop.f32.mrb[0].mxu0
      %v3131 = vadd.f32 %v1591, %v3130
      %3132 = vmatprep.mubr.bf16.mxu0 0
      %3133 = vmatmul.mubr.bf16.gmra.mrb[0].mxu0 %v2984
      %v3134 = vpop.f32.mrb[0].mxu0
      %v3135 = vadd.f32 %v1595, %v3134
      %v3136 = vpop.f32.mrb[0].mxu0
      %v3137 = vadd.f32 %v1597, %v3136
      %v3138 = vpop.f32.mrb[0].mxu0
      %v3139 = vadd.f32 %v1599, %v3138
      %v3140 = vpop.f32.mrb[0].mxu0
      %v3141 = vadd.f32 %v1601, %v3140
      %3142 = vmatprep.mubr.bf16.mxu0 0
      %3143 = vmatmul.mubr.bf16.gmra.mrb[0].mxu0 %v2987
      %v3144 = vpop.f32.mrb[0].mxu0
      %v3145 = vadd.f32 %v1605, %v3144
      %v3146 = vpop.f32.mrb[0].mxu0
      %v3147 = vadd.f32 %v1607, %v3146
      %v3148 = vpop.f32.mrb[0].mxu0
      %v3149 = vadd.f32 %v1609, %v3148
      %v3150 = vpop.f32.mrb[0].mxu0
      %v3151 = vadd.f32 %v1611, %v3150
      %3152 = vmatprep.mubr.bf16.mxu0 0
      %3153 = vmatmul.mubr.bf16.gmra.mrb[0].mxu0 %v2990
      %v3154 = vpop.f32.mrb[0].mxu0
      %v3155 = vadd.f32 %v1615, %v3154
      %v3156 = vpop.f32.mrb[0].mxu0
      %v3157 = vadd.f32 %v1617, %v3156
      %v3158 = vpop.f32.mrb[0].mxu0
      %v3159 = vadd.f32 %v1619, %v3158
      %v3160 = vpop.f32.mrb[0].mxu0
      %v3161 = vadd.f32 %v1621, %v3160
      %3162 = vmatprep.mubr.bf16.mxu0 0
      %3163 = vmatmul.mubr.bf16.gmra.mrb[0].mxu0 %v2993
      %v3164 = vpop.f32.mrb[0].mxu0
      %v3165 = vadd.f32 %v1625, %v3164
      %v3166 = vpop.f32.mrb[0].mxu0
      %v3167 = vadd.f32 %v1627, %v3166
      %v3168 = vpop.f32.mrb[0].mxu0
      %v3169 = vadd.f32 %v1629, %v3168
      %v3170 = vpop.f32.mrb[0].mxu0
      %v3171 = vadd.f32 %v1631, %v3170
      %3172 = vmatprep.mubr.bf16.mxu0 0
      %3173 = vmatmul.mubr.bf16.gmra.mrb[0].mxu0 %v2996
      %v3174 = vpop.f32.mrb[0].mxu0
      %v3175 = vadd.f32 %v1635, %v3174
      %v3176 = vpop.f32.mrb[0].mxu0
      %v3177 = vadd.f32 %v1637, %v3176
      %v3178 = vpop.f32.mrb[0].mxu0
      %v3179 = vadd.f32 %v1639, %v3178
      %v3180 = vpop.f32.mrb[0].mxu0
      %v3181 = vadd.f32 %v1641, %v3180
      %3182 = vmatprep.mubr.bf16.mxu0 0
      %3183 = vmatmul.mubr.bf16.gmra.mrb[0].mxu0 %v2999
      %v3184 = vpop.f32.mrb[0].mxu0
      %v3185 = vadd.f32 %v1645, %v3184
      %v3186 = vpop.f32.mrb[0].mxu0
      %v3187 = vadd.f32 %v1647, %v3186
      %v3188 = vpop.f32.mrb[0].mxu0
      %v3189 = vadd.f32 %v1649, %v3188
      %v3190 = vpop.f32.mrb[0].mxu0
      %v3191 = vadd.f32 %v1651, %v3190
      %3192 = vmatprep.mubr.bf16.mxu0 0
      %3193 = vmatmul.mubr.bf16.gmra.mrb[0].mxu0 %v3002
      %v3194 = vpop.f32.mrb[0].mxu0
      %v3195 = vadd.f32 %v1655, %v3194
      %v3196 = vpop.f32.mrb[0].mxu0
      %v3197 = vadd.f32 %v1657, %v3196
      %v3198 = vpop.f32.mrb[0].mxu0
      %v3199 = vadd.f32 %v1659, %v3198
      %v3200 = vpop.f32.mrb[0].mxu0
      %v3201 = vadd.f32 %v1661, %v3200
      %3202 = vmatprep.mubr.bf16.mxu0 0
      %3203 = vmatmul.mubr.bf16.gmra.mrb[0].mxu0 %v3005
      %v3204 = vpop.f32.mrb[0].mxu0
      %v3205 = vadd.f32 %v1665, %v3204
      %v3206 = vpop.f32.mrb[0].mxu0
      %v3207 = vadd.f32 %v1667, %v3206
      %v3208 = vpop.f32.mrb[0].mxu0
      %v3209 = vadd.f32 %v1669, %v3208
      %v3210 = vpop.f32.mrb[0].mxu0
      %v3211 = vadd.f32 %v1671, %v3210
      %3212 = vmatprep.mubr.bf16.mxu0 0
      %3213 = vmatmul.mubr.bf16.gmra.mrb[0].mxu0 %v3008
      %v3214 = vpop.f32.mrb[0].mxu0
      %v3215 = vadd.f32 %v1675, %v3214
      %v3216 = vpop.f32.mrb[0].mxu0
      %v3217 = vadd.f32 %v1677, %v3216
      %v3218 = vpop.f32.mrb[0].mxu0
      %v3219 = vadd.f32 %v1679, %v3218
      %v3220 = vpop.f32.mrb[0].mxu0
      %v3221 = vadd.f32 %v1681, %v3220
      %3222 = vmatprep.mubr.bf16.mxu0 0
      %3223 = vmatmul.mubr.bf16.gmra.mrb[0].mxu0 %v3011
      %v3224 = vpop.f32.mrb[0].mxu0
      %v3225 = vadd.f32 %v1685, %v3224
      %v3226 = vpop.f32.mrb[0].mxu0
      %v3227 = vadd.f32 %v1687, %v3226
      %v3228 = vpop.f32.mrb[0].mxu0
      %v3229 = vadd.f32 %v1689, %v3228
      %v3230 = vpop.f32.mrb[0].mxu0
      %v3231 = vadd.f32 %v1691, %v3230
      %3232 = vmatprep.mubr.bf16.mxu0 0
      %3233 = vmatmul.mubr.bf16.gmra.mrb[0].mxu0 %v3014
      %v3234 = vpop.f32.mrb[0].mxu0
      %v3235 = vadd.f32 %v1695, %v3234
      %v3236 = vpop.f32.mrb[0].mxu0
      %v3237 = vadd.f32 %v1697, %v3236
      %v3238 = vpop.f32.mrb[0].mxu0
      %v3239 = vadd.f32 %v1699, %v3238
      %v3240 = vpop.f32.mrb[0].mxu0
      %v3241 = vadd.f32 %v1701, %v3240
      %3242 = vmatprep.mubr.bf16.mxu0 0
      %3243 = vmatmul.mubr.bf16.gmra.mrb[0].mxu0 %v3017
      %v3244 = vpop.f32.mrb[0].mxu0
      %v3245 = vadd.f32 %v1705, %v3244
      %v3246 = vpop.f32.mrb[0].mxu0
      %v3247 = vadd.f32 %v1707, %v3246
      %v3248 = vpop.f32.mrb[0].mxu0
      %v3249 = vadd.f32 %v1709, %v3248
      %v3250 = vpop.f32.mrb[0].mxu0
      %v3251 = vadd.f32 %v1711, %v3250
      %3252 = vmatprep.mubr.bf16.mxu0 0
      %3253 = vmatmul.mubr.bf16.gmra.mrb[0].mxu0 %v3020
      %v3254 = vpop.f32.mrb[0].mxu0
      %v3255 = vadd.f32 %v1715, %v3254
      %v3256 = vpop.f32.mrb[0].mxu0
      %v3257 = vadd.f32 %v1717, %v3256
      %v3258 = vpop.f32.mrb[0].mxu0
      %v3259 = vadd.f32 %v1719, %v3258
      %v3260 = vpop.f32.mrb[0].mxu0
      %v3261 = vadd.f32 %v1721, %v3260
      %3262 = vmatprep.mubr.bf16.mxu0 0
      %3263 = vmatmul.mubr.bf16.gmra.mrb[0].mxu0 %v3023
      %v3264 = vpop.f32.mrb[0].mxu0
      %v3265 = vadd.f32 %v1725, %v3264
      %v3266 = vpop.f32.mrb[0].mxu0
      %v3267 = vadd.f32 %v1727, %v3266
      %v3268 = vpop.f32.mrb[0].mxu0
      %v3269 = vadd.f32 %v1729, %v3268
      %v3270 = vpop.f32.mrb[0].mxu0
      %v3271 = vadd.f32 %v1731, %v3270
      %3272 = vmatprep.mubr.bf16.mxu0 0
      %3273 = vmatmul.mubr.bf16.gmra.mrb[0].mxu0 %v3026
      %v3274 = vpop.f32.mrb[0].mxu0
      %v3275 = vadd.f32 %v1735, %v3274
      %v3276 = vpop.f32.mrb[0].mxu0
      %v3277 = vadd.f32 %v1737, %v3276
      %v3278 = vpop.f32.mrb[0].mxu0
      %v3279 = vadd.f32 %v1739, %v3278
      %v3280 = vpop.f32.mrb[0].mxu0
      %v3281 = vadd.f32 %v1741, %v3280
      %3282 = vmatprep.mubr.bf16.mxu0 0
      %3283 = vmatmul.mubr.bf16.gmra.mrb[0].mxu0 %v3029
      %v3284 = vpop.f32.mrb[0].mxu0
      %v3285 = vadd.f32 %v1745, %v3284
      %v3286 = vpop.f32.mrb[0].mxu0
      %v3287 = vadd.f32 %v1747, %v3286
      %v3288 = vpop.f32.mrb[0].mxu0
      %v3289 = vadd.f32 %v1749, %v3288
      %v3290 = vpop.f32.mrb[0].mxu0
      %v3291 = vadd.f32 %v1751, %v3290
      %3292 = vmatprep.mubr.bf16.mxu0 0
      %3293 = vmatmul.mubr.bf16.gmra.mrb[0].mxu0 %v3032
      %v3294 = vpop.f32.mrb[0].mxu0
      %v3295 = vadd.f32 %v1755, %v3294
      %v3296 = vpop.f32.mrb[0].mxu0
      %v3297 = vadd.f32 %v1757, %v3296
      %v3298 = vpop.f32.mrb[0].mxu0
      %v3299 = vadd.f32 %v1759, %v3298
      %v3300 = vpop.f32.mrb[0].mxu0
      %v3301 = vadd.f32 %v1761, %v3300
      %3302 = vmatprep.mubr.bf16.mxu0 0
      %3303 = vmatmul.mubr.bf16.gmra.mrb[0].mxu0 %v3035
      %v3304 = vpop.f32.mrb[0].mxu0
      %v3305 = vadd.f32 %v1765, %v3304
      %v3306 = vpop.f32.mrb[0].mxu0
      %v3307 = vadd.f32 %v1767, %v3306
      %v3308 = vpop.f32.mrb[0].mxu0
      %v3309 = vadd.f32 %v1769, %v3308
      %v3310 = vpop.f32.mrb[0].mxu0
      %v3311 = vadd.f32 %v1771, %v3310
      %3312 = vmatprep.mubr.bf16.mxu0 0
      %3313 = vmatmul.mubr.bf16.gmra.mrb[0].mxu0 %v3038
      %v3314 = vpop.f32.mrb[0].mxu0
      %v3315 = vadd.f32 %v1775, %v3314
      %v3316 = vpop.f32.mrb[0].mxu0
      %v3317 = vadd.f32 %v1777, %v3316
      %v3318 = vpop.f32.mrb[0].mxu0
      %v3319 = vadd.f32 %v1779, %v3318
      %v3320 = vpop.f32.mrb[0].mxu0
      %v3321 = vadd.f32 %v1781, %v3320
      %3322 = vmatprep.mubr.bf16.mxu0 0
      %3323 = vmatmul.mubr.bf16.gmra.mrb[0].mxu0 %v3041
      %v3324 = vpop.f32.mrb[0].mxu0
      %v3325 = vadd.f32 %v1785, %v3324
      %v3326 = vpop.f32.mrb[0].mxu0
      %v3327 = vadd.f32 %v1787, %v3326
      %v3328 = vpop.f32.mrb[0].mxu0
      %v3329 = vadd.f32 %v1789, %v3328
      %v3330 = vpop.f32.mrb[0].mxu0
      %v3331 = vadd.f32 %v1791, %v3330
      %3332 = vmatprep.mubr.bf16.mxu0 0
      %3333 = vmatmul.mubr.bf16.gmra.mrb[0].mxu0 %v3044
      %v3334 = vpop.f32.mrb[0].mxu0
      %v3335 = vadd.f32 %v1795, %v3334
      %v3336 = vpop.f32.mrb[0].mxu0
      %v3337 = vadd.f32 %v1797, %v3336
      %v3338 = vpop.f32.mrb[0].mxu0
      %v3339 = vadd.f32 %v1799, %v3338
      %v3340 = vpop.f32.mrb[0].mxu0
      %v3341 = vadd.f32 %v1801, %v3340
      %3342 = vmatprep.mubr.bf16.mxu0 0
      %3343 = vmatmul.mubr.bf16.gmra.mrb[0].mxu0 %v3047
      %v3344 = vpop.f32.mrb[0].mxu0
      %v3345 = vadd.f32 %v1805, %v3344
      %v3346 = vpop.f32.mrb[0].mxu0
      %v3347 = vadd.f32 %v1807, %v3346
      %v3348 = vpop.f32.mrb[0].mxu0
      %v3349 = vadd.f32 %v1809, %v3348
      %v3350 = vpop.f32.mrb[0].mxu0
      %v3351 = vadd.f32 %v1811, %v3350
      %3352 = vmatprep.mubr.bf16.mxu0 0
      %3353 = vmatmul.mubr.bf16.gmra.mrb[0].mxu0 %v3050
      %v3354 = vpop.f32.mrb[0].mxu0
      %v3355 = vadd.f32 %v1815, %v3354
      %v3356 = vpop.f32.mrb[0].mxu0
      %v3357 = vadd.f32 %v1817, %v3356
      %v3358 = vpop.f32.mrb[0].mxu0
      %v3359 = vadd.f32 %v1819, %v3358
      %v3360 = vpop.f32.mrb[0].mxu0
      %v3361 = vadd.f32 %v1821, %v3360
      %3362 = vmatprep.mubr.bf16.mxu0 0
      %3363 = vmatmul.mubr.bf16.gmra.mrb[0].mxu0 %v3053
      %v3364 = vpop.f32.mrb[0].mxu0
      %v3365 = vadd.f32 %v1825, %v3364
      %v3366 = vpop.f32.mrb[0].mxu0
      %v3367 = vadd.f32 %v1827, %v3366
      %v3368 = vpop.f32.mrb[0].mxu0
      %v3369 = vadd.f32 %v1829, %v3368
      %v3370 = vpop.f32.mrb[0].mxu0
      %v3371 = vadd.f32 %v1831, %v3370
      %3372 = vmatprep.mubr.bf16.mxu0 0
      %3373 = vmatmul.mubr.bf16.gmra.mrb[0].mxu0 %v3056
      %v3374 = vpop.f32.mrb[0].mxu0
      %v3375 = vadd.f32 %v1835, %v3374
      %v3376 = vpop.f32.mrb[0].mxu0
      %v3377 = vadd.f32 %v1837, %v3376
      %v3378 = vpop.f32.mrb[0].mxu0
      %v3379 = vadd.f32 %v1839, %v3378
      %v3380 = vpop.f32.mrb[0].mxu0
      %v3381 = vadd.f32 %v1841, %v3380
      %3382 = vmatprep.mubr.bf16.mxu0 0
      %3383 = vmatmul.mubr.bf16.gmra.mrb[0].mxu0 %v3059
      %v3384 = vpop.f32.mrb[0].mxu0
      %v3385 = vadd.f32 %v1845, %v3384
      %v3386 = vpop.f32.mrb[0].mxu0
      %v3387 = vadd.f32 %v1847, %v3386
      %v3388 = vpop.f32.mrb[0].mxu0
      %v3389 = vadd.f32 %v1849, %v3388
      %v3390 = vpop.f32.mrb[0].mxu0
      %v3391 = vadd.f32 %v1851, %v3390
      %3392 = vmatprep.mubr.bf16.mxu0 0
      %3393 = vmatmul.mubr.bf16.gmra.mrb[0].mxu0 %v3062
      %v3394 = vpop.f32.mrb[0].mxu0
      %v3395 = vadd.f32 %v1855, %v3394
      %v3396 = vpop.f32.mrb[0].mxu0
      %v3397 = vadd.f32 %v1857, %v3396
      %v3398 = vpop.f32.mrb[0].mxu0
      %v3399 = vadd.f32 %v1859, %v3398
      %v3400 = vpop.f32.mrb[0].mxu0
      %v3401 = vadd.f32 %v1861, %v3400
      %3402 = vmatprep.mubr.bf16.mxu0 0
      %3403 = vmatmul.mubr.bf16.gmra.mrb[0].mxu0 %v3065
      %v3404 = vpop.f32.mrb[0].mxu0
      %v3405 = vadd.f32 %v1865, %v3404
      %v3406 = vpop.f32.mrb[0].mxu0
      %v3407 = vadd.f32 %v1867, %v3406
      %v3408 = vpop.f32.mrb[0].mxu0
      %v3409 = vadd.f32 %v1869, %v3408
      %v3410 = vpop.f32.mrb[0].mxu0
      %v3411 = vadd.f32 %v1871, %v3410
      %3412 = vmatprep.mubr.bf16.mxu0 0
      %3413 = vmatmul.mubr.bf16.gmra.mrb[0].mxu0 %v3068
      %v3414 = vpop.f32.mrb[0].mxu0
      %v3415 = vadd.f32 %v1875, %v3414
      %v3416 = vpop.f32.mrb[0].mxu0
      %v3417 = vadd.f32 %v1877, %v3416
      %v3418 = vpop.f32.mrb[0].mxu0
      %v3419 = vadd.f32 %v1879, %v3418
      %v3420 = vpop.f32.mrb[0].mxu0
      %v3421 = vadd.f32 %v1881, %v3420
      %3422 = vdwg.mxu0
      %v3423 = vadd.f32 %v2572, %v3105
      %v3424 = vadd.f32 %v2574, %v3107
      %v3425 = vadd.f32 %v2576, %v3109
      %v3426 = vadd.f32 %v2578, %v3111
      %v3427 = vadd.f32 %v2582, %v3115
      %v3428 = vadd.f32 %v2584, %v3117
      %v3429 = vadd.f32 %v2586, %v3119
      %v3430 = vadd.f32 %v2588, %v3121
      %v3431 = vadd.f32 %v2592, %v3125
      %v3432 = vadd.f32 %v2594, %v3127
      %v3433 = vadd.f32 %v2596, %v3129
      %v3434 = vadd.f32 %v2598, %v3131
      %v3435 = vadd.f32 %v2602, %v3135
      %v3436 = vadd.f32 %v2604, %v3137
      %v3437 = vadd.f32 %v2606, %v3139
      %v3438 = vadd.f32 %v2608, %v3141
      %v3439 = vadd.f32 %v2612, %v3145
      %v3440 = vadd.f32 %v2614, %v3147
      %v3441 = vadd.f32 %v2616, %v3149
      %v3442 = vadd.f32 %v2618, %v3151
      %v3443 = vadd.f32 %v2622, %v3155
      %v3444 = vadd.f32 %v2624, %v3157
      %v3445 = vadd.f32 %v2626, %v3159
      %v3446 = vadd.f32 %v2628, %v3161
      %v3447 = vadd.f32 %v2632, %v3165
      %v3448 = vadd.f32 %v2634, %v3167
      %v3449 = vadd.f32 %v2636, %v3169
      %v3450 = vadd.f32 %v2638, %v3171
      %v3451 = vadd.f32 %v2642, %v3175
      %v3452 = vadd.f32 %v2644, %v3177
      %v3453 = vadd.f32 %v2646, %v3179
      %v3454 = vadd.f32 %v2648, %v3181
      %v3455 = vadd.f32 %v2652, %v3185
      %v3456 = vadd.f32 %v2654, %v3187
      %v3457 = vadd.f32 %v2656, %v3189
      %v3458 = vadd.f32 %v2658, %v3191
      %v3459 = vadd.f32 %v2662, %v3195
      %v3460 = vadd.f32 %v2664, %v3197
      %v3461 = vadd.f32 %v2666, %v3199
      %v3462 = vadd.f32 %v2668, %v3201
      %v3463 = vadd.f32 %v2672, %v3205
      %v3464 = vadd.f32 %v2674, %v3207
      %v3465 = vadd.f32 %v2676, %v3209
      %v3466 = vadd.f32 %v2678, %v3211
      %v3467 = vadd.f32 %v2682, %v3215
      %v3468 = vadd.f32 %v2684, %v3217
      %v3469 = vadd.f32 %v2686, %v3219
      %v3470 = vadd.f32 %v2688, %v3221
      %v3471 = vadd.f32 %v2692, %v3225
      %v3472 = vadd.f32 %v2694, %v3227
      %v3473 = vadd.f32 %v2696, %v3229
      %v3474 = vadd.f32 %v2698, %v3231
      %v3475 = vadd.f32 %v2702, %v3235
      %v3476 = vadd.f32 %v2704, %v3237
      %v3477 = vadd.f32 %v2706, %v3239
      %v3478 = vadd.f32 %v2708, %v3241
      %v3479 = vadd.f32 %v2712, %v3245
      %v3480 = vadd.f32 %v2714, %v3247
      %v3481 = vadd.f32 %v2716, %v3249
      %v3482 = vadd.f32 %v2718, %v3251
      %v3483 = vadd.f32 %v2722, %v3255
      %v3484 = vadd.f32 %v2724, %v3257
      %v3485 = vadd.f32 %v2726, %v3259
      %v3486 = vadd.f32 %v2728, %v3261
      %v3487 = vadd.f32 %v2732, %v3265
      %v3488 = vadd.f32 %v2734, %v3267
      %v3489 = vadd.f32 %v2736, %v3269
      %v3490 = vadd.f32 %v2738, %v3271
      %v3491 = vadd.f32 %v2742, %v3275
      %v3492 = vadd.f32 %v2744, %v3277
      %v3493 = vadd.f32 %v2746, %v3279
      %v3494 = vadd.f32 %v2748, %v3281
      %v3495 = vadd.f32 %v2752, %v3285
      %v3496 = vadd.f32 %v2754, %v3287
      %v3497 = vadd.f32 %v2756, %v3289
      %v3498 = vadd.f32 %v2758, %v3291
      %v3499 = vadd.f32 %v2762, %v3295
      %v3500 = vadd.f32 %v2764, %v3297
      %v3501 = vadd.f32 %v2766, %v3299
      %v3502 = vadd.f32 %v2768, %v3301
      %v3503 = vadd.f32 %v2772, %v3305
      %v3504 = vadd.f32 %v2774, %v3307
      %v3505 = vadd.f32 %v2776, %v3309
      %v3506 = vadd.f32 %v2778, %v3311
      %v3507 = vadd.f32 %v2782, %v3315
      %v3508 = vadd.f32 %v2784, %v3317
      %v3509 = vadd.f32 %v2786, %v3319
      %v3510 = vadd.f32 %v2788, %v3321
      %v3511 = vadd.f32 %v2792, %v3325
      %v3512 = vadd.f32 %v2794, %v3327
      %v3513 = vadd.f32 %v2796, %v3329
      %v3514 = vadd.f32 %v2798, %v3331
      %v3515 = vadd.f32 %v2802, %v3335
      %v3516 = vadd.f32 %v2804, %v3337
      %v3517 = vadd.f32 %v2806, %v3339
      %v3518 = vadd.f32 %v2808, %v3341
      %v3519 = vadd.f32 %v2812, %v3345
      %v3520 = vadd.f32 %v2814, %v3347
      %v3521 = vadd.f32 %v2816, %v3349
      %v3522 = vadd.f32 %v2818, %v3351
      %v3523 = vadd.f32 %v2822, %v3355
      %v3524 = vadd.f32 %v2824, %v3357
      %v3525 = vadd.f32 %v2826, %v3359
      %v3526 = vadd.f32 %v2828, %v3361
      %v3527 = vadd.f32 %v2832, %v3365
      %v3528 = vadd.f32 %v2834, %v3367
      %v3529 = vadd.f32 %v2836, %v3369
      %v3530 = vadd.f32 %v2838, %v3371
      %v3531 = vadd.f32 %v2842, %v3375
      %v3532 = vadd.f32 %v2844, %v3377
      %v3533 = vadd.f32 %v2846, %v3379
      %v3534 = vadd.f32 %v2848, %v3381
      %v3535 = vadd.f32 %v2852, %v3385
      %v3536 = vadd.f32 %v2854, %v3387
      %v3537 = vadd.f32 %v2856, %v3389
      %v3538 = vadd.f32 %v2858, %v3391
      %v3539 = vadd.f32 %v2862, %v3395
      %v3540 = vadd.f32 %v2864, %v3397
      %v3541 = vadd.f32 %v2866, %v3399
      %v3542 = vadd.f32 %v2868, %v3401
      %v3543 = vadd.f32 %v2872, %v3405
      %v3544 = vadd.f32 %v2874, %v3407
      %v3545 = vadd.f32 %v2876, %v3409
      %v3546 = vadd.f32 %v2878, %v3411
      %v3547 = vadd.f32 %v2882, %v3415
      %v3548 = vadd.f32 %v2884, %v3417
      %v3549 = vadd.f32 %v2886, %v3419
      %v3550 = vadd.f32 %v2888, %v3421
      %v3551 = vadd.f32 %v3423, %v2135
      %v3552 = vadd.f32 %v3424, %v2137
      %v3553 = vadd.f32 %v3425, %v2139
      %v3554 = vadd.f32 %v3426, %v2141
      %v3555 = vadd.f32 %v3427, %v2145
      %v3556 = vadd.f32 %v3428, %v2147
      %v3557 = vadd.f32 %v3429, %v2149
      %v3558 = vadd.f32 %v3430, %v2151
      %v3559 = vadd.f32 %v3431, %v2155
      %v3560 = vadd.f32 %v3432, %v2157
      %v3561 = vadd.f32 %v3433, %v2159
      %v3562 = vadd.f32 %v3434, %v2161
      %v3563 = vadd.f32 %v3435, %v2165
      %v3564 = vadd.f32 %v3436, %v2167
      %v3565 = vadd.f32 %v3437, %v2169
      %v3566 = vadd.f32 %v3438, %v2171
      %v3567 = vadd.f32 %v3439, %v2175
      %v3568 = vadd.f32 %v3440, %v2177
      %v3569 = vadd.f32 %v3441, %v2179
      %v3570 = vadd.f32 %v3442, %v2181
      %v3571 = vadd.f32 %v3443, %v2185
      %v3572 = vadd.f32 %v3444, %v2187
      %v3573 = vadd.f32 %v3445, %v2189
      %v3574 = vadd.f32 %v3446, %v2191
      %v3575 = vadd.f32 %v3447, %v2195
      %v3576 = vadd.f32 %v3448, %v2197
      %v3577 = vadd.f32 %v3449, %v2199
      %v3578 = vadd.f32 %v3450, %v2201
      %v3579 = vadd.f32 %v3451, %v2205
      %v3580 = vadd.f32 %v3452, %v2207
      %v3581 = vadd.f32 %v3453, %v2209
      %v3582 = vadd.f32 %v3454, %v2211
      %v3583 = vadd.f32 %v3455, %v2215
      %v3584 = vadd.f32 %v3456, %v2217
      %v3585 = vadd.f32 %v3457, %v2219
      %v3586 = vadd.f32 %v3458, %v2221
      %v3587 = vadd.f32 %v3459, %v2225
      %v3588 = vadd.f32 %v3460, %v2227
      %v3589 = vadd.f32 %v3461, %v2229
      %v3590 = vadd.f32 %v3462, %v2231
      %v3591 = vadd.f32 %v3463, %v2235
      %v3592 = vadd.f32 %v3464, %v2237
      %v3593 = vadd.f32 %v3465, %v2239
      %v3594 = vadd.f32 %v3466, %v2241
      %v3595 = vadd.f32 %v3467, %v2245
      %v3596 = vadd.f32 %v3468, %v2247
      %v3597 = vadd.f32 %v3469, %v2249
      %v3598 = vadd.f32 %v3470, %v2251
      %v3599 = vadd.f32 %v3471, %v2255
      %v3600 = vadd.f32 %v3472, %v2257
      %v3601 = vadd.f32 %v3473, %v2259
      %v3602 = vadd.f32 %v3474, %v2261
      %v3603 = vadd.f32 %v3475, %v2265
      %v3604 = vadd.f32 %v3476, %v2267
      %v3605 = vadd.f32 %v3477, %v2269
      %v3606 = vadd.f32 %v3478, %v2271
      %v3607 = vadd.f32 %v3479, %v2275
      %v3608 = vadd.f32 %v3480, %v2277
      %v3609 = vadd.f32 %v3481, %v2279
      %v3610 = vadd.f32 %v3482, %v2281
      %v3611 = vadd.f32 %v3483, %v2285
      %v3612 = vadd.f32 %v3484, %v2287
      %v3613 = vadd.f32 %v3485, %v2289
      %v3614 = vadd.f32 %v3486, %v2291
      %v3615 = vadd.f32 %v3487, %v2295
      %v3616 = vadd.f32 %v3488, %v2297
      %v3617 = vadd.f32 %v3489, %v2299
      %v3618 = vadd.f32 %v3490, %v2301
      %v3619 = vadd.f32 %v3491, %v2305
      %v3620 = vadd.f32 %v3492, %v2307
      %v3621 = vadd.f32 %v3493, %v2309
      %v3622 = vadd.f32 %v3494, %v2311
      %v3623 = vadd.f32 %v3495, %v2315
      %v3624 = vadd.f32 %v3496, %v2317
      %v3625 = vadd.f32 %v3497, %v2319
      %v3626 = vadd.f32 %v3498, %v2321
      %v3627 = vadd.f32 %v3499, %v2325
      %v3628 = vadd.f32 %v3500, %v2327
      %v3629 = vadd.f32 %v3501, %v2329
      %v3630 = vadd.f32 %v3502, %v2331
      %v3631 = vadd.f32 %v3503, %v2335
      %v3632 = vadd.f32 %v3504, %v2337
      %v3633 = vadd.f32 %v3505, %v2339
      %v3634 = vadd.f32 %v3506, %v2341
      %v3635 = vadd.f32 %v3507, %v2345
      %v3636 = vadd.f32 %v3508, %v2347
      %v3637 = vadd.f32 %v3509, %v2349
      %v3638 = vadd.f32 %v3510, %v2351
      %v3639 = vadd.f32 %v3511, %v2355
      %v3640 = vadd.f32 %v3512, %v2357
      %v3641 = vadd.f32 %v3513, %v2359
      %v3642 = vadd.f32 %v3514, %v2361
      %v3643 = vadd.f32 %v3515, %v2365
      %v3644 = vadd.f32 %v3516, %v2367
      %v3645 = vadd.f32 %v3517, %v2369
      %v3646 = vadd.f32 %v3518, %v2371
      %v3647 = vadd.f32 %v3519, %v2375
      %v3648 = vadd.f32 %v3520, %v2377
      %v3649 = vadd.f32 %v3521, %v2379
      %v3650 = vadd.f32 %v3522, %v2381
      %v3651 = vadd.f32 %v3523, %v2385
      %v3652 = vadd.f32 %v3524, %v2387
      %v3653 = vadd.f32 %v3525, %v2389
      %v3654 = vadd.f32 %v3526, %v2391
      %v3655 = vadd.f32 %v3527, %v2395
      %v3656 = vadd.f32 %v3528, %v2397
      %v3657 = vadd.f32 %v3529, %v2399
      %v3658 = vadd.f32 %v3530, %v2401
      %v3659 = vadd.f32 %v3531, %v2405
      %v3660 = vadd.f32 %v3532, %v2407
      %v3661 = vadd.f32 %v3533, %v2409
      %v3662 = vadd.f32 %v3534, %v2411
      %v3663 = vadd.f32 %v3535, %v2415
      %v3664 = vadd.f32 %v3536, %v2417
      %v3665 = vadd.f32 %v3537, %v2419
      %v3666 = vadd.f32 %v3538, %v2421
      %v3667 = vadd.f32 %v3539, %v2425
      %v3668 = vadd.f32 %v3540, %v2427
      %v3669 = vadd.f32 %v3541, %v2429
      %v3670 = vadd.f32 %v3542, %v2431
      %v3671 = vadd.f32 %v3543, %v2435
      %v3672 = vadd.f32 %v3544, %v2437
      %v3673 = vadd.f32 %v3545, %v2439
      %v3674 = vadd.f32 %v3546, %v2441
      %v3675 = vadd.f32 %v3547, %v2445
      %v3676 = vadd.f32 %v3548, %v2447
      %v3677 = vadd.f32 %v3549, %v2449
      %v3678 = vadd.f32 %v3550, %v2451
      %v3679 = vld [vmem:[%s2] sm:$0x3]
      %v3681 = vlaneseq
      %v3682 = vshrl.u32 %v3681, 7
      %v3683 = vsub.s32 0, %v3682
      %v3684 = vrot.slane %v3679, %v3683
      %v3685 = vlaneseq
      %v3686 = vshrl.u32 %v3685, 7
      %v3687 = vsub.s32 1, %v3686
      %v3688 = vrot.slane %v3679, %v3687
      %v3691 = vadd.f32 %v3551, %v3684
      %v3692 = vadd.f32 %v3552, %v3688
      %v3693 = vadd.f32 %v3553, %v3684
      %v3694 = vadd.f32 %v3554, %v3688
      %v3695 = vadd.f32 %v3555, %v3684
      %v3696 = vadd.f32 %v3556, %v3688
      %v3697 = vadd.f32 %v3557, %v3684
      %v3698 = vadd.f32 %v3558, %v3688
      %v3699 = vadd.f32 %v3559, %v3684
      %v3700 = vadd.f32 %v3560, %v3688
      %v3701 = vadd.f32 %v3561, %v3684
      %v3702 = vadd.f32 %v3562, %v3688
      %v3703 = vadd.f32 %v3563, %v3684
      %v3704 = vadd.f32 %v3564, %v3688
      %v3705 = vadd.f32 %v3565, %v3684
      %v3706 = vadd.f32 %v3566, %v3688
      %v3707 = vadd.f32 %v3567, %v3684
      %v3708 = vadd.f32 %v3568, %v3688
      %v3709 = vadd.f32 %v3569, %v3684
      %v3710 = vadd.f32 %v3570, %v3688
      %v3711 = vadd.f32 %v3571, %v3684
      %v3712 = vadd.f32 %v3572, %v3688
      %v3713 = vadd.f32 %v3573, %v3684
      %v3714 = vadd.f32 %v3574, %v3688
      %v3715 = vadd.f32 %v3575, %v3684
      %v3716 = vadd.f32 %v3576, %v3688
      %v3717 = vadd.f32 %v3577, %v3684
      %v3718 = vadd.f32 %v3578, %v3688
      %v3719 = vadd.f32 %v3579, %v3684
      %v3720 = vadd.f32 %v3580, %v3688
      %v3721 = vadd.f32 %v3581, %v3684
      %v3722 = vadd.f32 %v3582, %v3688
      %v3723 = vadd.f32 %v3583, %v3684
      %v3724 = vadd.f32 %v3584, %v3688
      %v3725 = vadd.f32 %v3585, %v3684
      %v3726 = vadd.f32 %v3586, %v3688
      %v3727 = vadd.f32 %v3587, %v3684
      %v3728 = vadd.f32 %v3588, %v3688
      %v3729 = vadd.f32 %v3589, %v3684
      %v3730 = vadd.f32 %v3590, %v3688
      %v3731 = vadd.f32 %v3591, %v3684
      %v3732 = vadd.f32 %v3592, %v3688
      %v3733 = vadd.f32 %v3593, %v3684
      %v3734 = vadd.f32 %v3594, %v3688
      %v3735 = vadd.f32 %v3595, %v3684
      %v3736 = vadd.f32 %v3596, %v3688
      %v3737 = vadd.f32 %v3597, %v3684
      %v3738 = vadd.f32 %v3598, %v3688
      %v3739 = vadd.f32 %v3599, %v3684
      %v3740 = vadd.f32 %v3600, %v3688
      %v3741 = vadd.f32 %v3601, %v3684
      %v3742 = vadd.f32 %v3602, %v3688
      %v3743 = vadd.f32 %v3603, %v3684
      %v3744 = vadd.f32 %v3604, %v3688
      %v3745 = vadd.f32 %v3605, %v3684
      %v3746 = vadd.f32 %v3606, %v3688
      %v3747 = vadd.f32 %v3607, %v3684
      %v3748 = vadd.f32 %v3608, %v3688
      %v3749 = vadd.f32 %v3609, %v3684
      %v3750 = vadd.f32 %v3610, %v3688
      %v3751 = vadd.f32 %v3611, %v3684
      %v3752 = vadd.f32 %v3612, %v3688
      %v3753 = vadd.f32 %v3613, %v3684
      %v3754 = vadd.f32 %v3614, %v3688
      %v3755 = vadd.f32 %v3615, %v3684
      %v3756 = vadd.f32 %v3616, %v3688
      %v3757 = vadd.f32 %v3617, %v3684
      %v3758 = vadd.f32 %v3618, %v3688
      %v3759 = vadd.f32 %v3619, %v3684
      %v3760 = vadd.f32 %v3620, %v3688
      %v3761 = vadd.f32 %v3621, %v3684
      %v3762 = vadd.f32 %v3622, %v3688
      %v3763 = vadd.f32 %v3623, %v3684
      %v3764 = vadd.f32 %v3624, %v3688
      %v3765 = vadd.f32 %v3625, %v3684
      %v3766 = vadd.f32 %v3626, %v3688
      %v3767 = vadd.f32 %v3627, %v3684
      %v3768 = vadd.f32 %v3628, %v3688
      %v3769 = vadd.f32 %v3629, %v3684
      %v3770 = vadd.f32 %v3630, %v3688
      %v3771 = vadd.f32 %v3631, %v3684
      %v3772 = vadd.f32 %v3632, %v3688
      %v3773 = vadd.f32 %v3633, %v3684
      %v3774 = vadd.f32 %v3634, %v3688
      %v3775 = vadd.f32 %v3635, %v3684
      %v3776 = vadd.f32 %v3636, %v3688
      %v3777 = vadd.f32 %v3637, %v3684
      %v3778 = vadd.f32 %v3638, %v3688
      %v3779 = vadd.f32 %v3639, %v3684
      %v3780 = vadd.f32 %v3640, %v3688
      %v3781 = vadd.f32 %v3641, %v3684
      %v3782 = vadd.f32 %v3642, %v3688
      %v3783 = vadd.f32 %v3643, %v3684
      %v3784 = vadd.f32 %v3644, %v3688
      %v3785 = vadd.f32 %v3645, %v3684
      %v3786 = vadd.f32 %v3646, %v3688
      %v3787 = vadd.f32 %v3647, %v3684
      %v3788 = vadd.f32 %v3648, %v3688
      %v3789 = vadd.f32 %v3649, %v3684
      %v3790 = vadd.f32 %v3650, %v3688
      %v3791 = vadd.f32 %v3651, %v3684
      %v3792 = vadd.f32 %v3652, %v3688
      %v3793 = vadd.f32 %v3653, %v3684
      %v3794 = vadd.f32 %v3654, %v3688
      %v3795 = vadd.f32 %v3655, %v3684
      %v3796 = vadd.f32 %v3656, %v3688
      %v3797 = vadd.f32 %v3657, %v3684
      %v3798 = vadd.f32 %v3658, %v3688
      %v3799 = vadd.f32 %v3659, %v3684
      %v3800 = vadd.f32 %v3660, %v3688
      %v3801 = vadd.f32 %v3661, %v3684
      %v3802 = vadd.f32 %v3662, %v3688
      %v3803 = vadd.f32 %v3663, %v3684
      %v3804 = vadd.f32 %v3664, %v3688
      %v3805 = vadd.f32 %v3665, %v3684
      %v3806 = vadd.f32 %v3666, %v3688
      %v3807 = vadd.f32 %v3667, %v3684
      %v3808 = vadd.f32 %v3668, %v3688
      %v3809 = vadd.f32 %v3669, %v3684
      %v3810 = vadd.f32 %v3670, %v3688
      %v3811 = vadd.f32 %v3671, %v3684
      %v3812 = vadd.f32 %v3672, %v3688
      %v3813 = vadd.f32 %v3673, %v3684
      %v3814 = vadd.f32 %v3674, %v3688
      %v3815 = vadd.f32 %v3675, %v3684
      %v3816 = vadd.f32 %v3676, %v3688
      %v3817 = vadd.f32 %v3677, %v3684
      %v3818 = vadd.f32 %v3678, %v3688
      %v3819 = vmax.f32 %v3691, 0.0
      %v3820 = vmax.f32 %v3692, 0.0
      %v3821 = vmax.f32 %v3693, 0.0
      %v3822 = vmax.f32 %v3694, 0.0
      %v3823 = vmax.f32 %v3695, 0.0
      %v3824 = vmax.f32 %v3696, 0.0
      %v3825 = vmax.f32 %v3697, 0.0
      %v3826 = vmax.f32 %v3698, 0.0
      %v3827 = vmax.f32 %v3699, 0.0
      %v3828 = vmax.f32 %v3700, 0.0
      %v3829 = vmax.f32 %v3701, 0.0
      %v3830 = vmax.f32 %v3702, 0.0
      %v3831 = vmax.f32 %v3703, 0.0
      %v3832 = vmax.f32 %v3704, 0.0
      %v3833 = vmax.f32 %v3705, 0.0
      %v3834 = vmax.f32 %v3706, 0.0
      %v3835 = vmax.f32 %v3707, 0.0
      %v3836 = vmax.f32 %v3708, 0.0
      %v3837 = vmax.f32 %v3709, 0.0
      %v3838 = vmax.f32 %v3710, 0.0
      %v3839 = vmax.f32 %v3711, 0.0
      %v3840 = vmax.f32 %v3712, 0.0
      %v3841 = vmax.f32 %v3713, 0.0
      %v3842 = vmax.f32 %v3714, 0.0
      %v3843 = vmax.f32 %v3715, 0.0
      %v3844 = vmax.f32 %v3716, 0.0
      %v3845 = vmax.f32 %v3717, 0.0
      %v3846 = vmax.f32 %v3718, 0.0
      %v3847 = vmax.f32 %v3719, 0.0
      %v3848 = vmax.f32 %v3720, 0.0
      %v3849 = vmax.f32 %v3721, 0.0
      %v3850 = vmax.f32 %v3722, 0.0
      %v3851 = vmax.f32 %v3723, 0.0
      %v3852 = vmax.f32 %v3724, 0.0
      %v3853 = vmax.f32 %v3725, 0.0
      %v3854 = vmax.f32 %v3726, 0.0
      %v3855 = vmax.f32 %v3727, 0.0
      %v3856 = vmax.f32 %v3728, 0.0
      %v3857 = vmax.f32 %v3729, 0.0
      %v3858 = vmax.f32 %v3730, 0.0
      %v3859 = vmax.f32 %v3731, 0.0
      %v3860 = vmax.f32 %v3732, 0.0
      %v3861 = vmax.f32 %v3733, 0.0
      %v3862 = vmax.f32 %v3734, 0.0
      %v3863 = vmax.f32 %v3735, 0.0
      %v3864 = vmax.f32 %v3736, 0.0
      %v3865 = vmax.f32 %v3737, 0.0
      %v3866 = vmax.f32 %v3738, 0.0
      %v3867 = vmax.f32 %v3739, 0.0
      %v3868 = vmax.f32 %v3740, 0.0
      %v3869 = vmax.f32 %v3741, 0.0
      %v3870 = vmax.f32 %v3742, 0.0
      %v3871 = vmax.f32 %v3743, 0.0
      %v3872 = vmax.f32 %v3744, 0.0
      %v3873 = vmax.f32 %v3745, 0.0
      %v3874 = vmax.f32 %v3746, 0.0
      %v3875 = vmax.f32 %v3747, 0.0
      %v3876 = vmax.f32 %v3748, 0.0
      %v3877 = vmax.f32 %v3749, 0.0
      %v3878 = vmax.f32 %v3750, 0.0
      %v3879 = vmax.f32 %v3751, 0.0
      %v3880 = vmax.f32 %v3752, 0.0
      %v3881 = vmax.f32 %v3753, 0.0
      %v3882 = vmax.f32 %v3754, 0.0
      %v3883 = vmax.f32 %v3755, 0.0
      %v3884 = vmax.f32 %v3756, 0.0
      %v3885 = vmax.f32 %v3757, 0.0
      %v3886 = vmax.f32 %v3758, 0.0
      %v3887 = vmax.f32 %v3759, 0.0
      %v3888 = vmax.f32 %v3760, 0.0
      %v3889 = vmax.f32 %v3761, 0.0
      %v3890 = vmax.f32 %v3762, 0.0
      %v3891 = vmax.f32 %v3763, 0.0
      %v3892 = vmax.f32 %v3764, 0.0
      %v3893 = vmax.f32 %v3765, 0.0
      %v3894 = vmax.f32 %v3766, 0.0
      %v3895 = vmax.f32 %v3767, 0.0
      %v3896 = vmax.f32 %v3768, 0.0
      %v3897 = vmax.f32 %v3769, 0.0
      %v3898 = vmax.f32 %v3770, 0.0
      %v3899 = vmax.f32 %v3771, 0.0
      %v3900 = vmax.f32 %v3772, 0.0
      %v3901 = vmax.f32 %v3773, 0.0
      %v3902 = vmax.f32 %v3774, 0.0
      %v3903 = vmax.f32 %v3775, 0.0
      %v3904 = vmax.f32 %v3776, 0.0
      %v3905 = vmax.f32 %v3777, 0.0
      %v3906 = vmax.f32 %v3778, 0.0
      %v3907 = vmax.f32 %v3779, 0.0
      %v3908 = vmax.f32 %v3780, 0.0
      %v3909 = vmax.f32 %v3781, 0.0
      %v3910 = vmax.f32 %v3782, 0.0
      %v3911 = vmax.f32 %v3783, 0.0
      %v3912 = vmax.f32 %v3784, 0.0
      %v3913 = vmax.f32 %v3785, 0.0
      %v3914 = vmax.f32 %v3786, 0.0
      %v3915 = vmax.f32 %v3787, 0.0
      %v3916 = vmax.f32 %v3788, 0.0
      %v3917 = vmax.f32 %v3789, 0.0
      %v3918 = vmax.f32 %v3790, 0.0
      %v3919 = vmax.f32 %v3791, 0.0
      %v3920 = vmax.f32 %v3792, 0.0
      %v3921 = vmax.f32 %v3793, 0.0
      %v3922 = vmax.f32 %v3794, 0.0
      %v3923 = vmax.f32 %v3795, 0.0
      %v3924 = vmax.f32 %v3796, 0.0
      %v3925 = vmax.f32 %v3797, 0.0
      %v3926 = vmax.f32 %v3798, 0.0
      %v3927 = vmax.f32 %v3799, 0.0
      %v3928 = vmax.f32 %v3800, 0.0
      %v3929 = vmax.f32 %v3801, 0.0
      %v3930 = vmax.f32 %v3802, 0.0
      %v3931 = vmax.f32 %v3803, 0.0
      %v3932 = vmax.f32 %v3804, 0.0
      %v3933 = vmax.f32 %v3805, 0.0
      %v3934 = vmax.f32 %v3806, 0.0
      %v3935 = vmax.f32 %v3807, 0.0
      %v3936 = vmax.f32 %v3808, 0.0
      %v3937 = vmax.f32 %v3809, 0.0
      %v3938 = vmax.f32 %v3810, 0.0
      %v3939 = vmax.f32 %v3811, 0.0
      %v3940 = vmax.f32 %v3812, 0.0
      %v3941 = vmax.f32 %v3813, 0.0
      %v3942 = vmax.f32 %v3814, 0.0
      %v3943 = vmax.f32 %v3815, 0.0
      %v3944 = vmax.f32 %v3816, 0.0
      %v3945 = vmax.f32 %v3817, 0.0
      %v3946 = vmax.f32 %v3818, 0.0
      %v3947 = vld [vmem:[%s3] sm:$0xf]
      %v3948 = vld [vmem:[%s3 + $0x4] sm:$0xf]
      %v3949 = vld [vmem:[%s3 + $0x8] sm:$0xf]
      %v3950 = vld [vmem:[%s3 + $0xc] sm:$0xf]
      %v3951 = vld [vmem:[%s3 + $0x10] sm:$0xf]
      %v3952 = vld [vmem:[%s3 + $0x14] sm:$0xf]
      %v3953 = vld [vmem:[%s3 + $0x18] sm:$0xf]
      %v3954 = vld [vmem:[%s3 + $0x1c] sm:$0xf]
      %v3955 = vld [vmem:[%s3 + $0x20] sm:$0xf]
      %v3956 = vld [vmem:[%s3 + $0x24] sm:$0xf]
      %v3957 = vld [vmem:[%s3 + $0x28] sm:$0xf]
      %v3958 = vld [vmem:[%s3 + $0x2c] sm:$0xf]
      %v3959 = vld [vmem:[%s3 + $0x30] sm:$0xf]
      %v3960 = vld [vmem:[%s3 + $0x34] sm:$0xf]
      %v3961 = vld [vmem:[%s3 + $0x38] sm:$0xf]
      %v3962 = vld [vmem:[%s3 + $0x3c] sm:$0xf]
      %v3963 = vld [vmem:[%s3 + $0x40] sm:$0xf]
      %v3964 = vld [vmem:[%s3 + $0x44] sm:$0xf]
      %v3965 = vld [vmem:[%s3 + $0x48] sm:$0xf]
      %v3966 = vld [vmem:[%s3 + $0x4c] sm:$0xf]
      %v3967 = vld [vmem:[%s3 + $0x50] sm:$0xf]
      %v3968 = vpack.c.bf16 %v3821, %v3819
      %v3969 = vpack.c.bf16 %v3822, %v3820
      %v3970 = vpack.c.bf16 %v3825, %v3823
      %v3971 = vpack.c.bf16 %v3826, %v3824
      %v3972 = vpack.c.bf16 %v3829, %v3827
      %v3973 = vpack.c.bf16 %v3830, %v3828
      %v3974 = vpack.c.bf16 %v3833, %v3831
      %v3975 = vpack.c.bf16 %v3834, %v3832
      %v3976 = vpack.c.bf16 %v3837, %v3835
      %v3977 = vpack.c.bf16 %v3838, %v3836
      %v3978 = vpack.c.bf16 %v3841, %v3839
      %v3979 = vpack.c.bf16 %v3842, %v3840
      %v3980 = vpack.c.bf16 %v3845, %v3843
      %v3981 = vpack.c.bf16 %v3846, %v3844
      %v3982 = vpack.c.bf16 %v3849, %v3847
      %v3983 = vpack.c.bf16 %v3850, %v3848
      %v3984 = vpack.c.bf16 %v3853, %v3851
      %v3985 = vpack.c.bf16 %v3854, %v3852
      %v3986 = vpack.c.bf16 %v3857, %v3855
      %v3987 = vpack.c.bf16 %v3858, %v3856
      %v3988 = vpack.c.bf16 %v3861, %v3859
      %v3989 = vpack.c.bf16 %v3862, %v3860
      %v3990 = vpack.c.bf16 %v3865, %v3863
      %v3991 = vpack.c.bf16 %v3866, %v3864
      %v3992 = vpack.c.bf16 %v3869, %v3867
      %v3993 = vpack.c.bf16 %v3870, %v3868
      %v3994 = vpack.c.bf16 %v3873, %v3871
      %v3995 = vpack.c.bf16 %v3874, %v3872
      %v3996 = vpack.c.bf16 %v3877, %v3875
      %v3997 = vpack.c.bf16 %v3878, %v3876
      %v3998 = vpack.c.bf16 %v3881, %v3879
      %v3999 = vpack.c.bf16 %v3882, %v3880
      %v4000 = vpack.c.bf16 %v3885, %v3883
      %v4001 = vpack.c.bf16 %v3886, %v3884
      %v4002 = vpack.c.bf16 %v3889, %v3887
      %v4003 = vpack.c.bf16 %v3890, %v3888
      %v4004 = vpack.c.bf16 %v3893, %v3891
      %v4005 = vpack.c.bf16 %v3894, %v3892
      %v4006 = vpack.c.bf16 %v3897, %v3895
      %v4007 = vpack.c.bf16 %v3898, %v3896
      %v4008 = vpack.c.bf16 %v3901, %v3899
      %v4009 = vpack.c.bf16 %v3902, %v3900
      %v4010 = vpack.c.bf16 %v3905, %v3903
      %v4011 = vpack.c.bf16 %v3906, %v3904
      %v4012 = vpack.c.bf16 %v3909, %v3907
      %v4013 = vpack.c.bf16 %v3910, %v3908
      %v4014 = vpack.c.bf16 %v3913, %v3911
      %v4015 = vpack.c.bf16 %v3914, %v3912
      %v4016 = vpack.c.bf16 %v3917, %v3915
      %v4017 = vpack.c.bf16 %v3918, %v3916
      %v4018 = vpack.c.bf16 %v3921, %v3919
      %v4019 = vpack.c.bf16 %v3922, %v3920
      %v4020 = vpack.c.bf16 %v3925, %v3923
      %v4021 = vpack.c.bf16 %v3926, %v3924
      %v4022 = vpack.c.bf16 %v3929, %v3927
      %v4023 = vpack.c.bf16 %v3930, %v3928
      %v4024 = vpack.c.bf16 %v3933, %v3931
      %v4025 = vpack.c.bf16 %v3934, %v3932
      %v4026 = vpack.c.bf16 %v3937, %v3935
      %v4027 = vpack.c.bf16 %v3938, %v3936
      %v4028 = vpack.c.bf16 %v3941, %v3939
      %v4029 = vpack.c.bf16 %v3942, %v3940
      %v4030 = vpack.c.bf16 %v3945, %v3943
      %v4031 = vpack.c.bf16 %v3946, %v3944
      %v4053 = vunpack.c.l.b16 %v3947
      %v4054 = vunpack.c.l.b16 %v3948
      %v4055 = vunpack.c.l.b16 %v3949
      %v4056 = vunpack.c.l.b16 %v3950
      %v4057 = vunpack.c.l.b16 %v3951
      %v4058 = vunpack.c.l.b16 %v3952
      %v4059 = vunpack.c.l.b16 %v3953
      %v4060 = vunpack.c.l.b16 %v3954
      %v4061 = vunpack.c.l.b16 %v3955
      %v4062 = vunpack.c.l.b16 %v3956
      %v4063 = vunpack.c.l.b16 %v3957
      %v4064 = vunpack.c.l.b16 %v3958
      %v4065 = vunpack.c.l.b16 %v3959
      %v4066 = vunpack.c.l.b16 %v3960
      %v4067 = vunpack.c.l.b16 %v3961
      %v4068 = vunpack.c.l.b16 %v3962
      %v4069 = vunpack.c.l.b16 %v3963
      %v4070 = vunpack.c.l.b16 %v3964
      %v4071 = vunpack.c.l.b16 %v3965
      %v4072 = vunpack.c.l.b16 %v3966
      %v4073 = vunpack.c.l.b16 %v3967
      %v4074 = vpack.c.b16 %v4054, %v4053
      %v4075 = vpack.c.b16 %v4056, %v4055
      %v4076 = vpack.c.b16 %v4058, %v4057
      %v4077 = vpack.c.b16 %v4060, %v4059
      %v4078 = vpack.c.b16 %v4062, %v4061
      %v4079 = vpack.c.b16 %v4064, %v4063
      %v4080 = vpack.c.b16 %v4066, %v4065
      %v4081 = vpack.c.b16 %v4068, %v4067
      %v4082 = vpack.c.b16 %v4070, %v4069
      %v4083 = vpack.c.b16 %v4072, %v4071
      %v4084 = vpack.c.b16 %v4073, %v4073
      %vm4095 = vcmask 326656
      %v4097 = vsel %vm4095, %v3969, 0
      %v4100 = vsel %vm4095, %v3971, 0
      %v4103 = vsel %vm4095, %v3973, 0
      %v4106 = vsel %vm4095, %v3975, 0
      %v4109 = vsel %vm4095, %v3977, 0
      %v4112 = vsel %vm4095, %v3979, 0
      %v4115 = vsel %vm4095, %v3981, 0
      %v4118 = vsel %vm4095, %v3983, 0
      %v4121 = vsel %vm4095, %v3985, 0
      %v4124 = vsel %vm4095, %v3987, 0
      %v4127 = vsel %vm4095, %v3989, 0
      %v4130 = vsel %vm4095, %v3991, 0
      %v4133 = vsel %vm4095, %v3993, 0
      %v4136 = vsel %vm4095, %v3995, 0
      %v4139 = vsel %vm4095, %v3997, 0
      %v4142 = vsel %vm4095, %v3999, 0
      %v4145 = vsel %vm4095, %v4001, 0
      %v4148 = vsel %vm4095, %v4003, 0
      %v4151 = vsel %vm4095, %v4005, 0
      %v4154 = vsel %vm4095, %v4007, 0
      %v4157 = vsel %vm4095, %v4009, 0
      %v4160 = vsel %vm4095, %v4011, 0
      %v4163 = vsel %vm4095, %v4013, 0
      %v4166 = vsel %vm4095, %v4015, 0
      %v4169 = vsel %vm4095, %v4017, 0
      %v4172 = vsel %vm4095, %v4019, 0
      %v4175 = vsel %vm4095, %v4021, 0
      %v4178 = vsel %vm4095, %v4023, 0
      %v4181 = vsel %vm4095, %v4025, 0
      %v4184 = vsel %vm4095, %v4027, 0
      %v4187 = vsel %vm4095, %v4029, 0
      %v4190 = vsel %vm4095, %v4031, 0
      %vm4192 = vcmask 1043456
      %v4194 = vsel %vm4192, %v4084, 0
      %4196 = vmatprep.subr.bf16.mxu0 0
      %4197 = vmatpush1.bf16.msra.mxu0 %v4074
      %4198 = vmatprep.subr.bf16.mxu0 0
      %4199 = vmatpush1.bf16.msra.mxu0 %v4075
      %4200 = vmatprep.subr.bf16.mxu0 0
      %4201 = vmatpush1.bf16.msra.mxu0 %v4076
      %4202 = vmatprep.subr.bf16.mxu0 0
      %4203 = vmatpush1.bf16.msra.mxu0 %v4077
      %4204 = vmatprep.subr.bf16.mxu0 0
      %4205 = vmatpush1.bf16.msra.mxu0 %v4078
      %4206 = vmatprep.subr.bf16.mxu0 0
      %4207 = vmatpush1.bf16.msra.mxu0 %v4079
      %4208 = vmatprep.subr.bf16.mxu0 0
      %4209 = vmatpush1.bf16.msra.mxu0 %v4080
      %4210 = vmatprep.subr.bf16.mxu0 0
      %4211 = vmatpush1.bf16.msra.mxu0 %v4081
      %4212 = vmatprep.subr.bf16.mxu0 0
      %4213 = vmatpush1.bf16.msra.mxu0 %v4082
      %4214 = vmatprep.subr.bf16.mxu0 0
      %4215 = vmatpush1.bf16.msra.mxu0 %v4083
      %4216 = vmatprep.subr.bf16.mxu0 0
      %4217 = vmatpush1.bf16.msra.mxu0 %v4194
      %4218 = vmatprep.subr.bf16.mxu0 0
      %4219 = vmatpush1.bf16.msra.mxu0 0
      %4220 = vmatprep.subr.bf16.mxu0 0
      %4221 = vmatpush1.bf16.msra.mxu0 0
      %4222 = vmatprep.subr.bf16.mxu0 0
      %4223 = vmatpush1.bf16.msra.mxu0 0
      %4224 = vmatprep.subr.bf16.mxu0 0
      %4225 = vmatpush1.bf16.msra.mxu0 0
      %4226 = vmatprep.subr.bf16.mxu0 0
      %4227 = vmatpush1.bf16.msra.mxu0 0
      %4228 = vmatprep.mubr.bf16.mxu0 %v4097
      %4229 = vmatmul.mubr.bf16.gmra.mrb[0].mxu0 %v3968
      %v4230 = vpop.f32.mrb[0].mxu0
      %v4231 = vadd.f32 0.0, %v4230
      %v4232 = vpop.f32.mrb[0].mxu0
      %v4233 = vpop.f32.mrb[0].mxu0
      %v4234 = vadd.f32 0.0, %v4233
      %v4235 = vpop.f32.mrb[0].mxu0
      %4236 = vmatprep.mubr.bf16.mxu0 %v4100
      %4237 = vmatmul.mubr.bf16.gmra.mrb[0].mxu0 %v3970
      %v4238 = vpop.f32.mrb[0].mxu0
      %v4239 = vadd.f32 0.0, %v4238
      %v4240 = vpop.f32.mrb[0].mxu0
      %v4241 = vpop.f32.mrb[0].mxu0
      %v4242 = vadd.f32 0.0, %v4241
      %v4243 = vpop.f32.mrb[0].mxu0
      %4244 = vmatprep.mubr.bf16.mxu0 %v4103
      %4245 = vmatmul.mubr.bf16.gmra.mrb[0].mxu0 %v3972
      %v4246 = vpop.f32.mrb[0].mxu0
      %v4247 = vadd.f32 0.0, %v4246
      %v4248 = vpop.f32.mrb[0].mxu0
      %v4249 = vpop.f32.mrb[0].mxu0
      %v4250 = vadd.f32 0.0, %v4249
      %v4251 = vpop.f32.mrb[0].mxu0
      %4252 = vmatprep.mubr.bf16.mxu0 %v4106
      %4253 = vmatmul.mubr.bf16.gmra.mrb[0].mxu0 %v3974
      %v4254 = vpop.f32.mrb[0].mxu0
      %v4255 = vadd.f32 0.0, %v4254
      %v4256 = vpop.f32.mrb[0].mxu0
      %v4257 = vpop.f32.mrb[0].mxu0
      %v4258 = vadd.f32 0.0, %v4257
      %v4259 = vpop.f32.mrb[0].mxu0
      %4260 = vmatprep.mubr.bf16.mxu0 %v4109
      %4261 = vmatmul.mubr.bf16.gmra.mrb[0].mxu0 %v3976
      %v4262 = vpop.f32.mrb[0].mxu0
      %v4263 = vadd.f32 0.0, %v4262
      %v4264 = vpop.f32.mrb[0].mxu0
      %v4265 = vpop.f32.mrb[0].mxu0
      %v4266 = vadd.f32 0.0, %v4265
      %v4267 = vpop.f32.mrb[0].mxu0
      %4268 = vmatprep.mubr.bf16.mxu0 %v4112
      %4269 = vmatmul.mubr.bf16.gmra.mrb[0].mxu0 %v3978
      %v4270 = vpop.f32.mrb[0].mxu0
      %v4271 = vadd.f32 0.0, %v4270
      %v4272 = vpop.f32.mrb[0].mxu0
      %v4273 = vpop.f32.mrb[0].mxu0
      %v4274 = vadd.f32 0.0, %v4273
      %v4275 = vpop.f32.mrb[0].mxu0
      %4276 = vmatprep.mubr.bf16.mxu0 %v4115
      %4277 = vmatmul.mubr.bf16.gmra.mrb[0].mxu0 %v3980
      %v4278 = vpop.f32.mrb[0].mxu0
      %v4279 = vadd.f32 0.0, %v4278
      %v4280 = vpop.f32.mrb[0].mxu0
      %v4281 = vpop.f32.mrb[0].mxu0
      %v4282 = vadd.f32 0.0, %v4281
      %v4283 = vpop.f32.mrb[0].mxu0
      %4284 = vmatprep.mubr.bf16.mxu0 %v4118
      %4285 = vmatmul.mubr.bf16.gmra.mrb[0].mxu0 %v3982
      %v4286 = vpop.f32.mrb[0].mxu0
      %v4287 = vadd.f32 0.0, %v4286
      %v4288 = vpop.f32.mrb[0].mxu0
      %v4289 = vpop.f32.mrb[0].mxu0
      %v4290 = vadd.f32 0.0, %v4289
      %v4291 = vpop.f32.mrb[0].mxu0
      %4292 = vmatprep.mubr.bf16.mxu0 %v4121
      %4293 = vmatmul.mubr.bf16.gmra.mrb[0].mxu0 %v3984
      %v4294 = vpop.f32.mrb[0].mxu0
      %v4295 = vadd.f32 0.0, %v4294
      %v4296 = vpop.f32.mrb[0].mxu0
      %v4297 = vpop.f32.mrb[0].mxu0
      %v4298 = vadd.f32 0.0, %v4297
      %v4299 = vpop.f32.mrb[0].mxu0
      %4300 = vmatprep.mubr.bf16.mxu0 %v4124
      %4301 = vmatmul.mubr.bf16.gmra.mrb[0].mxu0 %v3986
      %v4302 = vpop.f32.mrb[0].mxu0
      %v4303 = vadd.f32 0.0, %v4302
      %v4304 = vpop.f32.mrb[0].mxu0
      %v4305 = vpop.f32.mrb[0].mxu0
      %v4306 = vadd.f32 0.0, %v4305
      %v4307 = vpop.f32.mrb[0].mxu0
      %4308 = vmatprep.mubr.bf16.mxu0 %v4127
      %4309 = vmatmul.mubr.bf16.gmra.mrb[0].mxu0 %v3988
      %v4310 = vpop.f32.mrb[0].mxu0
      %v4311 = vadd.f32 0.0, %v4310
      %v4312 = vpop.f32.mrb[0].mxu0
      %v4313 = vpop.f32.mrb[0].mxu0
      %v4314 = vadd.f32 0.0, %v4313
      %v4315 = vpop.f32.mrb[0].mxu0
      %4316 = vmatprep.mubr.bf16.mxu0 %v4130
      %4317 = vmatmul.mubr.bf16.gmra.mrb[0].mxu0 %v3990
      %v4318 = vpop.f32.mrb[0].mxu0
      %v4319 = vadd.f32 0.0, %v4318
      %v4320 = vpop.f32.mrb[0].mxu0
      %v4321 = vpop.f32.mrb[0].mxu0
      %v4322 = vadd.f32 0.0, %v4321
      %v4323 = vpop.f32.mrb[0].mxu0
      %4324 = vmatprep.mubr.bf16.mxu0 %v4133
      %4325 = vmatmul.mubr.bf16.gmra.mrb[0].mxu0 %v3992
      %v4326 = vpop.f32.mrb[0].mxu0
      %v4327 = vadd.f32 0.0, %v4326
      %v4328 = vpop.f32.mrb[0].mxu0
      %v4329 = vpop.f32.mrb[0].mxu0
      %v4330 = vadd.f32 0.0, %v4329
      %v4331 = vpop.f32.mrb[0].mxu0
      %4332 = vmatprep.mubr.bf16.mxu0 %v4136
      %4333 = vmatmul.mubr.bf16.gmra.mrb[0].mxu0 %v3994
      %v4334 = vpop.f32.mrb[0].mxu0
      %v4335 = vadd.f32 0.0, %v4334
      %v4336 = vpop.f32.mrb[0].mxu0
      %v4337 = vpop.f32.mrb[0].mxu0
      %v4338 = vadd.f32 0.0, %v4337
      %v4339 = vpop.f32.mrb[0].mxu0
      %4340 = vmatprep.mubr.bf16.mxu0 %v4139
      %4341 = vmatmul.mubr.bf16.gmra.mrb[0].mxu0 %v3996
      %v4342 = vpop.f32.mrb[0].mxu0
      %v4343 = vadd.f32 0.0, %v4342
      %v4344 = vpop.f32.mrb[0].mxu0
      %v4345 = vpop.f32.mrb[0].mxu0
      %v4346 = vadd.f32 0.0, %v4345
      %v4347 = vpop.f32.mrb[0].mxu0
      %4348 = vmatprep.mubr.bf16.mxu0 %v4142
      %4349 = vmatmul.mubr.bf16.gmra.mrb[0].mxu0 %v3998
      %v4350 = vpop.f32.mrb[0].mxu0
      %v4351 = vadd.f32 0.0, %v4350
      %v4352 = vpop.f32.mrb[0].mxu0
      %v4353 = vpop.f32.mrb[0].mxu0
      %v4354 = vadd.f32 0.0, %v4353
      %v4355 = vpop.f32.mrb[0].mxu0
      %4356 = vmatprep.mubr.bf16.mxu0 %v4145
      %4357 = vmatmul.mubr.bf16.gmra.mrb[0].mxu0 %v4000
      %v4358 = vpop.f32.mrb[0].mxu0
      %v4359 = vadd.f32 0.0, %v4358
      %v4360 = vpop.f32.mrb[0].mxu0
      %v4361 = vpop.f32.mrb[0].mxu0
      %v4362 = vadd.f32 0.0, %v4361
      %v4363 = vpop.f32.mrb[0].mxu0
      %4364 = vmatprep.mubr.bf16.mxu0 %v4148
      %4365 = vmatmul.mubr.bf16.gmra.mrb[0].mxu0 %v4002
      %v4366 = vpop.f32.mrb[0].mxu0
      %v4367 = vadd.f32 0.0, %v4366
      %v4368 = vpop.f32.mrb[0].mxu0
      %v4369 = vpop.f32.mrb[0].mxu0
      %v4370 = vadd.f32 0.0, %v4369
      %v4371 = vpop.f32.mrb[0].mxu0
      %4372 = vmatprep.mubr.bf16.mxu0 %v4151
      %4373 = vmatmul.mubr.bf16.gmra.mrb[0].mxu0 %v4004
      %v4374 = vpop.f32.mrb[0].mxu0
      %v4375 = vadd.f32 0.0, %v4374
      %v4376 = vpop.f32.mrb[0].mxu0
      %v4377 = vpop.f32.mrb[0].mxu0
      %v4378 = vadd.f32 0.0, %v4377
      %v4379 = vpop.f32.mrb[0].mxu0
      %4380 = vmatprep.mubr.bf16.mxu0 %v4154
      %4381 = vmatmul.mubr.bf16.gmra.mrb[0].mxu0 %v4006
      %v4382 = vpop.f32.mrb[0].mxu0
      %v4383 = vadd.f32 0.0, %v4382
      %v4384 = vpop.f32.mrb[0].mxu0
      %v4385 = vpop.f32.mrb[0].mxu0
      %v4386 = vadd.f32 0.0, %v4385
      %v4387 = vpop.f32.mrb[0].mxu0
      %4388 = vmatprep.mubr.bf16.mxu0 %v4157
      %4389 = vmatmul.mubr.bf16.gmra.mrb[0].mxu0 %v4008
      %v4390 = vpop.f32.mrb[0].mxu0
      %v4391 = vadd.f32 0.0, %v4390
      %v4392 = vpop.f32.mrb[0].mxu0
      %v4393 = vpop.f32.mrb[0].mxu0
      %v4394 = vadd.f32 0.0, %v4393
      %v4395 = vpop.f32.mrb[0].mxu0
      %4396 = vmatprep.mubr.bf16.mxu0 %v4160
      %4397 = vmatmul.mubr.bf16.gmra.mrb[0].mxu0 %v4010
      %v4398 = vpop.f32.mrb[0].mxu0
      %v4399 = vadd.f32 0.0, %v4398
      %v4400 = vpop.f32.mrb[0].mxu0
      %v4401 = vpop.f32.mrb[0].mxu0
      %v4402 = vadd.f32 0.0, %v4401
      %v4403 = vpop.f32.mrb[0].mxu0
      %4404 = vmatprep.mubr.bf16.mxu0 %v4163
      %4405 = vmatmul.mubr.bf16.gmra.mrb[0].mxu0 %v4012
      %v4406 = vpop.f32.mrb[0].mxu0
      %v4407 = vadd.f32 0.0, %v4406
      %v4408 = vpop.f32.mrb[0].mxu0
      %v4409 = vpop.f32.mrb[0].mxu0
      %v4410 = vadd.f32 0.0, %v4409
      %v4411 = vpop.f32.mrb[0].mxu0
      %4412 = vmatprep.mubr.bf16.mxu0 %v4166
      %4413 = vmatmul.mubr.bf16.gmra.mrb[0].mxu0 %v4014
      %v4414 = vpop.f32.mrb[0].mxu0
      %v4415 = vadd.f32 0.0, %v4414
      %v4416 = vpop.f32.mrb[0].mxu0
      %v4417 = vpop.f32.mrb[0].mxu0
      %v4418 = vadd.f32 0.0, %v4417
      %v4419 = vpop.f32.mrb[0].mxu0
      %4420 = vmatprep.mubr.bf16.mxu0 %v4169
      %4421 = vmatmul.mubr.bf16.gmra.mrb[0].mxu0 %v4016
      %v4422 = vpop.f32.mrb[0].mxu0
      %v4423 = vadd.f32 0.0, %v4422
      %v4424 = vpop.f32.mrb[0].mxu0
      %v4425 = vpop.f32.mrb[0].mxu0
      %v4426 = vadd.f32 0.0, %v4425
      %v4427 = vpop.f32.mrb[0].mxu0
      %4428 = vmatprep.mubr.bf16.mxu0 %v4172
      %4429 = vmatmul.mubr.bf16.gmra.mrb[0].mxu0 %v4018
      %v4430 = vpop.f32.mrb[0].mxu0
      %v4431 = vadd.f32 0.0, %v4430
      %v4432 = vpop.f32.mrb[0].mxu0
      %v4433 = vpop.f32.mrb[0].mxu0
      %v4434 = vadd.f32 0.0, %v4433
      %v4435 = vpop.f32.mrb[0].mxu0
      %4436 = vmatprep.mubr.bf16.mxu0 %v4175
      %4437 = vmatmul.mubr.bf16.gmra.mrb[0].mxu0 %v4020
      %v4438 = vpop.f32.mrb[0].mxu0
      %v4439 = vadd.f32 0.0, %v4438
      %v4440 = vpop.f32.mrb[0].mxu0
      %v4441 = vpop.f32.mrb[0].mxu0
      %v4442 = vadd.f32 0.0, %v4441
      %v4443 = vpop.f32.mrb[0].mxu0
      %4444 = vmatprep.mubr.bf16.mxu0 %v4178
      %4445 = vmatmul.mubr.bf16.gmra.mrb[0].mxu0 %v4022
      %v4446 = vpop.f32.mrb[0].mxu0
      %v4447 = vadd.f32 0.0, %v4446
      %v4448 = vpop.f32.mrb[0].mxu0
      %v4449 = vpop.f32.mrb[0].mxu0
      %v4450 = vadd.f32 0.0, %v4449
      %v4451 = vpop.f32.mrb[0].mxu0
      %4452 = vmatprep.mubr.bf16.mxu0 %v4181
      %4453 = vmatmul.mubr.bf16.gmra.mrb[0].mxu0 %v4024
      %v4454 = vpop.f32.mrb[0].mxu0
      %v4455 = vadd.f32 0.0, %v4454
      %v4456 = vpop.f32.mrb[0].mxu0
      %v4457 = vpop.f32.mrb[0].mxu0
      %v4458 = vadd.f32 0.0, %v4457
      %v4459 = vpop.f32.mrb[0].mxu0
      %4460 = vmatprep.mubr.bf16.mxu0 %v4184
      %4461 = vmatmul.mubr.bf16.gmra.mrb[0].mxu0 %v4026
      %v4462 = vpop.f32.mrb[0].mxu0
      %v4463 = vadd.f32 0.0, %v4462
      %v4464 = vpop.f32.mrb[0].mxu0
      %v4465 = vpop.f32.mrb[0].mxu0
      %v4466 = vadd.f32 0.0, %v4465
      %v4467 = vpop.f32.mrb[0].mxu0
      %4468 = vmatprep.mubr.bf16.mxu0 %v4187
      %4469 = vmatmul.mubr.bf16.gmra.mrb[0].mxu0 %v4028
      %v4470 = vpop.f32.mrb[0].mxu0
      %v4471 = vadd.f32 0.0, %v4470
      %v4472 = vpop.f32.mrb[0].mxu0
      %v4473 = vpop.f32.mrb[0].mxu0
      %v4474 = vadd.f32 0.0, %v4473
      %v4475 = vpop.f32.mrb[0].mxu0
      %4476 = vmatprep.mubr.bf16.mxu0 %v4190
      %4477 = vmatmul.mubr.bf16.gmra.mrb[0].mxu0 %v4030
      %v4478 = vpop.f32.mrb[0].mxu0
      %v4479 = vadd.f32 0.0, %v4478
      %v4480 = vpop.f32.mrb[0].mxu0
      %v4481 = vpop.f32.mrb[0].mxu0
      %v4482 = vadd.f32 0.0, %v4481
      %v4483 = vpop.f32.mrb[0].mxu0
      %4484 = vdwg.mxu0
      %s4485 = scalar_lea.vmem %s3, 84
      %v4486 = vld [vmem:[%s4485] sm:$0xf]
      %v4487 = vld [vmem:[%s4485 + $0x4] sm:$0xf]
      %v4488 = vld [vmem:[%s4485 + $0x8] sm:$0xf]
      %v4489 = vld [vmem:[%s4485 + $0xc] sm:$0xf]
      %v4490 = vld [vmem:[%s4485 + $0x10] sm:$0xf]
      %v4491 = vld [vmem:[%s4485 + $0x14] sm:$0xf]
      %v4492 = vld [vmem:[%s4485 + $0x18] sm:$0xf]
      %v4493 = vld [vmem:[%s4485 + $0x1c] sm:$0xf]
      %v4494 = vld [vmem:[%s4485 + $0x20] sm:$0xf]
      %v4495 = vld [vmem:[%s4485 + $0x24] sm:$0xf]
      %v4496 = vld [vmem:[%s4485 + $0x28] sm:$0xf]
      %v4497 = vld [vmem:[%s4485 + $0x2c] sm:$0xf]
      %v4498 = vld [vmem:[%s4485 + $0x30] sm:$0xf]
      %v4499 = vld [vmem:[%s4485 + $0x34] sm:$0xf]
      %v4500 = vld [vmem:[%s4485 + $0x38] sm:$0xf]
      %v4501 = vld [vmem:[%s4485 + $0x3c] sm:$0xf]
      %v4502 = vld [vmem:[%s4485 + $0x40] sm:$0xf]
      %v4503 = vld [vmem:[%s4485 + $0x44] sm:$0xf]
      %v4504 = vld [vmem:[%s4485 + $0x48] sm:$0xf]
      %v4505 = vld [vmem:[%s4485 + $0x4c] sm:$0xf]
      %v4506 = vld [vmem:[%s4485 + $0x50] sm:$0xf]
      %v4528 = vunpack.c.l.b16 %v4486
      %v4529 = vunpack.c.l.b16 %v4487
      %v4530 = vunpack.c.l.b16 %v4488
      %v4531 = vunpack.c.l.b16 %v4489
      %v4532 = vunpack.c.l.b16 %v4490
      %v4533 = vunpack.c.l.b16 %v4491
      %v4534 = vunpack.c.l.b16 %v4492
      %v4535 = vunpack.c.l.b16 %v4493
      %v4536 = vunpack.c.l.b16 %v4494
      %v4537 = vunpack.c.l.b16 %v4495
      %v4538 = vunpack.c.l.b16 %v4496
      %v4539 = vunpack.c.l.b16 %v4497
      %v4540 = vunpack.c.l.b16 %v4498
      %v4541 = vunpack.c.l.b16 %v4499
      %v4542 = vunpack.c.l.b16 %v4500
      %v4543 = vunpack.c.l.b16 %v4501
      %v4544 = vunpack.c.l.b16 %v4502
      %v4545 = vunpack.c.l.b16 %v4503
      %v4546 = vunpack.c.l.b16 %v4504
      %v4547 = vunpack.c.l.b16 %v4505
      %v4548 = vunpack.c.l.b16 %v4506
      %v4549 = vpack.c.b16 %v4529, %v4528
      %v4550 = vpack.c.b16 %v4531, %v4530
      %v4551 = vpack.c.b16 %v4533, %v4532
      %v4552 = vpack.c.b16 %v4535, %v4534
      %v4553 = vpack.c.b16 %v4537, %v4536
      %v4554 = vpack.c.b16 %v4539, %v4538
      %v4555 = vpack.c.b16 %v4541, %v4540
      %v4556 = vpack.c.b16 %v4543, %v4542
      %v4557 = vpack.c.b16 %v4545, %v4544
      %v4558 = vpack.c.b16 %v4547, %v4546
      %v4559 = vpack.c.b16 %v4548, %v4548
      %v4571 = vsel %vm4192, %v4559, 0
      %4573 = vmatprep.subr.bf16.mxu0 0
      %4574 = vmatpush1.bf16.msra.mxu0 %v4549
      %4575 = vmatprep.subr.bf16.mxu0 0
      %4576 = vmatpush1.bf16.msra.mxu0 %v4550
      %4577 = vmatprep.subr.bf16.mxu0 0
      %4578 = vmatpush1.bf16.msra.mxu0 %v4551
      %4579 = vmatprep.subr.bf16.mxu0 0
      %4580 = vmatpush1.bf16.msra.mxu0 %v4552
      %4581 = vmatprep.subr.bf16.mxu0 0
      %4582 = vmatpush1.bf16.msra.mxu0 %v4553
      %4583 = vmatprep.subr.bf16.mxu0 0
      %4584 = vmatpush1.bf16.msra.mxu0 %v4554
      %4585 = vmatprep.subr.bf16.mxu0 0
      %4586 = vmatpush1.bf16.msra.mxu0 %v4555
      %4587 = vmatprep.subr.bf16.mxu0 0
      %4588 = vmatpush1.bf16.msra.mxu0 %v4556
      %4589 = vmatprep.subr.bf16.mxu0 0
      %4590 = vmatpush1.bf16.msra.mxu0 %v4557
      %4591 = vmatprep.subr.bf16.mxu0 0
      %4592 = vmatpush1.bf16.msra.mxu0 %v4558
      %4593 = vmatprep.subr.bf16.mxu0 0
      %4594 = vmatpush1.bf16.msra.mxu0 %v4571
      %4595 = vmatprep.subr.bf16.mxu0 0
      %4596 = vmatpush1.bf16.msra.mxu0 0
      %4597 = vmatprep.subr.bf16.mxu0 0
      %4598 = vmatpush1.bf16.msra.mxu0 0
      %4599 = vmatprep.subr.bf16.mxu0 0
      %4600 = vmatpush1.bf16.msra.mxu0 0
      %4601 = vmatprep.subr.bf16.mxu0 0
      %4602 = vmatpush1.bf16.msra.mxu0 0
      %4603 = vmatprep.subr.bf16.mxu0 0
      %4604 = vmatpush1.bf16.msra.mxu0 0
      %4605 = vmatprep.mubr.bf16.mxu0 %v4097
      %4606 = vmatmul.mubr.bf16.gmra.mrb[0].mxu0 %v3968
      %v4607 = vpop.f32.mrb[0].mxu0
      %v4608 = vadd.f32 0.0, %v4607
      %v4609 = vpop.f32.mrb[0].mxu0
      %v4610 = vpop.f32.mrb[0].mxu0
      %v4611 = vadd.f32 0.0, %v4610
      %v4612 = vpop.f32.mrb[0].mxu0
      %4613 = vmatprep.mubr.bf16.mxu0 %v4100
      %4614 = vmatmul.mubr.bf16.gmra.mrb[0].mxu0 %v3970
      %v4615 = vpop.f32.mrb[0].mxu0
      %v4616 = vadd.f32 0.0, %v4615
      %v4617 = vpop.f32.mrb[0].mxu0
      %v4618 = vpop.f32.mrb[0].mxu0
      %v4619 = vadd.f32 0.0, %v4618
      %v4620 = vpop.f32.mrb[0].mxu0
      %4621 = vmatprep.mubr.bf16.mxu0 %v4103
      %4622 = vmatmul.mubr.bf16.gmra.mrb[0].mxu0 %v3972
      %v4623 = vpop.f32.mrb[0].mxu0
      %v4624 = vadd.f32 0.0, %v4623
      %v4625 = vpop.f32.mrb[0].mxu0
      %v4626 = vpop.f32.mrb[0].mxu0
      %v4627 = vadd.f32 0.0, %v4626
      %v4628 = vpop.f32.mrb[0].mxu0
      %4629 = vmatprep.mubr.bf16.mxu0 %v4106
      %4630 = vmatmul.mubr.bf16.gmra.mrb[0].mxu0 %v3974
      %v4631 = vpop.f32.mrb[0].mxu0
      %v4632 = vadd.f32 0.0, %v4631
      %v4633 = vpop.f32.mrb[0].mxu0
      %v4634 = vpop.f32.mrb[0].mxu0
      %v4635 = vadd.f32 0.0, %v4634
      %v4636 = vpop.f32.mrb[0].mxu0
      %4637 = vmatprep.mubr.bf16.mxu0 %v4109
      %4638 = vmatmul.mubr.bf16.gmra.mrb[0].mxu0 %v3976
      %v4639 = vpop.f32.mrb[0].mxu0
      %v4640 = vadd.f32 0.0, %v4639
      %v4641 = vpop.f32.mrb[0].mxu0
      %v4642 = vpop.f32.mrb[0].mxu0
      %v4643 = vadd.f32 0.0, %v4642
      %v4644 = vpop.f32.mrb[0].mxu0
      %4645 = vmatprep.mubr.bf16.mxu0 %v4112
      %4646 = vmatmul.mubr.bf16.gmra.mrb[0].mxu0 %v3978
      %v4647 = vpop.f32.mrb[0].mxu0
      %v4648 = vadd.f32 0.0, %v4647
      %v4649 = vpop.f32.mrb[0].mxu0
      %v4650 = vpop.f32.mrb[0].mxu0
      %v4651 = vadd.f32 0.0, %v4650
      %v4652 = vpop.f32.mrb[0].mxu0
      %4653 = vmatprep.mubr.bf16.mxu0 %v4115
      %4654 = vmatmul.mubr.bf16.gmra.mrb[0].mxu0 %v3980
      %v4655 = vpop.f32.mrb[0].mxu0
      %v4656 = vadd.f32 0.0, %v4655
      %v4657 = vpop.f32.mrb[0].mxu0
      %v4658 = vpop.f32.mrb[0].mxu0
      %v4659 = vadd.f32 0.0, %v4658
      %v4660 = vpop.f32.mrb[0].mxu0
      %4661 = vmatprep.mubr.bf16.mxu0 %v4118
      %4662 = vmatmul.mubr.bf16.gmra.mrb[0].mxu0 %v3982
      %v4663 = vpop.f32.mrb[0].mxu0
      %v4664 = vadd.f32 0.0, %v4663
      %v4665 = vpop.f32.mrb[0].mxu0
      %v4666 = vpop.f32.mrb[0].mxu0
      %v4667 = vadd.f32 0.0, %v4666
      %v4668 = vpop.f32.mrb[0].mxu0
      %4669 = vmatprep.mubr.bf16.mxu0 %v4121
      %4670 = vmatmul.mubr.bf16.gmra.mrb[0].mxu0 %v3984
      %v4671 = vpop.f32.mrb[0].mxu0
      %v4672 = vadd.f32 0.0, %v4671
      %v4673 = vpop.f32.mrb[0].mxu0
      %v4674 = vpop.f32.mrb[0].mxu0
      %v4675 = vadd.f32 0.0, %v4674
      %v4676 = vpop.f32.mrb[0].mxu0
      %4677 = vmatprep.mubr.bf16.mxu0 %v4124
      %4678 = vmatmul.mubr.bf16.gmra.mrb[0].mxu0 %v3986
      %v4679 = vpop.f32.mrb[0].mxu0
      %v4680 = vadd.f32 0.0, %v4679
      %v4681 = vpop.f32.mrb[0].mxu0
      %v4682 = vpop.f32.mrb[0].mxu0
      %v4683 = vadd.f32 0.0, %v4682
      %v4684 = vpop.f32.mrb[0].mxu0
      %4685 = vmatprep.mubr.bf16.mxu0 %v4127
      %4686 = vmatmul.mubr.bf16.gmra.mrb[0].mxu0 %v3988
      %v4687 = vpop.f32.mrb[0].mxu0
      %v4688 = vadd.f32 0.0, %v4687
      %v4689 = vpop.f32.mrb[0].mxu0
      %v4690 = vpop.f32.mrb[0].mxu0
      %v4691 = vadd.f32 0.0, %v4690
      %v4692 = vpop.f32.mrb[0].mxu0
      %4693 = vmatprep.mubr.bf16.mxu0 %v4130
      %4694 = vmatmul.mubr.bf16.gmra.mrb[0].mxu0 %v3990
      %v4695 = vpop.f32.mrb[0].mxu0
      %v4696 = vadd.f32 0.0, %v4695
      %v4697 = vpop.f32.mrb[0].mxu0
      %v4698 = vpop.f32.mrb[0].mxu0
      %v4699 = vadd.f32 0.0, %v4698
      %v4700 = vpop.f32.mrb[0].mxu0
      %4701 = vmatprep.mubr.bf16.mxu0 %v4133
      %4702 = vmatmul.mubr.bf16.gmra.mrb[0].mxu0 %v3992
      %v4703 = vpop.f32.mrb[0].mxu0
      %v4704 = vadd.f32 0.0, %v4703
      %v4705 = vpop.f32.mrb[0].mxu0
      %v4706 = vpop.f32.mrb[0].mxu0
      %v4707 = vadd.f32 0.0, %v4706
      %v4708 = vpop.f32.mrb[0].mxu0
      %4709 = vmatprep.mubr.bf16.mxu0 %v4136
      %4710 = vmatmul.mubr.bf16.gmra.mrb[0].mxu0 %v3994
      %v4711 = vpop.f32.mrb[0].mxu0
      %v4712 = vadd.f32 0.0, %v4711
      %v4713 = vpop.f32.mrb[0].mxu0
      %v4714 = vpop.f32.mrb[0].mxu0
      %v4715 = vadd.f32 0.0, %v4714
      %v4716 = vpop.f32.mrb[0].mxu0
      %4717 = vmatprep.mubr.bf16.mxu0 %v4139
      %4718 = vmatmul.mubr.bf16.gmra.mrb[0].mxu0 %v3996
      %v4719 = vpop.f32.mrb[0].mxu0
      %v4720 = vadd.f32 0.0, %v4719
      %v4721 = vpop.f32.mrb[0].mxu0
      %v4722 = vpop.f32.mrb[0].mxu0
      %v4723 = vadd.f32 0.0, %v4722
      %v4724 = vpop.f32.mrb[0].mxu0
      %4725 = vmatprep.mubr.bf16.mxu0 %v4142
      %4726 = vmatmul.mubr.bf16.gmra.mrb[0].mxu0 %v3998
      %v4727 = vpop.f32.mrb[0].mxu0
      %v4728 = vadd.f32 0.0, %v4727
      %v4729 = vpop.f32.mrb[0].mxu0
      %v4730 = vpop.f32.mrb[0].mxu0
      %v4731 = vadd.f32 0.0, %v4730
      %v4732 = vpop.f32.mrb[0].mxu0
      %4733 = vmatprep.mubr.bf16.mxu0 %v4145
      %4734 = vmatmul.mubr.bf16.gmra.mrb[0].mxu0 %v4000
      %v4735 = vpop.f32.mrb[0].mxu0
      %v4736 = vadd.f32 0.0, %v4735
      %v4737 = vpop.f32.mrb[0].mxu0
      %v4738 = vpop.f32.mrb[0].mxu0
      %v4739 = vadd.f32 0.0, %v4738
      %v4740 = vpop.f32.mrb[0].mxu0
      %4741 = vmatprep.mubr.bf16.mxu0 %v4148
      %4742 = vmatmul.mubr.bf16.gmra.mrb[0].mxu0 %v4002
      %v4743 = vpop.f32.mrb[0].mxu0
      %v4744 = vadd.f32 0.0, %v4743
      %v4745 = vpop.f32.mrb[0].mxu0
      %v4746 = vpop.f32.mrb[0].mxu0
      %v4747 = vadd.f32 0.0, %v4746
      %v4748 = vpop.f32.mrb[0].mxu0
      %4749 = vmatprep.mubr.bf16.mxu0 %v4151
      %4750 = vmatmul.mubr.bf16.gmra.mrb[0].mxu0 %v4004
      %v4751 = vpop.f32.mrb[0].mxu0
      %v4752 = vadd.f32 0.0, %v4751
      %v4753 = vpop.f32.mrb[0].mxu0
      %v4754 = vpop.f32.mrb[0].mxu0
      %v4755 = vadd.f32 0.0, %v4754
      %v4756 = vpop.f32.mrb[0].mxu0
      %4757 = vmatprep.mubr.bf16.mxu0 %v4154
      %4758 = vmatmul.mubr.bf16.gmra.mrb[0].mxu0 %v4006
      %v4759 = vpop.f32.mrb[0].mxu0
      %v4760 = vadd.f32 0.0, %v4759
      %v4761 = vpop.f32.mrb[0].mxu0
      %v4762 = vpop.f32.mrb[0].mxu0
      %v4763 = vadd.f32 0.0, %v4762
      %v4764 = vpop.f32.mrb[0].mxu0
      %4765 = vmatprep.mubr.bf16.mxu0 %v4157
      %4766 = vmatmul.mubr.bf16.gmra.mrb[0].mxu0 %v4008
      %v4767 = vpop.f32.mrb[0].mxu0
      %v4768 = vadd.f32 0.0, %v4767
      %v4769 = vpop.f32.mrb[0].mxu0
      %v4770 = vpop.f32.mrb[0].mxu0
      %v4771 = vadd.f32 0.0, %v4770
      %v4772 = vpop.f32.mrb[0].mxu0
      %4773 = vmatprep.mubr.bf16.mxu0 %v4160
      %4774 = vmatmul.mubr.bf16.gmra.mrb[0].mxu0 %v4010
      %v4775 = vpop.f32.mrb[0].mxu0
      %v4776 = vadd.f32 0.0, %v4775
      %v4777 = vpop.f32.mrb[0].mxu0
      %v4778 = vpop.f32.mrb[0].mxu0
      %v4779 = vadd.f32 0.0, %v4778
      %v4780 = vpop.f32.mrb[0].mxu0
      %4781 = vmatprep.mubr.bf16.mxu0 %v4163
      %4782 = vmatmul.mubr.bf16.gmra.mrb[0].mxu0 %v4012
      %v4783 = vpop.f32.mrb[0].mxu0
      %v4784 = vadd.f32 0.0, %v4783
      %v4785 = vpop.f32.mrb[0].mxu0
      %v4786 = vpop.f32.mrb[0].mxu0
      %v4787 = vadd.f32 0.0, %v4786
      %v4788 = vpop.f32.mrb[0].mxu0
      %4789 = vmatprep.mubr.bf16.mxu0 %v4166
      %4790 = vmatmul.mubr.bf16.gmra.mrb[0].mxu0 %v4014
      %v4791 = vpop.f32.mrb[0].mxu0
      %v4792 = vadd.f32 0.0, %v4791
      %v4793 = vpop.f32.mrb[0].mxu0
      %v4794 = vpop.f32.mrb[0].mxu0
      %v4795 = vadd.f32 0.0, %v4794
      %v4796 = vpop.f32.mrb[0].mxu0
      %4797 = vmatprep.mubr.bf16.mxu0 %v4169
      %4798 = vmatmul.mubr.bf16.gmra.mrb[0].mxu0 %v4016
      %v4799 = vpop.f32.mrb[0].mxu0
      %v4800 = vadd.f32 0.0, %v4799
      %v4801 = vpop.f32.mrb[0].mxu0
      %v4802 = vpop.f32.mrb[0].mxu0
      %v4803 = vadd.f32 0.0, %v4802
      %v4804 = vpop.f32.mrb[0].mxu0
      %4805 = vmatprep.mubr.bf16.mxu0 %v4172
      %4806 = vmatmul.mubr.bf16.gmra.mrb[0].mxu0 %v4018
      %v4807 = vpop.f32.mrb[0].mxu0
      %v4808 = vadd.f32 0.0, %v4807
      %v4809 = vpop.f32.mrb[0].mxu0
      %v4810 = vpop.f32.mrb[0].mxu0
      %v4811 = vadd.f32 0.0, %v4810
      %v4812 = vpop.f32.mrb[0].mxu0
      %4813 = vmatprep.mubr.bf16.mxu0 %v4175
      %4814 = vmatmul.mubr.bf16.gmra.mrb[0].mxu0 %v4020
      %v4815 = vpop.f32.mrb[0].mxu0
      %v4816 = vadd.f32 0.0, %v4815
      %v4817 = vpop.f32.mrb[0].mxu0
      %v4818 = vpop.f32.mrb[0].mxu0
      %v4819 = vadd.f32 0.0, %v4818
      %v4820 = vpop.f32.mrb[0].mxu0
      %4821 = vmatprep.mubr.bf16.mxu0 %v4178
      %4822 = vmatmul.mubr.bf16.gmra.mrb[0].mxu0 %v4022
      %v4823 = vpop.f32.mrb[0].mxu0
      %v4824 = vadd.f32 0.0, %v4823
      %v4825 = vpop.f32.mrb[0].mxu0
      %v4826 = vpop.f32.mrb[0].mxu0
      %v4827 = vadd.f32 0.0, %v4826
      %v4828 = vpop.f32.mrb[0].mxu0
      %4829 = vmatprep.mubr.bf16.mxu0 %v4181
      %4830 = vmatmul.mubr.bf16.gmra.mrb[0].mxu0 %v4024
      %v4831 = vpop.f32.mrb[0].mxu0
      %v4832 = vadd.f32 0.0, %v4831
      %v4833 = vpop.f32.mrb[0].mxu0
      %v4834 = vpop.f32.mrb[0].mxu0
      %v4835 = vadd.f32 0.0, %v4834
      %v4836 = vpop.f32.mrb[0].mxu0
      %4837 = vmatprep.mubr.bf16.mxu0 %v4184
      %4838 = vmatmul.mubr.bf16.gmra.mrb[0].mxu0 %v4026
      %v4839 = vpop.f32.mrb[0].mxu0
      %v4840 = vadd.f32 0.0, %v4839
      %v4841 = vpop.f32.mrb[0].mxu0
      %v4842 = vpop.f32.mrb[0].mxu0
      %v4843 = vadd.f32 0.0, %v4842
      %v4844 = vpop.f32.mrb[0].mxu0
      %4845 = vmatprep.mubr.bf16.mxu0 %v4187
      %4846 = vmatmul.mubr.bf16.gmra.mrb[0].mxu0 %v4028
      %v4847 = vpop.f32.mrb[0].mxu0
      %v4848 = vadd.f32 0.0, %v4847
      %v4849 = vpop.f32.mrb[0].mxu0
      %v4850 = vpop.f32.mrb[0].mxu0
      %v4851 = vadd.f32 0.0, %v4850
      %v4852 = vpop.f32.mrb[0].mxu0
      %4853 = vmatprep.mubr.bf16.mxu0 %v4190
      %4854 = vmatmul.mubr.bf16.gmra.mrb[0].mxu0 %v4030
      %v4855 = vpop.f32.mrb[0].mxu0
      %v4856 = vadd.f32 0.0, %v4855
      %v4857 = vpop.f32.mrb[0].mxu0
      %v4858 = vpop.f32.mrb[0].mxu0
      %v4859 = vadd.f32 0.0, %v4858
      %v4860 = vpop.f32.mrb[0].mxu0
      %4861 = vdwg.mxu0
      %v4862 = vmax.f32 %v4231, %v4608
      %v4863 = vmax.f32 %v4234, %v4611
      %v4864 = vmax.f32 %v4239, %v4616
      %v4865 = vmax.f32 %v4242, %v4619
      %v4866 = vmax.f32 %v4247, %v4624
      %v4867 = vmax.f32 %v4250, %v4627
      %v4868 = vmax.f32 %v4255, %v4632
      %v4869 = vmax.f32 %v4258, %v4635
      %v4870 = vmax.f32 %v4263, %v4640
      %v4871 = vmax.f32 %v4266, %v4643
      %v4872 = vmax.f32 %v4271, %v4648
      %v4873 = vmax.f32 %v4274, %v4651
      %v4874 = vmax.f32 %v4279, %v4656
      %v4875 = vmax.f32 %v4282, %v4659
      %v4876 = vmax.f32 %v4287, %v4664
      %v4877 = vmax.f32 %v4290, %v4667
      %v4878 = vmax.f32 %v4295, %v4672
      %v4879 = vmax.f32 %v4298, %v4675
      %v4880 = vmax.f32 %v4303, %v4680
      %v4881 = vmax.f32 %v4306, %v4683
      %v4882 = vmax.f32 %v4311, %v4688
      %v4883 = vmax.f32 %v4314, %v4691
      %v4884 = vmax.f32 %v4319, %v4696
      %v4885 = vmax.f32 %v4322, %v4699
      %v4886 = vmax.f32 %v4327, %v4704
      %v4887 = vmax.f32 %v4330, %v4707
      %v4888 = vmax.f32 %v4335, %v4712
      %v4889 = vmax.f32 %v4338, %v4715
      %v4890 = vmax.f32 %v4343, %v4720
      %v4891 = vmax.f32 %v4346, %v4723
      %v4892 = vmax.f32 %v4351, %v4728
      %v4893 = vmax.f32 %v4354, %v4731
      %v4894 = vmax.f32 %v4359, %v4736
      %v4895 = vmax.f32 %v4362, %v4739
      %v4896 = vmax.f32 %v4367, %v4744
      %v4897 = vmax.f32 %v4370, %v4747
      %v4898 = vmax.f32 %v4375, %v4752
      %v4899 = vmax.f32 %v4378, %v4755
      %v4900 = vmax.f32 %v4383, %v4760
      %v4901 = vmax.f32 %v4386, %v4763
      %v4902 = vmax.f32 %v4391, %v4768
      %v4903 = vmax.f32 %v4394, %v4771
      %v4904 = vmax.f32 %v4399, %v4776
      %v4905 = vmax.f32 %v4402, %v4779
      %v4906 = vmax.f32 %v4407, %v4784
      %v4907 = vmax.f32 %v4410, %v4787
      %v4908 = vmax.f32 %v4415, %v4792
      %v4909 = vmax.f32 %v4418, %v4795
      %v4910 = vmax.f32 %v4423, %v4800
      %v4911 = vmax.f32 %v4426, %v4803
      %v4912 = vmax.f32 %v4431, %v4808
      %v4913 = vmax.f32 %v4434, %v4811
      %v4914 = vmax.f32 %v4439, %v4816
      %v4915 = vmax.f32 %v4442, %v4819
      %v4916 = vmax.f32 %v4447, %v4824
      %v4917 = vmax.f32 %v4450, %v4827
      %v4918 = vmax.f32 %v4455, %v4832
      %v4919 = vmax.f32 %v4458, %v4835
      %v4920 = vmax.f32 %v4463, %v4840
      %v4921 = vmax.f32 %v4466, %v4843
      %v4922 = vmax.f32 %v4471, %v4848
      %v4923 = vmax.f32 %v4474, %v4851
      %v4924 = vmax.f32 %v4479, %v4856
      %v4925 = vmax.f32 %v4482, %v4859
      %vm4990 = vcmask 1046528
      %v4991 = vrot.slane %v4862, 1
      %v4992 = vrot.slane %v4863, 1
      %v4993 = vsel %vm4990, %v4991, %v4992
      %v4994 = vrot.slane %v4864, 1
      %v4995 = vsel %vm4990, %v4992, %v4994
      %v4996 = vrot.slane %v4865, 1
      %v4997 = vsel %vm4990, %v4994, %v4996
      %v4998 = vrot.slane %v4866, 1
      %v4999 = vsel %vm4990, %v4996, %v4998
      %v5000 = vrot.slane %v4867, 1
      %v5001 = vsel %vm4990, %v4998, %v5000
      %v5002 = vrot.slane %v4868, 1
      %v5003 = vsel %vm4990, %v5000, %v5002
      %v5004 = vrot.slane %v4869, 1
      %v5005 = vsel %vm4990, %v5002, %v5004
      %v5006 = vrot.slane %v4870, 1
      %v5007 = vsel %vm4990, %v5004, %v5006
      %v5008 = vrot.slane %v4871, 1
      %v5009 = vsel %vm4990, %v5006, %v5008
      %v5010 = vrot.slane %v4872, 1
      %v5011 = vsel %vm4990, %v5008, %v5010
      %v5012 = vrot.slane %v4873, 1
      %v5013 = vsel %vm4990, %v5010, %v5012
      %v5014 = vrot.slane %v4874, 1
      %v5015 = vsel %vm4990, %v5012, %v5014
      %v5016 = vrot.slane %v4875, 1
      %v5017 = vsel %vm4990, %v5014, %v5016
      %v5018 = vrot.slane %v4876, 1
      %v5019 = vsel %vm4990, %v5016, %v5018
      %v5020 = vrot.slane %v4877, 1
      %v5021 = vsel %vm4990, %v5018, %v5020
      %v5022 = vrot.slane %v4878, 1
      %v5023 = vsel %vm4990, %v5020, %v5022
      %v5024 = vrot.slane %v4879, 1
      %v5025 = vsel %vm4990, %v5022, %v5024
      %v5026 = vrot.slane %v4880, 1
      %v5027 = vsel %vm4990, %v5024, %v5026
      %v5028 = vrot.slane %v4881, 1
      %v5029 = vsel %vm4990, %v5026, %v5028
      %v5030 = vrot.slane %v4882, 1
      %v5031 = vsel %vm4990, %v5028, %v5030
      %v5032 = vrot.slane %v4883, 1
      %v5033 = vsel %vm4990, %v5030, %v5032
      %v5034 = vrot.slane %v4884, 1
      %v5035 = vsel %vm4990, %v5032, %v5034
      %v5036 = vrot.slane %v4885, 1
      %v5037 = vsel %vm4990, %v5034, %v5036
      %v5038 = vrot.slane %v4886, 1
      %v5039 = vsel %vm4990, %v5036, %v5038
      %v5040 = vrot.slane %v4887, 1
      %v5041 = vsel %vm4990, %v5038, %v5040
      %v5042 = vrot.slane %v4888, 1
      %v5043 = vsel %vm4990, %v5040, %v5042
      %v5044 = vrot.slane %v4889, 1
      %v5045 = vsel %vm4990, %v5042, %v5044
      %v5046 = vrot.slane %v4890, 1
      %v5047 = vsel %vm4990, %v5044, %v5046
      %v5048 = vrot.slane %v4891, 1
      %v5049 = vsel %vm4990, %v5046, %v5048
      %v5050 = vrot.slane %v4892, 1
      %v5051 = vsel %vm4990, %v5048, %v5050
      %v5052 = vrot.slane %v4893, 1
      %v5053 = vsel %vm4990, %v5050, %v5052
      %v5054 = vrot.slane %v4894, 1
      %v5055 = vsel %vm4990, %v5052, %v5054
      %v5056 = vrot.slane %v4895, 1
      %v5057 = vsel %vm4990, %v5054, %v5056
      %v5058 = vrot.slane %v4896, 1
      %v5059 = vsel %vm4990, %v5056, %v5058
      %v5060 = vrot.slane %v4897, 1
      %v5061 = vsel %vm4990, %v5058, %v5060
      %v5062 = vrot.slane %v4898, 1
      %v5063 = vsel %vm4990, %v5060, %v5062
      %v5064 = vrot.slane %v4899, 1
      %v5065 = vsel %vm4990, %v5062, %v5064
      %v5066 = vrot.slane %v4900, 1
      %v5067 = vsel %vm4990, %v5064, %v5066
      %v5068 = vrot.slane %v4901, 1
      %v5069 = vsel %vm4990, %v5066, %v5068
      %v5070 = vrot.slane %v4902, 1
      %v5071 = vsel %vm4990, %v5068, %v5070
      %v5072 = vrot.slane %v4903, 1
      %v5073 = vsel %vm4990, %v5070, %v5072
      %v5074 = vrot.slane %v4904, 1
      %v5075 = vsel %vm4990, %v5072, %v5074
      %v5076 = vrot.slane %v4905, 1
      %v5077 = vsel %vm4990, %v5074, %v5076
      %v5078 = vrot.slane %v4906, 1
      %v5079 = vsel %vm4990, %v5076, %v5078
      %v5080 = vrot.slane %v4907, 1
      %v5081 = vsel %vm4990, %v5078, %v5080
      %v5082 = vrot.slane %v4908, 1
      %v5083 = vsel %vm4990, %v5080, %v5082
      %v5084 = vrot.slane %v4909, 1
      %v5085 = vsel %vm4990, %v5082, %v5084
      %v5086 = vrot.slane %v4910, 1
      %v5087 = vsel %vm4990, %v5084, %v5086
      %v5088 = vrot.slane %v4911, 1
      %v5089 = vsel %vm4990, %v5086, %v5088
      %v5090 = vrot.slane %v4912, 1
      %v5091 = vsel %vm4990, %v5088, %v5090
      %v5092 = vrot.slane %v4913, 1
      %v5093 = vsel %vm4990, %v5090, %v5092
      %v5094 = vrot.slane %v4914, 1
      %v5095 = vsel %vm4990, %v5092, %v5094
      %v5096 = vrot.slane %v4915, 1
      %v5097 = vsel %vm4990, %v5094, %v5096
      %v5098 = vrot.slane %v4916, 1
      %v5099 = vsel %vm4990, %v5096, %v5098
      %v5100 = vrot.slane %v4917, 1
      %v5101 = vsel %vm4990, %v5098, %v5100
      %v5102 = vrot.slane %v4918, 1
      %v5103 = vsel %vm4990, %v5100, %v5102
      %v5104 = vrot.slane %v4919, 1
      %v5105 = vsel %vm4990, %v5102, %v5104
      %v5106 = vrot.slane %v4920, 1
      %v5107 = vsel %vm4990, %v5104, %v5106
      %v5108 = vrot.slane %v4921, 1
      %v5109 = vsel %vm4990, %v5106, %v5108
      %v5110 = vrot.slane %v4922, 1
      %v5111 = vsel %vm4990, %v5108, %v5110
      %v5112 = vrot.slane %v4923, 1
      %v5113 = vsel %vm4990, %v5110, %v5112
      %v5114 = vrot.slane %v4924, 1
      %v5115 = vsel %vm4990, %v5112, %v5114
      %v5116 = vrot.slane %v4925, 1
      %v5117 = vsel %vm4990, %v5114, %v5116
      %v5182 = vmax.f32 %v4862, %v4993
      %v5183 = vmax.f32 %v4863, %v4995
      %v5184 = vmax.f32 %v4864, %v4997
      %v5185 = vmax.f32 %v4865, %v4999
      %v5186 = vmax.f32 %v4866, %v5001
      %v5187 = vmax.f32 %v4867, %v5003
      %v5188 = vmax.f32 %v4868, %v5005
      %v5189 = vmax.f32 %v4869, %v5007
      %v5190 = vmax.f32 %v4870, %v5009
      %v5191 = vmax.f32 %v4871, %v5011
      %v5192 = vmax.f32 %v4872, %v5013
      %v5193 = vmax.f32 %v4873, %v5015
      %v5194 = vmax.f32 %v4874, %v5017
      %v5195 = vmax.f32 %v4875, %v5019
      %v5196 = vmax.f32 %v4876, %v5021
      %v5197 = vmax.f32 %v4877, %v5023
      %v5198 = vmax.f32 %v4878, %v5025
      %v5199 = vmax.f32 %v4879, %v5027
      %v5200 = vmax.f32 %v4880, %v5029
      %v5201 = vmax.f32 %v4881, %v5031
      %v5202 = vmax.f32 %v4882, %v5033
      %v5203 = vmax.f32 %v4883, %v5035
      %v5204 = vmax.f32 %v4884, %v5037
      %v5205 = vmax.f32 %v4885, %v5039
      %v5206 = vmax.f32 %v4886, %v5041
      %v5207 = vmax.f32 %v4887, %v5043
      %v5208 = vmax.f32 %v4888, %v5045
      %v5209 = vmax.f32 %v4889, %v5047
      %v5210 = vmax.f32 %v4890, %v5049
      %v5211 = vmax.f32 %v4891, %v5051
      %v5212 = vmax.f32 %v4892, %v5053
      %v5213 = vmax.f32 %v4893, %v5055
      %v5214 = vmax.f32 %v4894, %v5057
      %v5215 = vmax.f32 %v4895, %v5059
      %v5216 = vmax.f32 %v4896, %v5061
      %v5217 = vmax.f32 %v4897, %v5063
      %v5218 = vmax.f32 %v4898, %v5065
      %v5219 = vmax.f32 %v4899, %v5067
      %v5220 = vmax.f32 %v4900, %v5069
      %v5221 = vmax.f32 %v4901, %v5071
      %v5222 = vmax.f32 %v4902, %v5073
      %v5223 = vmax.f32 %v4903, %v5075
      %v5224 = vmax.f32 %v4904, %v5077
      %v5225 = vmax.f32 %v4905, %v5079
      %v5226 = vmax.f32 %v4906, %v5081
      %v5227 = vmax.f32 %v4907, %v5083
      %v5228 = vmax.f32 %v4908, %v5085
      %v5229 = vmax.f32 %v4909, %v5087
      %v5230 = vmax.f32 %v4910, %v5089
      %v5231 = vmax.f32 %v4911, %v5091
      %v5232 = vmax.f32 %v4912, %v5093
      %v5233 = vmax.f32 %v4913, %v5095
      %v5234 = vmax.f32 %v4914, %v5097
      %v5235 = vmax.f32 %v4915, %v5099
      %v5236 = vmax.f32 %v4916, %v5101
      %v5237 = vmax.f32 %v4917, %v5103
      %v5238 = vmax.f32 %v4918, %v5105
      %v5239 = vmax.f32 %v4919, %v5107
      %v5240 = vmax.f32 %v4920, %v5109
      %v5241 = vmax.f32 %v4921, %v5111
      %v5242 = vmax.f32 %v4922, %v5113
      %v5243 = vmax.f32 %v4923, %v5115
      %v5244 = vmax.f32 %v4924, %v5117
      %v5245 = vmax.f32 %v4925, %v5116
      %v5246 = vld [vmem:[%s4] sm:$0xff]
      %v5247 = vld [vmem:[%s4 + $0x8] sm:$0xff]
      %v5248 = vld [vmem:[%s4 + $0x10] sm:$0xff]
      %v5249 = vld [vmem:[%s4 + $0x18] sm:$0xff]
      %v5250 = vld [vmem:[%s4 + $0x20] sm:$0xff]
      %v5251 = vld [vmem:[%s4 + $0x28] sm:$0xff]
      %v5252 = vld [vmem:[%s4 + $0x30] sm:$0xff]
      %v5253 = vld [vmem:[%s4 + $0x38] sm:$0xff]
      %v5254 = vld [vmem:[%s4 + $0x40] sm:$0xff]
      %v5255 = vld [vmem:[%s4 + $0x48] sm:$0xff]
      %v5256 = vld [vmem:[%s4 + $0x50] sm:$0x33]
      %v5257 = vpack.c.bf16 %v5183, %v5182
      %v5258 = vpack.c.bf16 %v5185, %v5184
      %v5259 = vpack.c.bf16 %v5187, %v5186
      %v5260 = vpack.c.bf16 %v5189, %v5188
      %v5261 = vpack.c.bf16 %v5191, %v5190
      %v5262 = vpack.c.bf16 %v5193, %v5192
      %v5263 = vpack.c.bf16 %v5195, %v5194
      %v5264 = vpack.c.bf16 %v5197, %v5196
      %v5265 = vpack.c.bf16 %v5199, %v5198
      %v5266 = vpack.c.bf16 %v5201, %v5200
      %v5267 = vpack.c.bf16 %v5203, %v5202
      %v5268 = vpack.c.bf16 %v5205, %v5204
      %v5269 = vpack.c.bf16 %v5207, %v5206
      %v5270 = vpack.c.bf16 %v5209, %v5208
      %v5271 = vpack.c.bf16 %v5211, %v5210
      %v5272 = vpack.c.bf16 %v5213, %v5212
      %v5273 = vpack.c.bf16 %v5215, %v5214
      %v5274 = vpack.c.bf16 %v5217, %v5216
      %v5275 = vpack.c.bf16 %v5219, %v5218
      %v5276 = vpack.c.bf16 %v5221, %v5220
      %v5277 = vpack.c.bf16 %v5223, %v5222
      %v5278 = vpack.c.bf16 %v5225, %v5224
      %v5279 = vpack.c.bf16 %v5227, %v5226
      %v5280 = vpack.c.bf16 %v5229, %v5228
      %v5281 = vpack.c.bf16 %v5231, %v5230
      %v5282 = vpack.c.bf16 %v5233, %v5232
      %v5283 = vpack.c.bf16 %v5235, %v5234
      %v5284 = vpack.c.bf16 %v5237, %v5236
      %v5285 = vpack.c.bf16 %v5239, %v5238
      %v5286 = vpack.c.bf16 %v5241, %v5240
      %v5287 = vpack.c.bf16 %v5243, %v5242
      %v5288 = vpack.c.bf16 %v5244, %v5244
      %s5289 = scalar_lea.vmem %s4, 88
      %v5290 = vld [vmem:[%s5289] sm:$0xff]
      %v5291 = vld [vmem:[%s5289 + $0x8] sm:$0xff]
      %v5292 = vld [vmem:[%s5289 + $0x10] sm:$0xff]
      %v5293 = vld [vmem:[%s5289 + $0x18] sm:$0xff]
      %v5294 = vld [vmem:[%s5289 + $0x20] sm:$0xff]
      %v5295 = vld [vmem:[%s5289 + $0x28] sm:$0xff]
      %v5296 = vld [vmem:[%s5289 + $0x30] sm:$0xff]
      %v5297 = vld [vmem:[%s5289 + $0x38] sm:$0xff]
      %v5298 = vld [vmem:[%s5289 + $0x40] sm:$0xff]
      %v5299 = vld [vmem:[%s5289 + $0x48] sm:$0xff]
      %v5300 = vld [vmem:[%s5289 + $0x50] sm:$0x33]
      %v5333 = vrot.slane %v5257, 1
      %v5334 = vrot.slane %v5258, 1
      %v5335 = vsel %vm2890, %v5333, %v5334
      %v5336 = vrot.slane %v5259, 1
      %v5337 = vsel %vm2890, %v5334, %v5336
      %v5338 = vrot.slane %v5260, 1
      %v5339 = vsel %vm2890, %v5336, %v5338
      %v5340 = vrot.slane %v5261, 1
      %v5341 = vsel %vm2890, %v5338, %v5340
      %v5342 = vrot.slane %v5262, 1
      %v5343 = vsel %vm2890, %v5340, %v5342
      %v5344 = vrot.slane %v5263, 1
      %v5345 = vsel %vm2890, %v5342, %v5344
      %v5346 = vrot.slane %v5264, 1
      %v5347 = vsel %vm2890, %v5344, %v5346
      %v5348 = vrot.slane %v5265, 1
      %v5349 = vsel %vm2890, %v5346, %v5348
      %v5350 = vrot.slane %v5266, 1
      %v5351 = vsel %vm2890, %v5348, %v5350
      %v5352 = vrot.slane %v5267, 1
      %v5353 = vsel %vm2890, %v5350, %v5352
      %v5354 = vrot.slane %v5268, 1
      %v5355 = vsel %vm2890, %v5352, %v5354
      %v5356 = vrot.slane %v5269, 1
      %v5357 = vsel %vm2890, %v5354, %v5356
      %v5358 = vrot.slane %v5270, 1
      %v5359 = vsel %vm2890, %v5356, %v5358
      %v5360 = vrot.slane %v5271, 1
      %v5361 = vsel %vm2890, %v5358, %v5360
      %v5362 = vrot.slane %v5272, 1
      %v5363 = vsel %vm2890, %v5360, %v5362
      %v5364 = vrot.slane %v5273, 1
      %v5365 = vsel %vm2890, %v5362, %v5364
      %v5366 = vrot.slane %v5274, 1
      %v5367 = vsel %vm2890, %v5364, %v5366
      %v5368 = vrot.slane %v5275, 1
      %v5369 = vsel %vm2890, %v5366, %v5368
      %v5370 = vrot.slane %v5276, 1
      %v5371 = vsel %vm2890, %v5368, %v5370
      %v5372 = vrot.slane %v5277, 1
      %v5373 = vsel %vm2890, %v5370, %v5372
      %v5374 = vrot.slane %v5278, 1
      %v5375 = vsel %vm2890, %v5372, %v5374
      %v5376 = vrot.slane %v5279, 1
      %v5377 = vsel %vm2890, %v5374, %v5376
      %v5378 = vrot.slane %v5280, 1
      %v5379 = vsel %vm2890, %v5376, %v5378
      %v5380 = vrot.slane %v5281, 1
      %v5381 = vsel %vm2890, %v5378, %v5380
      %v5382 = vrot.slane %v5282, 1
      %v5383 = vsel %vm2890, %v5380, %v5382
      %v5384 = vrot.slane %v5283, 1
      %v5385 = vsel %vm2890, %v5382, %v5384
      %v5386 = vrot.slane %v5284, 1
      %v5387 = vsel %vm2890, %v5384, %v5386
      %v5388 = vrot.slane %v5285, 1
      %v5389 = vsel %vm2890, %v5386, %v5388
      %v5390 = vrot.slane %v5286, 1
      %v5391 = vsel %vm2890, %v5388, %v5390
      %v5392 = vrot.slane %v5287, 1
      %v5393 = vsel %vm2890, %v5390, %v5392
      %v5394 = vrot.slane %v5288, 1
      %v5395 = vsel %vm2890, %v5392, %v5394
      %v5407 = vunpack.c.l.b16 %v5290
      %v5408 = vunpack.c.h.b16 %v5290
      %v5409 = vunpack.c.l.b16 %v5291
      %v5410 = vunpack.c.h.b16 %v5291
      %v5411 = vunpack.c.l.b16 %v5292
      %v5412 = vunpack.c.h.b16 %v5292
      %v5413 = vunpack.c.l.b16 %v5293
      %v5414 = vunpack.c.h.b16 %v5293
      %v5415 = vunpack.c.l.b16 %v5294
      %v5416 = vunpack.c.h.b16 %v5294
      %v5417 = vunpack.c.l.b16 %v5295
      %v5418 = vunpack.c.h.b16 %v5295
      %v5419 = vunpack.c.l.b16 %v5296
      %v5420 = vunpack.c.h.b16 %v5296
      %v5421 = vunpack.c.l.b16 %v5297
      %v5422 = vunpack.c.h.b16 %v5297
      %v5423 = vunpack.c.l.b16 %v5298
      %v5424 = vunpack.c.h.b16 %v5298
      %v5425 = vunpack.c.l.b16 %v5299
      %v5426 = vunpack.c.h.b16 %v5299
      %v5427 = vunpack.c.l.b16 %v5300
      %v5428 = vunpack.c.h.b16 %v5300
      %v5429 = vpack.c.b16 %v5409, %v5407
      %v5430 = vpack.c.b16 %v5410, %v5408
      %v5431 = vpack.c.b16 %v5413, %v5411
      %v5432 = vpack.c.b16 %v5414, %v5412
      %v5433 = vpack.c.b16 %v5417, %v5415
      %v5434 = vpack.c.b16 %v5418, %v5416
      %v5435 = vpack.c.b16 %v5421, %v5419
      %v5436 = vpack.c.b16 %v5422, %v5420
      %v5437 = vpack.c.b16 %v5425, %v5423
      %v5438 = vpack.c.b16 %v5426, %v5424
      %v5439 = vpack.c.b16 %v5427, %v5427
      %v5440 = vpack.c.b16 %v5428, %v5428
      %vm5451 = vcmask 687104
      %v5453 = vsel %vm5451, %v5335, 0
      %v5456 = vsel %vm5451, %v5337, 0
      %v5459 = vsel %vm5451, %v5339, 0
      %v5462 = vsel %vm5451, %v5341, 0
      %v5465 = vsel %vm5451, %v5343, 0
      %v5468 = vsel %vm5451, %v5345, 0
      %v5471 = vsel %vm5451, %v5347, 0
      %v5474 = vsel %vm5451, %v5349, 0
      %v5477 = vsel %vm5451, %v5351, 0
      %v5480 = vsel %vm5451, %v5353, 0
      %v5483 = vsel %vm5451, %v5355, 0
      %v5486 = vsel %vm5451, %v5357, 0
      %v5489 = vsel %vm5451, %v5359, 0
      %v5492 = vsel %vm5451, %v5361, 0
      %v5495 = vsel %vm5451, %v5363, 0
      %v5498 = vsel %vm5451, %v5365, 0
      %v5501 = vsel %vm5451, %v5367, 0
      %v5504 = vsel %vm5451, %v5369, 0
      %v5507 = vsel %vm5451, %v5371, 0
      %v5510 = vsel %vm5451, %v5373, 0
      %v5513 = vsel %vm5451, %v5375, 0
      %v5516 = vsel %vm5451, %v5377, 0
      %v5519 = vsel %vm5451, %v5379, 0
      %v5522 = vsel %vm5451, %v5381, 0
      %v5525 = vsel %vm5451, %v5383, 0
      %v5528 = vsel %vm5451, %v5385, 0
      %v5531 = vsel %vm5451, %v5387, 0
      %v5534 = vsel %vm5451, %v5389, 0
      %v5537 = vsel %vm5451, %v5391, 0
      %v5540 = vsel %vm5451, %v5393, 0
      %v5543 = vsel %vm5451, %v5395, 0
      %v5546 = vsel %vm5451, %v5394, 0
      %vm5548 = vcmask 1041408
      %v5550 = vsel %vm5548, %v5439, 0
      %v5553 = vsel %vm5548, %v5440, 0
      %5555 = vmatprep.subr.bf16.mxu0 %v5430
      %5556 = vmatpush1.bf16.msra.mxu0 %v5429
      %5557 = vmatprep.subr.bf16.mxu0 %v5432
      %5558 = vmatpush1.bf16.msra.mxu0 %v5431
      %5559 = vmatprep.subr.bf16.mxu0 %v5434
      %5560 = vmatpush1.bf16.msra.mxu0 %v5433
      %5561 = vmatprep.subr.bf16.mxu0 %v5436
      %5562 = vmatpush1.bf16.msra.mxu0 %v5435
      %5563 = vmatprep.subr.bf16.mxu0 %v5438
      %5564 = vmatpush1.bf16.msra.mxu0 %v5437
      %5565 = vmatprep.subr.bf16.mxu0 %v5553
      %5566 = vmatpush1.bf16.msra.mxu0 %v5550
      %5567 = vmatprep.subr.bf16.mxu0 0
      %5568 = vmatpush1.bf16.msra.mxu0 0
      %5569 = vmatprep.subr.bf16.mxu0 0
      %5570 = vmatpush1.bf16.msra.mxu0 0
      %5571 = vmatprep.subr.bf16.mxu0 0
      %5572 = vmatpush1.bf16.msra.mxu0 0
      %5573 = vmatprep.subr.bf16.mxu0 0
      %5574 = vmatpush1.bf16.msra.mxu0 0
      %5575 = vmatprep.subr.bf16.mxu0 0
      %5576 = vmatpush1.bf16.msra.mxu0 0
      %5577 = vmatprep.subr.bf16.mxu0 0
      %5578 = vmatpush1.bf16.msra.mxu0 0
      %5579 = vmatprep.subr.bf16.mxu0 0
      %5580 = vmatpush1.bf16.msra.mxu0 0
      %5581 = vmatprep.subr.bf16.mxu0 0
      %5582 = vmatpush1.bf16.msra.mxu0 0
      %5583 = vmatprep.subr.bf16.mxu0 0
      %5584 = vmatpush1.bf16.msra.mxu0 0
      %5585 = vmatprep.subr.bf16.mxu0 0
      %5586 = vmatpush1.bf16.msra.mxu0 0
      %5587 = vmatprep.mubr.bf16.mxu0 0
      %5588 = vmatmul.mubr.bf16.gmra.mrb[0].mxu0 %v5453
      %v5589 = vpop.f32.mrb[0].mxu0
      %v5590 = vadd.f32 0.0, %v5589
      %v5591 = vpop.f32.mrb[0].mxu0
      %v5592 = vadd.f32 0.0, %v5591
      %v5593 = vpop.f32.mrb[0].mxu0
      %v5594 = vadd.f32 0.0, %v5593
      %v5595 = vpop.f32.mrb[0].mxu0
      %v5596 = vadd.f32 0.0, %v5595
      %5597 = vmatprep.mubr.bf16.mxu0 0
      %5598 = vmatmul.mubr.bf16.gmra.mrb[0].mxu0 %v5456
      %v5599 = vpop.f32.mrb[0].mxu0
      %v5600 = vadd.f32 0.0, %v5599
      %v5601 = vpop.f32.mrb[0].mxu0
      %v5602 = vadd.f32 0.0, %v5601
      %v5603 = vpop.f32.mrb[0].mxu0
      %v5604 = vadd.f32 0.0, %v5603
      %v5605 = vpop.f32.mrb[0].mxu0
      %v5606 = vadd.f32 0.0, %v5605
      %5607 = vmatprep.mubr.bf16.mxu0 0
      %5608 = vmatmul.mubr.bf16.gmra.mrb[0].mxu0 %v5459
      %v5609 = vpop.f32.mrb[0].mxu0
      %v5610 = vadd.f32 0.0, %v5609
      %v5611 = vpop.f32.mrb[0].mxu0
      %v5612 = vadd.f32 0.0, %v5611
      %v5613 = vpop.f32.mrb[0].mxu0
      %v5614 = vadd.f32 0.0, %v5613
      %v5615 = vpop.f32.mrb[0].mxu0
      %v5616 = vadd.f32 0.0, %v5615
      %5617 = vmatprep.mubr.bf16.mxu0 0
      %5618 = vmatmul.mubr.bf16.gmra.mrb[0].mxu0 %v5462
      %v5619 = vpop.f32.mrb[0].mxu0
      %v5620 = vadd.f32 0.0, %v5619
      %v5621 = vpop.f32.mrb[0].mxu0
      %v5622 = vadd.f32 0.0, %v5621
      %v5623 = vpop.f32.mrb[0].mxu0
      %v5624 = vadd.f32 0.0, %v5623
      %v5625 = vpop.f32.mrb[0].mxu0
      %v5626 = vadd.f32 0.0, %v5625
      %5627 = vmatprep.mubr.bf16.mxu0 0
      %5628 = vmatmul.mubr.bf16.gmra.mrb[0].mxu0 %v5465
      %v5629 = vpop.f32.mrb[0].mxu0
      %v5630 = vadd.f32 0.0, %v5629
      %v5631 = vpop.f32.mrb[0].mxu0
      %v5632 = vadd.f32 0.0, %v5631
      %v5633 = vpop.f32.mrb[0].mxu0
      %v5634 = vadd.f32 0.0, %v5633
      %v5635 = vpop.f32.mrb[0].mxu0
      %v5636 = vadd.f32 0.0, %v5635
      %5637 = vmatprep.mubr.bf16.mxu0 0
      %5638 = vmatmul.mubr.bf16.gmra.mrb[0].mxu0 %v5468
      %v5639 = vpop.f32.mrb[0].mxu0
      %v5640 = vadd.f32 0.0, %v5639
      %v5641 = vpop.f32.mrb[0].mxu0
      %v5642 = vadd.f32 0.0, %v5641
      %v5643 = vpop.f32.mrb[0].mxu0
      %v5644 = vadd.f32 0.0, %v5643
      %v5645 = vpop.f32.mrb[0].mxu0
      %v5646 = vadd.f32 0.0, %v5645
      %5647 = vmatprep.mubr.bf16.mxu0 0
      %5648 = vmatmul.mubr.bf16.gmra.mrb[0].mxu0 %v5471
      %v5649 = vpop.f32.mrb[0].mxu0
      %v5650 = vadd.f32 0.0, %v5649
      %v5651 = vpop.f32.mrb[0].mxu0
      %v5652 = vadd.f32 0.0, %v5651
      %v5653 = vpop.f32.mrb[0].mxu0
      %v5654 = vadd.f32 0.0, %v5653
      %v5655 = vpop.f32.mrb[0].mxu0
      %v5656 = vadd.f32 0.0, %v5655
      %5657 = vmatprep.mubr.bf16.mxu0 0
      %5658 = vmatmul.mubr.bf16.gmra.mrb[0].mxu0 %v5474
      %v5659 = vpop.f32.mrb[0].mxu0
      %v5660 = vadd.f32 0.0, %v5659
      %v5661 = vpop.f32.mrb[0].mxu0
      %v5662 = vadd.f32 0.0, %v5661
      %v5663 = vpop.f32.mrb[0].mxu0
      %v5664 = vadd.f32 0.0, %v5663
      %v5665 = vpop.f32.mrb[0].mxu0
      %v5666 = vadd.f32 0.0, %v5665
      %5667 = vmatprep.mubr.bf16.mxu0 0
      %5668 = vmatmul.mubr.bf16.gmra.mrb[0].mxu0 %v5477
      %v5669 = vpop.f32.mrb[0].mxu0
      %v5670 = vadd.f32 0.0, %v5669
      %v5671 = vpop.f32.mrb[0].mxu0
      %v5672 = vadd.f32 0.0, %v5671
      %v5673 = vpop.f32.mrb[0].mxu0
      %v5674 = vadd.f32 0.0, %v5673
      %v5675 = vpop.f32.mrb[0].mxu0
      %v5676 = vadd.f32 0.0, %v5675
      %5677 = vmatprep.mubr.bf16.mxu0 0
      %5678 = vmatmul.mubr.bf16.gmra.mrb[0].mxu0 %v5480
      %v5679 = vpop.f32.mrb[0].mxu0
      %v5680 = vadd.f32 0.0, %v5679
      %v5681 = vpop.f32.mrb[0].mxu0
      %v5682 = vadd.f32 0.0, %v5681
      %v5683 = vpop.f32.mrb[0].mxu0
      %v5684 = vadd.f32 0.0, %v5683
      %v5685 = vpop.f32.mrb[0].mxu0
      %v5686 = vadd.f32 0.0, %v5685
      %5687 = vmatprep.mubr.bf16.mxu0 0
      %5688 = vmatmul.mubr.bf16.gmra.mrb[0].mxu0 %v5483
      %v5689 = vpop.f32.mrb[0].mxu0
      %v5690 = vadd.f32 0.0, %v5689
      %v5691 = vpop.f32.mrb[0].mxu0
      %v5692 = vadd.f32 0.0, %v5691
      %v5693 = vpop.f32.mrb[0].mxu0
      %v5694 = vadd.f32 0.0, %v5693
      %v5695 = vpop.f32.mrb[0].mxu0
      %v5696 = vadd.f32 0.0, %v5695
      %5697 = vmatprep.mubr.bf16.mxu0 0
      %5698 = vmatmul.mubr.bf16.gmra.mrb[0].mxu0 %v5486
      %v5699 = vpop.f32.mrb[0].mxu0
      %v5700 = vadd.f32 0.0, %v5699
      %v5701 = vpop.f32.mrb[0].mxu0
      %v5702 = vadd.f32 0.0, %v5701
      %v5703 = vpop.f32.mrb[0].mxu0
      %v5704 = vadd.f32 0.0, %v5703
      %v5705 = vpop.f32.mrb[0].mxu0
      %v5706 = vadd.f32 0.0, %v5705
      %5707 = vmatprep.mubr.bf16.mxu0 0
      %5708 = vmatmul.mubr.bf16.gmra.mrb[0].mxu0 %v5489
      %v5709 = vpop.f32.mrb[0].mxu0
      %v5710 = vadd.f32 0.0, %v5709
      %v5711 = vpop.f32.mrb[0].mxu0
      %v5712 = vadd.f32 0.0, %v5711
      %v5713 = vpop.f32.mrb[0].mxu0
      %v5714 = vadd.f32 0.0, %v5713
      %v5715 = vpop.f32.mrb[0].mxu0
      %v5716 = vadd.f32 0.0, %v5715
      %5717 = vmatprep.mubr.bf16.mxu0 0
      %5718 = vmatmul.mubr.bf16.gmra.mrb[0].mxu0 %v5492
      %v5719 = vpop.f32.mrb[0].mxu0
      %v5720 = vadd.f32 0.0, %v5719
      %v5721 = vpop.f32.mrb[0].mxu0
      %v5722 = vadd.f32 0.0, %v5721
      %v5723 = vpop.f32.mrb[0].mxu0
      %v5724 = vadd.f32 0.0, %v5723
      %v5725 = vpop.f32.mrb[0].mxu0
      %v5726 = vadd.f32 0.0, %v5725
      %5727 = vmatprep.mubr.bf16.mxu0 0
      %5728 = vmatmul.mubr.bf16.gmra.mrb[0].mxu0 %v5495
      %v5729 = vpop.f32.mrb[0].mxu0
      %v5730 = vadd.f32 0.0, %v5729
      %v5731 = vpop.f32.mrb[0].mxu0
      %v5732 = vadd.f32 0.0, %v5731
      %v5733 = vpop.f32.mrb[0].mxu0
      %v5734 = vadd.f32 0.0, %v5733
      %v5735 = vpop.f32.mrb[0].mxu0
      %v5736 = vadd.f32 0.0, %v5735
      %5737 = vmatprep.mubr.bf16.mxu0 0
      %5738 = vmatmul.mubr.bf16.gmra.mrb[0].mxu0 %v5498
      %v5739 = vpop.f32.mrb[0].mxu0
      %v5740 = vadd.f32 0.0, %v5739
      %v5741 = vpop.f32.mrb[0].mxu0
      %v5742 = vadd.f32 0.0, %v5741
      %v5743 = vpop.f32.mrb[0].mxu0
      %v5744 = vadd.f32 0.0, %v5743
      %v5745 = vpop.f32.mrb[0].mxu0
      %v5746 = vadd.f32 0.0, %v5745
      %5747 = vmatprep.mubr.bf16.mxu0 0
      %5748 = vmatmul.mubr.bf16.gmra.mrb[0].mxu0 %v5501
      %v5749 = vpop.f32.mrb[0].mxu0
      %v5750 = vadd.f32 0.0, %v5749
      %v5751 = vpop.f32.mrb[0].mxu0
      %v5752 = vadd.f32 0.0, %v5751
      %v5753 = vpop.f32.mrb[0].mxu0
      %v5754 = vadd.f32 0.0, %v5753
      %v5755 = vpop.f32.mrb[0].mxu0
      %v5756 = vadd.f32 0.0, %v5755
      %5757 = vmatprep.mubr.bf16.mxu0 0
      %5758 = vmatmul.mubr.bf16.gmra.mrb[0].mxu0 %v5504
      %v5759 = vpop.f32.mrb[0].mxu0
      %v5760 = vadd.f32 0.0, %v5759
      %v5761 = vpop.f32.mrb[0].mxu0
      %v5762 = vadd.f32 0.0, %v5761
      %v5763 = vpop.f32.mrb[0].mxu0
      %v5764 = vadd.f32 0.0, %v5763
      %v5765 = vpop.f32.mrb[0].mxu0
      %v5766 = vadd.f32 0.0, %v5765
      %5767 = vmatprep.mubr.bf16.mxu0 0
      %5768 = vmatmul.mubr.bf16.gmra.mrb[0].mxu0 %v5507
      %v5769 = vpop.f32.mrb[0].mxu0
      %v5770 = vadd.f32 0.0, %v5769
      %v5771 = vpop.f32.mrb[0].mxu0
      %v5772 = vadd.f32 0.0, %v5771
      %v5773 = vpop.f32.mrb[0].mxu0
      %v5774 = vadd.f32 0.0, %v5773
      %v5775 = vpop.f32.mrb[0].mxu0
      %v5776 = vadd.f32 0.0, %v5775
      %5777 = vmatprep.mubr.bf16.mxu0 0
      %5778 = vmatmul.mubr.bf16.gmra.mrb[0].mxu0 %v5510
      %v5779 = vpop.f32.mrb[0].mxu0
      %v5780 = vadd.f32 0.0, %v5779
      %v5781 = vpop.f32.mrb[0].mxu0
      %v5782 = vadd.f32 0.0, %v5781
      %v5783 = vpop.f32.mrb[0].mxu0
      %v5784 = vadd.f32 0.0, %v5783
      %v5785 = vpop.f32.mrb[0].mxu0
      %v5786 = vadd.f32 0.0, %v5785
      %5787 = vmatprep.mubr.bf16.mxu0 0
      %5788 = vmatmul.mubr.bf16.gmra.mrb[0].mxu0 %v5513
      %v5789 = vpop.f32.mrb[0].mxu0
      %v5790 = vadd.f32 0.0, %v5789
      %v5791 = vpop.f32.mrb[0].mxu0
      %v5792 = vadd.f32 0.0, %v5791
      %v5793 = vpop.f32.mrb[0].mxu0
      %v5794 = vadd.f32 0.0, %v5793
      %v5795 = vpop.f32.mrb[0].mxu0
      %v5796 = vadd.f32 0.0, %v5795
      %5797 = vmatprep.mubr.bf16.mxu0 0
      %5798 = vmatmul.mubr.bf16.gmra.mrb[0].mxu0 %v5516
      %v5799 = vpop.f32.mrb[0].mxu0
      %v5800 = vadd.f32 0.0, %v5799
      %v5801 = vpop.f32.mrb[0].mxu0
      %v5802 = vadd.f32 0.0, %v5801
      %v5803 = vpop.f32.mrb[0].mxu0
      %v5804 = vadd.f32 0.0, %v5803
      %v5805 = vpop.f32.mrb[0].mxu0
      %v5806 = vadd.f32 0.0, %v5805
      %5807 = vmatprep.mubr.bf16.mxu0 0
      %5808 = vmatmul.mubr.bf16.gmra.mrb[0].mxu0 %v5519
      %v5809 = vpop.f32.mrb[0].mxu0
      %v5810 = vadd.f32 0.0, %v5809
      %v5811 = vpop.f32.mrb[0].mxu0
      %v5812 = vadd.f32 0.0, %v5811
      %v5813 = vpop.f32.mrb[0].mxu0
      %v5814 = vadd.f32 0.0, %v5813
      %v5815 = vpop.f32.mrb[0].mxu0
      %v5816 = vadd.f32 0.0, %v5815
      %5817 = vmatprep.mubr.bf16.mxu0 0
      %5818 = vmatmul.mubr.bf16.gmra.mrb[0].mxu0 %v5522
      %v5819 = vpop.f32.mrb[0].mxu0
      %v5820 = vadd.f32 0.0, %v5819
      %v5821 = vpop.f32.mrb[0].mxu0
      %v5822 = vadd.f32 0.0, %v5821
      %v5823 = vpop.f32.mrb[0].mxu0
      %v5824 = vadd.f32 0.0, %v5823
      %v5825 = vpop.f32.mrb[0].mxu0
      %v5826 = vadd.f32 0.0, %v5825
      %5827 = vmatprep.mubr.bf16.mxu0 0
      %5828 = vmatmul.mubr.bf16.gmra.mrb[0].mxu0 %v5525
      %v5829 = vpop.f32.mrb[0].mxu0
      %v5830 = vadd.f32 0.0, %v5829
      %v5831 = vpop.f32.mrb[0].mxu0
      %v5832 = vadd.f32 0.0, %v5831
      %v5833 = vpop.f32.mrb[0].mxu0
      %v5834 = vadd.f32 0.0, %v5833
      %v5835 = vpop.f32.mrb[0].mxu0
      %v5836 = vadd.f32 0.0, %v5835
      %5837 = vmatprep.mubr.bf16.mxu0 0
      %5838 = vmatmul.mubr.bf16.gmra.mrb[0].mxu0 %v5528
      %v5839 = vpop.f32.mrb[0].mxu0
      %v5840 = vadd.f32 0.0, %v5839
      %v5841 = vpop.f32.mrb[0].mxu0
      %v5842 = vadd.f32 0.0, %v5841
      %v5843 = vpop.f32.mrb[0].mxu0
      %v5844 = vadd.f32 0.0, %v5843
      %v5845 = vpop.f32.mrb[0].mxu0
      %v5846 = vadd.f32 0.0, %v5845
      %5847 = vmatprep.mubr.bf16.mxu0 0
      %5848 = vmatmul.mubr.bf16.gmra.mrb[0].mxu0 %v5531
      %v5849 = vpop.f32.mrb[0].mxu0
      %v5850 = vadd.f32 0.0, %v5849
      %v5851 = vpop.f32.mrb[0].mxu0
      %v5852 = vadd.f32 0.0, %v5851
      %v5853 = vpop.f32.mrb[0].mxu0
      %v5854 = vadd.f32 0.0, %v5853
      %v5855 = vpop.f32.mrb[0].mxu0
      %v5856 = vadd.f32 0.0, %v5855
      %5857 = vmatprep.mubr.bf16.mxu0 0
      %5858 = vmatmul.mubr.bf16.gmra.mrb[0].mxu0 %v5534
      %v5859 = vpop.f32.mrb[0].mxu0
      %v5860 = vadd.f32 0.0, %v5859
      %v5861 = vpop.f32.mrb[0].mxu0
      %v5862 = vadd.f32 0.0, %v5861
      %v5863 = vpop.f32.mrb[0].mxu0
      %v5864 = vadd.f32 0.0, %v5863
      %v5865 = vpop.f32.mrb[0].mxu0
      %v5866 = vadd.f32 0.0, %v5865
      %5867 = vmatprep.mubr.bf16.mxu0 0
      %5868 = vmatmul.mubr.bf16.gmra.mrb[0].mxu0 %v5537
      %v5869 = vpop.f32.mrb[0].mxu0
      %v5870 = vadd.f32 0.0, %v5869
      %v5871 = vpop.f32.mrb[0].mxu0
      %v5872 = vadd.f32 0.0, %v5871
      %v5873 = vpop.f32.mrb[0].mxu0
      %v5874 = vadd.f32 0.0, %v5873
      %v5875 = vpop.f32.mrb[0].mxu0
      %v5876 = vadd.f32 0.0, %v5875
      %5877 = vmatprep.mubr.bf16.mxu0 0
      %5878 = vmatmul.mubr.bf16.gmra.mrb[0].mxu0 %v5540
      %v5879 = vpop.f32.mrb[0].mxu0
      %v5880 = vadd.f32 0.0, %v5879
      %v5881 = vpop.f32.mrb[0].mxu0
      %v5882 = vadd.f32 0.0, %v5881
      %v5883 = vpop.f32.mrb[0].mxu0
      %v5884 = vadd.f32 0.0, %v5883
      %v5885 = vpop.f32.mrb[0].mxu0
      %v5886 = vadd.f32 0.0, %v5885
      %5887 = vmatprep.mubr.bf16.mxu0 0
      %5888 = vmatmul.mubr.bf16.gmra.mrb[0].mxu0 %v5543
      %v5889 = vpop.f32.mrb[0].mxu0
      %v5890 = vadd.f32 0.0, %v5889
      %v5891 = vpop.f32.mrb[0].mxu0
      %v5892 = vadd.f32 0.0, %v5891
      %v5893 = vpop.f32.mrb[0].mxu0
      %v5894 = vadd.f32 0.0, %v5893
      %v5895 = vpop.f32.mrb[0].mxu0
      %v5896 = vadd.f32 0.0, %v5895
      %5897 = vmatprep.mubr.bf16.mxu0 0
      %5898 = vmatmul.mubr.bf16.gmra.mrb[0].mxu0 %v5546
      %v5899 = vpop.f32.mrb[0].mxu0
      %v5900 = vadd.f32 0.0, %v5899
      %v5901 = vpop.f32.mrb[0].mxu0
      %v5902 = vadd.f32 0.0, %v5901
      %v5903 = vpop.f32.mrb[0].mxu0
      %v5904 = vpop.f32.mrb[0].mxu0
      %5905 = vdwg.mxu0
      %s5906 = scalar_lea.vmem %s4, 176
      %v5907 = vld [vmem:[%s5906] sm:$0xff]
      %v5908 = vld [vmem:[%s5906 + $0x8] sm:$0xff]
      %v5909 = vld [vmem:[%s5906 + $0x10] sm:$0xff]
      %v5910 = vld [vmem:[%s5906 + $0x18] sm:$0xff]
      %v5911 = vld [vmem:[%s5906 + $0x20] sm:$0xff]
      %v5912 = vld [vmem:[%s5906 + $0x28] sm:$0xff]
      %v5913 = vld [vmem:[%s5906 + $0x30] sm:$0xff]
      %v5914 = vld [vmem:[%s5906 + $0x38] sm:$0xff]
      %v5915 = vld [vmem:[%s5906 + $0x40] sm:$0xff]
      %v5916 = vld [vmem:[%s5906 + $0x48] sm:$0xff]
      %v5917 = vld [vmem:[%s5906 + $0x50] sm:$0x33]
      %s5918 = scalar_lea.vmem %s4, 264
      %v5919 = vld [vmem:[%s5918] sm:$0xff]
      %v5920 = vld [vmem:[%s5918 + $0x8] sm:$0xff]
      %v5921 = vld [vmem:[%s5918 + $0x10] sm:$0xff]
      %v5922 = vld [vmem:[%s5918 + $0x18] sm:$0xff]
      %v5923 = vld [vmem:[%s5918 + $0x20] sm:$0xff]
      %v5924 = vld [vmem:[%s5918 + $0x28] sm:$0xff]
      %v5925 = vld [vmem:[%s5918 + $0x30] sm:$0xff]
      %v5926 = vld [vmem:[%s5918 + $0x38] sm:$0xff]
      %v5927 = vld [vmem:[%s5918 + $0x40] sm:$0xff]
      %v5928 = vld [vmem:[%s5918 + $0x48] sm:$0xff]
      %v5929 = vld [vmem:[%s5918 + $0x50] sm:$0x33]
      %v5930 = vpack.c.bf16 %v5245, %v5244
      %vm5932 = vcmask 1044480
      %v5933 = vrot.slane %v5257, 3
      %v5934 = vrot.slane %v5258, 3
      %v5935 = vsel %vm5932, %v5933, %v5934
      %v5936 = vrot.slane %v5259, 3
      %v5937 = vsel %vm5932, %v5934, %v5936
      %v5938 = vrot.slane %v5260, 3
      %v5939 = vsel %vm5932, %v5936, %v5938
      %v5940 = vrot.slane %v5261, 3
      %v5941 = vsel %vm5932, %v5938, %v5940
      %v5942 = vrot.slane %v5262, 3
      %v5943 = vsel %vm5932, %v5940, %v5942
      %v5944 = vrot.slane %v5263, 3
      %v5945 = vsel %vm5932, %v5942, %v5944
      %v5946 = vrot.slane %v5264, 3
      %v5947 = vsel %vm5932, %v5944, %v5946
      %v5948 = vrot.slane %v5265, 3
      %v5949 = vsel %vm5932, %v5946, %v5948
      %v5950 = vrot.slane %v5266, 3
      %v5951 = vsel %vm5932, %v5948, %v5950
      %v5952 = vrot.slane %v5267, 3
      %v5953 = vsel %vm5932, %v5950, %v5952
      %v5954 = vrot.slane %v5268, 3
      %v5955 = vsel %vm5932, %v5952, %v5954
      %v5956 = vrot.slane %v5269, 3
      %v5957 = vsel %vm5932, %v5954, %v5956
      %v5958 = vrot.slane %v5270, 3
      %v5959 = vsel %vm5932, %v5956, %v5958
      %v5960 = vrot.slane %v5271, 3
      %v5961 = vsel %vm5932, %v5958, %v5960
      %v5962 = vrot.slane %v5272, 3
      %v5963 = vsel %vm5932, %v5960, %v5962
      %v5964 = vrot.slane %v5273, 3
      %v5965 = vsel %vm5932, %v5962, %v5964
      %v5966 = vrot.slane %v5274, 3
      %v5967 = vsel %vm5932, %v5964, %v5966
      %v5968 = vrot.slane %v5275, 3
      %v5969 = vsel %vm5932, %v5966, %v5968
      %v5970 = vrot.slane %v5276, 3
      %v5971 = vsel %vm5932, %v5968, %v5970
      %v5972 = vrot.slane %v5277, 3
      %v5973 = vsel %vm5932, %v5970, %v5972
      %v5974 = vrot.slane %v5278, 3
      %v5975 = vsel %vm5932, %v5972, %v5974
      %v5976 = vrot.slane %v5279, 3
      %v5977 = vsel %vm5932, %v5974, %v5976
      %v5978 = vrot.slane %v5280, 3
      %v5979 = vsel %vm5932, %v5976, %v5978
      %v5980 = vrot.slane %v5281, 3
      %v5981 = vsel %vm5932, %v5978, %v5980
      %v5982 = vrot.slane %v5282, 3
      %v5983 = vsel %vm5932, %v5980, %v5982
      %v5984 = vrot.slane %v5283, 3
      %v5985 = vsel %vm5932, %v5982, %v5984
      %v5986 = vrot.slane %v5284, 3
      %v5987 = vsel %vm5932, %v5984, %v5986
      %v5988 = vrot.slane %v5285, 3
      %v5989 = vsel %vm5932, %v5986, %v5988
      %v5990 = vrot.slane %v5286, 3
      %v5991 = vsel %vm5932, %v5988, %v5990
      %v5992 = vrot.slane %v5287, 3
      %v5993 = vsel %vm5932, %v5990, %v5992
      %v5994 = vrot.slane %v5930, 3
      %v5995 = vsel %vm5932, %v5992, %v5994
      %v6007 = vunpack.c.l.b16 %v5919
      %v6008 = vunpack.c.h.b16 %v5919
      %v6009 = vunpack.c.l.b16 %v5920
      %v6010 = vunpack.c.h.b16 %v5920
      %v6011 = vunpack.c.l.b16 %v5921
      %v6012 = vunpack.c.h.b16 %v5921
      %v6013 = vunpack.c.l.b16 %v5922
      %v6014 = vunpack.c.h.b16 %v5922
      %v6015 = vunpack.c.l.b16 %v5923
      %v6016 = vunpack.c.h.b16 %v5923
      %v6017 = vunpack.c.l.b16 %v5924
      %v6018 = vunpack.c.h.b16 %v5924
      %v6019 = vunpack.c.l.b16 %v5925
      %v6020 = vunpack.c.h.b16 %v5925
      %v6021 = vunpack.c.l.b16 %v5926
      %v6022 = vunpack.c.h.b16 %v5926
      %v6023 = vunpack.c.l.b16 %v5927
      %v6024 = vunpack.c.h.b16 %v5927
      %v6025 = vunpack.c.l.b16 %v5928
      %v6026 = vunpack.c.h.b16 %v5928
      %v6027 = vunpack.c.l.b16 %v5929
      %v6028 = vunpack.c.h.b16 %v5929
      %v6029 = vpack.c.b16 %v6009, %v6007
      %v6030 = vpack.c.b16 %v6010, %v6008
      %v6031 = vpack.c.b16 %v6013, %v6011
      %v6032 = vpack.c.b16 %v6014, %v6012
      %v6033 = vpack.c.b16 %v6017, %v6015
      %v6034 = vpack.c.b16 %v6018, %v6016
      %v6035 = vpack.c.b16 %v6021, %v6019
      %v6036 = vpack.c.b16 %v6022, %v6020
      %v6037 = vpack.c.b16 %v6025, %v6023
      %v6038 = vpack.c.b16 %v6026, %v6024
      %v6039 = vpack.c.b16 %v6027, %v6027
      %v6040 = vpack.c.b16 %v6028, %v6028
      %v6052 = vsel %vm5451, %v5935, 0
      %v6055 = vsel %vm5451, %v5937, 0
      %v6058 = vsel %vm5451, %v5939, 0
      %v6061 = vsel %vm5451, %v5941, 0
      %v6064 = vsel %vm5451, %v5943, 0
      %v6067 = vsel %vm5451, %v5945, 0
      %v6070 = vsel %vm5451, %v5947, 0
      %v6073 = vsel %vm5451, %v5949, 0
      %v6076 = vsel %vm5451, %v5951, 0
      %v6079 = vsel %vm5451, %v5953, 0
      %v6082 = vsel %vm5451, %v5955, 0
      %v6085 = vsel %vm5451, %v5957, 0
      %v6088 = vsel %vm5451, %v5959, 0
      %v6091 = vsel %vm5451, %v5961, 0
      %v6094 = vsel %vm5451, %v5963, 0
      %v6097 = vsel %vm5451, %v5965, 0
      %v6100 = vsel %vm5451, %v5967, 0
      %v6103 = vsel %vm5451, %v5969, 0
      %v6106 = vsel %vm5451, %v5971, 0
      %v6109 = vsel %vm5451, %v5973, 0
      %v6112 = vsel %vm5451, %v5975, 0
      %v6115 = vsel %vm5451, %v5977, 0
      %v6118 = vsel %vm5451, %v5979, 0
      %v6121 = vsel %vm5451, %v5981, 0
      %v6124 = vsel %vm5451, %v5983, 0
      %v6127 = vsel %vm5451, %v5985, 0
      %v6130 = vsel %vm5451, %v5987, 0
      %v6133 = vsel %vm5451, %v5989, 0
      %v6136 = vsel %vm5451, %v5991, 0
      %v6139 = vsel %vm5451, %v5993, 0
      %v6142 = vsel %vm5451, %v5995, 0
      %v6145 = vsel %vm5451, %v5994, 0
      %v6148 = vsel %vm5548, %v6039, 0
      %v6151 = vsel %vm5548, %v6040, 0
      %6153 = vmatprep.subr.bf16.mxu0 %v6030
      %6154 = vmatpush1.bf16.msra.mxu0 %v6029
      %6155 = vmatprep.subr.bf16.mxu0 %v6032
      %6156 = vmatpush1.bf16.msra.mxu0 %v6031
      %6157 = vmatprep.subr.bf16.mxu0 %v6034
      %6158 = vmatpush1.bf16.msra.mxu0 %v6033
      %6159 = vmatprep.subr.bf16.mxu0 %v6036
      %6160 = vmatpush1.bf16.msra.mxu0 %v6035
      %6161 = vmatprep.subr.bf16.mxu0 %v6038
      %6162 = vmatpush1.bf16.msra.mxu0 %v6037
      %6163 = vmatprep.subr.bf16.mxu0 %v6151
      %6164 = vmatpush1.bf16.msra.mxu0 %v6148
      %6165 = vmatprep.subr.bf16.mxu0 0
      %6166 = vmatpush1.bf16.msra.mxu0 0
      %6167 = vmatprep.subr.bf16.mxu0 0
      %6168 = vmatpush1.bf16.msra.mxu0 0
      %6169 = vmatprep.subr.bf16.mxu0 0
      %6170 = vmatpush1.bf16.msra.mxu0 0
      %6171 = vmatprep.subr.bf16.mxu0 0
      %6172 = vmatpush1.bf16.msra.mxu0 0
      %6173 = vmatprep.subr.bf16.mxu0 0
      %6174 = vmatpush1.bf16.msra.mxu0 0
      %6175 = vmatprep.subr.bf16.mxu0 0
      %6176 = vmatpush1.bf16.msra.mxu0 0
      %6177 = vmatprep.subr.bf16.mxu0 0
      %6178 = vmatpush1.bf16.msra.mxu0 0
      %6179 = vmatprep.subr.bf16.mxu0 0
      %6180 = vmatpush1.bf16.msra.mxu0 0
      %6181 = vmatprep.subr.bf16.mxu0 0
      %6182 = vmatpush1.bf16.msra.mxu0 0
      %6183 = vmatprep.subr.bf16.mxu0 0
      %6184 = vmatpush1.bf16.msra.mxu0 0
      %6185 = vmatprep.mubr.bf16.mxu0 0
      %6186 = vmatmul.mubr.bf16.gmra.mrb[0].mxu0 %v6052
      %v6187 = vpop.f32.mrb[0].mxu0
      %v6188 = vadd.f32 0.0, %v6187
      %v6189 = vpop.f32.mrb[0].mxu0
      %v6190 = vadd.f32 0.0, %v6189
      %v6191 = vpop.f32.mrb[0].mxu0
      %v6192 = vadd.f32 0.0, %v6191
      %v6193 = vpop.f32.mrb[0].mxu0
      %v6194 = vadd.f32 0.0, %v6193
      %6195 = vmatprep.mubr.bf16.mxu0 0
      %6196 = vmatmul.mubr.bf16.gmra.mrb[0].mxu0 %v6055
      %v6197 = vpop.f32.mrb[0].mxu0
      %v6198 = vadd.f32 0.0, %v6197
      %v6199 = vpop.f32.mrb[0].mxu0
      %v6200 = vadd.f32 0.0, %v6199
      %v6201 = vpop.f32.mrb[0].mxu0
      %v6202 = vadd.f32 0.0, %v6201
      %v6203 = vpop.f32.mrb[0].mxu0
      %v6204 = vadd.f32 0.0, %v6203
      %6205 = vmatprep.mubr.bf16.mxu0 0
      %6206 = vmatmul.mubr.bf16.gmra.mrb[0].mxu0 %v6058
      %v6207 = vpop.f32.mrb[0].mxu0
      %v6208 = vadd.f32 0.0, %v6207
      %v6209 = vpop.f32.mrb[0].mxu0
      %v6210 = vadd.f32 0.0, %v6209
      %v6211 = vpop.f32.mrb[0].mxu0
      %v6212 = vadd.f32 0.0, %v6211
      %v6213 = vpop.f32.mrb[0].mxu0
      %v6214 = vadd.f32 0.0, %v6213
      %6215 = vmatprep.mubr.bf16.mxu0 0
      %6216 = vmatmul.mubr.bf16.gmra.mrb[0].mxu0 %v6061
      %v6217 = vpop.f32.mrb[0].mxu0
      %v6218 = vadd.f32 0.0, %v6217
      %v6219 = vpop.f32.mrb[0].mxu0
      %v6220 = vadd.f32 0.0, %v6219
      %v6221 = vpop.f32.mrb[0].mxu0
      %v6222 = vadd.f32 0.0, %v6221
      %v6223 = vpop.f32.mrb[0].mxu0
      %v6224 = vadd.f32 0.0, %v6223
      %6225 = vmatprep.mubr.bf16.mxu0 0
      %6226 = vmatmul.mubr.bf16.gmra.mrb[0].mxu0 %v6064
      %v6227 = vpop.f32.mrb[0].mxu0
      %v6228 = vadd.f32 0.0, %v6227
      %v6229 = vpop.f32.mrb[0].mxu0
      %v6230 = vadd.f32 0.0, %v6229
      %v6231 = vpop.f32.mrb[0].mxu0
      %v6232 = vadd.f32 0.0, %v6231
      %v6233 = vpop.f32.mrb[0].mxu0
      %v6234 = vadd.f32 0.0, %v6233
      %6235 = vmatprep.mubr.bf16.mxu0 0
      %6236 = vmatmul.mubr.bf16.gmra.mrb[0].mxu0 %v6067
      %v6237 = vpop.f32.mrb[0].mxu0
      %v6238 = vadd.f32 0.0, %v6237
      %v6239 = vpop.f32.mrb[0].mxu0
      %v6240 = vadd.f32 0.0, %v6239
      %v6241 = vpop.f32.mrb[0].mxu0
      %v6242 = vadd.f32 0.0, %v6241
      %v6243 = vpop.f32.mrb[0].mxu0
      %v6244 = vadd.f32 0.0, %v6243
      %6245 = vmatprep.mubr.bf16.mxu0 0
      %6246 = vmatmul.mubr.bf16.gmra.mrb[0].mxu0 %v6070
      %v6247 = vpop.f32.mrb[0].mxu0
      %v6248 = vadd.f32 0.0, %v6247
      %v6249 = vpop.f32.mrb[0].mxu0
      %v6250 = vadd.f32 0.0, %v6249
      %v6251 = vpop.f32.mrb[0].mxu0
      %v6252 = vadd.f32 0.0, %v6251
      %v6253 = vpop.f32.mrb[0].mxu0
      %v6254 = vadd.f32 0.0, %v6253
      %6255 = vmatprep.mubr.bf16.mxu0 0
      %6256 = vmatmul.mubr.bf16.gmra.mrb[0].mxu0 %v6073
      %v6257 = vpop.f32.mrb[0].mxu0
      %v6258 = vadd.f32 0.0, %v6257
      %v6259 = vpop.f32.mrb[0].mxu0
      %v6260 = vadd.f32 0.0, %v6259
      %v6261 = vpop.f32.mrb[0].mxu0
      %v6262 = vadd.f32 0.0, %v6261
      %v6263 = vpop.f32.mrb[0].mxu0
      %v6264 = vadd.f32 0.0, %v6263
      %6265 = vmatprep.mubr.bf16.mxu0 0
      %6266 = vmatmul.mubr.bf16.gmra.mrb[0].mxu0 %v6076
      %v6267 = vpop.f32.mrb[0].mxu0
      %v6268 = vadd.f32 0.0, %v6267
      %v6269 = vpop.f32.mrb[0].mxu0
      %v6270 = vadd.f32 0.0, %v6269
      %v6271 = vpop.f32.mrb[0].mxu0
      %v6272 = vadd.f32 0.0, %v6271
      %v6273 = vpop.f32.mrb[0].mxu0
      %v6274 = vadd.f32 0.0, %v6273
      %6275 = vmatprep.mubr.bf16.mxu0 0
      %6276 = vmatmul.mubr.bf16.gmra.mrb[0].mxu0 %v6079
      %v6277 = vpop.f32.mrb[0].mxu0
      %v6278 = vadd.f32 0.0, %v6277
      %v6279 = vpop.f32.mrb[0].mxu0
      %v6280 = vadd.f32 0.0, %v6279
      %v6281 = vpop.f32.mrb[0].mxu0
      %v6282 = vadd.f32 0.0, %v6281
      %v6283 = vpop.f32.mrb[0].mxu0
      %v6284 = vadd.f32 0.0, %v6283
      %6285 = vmatprep.mubr.bf16.mxu0 0
      %6286 = vmatmul.mubr.bf16.gmra.mrb[0].mxu0 %v6082
      %v6287 = vpop.f32.mrb[0].mxu0
      %v6288 = vadd.f32 0.0, %v6287
      %v6289 = vpop.f32.mrb[0].mxu0
      %v6290 = vadd.f32 0.0, %v6289
      %v6291 = vpop.f32.mrb[0].mxu0
      %v6292 = vadd.f32 0.0, %v6291
      %v6293 = vpop.f32.mrb[0].mxu0
      %v6294 = vadd.f32 0.0, %v6293
      %6295 = vmatprep.mubr.bf16.mxu0 0
      %6296 = vmatmul.mubr.bf16.gmra.mrb[0].mxu0 %v6085
      %v6297 = vpop.f32.mrb[0].mxu0
      %v6298 = vadd.f32 0.0, %v6297
      %v6299 = vpop.f32.mrb[0].mxu0
      %v6300 = vadd.f32 0.0, %v6299
      %v6301 = vpop.f32.mrb[0].mxu0
      %v6302 = vadd.f32 0.0, %v6301
      %v6303 = vpop.f32.mrb[0].mxu0
      %v6304 = vadd.f32 0.0, %v6303
      %6305 = vmatprep.mubr.bf16.mxu0 0
      %6306 = vmatmul.mubr.bf16.gmra.mrb[0].mxu0 %v6088
      %v6307 = vpop.f32.mrb[0].mxu0
      %v6308 = vadd.f32 0.0, %v6307
      %v6309 = vpop.f32.mrb[0].mxu0
      %v6310 = vadd.f32 0.0, %v6309
      %v6311 = vpop.f32.mrb[0].mxu0
      %v6312 = vadd.f32 0.0, %v6311
      %v6313 = vpop.f32.mrb[0].mxu0
      %v6314 = vadd.f32 0.0, %v6313
      %6315 = vmatprep.mubr.bf16.mxu0 0
      %6316 = vmatmul.mubr.bf16.gmra.mrb[0].mxu0 %v6091
      %v6317 = vpop.f32.mrb[0].mxu0
      %v6318 = vadd.f32 0.0, %v6317
      %v6319 = vpop.f32.mrb[0].mxu0
      %v6320 = vadd.f32 0.0, %v6319
      %v6321 = vpop.f32.mrb[0].mxu0
      %v6322 = vadd.f32 0.0, %v6321
      %v6323 = vpop.f32.mrb[0].mxu0
      %v6324 = vadd.f32 0.0, %v6323
      %6325 = vmatprep.mubr.bf16.mxu0 0
      %6326 = vmatmul.mubr.bf16.gmra.mrb[0].mxu0 %v6094
      %v6327 = vpop.f32.mrb[0].mxu0
      %v6328 = vadd.f32 0.0, %v6327
      %v6329 = vpop.f32.mrb[0].mxu0
      %v6330 = vadd.f32 0.0, %v6329
      %v6331 = vpop.f32.mrb[0].mxu0
      %v6332 = vadd.f32 0.0, %v6331
      %v6333 = vpop.f32.mrb[0].mxu0
      %v6334 = vadd.f32 0.0, %v6333
      %6335 = vmatprep.mubr.bf16.mxu0 0
      %6336 = vmatmul.mubr.bf16.gmra.mrb[0].mxu0 %v6097
      %v6337 = vpop.f32.mrb[0].mxu0
      %v6338 = vadd.f32 0.0, %v6337
      %v6339 = vpop.f32.mrb[0].mxu0
      %v6340 = vadd.f32 0.0, %v6339
      %v6341 = vpop.f32.mrb[0].mxu0
      %v6342 = vadd.f32 0.0, %v6341
      %v6343 = vpop.f32.mrb[0].mxu0
      %v6344 = vadd.f32 0.0, %v6343
      %6345 = vmatprep.mubr.bf16.mxu0 0
      %6346 = vmatmul.mubr.bf16.gmra.mrb[0].mxu0 %v6100
      %v6347 = vpop.f32.mrb[0].mxu0
      %v6348 = vadd.f32 0.0, %v6347
      %v6349 = vpop.f32.mrb[0].mxu0
      %v6350 = vadd.f32 0.0, %v6349
      %v6351 = vpop.f32.mrb[0].mxu0
      %v6352 = vadd.f32 0.0, %v6351
      %v6353 = vpop.f32.mrb[0].mxu0
      %v6354 = vadd.f32 0.0, %v6353
      %6355 = vmatprep.mubr.bf16.mxu0 0
      %6356 = vmatmul.mubr.bf16.gmra.mrb[0].mxu0 %v6103
      %v6357 = vpop.f32.mrb[0].mxu0
      %v6358 = vadd.f32 0.0, %v6357
      %v6359 = vpop.f32.mrb[0].mxu0
      %v6360 = vadd.f32 0.0, %v6359
      %v6361 = vpop.f32.mrb[0].mxu0
      %v6362 = vadd.f32 0.0, %v6361
      %v6363 = vpop.f32.mrb[0].mxu0
      %v6364 = vadd.f32 0.0, %v6363
      %6365 = vmatprep.mubr.bf16.mxu0 0
      %6366 = vmatmul.mubr.bf16.gmra.mrb[0].mxu0 %v6106
      %v6367 = vpop.f32.mrb[0].mxu0
      %v6368 = vadd.f32 0.0, %v6367
      %v6369 = vpop.f32.mrb[0].mxu0
      %v6370 = vadd.f32 0.0, %v6369
      %v6371 = vpop.f32.mrb[0].mxu0
      %v6372 = vadd.f32 0.0, %v6371
      %v6373 = vpop.f32.mrb[0].mxu0
      %v6374 = vadd.f32 0.0, %v6373
      %6375 = vmatprep.mubr.bf16.mxu0 0
      %6376 = vmatmul.mubr.bf16.gmra.mrb[0].mxu0 %v6109
      %v6377 = vpop.f32.mrb[0].mxu0
      %v6378 = vadd.f32 0.0, %v6377
      %v6379 = vpop.f32.mrb[0].mxu0
      %v6380 = vadd.f32 0.0, %v6379
      %v6381 = vpop.f32.mrb[0].mxu0
      %v6382 = vadd.f32 0.0, %v6381
      %v6383 = vpop.f32.mrb[0].mxu0
      %v6384 = vadd.f32 0.0, %v6383
      %6385 = vmatprep.mubr.bf16.mxu0 0
      %6386 = vmatmul.mubr.bf16.gmra.mrb[0].mxu0 %v6112
      %v6387 = vpop.f32.mrb[0].mxu0
      %v6388 = vadd.f32 0.0, %v6387
      %v6389 = vpop.f32.mrb[0].mxu0
      %v6390 = vadd.f32 0.0, %v6389
      %v6391 = vpop.f32.mrb[0].mxu0
      %v6392 = vadd.f32 0.0, %v6391
      %v6393 = vpop.f32.mrb[0].mxu0
      %v6394 = vadd.f32 0.0, %v6393
      %6395 = vmatprep.mubr.bf16.mxu0 0
      %6396 = vmatmul.mubr.bf16.gmra.mrb[0].mxu0 %v6115
      %v6397 = vpop.f32.mrb[0].mxu0
      %v6398 = vadd.f32 0.0, %v6397
      %v6399 = vpop.f32.mrb[0].mxu0
      %v6400 = vadd.f32 0.0, %v6399
      %v6401 = vpop.f32.mrb[0].mxu0
      %v6402 = vadd.f32 0.0, %v6401
      %v6403 = vpop.f32.mrb[0].mxu0
      %v6404 = vadd.f32 0.0, %v6403
      %6405 = vmatprep.mubr.bf16.mxu0 0
      %6406 = vmatmul.mubr.bf16.gmra.mrb[0].mxu0 %v6118
      %v6407 = vpop.f32.mrb[0].mxu0
      %v6408 = vadd.f32 0.0, %v6407
      %v6409 = vpop.f32.mrb[0].mxu0
      %v6410 = vadd.f32 0.0, %v6409
      %v6411 = vpop.f32.mrb[0].mxu0
      %v6412 = vadd.f32 0.0, %v6411
      %v6413 = vpop.f32.mrb[0].mxu0
      %v6414 = vadd.f32 0.0, %v6413
      %6415 = vmatprep.mubr.bf16.mxu0 0
      %6416 = vmatmul.mubr.bf16.gmra.mrb[0].mxu0 %v6121
      %v6417 = vpop.f32.mrb[0].mxu0
      %v6418 = vadd.f32 0.0, %v6417
      %v6419 = vpop.f32.mrb[0].mxu0
      %v6420 = vadd.f32 0.0, %v6419
      %v6421 = vpop.f32.mrb[0].mxu0
      %v6422 = vadd.f32 0.0, %v6421
      %v6423 = vpop.f32.mrb[0].mxu0
      %v6424 = vadd.f32 0.0, %v6423
      %6425 = vmatprep.mubr.bf16.mxu0 0
      %6426 = vmatmul.mubr.bf16.gmra.mrb[0].mxu0 %v6124
      %v6427 = vpop.f32.mrb[0].mxu0
      %v6428 = vadd.f32 0.0, %v6427
      %v6429 = vpop.f32.mrb[0].mxu0
      %v6430 = vadd.f32 0.0, %v6429
      %v6431 = vpop.f32.mrb[0].mxu0
      %v6432 = vadd.f32 0.0, %v6431
      %v6433 = vpop.f32.mrb[0].mxu0
      %v6434 = vadd.f32 0.0, %v6433
      %6435 = vmatprep.mubr.bf16.mxu0 0
      %6436 = vmatmul.mubr.bf16.gmra.mrb[0].mxu0 %v6127
      %v6437 = vpop.f32.mrb[0].mxu0
      %v6438 = vadd.f32 0.0, %v6437
      %v6439 = vpop.f32.mrb[0].mxu0
      %v6440 = vadd.f32 0.0, %v6439
      %v6441 = vpop.f32.mrb[0].mxu0
      %v6442 = vadd.f32 0.0, %v6441
      %v6443 = vpop.f32.mrb[0].mxu0
      %v6444 = vadd.f32 0.0, %v6443
      %6445 = vmatprep.mubr.bf16.mxu0 0
      %6446 = vmatmul.mubr.bf16.gmra.mrb[0].mxu0 %v6130
      %v6447 = vpop.f32.mrb[0].mxu0
      %v6448 = vadd.f32 0.0, %v6447
      %v6449 = vpop.f32.mrb[0].mxu0
      %v6450 = vadd.f32 0.0, %v6449
      %v6451 = vpop.f32.mrb[0].mxu0
      %v6452 = vadd.f32 0.0, %v6451
      %v6453 = vpop.f32.mrb[0].mxu0
      %v6454 = vadd.f32 0.0, %v6453
      %6455 = vmatprep.mubr.bf16.mxu0 0
      %6456 = vmatmul.mubr.bf16.gmra.mrb[0].mxu0 %v6133
      %v6457 = vpop.f32.mrb[0].mxu0
      %v6458 = vadd.f32 0.0, %v6457
      %v6459 = vpop.f32.mrb[0].mxu0
      %v6460 = vadd.f32 0.0, %v6459
      %v6461 = vpop.f32.mrb[0].mxu0
      %v6462 = vadd.f32 0.0, %v6461
      %v6463 = vpop.f32.mrb[0].mxu0
      %v6464 = vadd.f32 0.0, %v6463
      %6465 = vmatprep.mubr.bf16.mxu0 0
      %6466 = vmatmul.mubr.bf16.gmra.mrb[0].mxu0 %v6136
      %v6467 = vpop.f32.mrb[0].mxu0
      %v6468 = vadd.f32 0.0, %v6467
      %v6469 = vpop.f32.mrb[0].mxu0
      %v6470 = vadd.f32 0.0, %v6469
      %v6471 = vpop.f32.mrb[0].mxu0
      %v6472 = vadd.f32 0.0, %v6471
      %v6473 = vpop.f32.mrb[0].mxu0
      %v6474 = vadd.f32 0.0, %v6473
      %6475 = vmatprep.mubr.bf16.mxu0 0
      %6476 = vmatmul.mubr.bf16.gmra.mrb[0].mxu0 %v6139
      %v6477 = vpop.f32.mrb[0].mxu0
      %v6478 = vadd.f32 0.0, %v6477
      %v6479 = vpop.f32.mrb[0].mxu0
      %v6480 = vadd.f32 0.0, %v6479
      %v6481 = vpop.f32.mrb[0].mxu0
      %v6482 = vadd.f32 0.0, %v6481
      %v6483 = vpop.f32.mrb[0].mxu0
      %v6484 = vadd.f32 0.0, %v6483
      %6485 = vmatprep.mubr.bf16.mxu0 0
      %6486 = vmatmul.mubr.bf16.gmra.mrb[0].mxu0 %v6142
      %v6487 = vpop.f32.mrb[0].mxu0
      %v6488 = vadd.f32 0.0, %v6487
      %v6489 = vpop.f32.mrb[0].mxu0
      %v6490 = vadd.f32 0.0, %v6489
      %v6491 = vpop.f32.mrb[0].mxu0
      %v6492 = vadd.f32 0.0, %v6491
      %v6493 = vpop.f32.mrb[0].mxu0
      %v6494 = vadd.f32 0.0, %v6493
      %6495 = vmatprep.mubr.bf16.mxu0 0
      %6496 = vmatmul.mubr.bf16.gmra.mrb[0].mxu0 %v6145
      %v6497 = vpop.f32.mrb[0].mxu0
      %v6498 = vadd.f32 0.0, %v6497
      %v6499 = vpop.f32.mrb[0].mxu0
      %v6500 = vadd.f32 0.0, %v6499
      %v6501 = vpop.f32.mrb[0].mxu0
      %v6502 = vpop.f32.mrb[0].mxu0
      %6503 = vdwg.mxu0
      %s6504 = scalar_lea.vmem %s4, 352
      %v6505 = vld [vmem:[%s6504] sm:$0xff]
      %v6506 = vld [vmem:[%s6504 + $0x8] sm:$0xff]
      %v6507 = vld [vmem:[%s6504 + $0x10] sm:$0xff]
      %v6508 = vld [vmem:[%s6504 + $0x18] sm:$0xff]
      %v6509 = vld [vmem:[%s6504 + $0x20] sm:$0xff]
      %v6510 = vld [vmem:[%s6504 + $0x28] sm:$0xff]
      %v6511 = vld [vmem:[%s6504 + $0x30] sm:$0xff]
      %v6512 = vld [vmem:[%s6504 + $0x38] sm:$0xff]
      %v6513 = vld [vmem:[%s6504 + $0x40] sm:$0xff]
      %v6514 = vld [vmem:[%s6504 + $0x48] sm:$0xff]
      %v6515 = vld [vmem:[%s6504 + $0x50] sm:$0x33]
      %v6516 = vpack.c.bf16 %v5184, %v5183
      %v6517 = vpack.c.bf16 %v5186, %v5185
      %v6518 = vpack.c.bf16 %v5188, %v5187
      %v6519 = vpack.c.bf16 %v5190, %v5189
      %v6520 = vpack.c.bf16 %v5192, %v5191
      %v6521 = vpack.c.bf16 %v5194, %v5193
      %v6522 = vpack.c.bf16 %v5196, %v5195
      %v6523 = vpack.c.bf16 %v5198, %v5197
      %v6524 = vpack.c.bf16 %v5200, %v5199
      %v6525 = vpack.c.bf16 %v5202, %v5201
      %v6526 = vpack.c.bf16 %v5204, %v5203
      %v6527 = vpack.c.bf16 %v5206, %v5205
      %v6528 = vpack.c.bf16 %v5208, %v5207
      %v6529 = vpack.c.bf16 %v5210, %v5209
      %v6530 = vpack.c.bf16 %v5212, %v5211
      %v6531 = vpack.c.bf16 %v5214, %v5213
      %v6532 = vpack.c.bf16 %v5216, %v5215
      %v6533 = vpack.c.bf16 %v5218, %v5217
      %v6534 = vpack.c.bf16 %v5220, %v5219
      %v6535 = vpack.c.bf16 %v5222, %v5221
      %v6536 = vpack.c.bf16 %v5224, %v5223
      %v6537 = vpack.c.bf16 %v5226, %v5225
      %v6538 = vpack.c.bf16 %v5228, %v5227
      %v6539 = vpack.c.bf16 %v5230, %v5229
      %v6540 = vpack.c.bf16 %v5232, %v5231
      %v6541 = vpack.c.bf16 %v5234, %v5233
      %v6542 = vpack.c.bf16 %v5236, %v5235
      %v6543 = vpack.c.bf16 %v5238, %v5237
      %v6544 = vpack.c.bf16 %v5240, %v5239
      %v6545 = vpack.c.bf16 %v5242, %v5241
      %v6546 = vpack.c.bf16 %v5244, %v5243
      %v6547 = vpack.c.bf16 %v5245, %v5245
      %v6559 = vunpack.c.l.b16 %v6505
      %v6560 = vunpack.c.h.b16 %v6505
      %v6561 = vunpack.c.l.b16 %v6506
      %v6562 = vunpack.c.h.b16 %v6506
      %v6563 = vunpack.c.l.b16 %v6507
      %v6564 = vunpack.c.h.b16 %v6507
      %v6565 = vunpack.c.l.b16 %v6508
      %v6566 = vunpack.c.h.b16 %v6508
      %v6567 = vunpack.c.l.b16 %v6509
      %v6568 = vunpack.c.h.b16 %v6509
      %v6569 = vunpack.c.l.b16 %v6510
      %v6570 = vunpack.c.h.b16 %v6510
      %v6571 = vunpack.c.l.b16 %v6511
      %v6572 = vunpack.c.h.b16 %v6511
      %v6573 = vunpack.c.l.b16 %v6512
      %v6574 = vunpack.c.h.b16 %v6512
      %v6575 = vunpack.c.l.b16 %v6513
      %v6576 = vunpack.c.h.b16 %v6513
      %v6577 = vunpack.c.l.b16 %v6514
      %v6578 = vunpack.c.h.b16 %v6514
      %v6579 = vunpack.c.l.b16 %v6515
      %v6580 = vunpack.c.h.b16 %v6515
      %v6581 = vpack.c.b16 %v6561, %v6559
      %v6582 = vpack.c.b16 %v6562, %v6560
      %v6583 = vpack.c.b16 %v6565, %v6563
      %v6584 = vpack.c.b16 %v6566, %v6564
      %v6585 = vpack.c.b16 %v6569, %v6567
      %v6586 = vpack.c.b16 %v6570, %v6568
      %v6587 = vpack.c.b16 %v6573, %v6571
      %v6588 = vpack.c.b16 %v6574, %v6572
      %v6589 = vpack.c.b16 %v6577, %v6575
      %v6590 = vpack.c.b16 %v6578, %v6576
      %v6591 = vpack.c.b16 %v6579, %v6579
      %v6592 = vpack.c.b16 %v6580, %v6580
      %v6604 = vsel %vm5451, %v6516, 0
      %v6607 = vsel %vm5451, %v6517, 0
      %v6610 = vsel %vm5451, %v6518, 0
      %v6613 = vsel %vm5451, %v6519, 0
      %v6616 = vsel %vm5451, %v6520, 0
      %v6619 = vsel %vm5451, %v6521, 0
      %v6622 = vsel %vm5451, %v6522, 0
      %v6625 = vsel %vm5451, %v6523, 0
      %v6628 = vsel %vm5451, %v6524, 0
      %v6631 = vsel %vm5451, %v6525, 0
      %v6634 = vsel %vm5451, %v6526, 0
      %v6637 = vsel %vm5451, %v6527, 0
      %v6640 = vsel %vm5451, %v6528, 0
      %v6643 = vsel %vm5451, %v6529, 0
      %v6646 = vsel %vm5451, %v6530, 0
      %v6649 = vsel %vm5451, %v6531, 0
      %v6652 = vsel %vm5451, %v6532, 0
      %v6655 = vsel %vm5451, %v6533, 0
      %v6658 = vsel %vm5451, %v6534, 0
      %v6661 = vsel %vm5451, %v6535, 0
      %v6664 = vsel %vm5451, %v6536, 0
      %v6667 = vsel %vm5451, %v6537, 0
      %v6670 = vsel %vm5451, %v6538, 0
      %v6673 = vsel %vm5451, %v6539, 0
      %v6676 = vsel %vm5451, %v6540, 0
      %v6679 = vsel %vm5451, %v6541, 0
      %v6682 = vsel %vm5451, %v6542, 0
      %v6685 = vsel %vm5451, %v6543, 0
      %v6688 = vsel %vm5451, %v6544, 0
      %v6691 = vsel %vm5451, %v6545, 0
      %v6694 = vsel %vm5451, %v6546, 0
      %v6697 = vsel %vm5451, %v6547, 0
      %v6700 = vsel %vm5548, %v6591, 0
      %v6703 = vsel %vm5548, %v6592, 0
      %6705 = vmatprep.subr.bf16.mxu0 %v6582
      %6706 = vmatpush1.bf16.msra.mxu0 %v6581
      %6707 = vmatprep.subr.bf16.mxu0 %v6584
      %6708 = vmatpush1.bf16.msra.mxu0 %v6583
      %6709 = vmatprep.subr.bf16.mxu0 %v6586
      %6710 = vmatpush1.bf16.msra.mxu0 %v6585
      %6711 = vmatprep.subr.bf16.mxu0 %v6588
      %6712 = vmatpush1.bf16.msra.mxu0 %v6587
      %6713 = vmatprep.subr.bf16.mxu0 %v6590
      %6714 = vmatpush1.bf16.msra.mxu0 %v6589
      %6715 = vmatprep.subr.bf16.mxu0 %v6703
      %6716 = vmatpush1.bf16.msra.mxu0 %v6700
      %6717 = vmatprep.subr.bf16.mxu0 0
      %6718 = vmatpush1.bf16.msra.mxu0 0
      %6719 = vmatprep.subr.bf16.mxu0 0
      %6720 = vmatpush1.bf16.msra.mxu0 0
      %6721 = vmatprep.subr.bf16.mxu0 0
      %6722 = vmatpush1.bf16.msra.mxu0 0
      %6723 = vmatprep.subr.bf16.mxu0 0
      %6724 = vmatpush1.bf16.msra.mxu0 0
      %6725 = vmatprep.subr.bf16.mxu0 0
      %6726 = vmatpush1.bf16.msra.mxu0 0
      %6727 = vmatprep.subr.bf16.mxu0 0
      %6728 = vmatpush1.bf16.msra.mxu0 0
      %6729 = vmatprep.subr.bf16.mxu0 0
      %6730 = vmatpush1.bf16.msra.mxu0 0
      %6731 = vmatprep.subr.bf16.mxu0 0
      %6732 = vmatpush1.bf16.msra.mxu0 0
      %6733 = vmatprep.subr.bf16.mxu0 0
      %6734 = vmatpush1.bf16.msra.mxu0 0
      %6735 = vmatprep.subr.bf16.mxu0 0
      %6736 = vmatpush1.bf16.msra.mxu0 0
      %6737 = vmatprep.mubr.bf16.mxu0 0
      %6738 = vmatmul.mubr.bf16.gmra.mrb[0].mxu0 %v6604
      %v6739 = vpop.f32.mrb[0].mxu0
      %v6740 = vadd.f32 0.0, %v6739
      %v6741 = vpop.f32.mrb[0].mxu0
      %v6742 = vadd.f32 0.0, %v6741
      %v6743 = vpop.f32.mrb[0].mxu0
      %v6744 = vadd.f32 0.0, %v6743
      %v6745 = vpop.f32.mrb[0].mxu0
      %v6746 = vadd.f32 0.0, %v6745
      %6747 = vmatprep.mubr.bf16.mxu0 0
      %6748 = vmatmul.mubr.bf16.gmra.mrb[0].mxu0 %v6607
      %v6749 = vpop.f32.mrb[0].mxu0
      %v6750 = vadd.f32 0.0, %v6749
      %v6751 = vpop.f32.mrb[0].mxu0
      %v6752 = vadd.f32 0.0, %v6751
      %v6753 = vpop.f32.mrb[0].mxu0
      %v6754 = vadd.f32 0.0, %v6753
      %v6755 = vpop.f32.mrb[0].mxu0
      %v6756 = vadd.f32 0.0, %v6755
      %6757 = vmatprep.mubr.bf16.mxu0 0
      %6758 = vmatmul.mubr.bf16.gmra.mrb[0].mxu0 %v6610
      %v6759 = vpop.f32.mrb[0].mxu0
      %v6760 = vadd.f32 0.0, %v6759
      %v6761 = vpop.f32.mrb[0].mxu0
      %v6762 = vadd.f32 0.0, %v6761
      %v6763 = vpop.f32.mrb[0].mxu0
      %v6764 = vadd.f32 0.0, %v6763
      %v6765 = vpop.f32.mrb[0].mxu0
      %v6766 = vadd.f32 0.0, %v6765
      %6767 = vmatprep.mubr.bf16.mxu0 0
      %6768 = vmatmul.mubr.bf16.gmra.mrb[0].mxu0 %v6613
      %v6769 = vpop.f32.mrb[0].mxu0
      %v6770 = vadd.f32 0.0, %v6769
      %v6771 = vpop.f32.mrb[0].mxu0
      %v6772 = vadd.f32 0.0, %v6771
      %v6773 = vpop.f32.mrb[0].mxu0
      %v6774 = vadd.f32 0.0, %v6773
      %v6775 = vpop.f32.mrb[0].mxu0
      %v6776 = vadd.f32 0.0, %v6775
      %6777 = vmatprep.mubr.bf16.mxu0 0
      %6778 = vmatmul.mubr.bf16.gmra.mrb[0].mxu0 %v6616
      %v6779 = vpop.f32.mrb[0].mxu0
      %v6780 = vadd.f32 0.0, %v6779
      %v6781 = vpop.f32.mrb[0].mxu0
      %v6782 = vadd.f32 0.0, %v6781
      %v6783 = vpop.f32.mrb[0].mxu0
      %v6784 = vadd.f32 0.0, %v6783
      %v6785 = vpop.f32.mrb[0].mxu0
      %v6786 = vadd.f32 0.0, %v6785
      %6787 = vmatprep.mubr.bf16.mxu0 0
      %6788 = vmatmul.mubr.bf16.gmra.mrb[0].mxu0 %v6619
      %v6789 = vpop.f32.mrb[0].mxu0
      %v6790 = vadd.f32 0.0, %v6789
      %v6791 = vpop.f32.mrb[0].mxu0
      %v6792 = vadd.f32 0.0, %v6791
      %v6793 = vpop.f32.mrb[0].mxu0
      %v6794 = vadd.f32 0.0, %v6793
      %v6795 = vpop.f32.mrb[0].mxu0
      %v6796 = vadd.f32 0.0, %v6795
      %6797 = vmatprep.mubr.bf16.mxu0 0
      %6798 = vmatmul.mubr.bf16.gmra.mrb[0].mxu0 %v6622
      %v6799 = vpop.f32.mrb[0].mxu0
      %v6800 = vadd.f32 0.0, %v6799
      %v6801 = vpop.f32.mrb[0].mxu0
      %v6802 = vadd.f32 0.0, %v6801
      %v6803 = vpop.f32.mrb[0].mxu0
      %v6804 = vadd.f32 0.0, %v6803
      %v6805 = vpop.f32.mrb[0].mxu0
      %v6806 = vadd.f32 0.0, %v6805
      %6807 = vmatprep.mubr.bf16.mxu0 0
      %6808 = vmatmul.mubr.bf16.gmra.mrb[0].mxu0 %v6625
      %v6809 = vpop.f32.mrb[0].mxu0
      %v6810 = vadd.f32 0.0, %v6809
      %v6811 = vpop.f32.mrb[0].mxu0
      %v6812 = vadd.f32 0.0, %v6811
      %v6813 = vpop.f32.mrb[0].mxu0
      %v6814 = vadd.f32 0.0, %v6813
      %v6815 = vpop.f32.mrb[0].mxu0
      %v6816 = vadd.f32 0.0, %v6815
      %6817 = vmatprep.mubr.bf16.mxu0 0
      %6818 = vmatmul.mubr.bf16.gmra.mrb[0].mxu0 %v6628
      %v6819 = vpop.f32.mrb[0].mxu0
      %v6820 = vadd.f32 0.0, %v6819
      %v6821 = vpop.f32.mrb[0].mxu0
      %v6822 = vadd.f32 0.0, %v6821
      %v6823 = vpop.f32.mrb[0].mxu0
      %v6824 = vadd.f32 0.0, %v6823
      %v6825 = vpop.f32.mrb[0].mxu0
      %v6826 = vadd.f32 0.0, %v6825
      %6827 = vmatprep.mubr.bf16.mxu0 0
      %6828 = vmatmul.mubr.bf16.gmra.mrb[0].mxu0 %v6631
      %v6829 = vpop.f32.mrb[0].mxu0
      %v6830 = vadd.f32 0.0, %v6829
      %v6831 = vpop.f32.mrb[0].mxu0
      %v6832 = vadd.f32 0.0, %v6831
      %v6833 = vpop.f32.mrb[0].mxu0
      %v6834 = vadd.f32 0.0, %v6833
      %v6835 = vpop.f32.mrb[0].mxu0
      %v6836 = vadd.f32 0.0, %v6835
      %6837 = vmatprep.mubr.bf16.mxu0 0
      %6838 = vmatmul.mubr.bf16.gmra.mrb[0].mxu0 %v6634
      %v6839 = vpop.f32.mrb[0].mxu0
      %v6840 = vadd.f32 0.0, %v6839
      %v6841 = vpop.f32.mrb[0].mxu0
      %v6842 = vadd.f32 0.0, %v6841
      %v6843 = vpop.f32.mrb[0].mxu0
      %v6844 = vadd.f32 0.0, %v6843
      %v6845 = vpop.f32.mrb[0].mxu0
      %v6846 = vadd.f32 0.0, %v6845
      %6847 = vmatprep.mubr.bf16.mxu0 0
      %6848 = vmatmul.mubr.bf16.gmra.mrb[0].mxu0 %v6637
      %v6849 = vpop.f32.mrb[0].mxu0
      %v6850 = vadd.f32 0.0, %v6849
      %v6851 = vpop.f32.mrb[0].mxu0
      %v6852 = vadd.f32 0.0, %v6851
      %v6853 = vpop.f32.mrb[0].mxu0
      %v6854 = vadd.f32 0.0, %v6853
      %v6855 = vpop.f32.mrb[0].mxu0
      %v6856 = vadd.f32 0.0, %v6855
      %6857 = vmatprep.mubr.bf16.mxu0 0
      %6858 = vmatmul.mubr.bf16.gmra.mrb[0].mxu0 %v6640
      %v6859 = vpop.f32.mrb[0].mxu0
      %v6860 = vadd.f32 0.0, %v6859
      %v6861 = vpop.f32.mrb[0].mxu0
      %v6862 = vadd.f32 0.0, %v6861
      %v6863 = vpop.f32.mrb[0].mxu0
      %v6864 = vadd.f32 0.0, %v6863
      %v6865 = vpop.f32.mrb[0].mxu0
      %v6866 = vadd.f32 0.0, %v6865
      %6867 = vmatprep.mubr.bf16.mxu0 0
      %6868 = vmatmul.mubr.bf16.gmra.mrb[0].mxu0 %v6643
      %v6869 = vpop.f32.mrb[0].mxu0
      %v6870 = vadd.f32 0.0, %v6869
      %v6871 = vpop.f32.mrb[0].mxu0
      %v6872 = vadd.f32 0.0, %v6871
      %v6873 = vpop.f32.mrb[0].mxu0
      %v6874 = vadd.f32 0.0, %v6873
      %v6875 = vpop.f32.mrb[0].mxu0
      %v6876 = vadd.f32 0.0, %v6875
      %6877 = vmatprep.mubr.bf16.mxu0 0
      %6878 = vmatmul.mubr.bf16.gmra.mrb[0].mxu0 %v6646
      %v6879 = vpop.f32.mrb[0].mxu0
      %v6880 = vadd.f32 0.0, %v6879
      %v6881 = vpop.f32.mrb[0].mxu0
      %v6882 = vadd.f32 0.0, %v6881
      %v6883 = vpop.f32.mrb[0].mxu0
      %v6884 = vadd.f32 0.0, %v6883
      %v6885 = vpop.f32.mrb[0].mxu0
      %v6886 = vadd.f32 0.0, %v6885
      %6887 = vmatprep.mubr.bf16.mxu0 0
      %6888 = vmatmul.mubr.bf16.gmra.mrb[0].mxu0 %v6649
      %v6889 = vpop.f32.mrb[0].mxu0
      %v6890 = vadd.f32 0.0, %v6889
      %v6891 = vpop.f32.mrb[0].mxu0
      %v6892 = vadd.f32 0.0, %v6891
      %v6893 = vpop.f32.mrb[0].mxu0
      %v6894 = vadd.f32 0.0, %v6893
      %v6895 = vpop.f32.mrb[0].mxu0
      %v6896 = vadd.f32 0.0, %v6895
      %6897 = vmatprep.mubr.bf16.mxu0 0
      %6898 = vmatmul.mubr.bf16.gmra.mrb[0].mxu0 %v6652
      %v6899 = vpop.f32.mrb[0].mxu0
      %v6900 = vadd.f32 0.0, %v6899
      %v6901 = vpop.f32.mrb[0].mxu0
      %v6902 = vadd.f32 0.0, %v6901
      %v6903 = vpop.f32.mrb[0].mxu0
      %v6904 = vadd.f32 0.0, %v6903
      %v6905 = vpop.f32.mrb[0].mxu0
      %v6906 = vadd.f32 0.0, %v6905
      %6907 = vmatprep.mubr.bf16.mxu0 0
      %6908 = vmatmul.mubr.bf16.gmra.mrb[0].mxu0 %v6655
      %v6909 = vpop.f32.mrb[0].mxu0
      %v6910 = vadd.f32 0.0, %v6909
      %v6911 = vpop.f32.mrb[0].mxu0
      %v6912 = vadd.f32 0.0, %v6911
      %v6913 = vpop.f32.mrb[0].mxu0
      %v6914 = vadd.f32 0.0, %v6913
      %v6915 = vpop.f32.mrb[0].mxu0
      %v6916 = vadd.f32 0.0, %v6915
      %6917 = vmatprep.mubr.bf16.mxu0 0
      %6918 = vmatmul.mubr.bf16.gmra.mrb[0].mxu0 %v6658
      %v6919 = vpop.f32.mrb[0].mxu0
      %v6920 = vadd.f32 0.0, %v6919
      %v6921 = vpop.f32.mrb[0].mxu0
      %v6922 = vadd.f32 0.0, %v6921
      %v6923 = vpop.f32.mrb[0].mxu0
      %v6924 = vadd.f32 0.0, %v6923
      %v6925 = vpop.f32.mrb[0].mxu0
      %v6926 = vadd.f32 0.0, %v6925
      %6927 = vmatprep.mubr.bf16.mxu0 0
      %6928 = vmatmul.mubr.bf16.gmra.mrb[0].mxu0 %v6661
      %v6929 = vpop.f32.mrb[0].mxu0
      %v6930 = vadd.f32 0.0, %v6929
      %v6931 = vpop.f32.mrb[0].mxu0
      %v6932 = vadd.f32 0.0, %v6931
      %v6933 = vpop.f32.mrb[0].mxu0
      %v6934 = vadd.f32 0.0, %v6933
      %v6935 = vpop.f32.mrb[0].mxu0
      %v6936 = vadd.f32 0.0, %v6935
      %6937 = vmatprep.mubr.bf16.mxu0 0
      %6938 = vmatmul.mubr.bf16.gmra.mrb[0].mxu0 %v6664
      %v6939 = vpop.f32.mrb[0].mxu0
      %v6940 = vadd.f32 0.0, %v6939
      %v6941 = vpop.f32.mrb[0].mxu0
      %v6942 = vadd.f32 0.0, %v6941
      %v6943 = vpop.f32.mrb[0].mxu0
      %v6944 = vadd.f32 0.0, %v6943
      %v6945 = vpop.f32.mrb[0].mxu0
      %v6946 = vadd.f32 0.0, %v6945
      %6947 = vmatprep.mubr.bf16.mxu0 0
      %6948 = vmatmul.mubr.bf16.gmra.mrb[0].mxu0 %v6667
      %v6949 = vpop.f32.mrb[0].mxu0
      %v6950 = vadd.f32 0.0, %v6949
      %v6951 = vpop.f32.mrb[0].mxu0
      %v6952 = vadd.f32 0.0, %v6951
      %v6953 = vpop.f32.mrb[0].mxu0
      %v6954 = vadd.f32 0.0, %v6953
      %v6955 = vpop.f32.mrb[0].mxu0
      %v6956 = vadd.f32 0.0, %v6955
      %6957 = vmatprep.mubr.bf16.mxu0 0
      %6958 = vmatmul.mubr.bf16.gmra.mrb[0].mxu0 %v6670
      %v6959 = vpop.f32.mrb[0].mxu0
      %v6960 = vadd.f32 0.0, %v6959
      %v6961 = vpop.f32.mrb[0].mxu0
      %v6962 = vadd.f32 0.0, %v6961
      %v6963 = vpop.f32.mrb[0].mxu0
      %v6964 = vadd.f32 0.0, %v6963
      %v6965 = vpop.f32.mrb[0].mxu0
      %v6966 = vadd.f32 0.0, %v6965
      %6967 = vmatprep.mubr.bf16.mxu0 0
      %6968 = vmatmul.mubr.bf16.gmra.mrb[0].mxu0 %v6673
      %v6969 = vpop.f32.mrb[0].mxu0
      %v6970 = vadd.f32 0.0, %v6969
      %v6971 = vpop.f32.mrb[0].mxu0
      %v6972 = vadd.f32 0.0, %v6971
      %v6973 = vpop.f32.mrb[0].mxu0
      %v6974 = vadd.f32 0.0, %v6973
      %v6975 = vpop.f32.mrb[0].mxu0
      %v6976 = vadd.f32 0.0, %v6975
      %6977 = vmatprep.mubr.bf16.mxu0 0
      %6978 = vmatmul.mubr.bf16.gmra.mrb[0].mxu0 %v6676
      %v6979 = vpop.f32.mrb[0].mxu0
      %v6980 = vadd.f32 0.0, %v6979
      %v6981 = vpop.f32.mrb[0].mxu0
      %v6982 = vadd.f32 0.0, %v6981
      %v6983 = vpop.f32.mrb[0].mxu0
      %v6984 = vadd.f32 0.0, %v6983
      %v6985 = vpop.f32.mrb[0].mxu0
      %v6986 = vadd.f32 0.0, %v6985
      %6987 = vmatprep.mubr.bf16.mxu0 0
      %6988 = vmatmul.mubr.bf16.gmra.mrb[0].mxu0 %v6679
      %v6989 = vpop.f32.mrb[0].mxu0
      %v6990 = vadd.f32 0.0, %v6989
      %v6991 = vpop.f32.mrb[0].mxu0
      %v6992 = vadd.f32 0.0, %v6991
      %v6993 = vpop.f32.mrb[0].mxu0
      %v6994 = vadd.f32 0.0, %v6993
      %v6995 = vpop.f32.mrb[0].mxu0
      %v6996 = vadd.f32 0.0, %v6995
      %6997 = vmatprep.mubr.bf16.mxu0 0
      %6998 = vmatmul.mubr.bf16.gmra.mrb[0].mxu0 %v6682
      %v6999 = vpop.f32.mrb[0].mxu0
      %v7000 = vadd.f32 0.0, %v6999
      %v7001 = vpop.f32.mrb[0].mxu0
      %v7002 = vadd.f32 0.0, %v7001
      %v7003 = vpop.f32.mrb[0].mxu0
      %v7004 = vadd.f32 0.0, %v7003
      %v7005 = vpop.f32.mrb[0].mxu0
      %v7006 = vadd.f32 0.0, %v7005
      %7007 = vmatprep.mubr.bf16.mxu0 0
      %7008 = vmatmul.mubr.bf16.gmra.mrb[0].mxu0 %v6685
      %v7009 = vpop.f32.mrb[0].mxu0
      %v7010 = vadd.f32 0.0, %v7009
      %v7011 = vpop.f32.mrb[0].mxu0
      %v7012 = vadd.f32 0.0, %v7011
      %v7013 = vpop.f32.mrb[0].mxu0
      %v7014 = vadd.f32 0.0, %v7013
      %v7015 = vpop.f32.mrb[0].mxu0
      %v7016 = vadd.f32 0.0, %v7015
      %7017 = vmatprep.mubr.bf16.mxu0 0
      %7018 = vmatmul.mubr.bf16.gmra.mrb[0].mxu0 %v6688
      %v7019 = vpop.f32.mrb[0].mxu0
      %v7020 = vadd.f32 0.0, %v7019
      %v7021 = vpop.f32.mrb[0].mxu0
      %v7022 = vadd.f32 0.0, %v7021
      %v7023 = vpop.f32.mrb[0].mxu0
      %v7024 = vadd.f32 0.0, %v7023
      %v7025 = vpop.f32.mrb[0].mxu0
      %v7026 = vadd.f32 0.0, %v7025
      %7027 = vmatprep.mubr.bf16.mxu0 0
      %7028 = vmatmul.mubr.bf16.gmra.mrb[0].mxu0 %v6691
      %v7029 = vpop.f32.mrb[0].mxu0
      %v7030 = vadd.f32 0.0, %v7029
      %v7031 = vpop.f32.mrb[0].mxu0
      %v7032 = vadd.f32 0.0, %v7031
      %v7033 = vpop.f32.mrb[0].mxu0
      %v7034 = vadd.f32 0.0, %v7033
      %v7035 = vpop.f32.mrb[0].mxu0
      %v7036 = vadd.f32 0.0, %v7035
      %7037 = vmatprep.mubr.bf16.mxu0 0
      %7038 = vmatmul.mubr.bf16.gmra.mrb[0].mxu0 %v6694
      %v7039 = vpop.f32.mrb[0].mxu0
      %v7040 = vadd.f32 0.0, %v7039
      %v7041 = vpop.f32.mrb[0].mxu0
      %v7042 = vadd.f32 0.0, %v7041
      %v7043 = vpop.f32.mrb[0].mxu0
      %v7044 = vadd.f32 0.0, %v7043
      %v7045 = vpop.f32.mrb[0].mxu0
      %v7046 = vadd.f32 0.0, %v7045
      %7047 = vmatprep.mubr.bf16.mxu0 0
      %7048 = vmatmul.mubr.bf16.gmra.mrb[0].mxu0 %v6697
      %v7049 = vpop.f32.mrb[0].mxu0
      %v7050 = vadd.f32 0.0, %v7049
      %v7051 = vpop.f32.mrb[0].mxu0
      %v7052 = vadd.f32 0.0, %v7051
      %v7053 = vpop.f32.mrb[0].mxu0
      %v7054 = vpop.f32.mrb[0].mxu0
      %7055 = vdwg.mxu0
      %v7067 = vunpack.c.l.b16 %v5246
      %v7068 = vunpack.c.h.b16 %v5246
      %v7069 = vunpack.c.l.b16 %v5247
      %v7070 = vunpack.c.h.b16 %v5247
      %v7071 = vunpack.c.l.b16 %v5248
      %v7072 = vunpack.c.h.b16 %v5248
      %v7073 = vunpack.c.l.b16 %v5249
      %v7074 = vunpack.c.h.b16 %v5249
      %v7075 = vunpack.c.l.b16 %v5250
      %v7076 = vunpack.c.h.b16 %v5250
      %v7077 = vunpack.c.l.b16 %v5251
      %v7078 = vunpack.c.h.b16 %v5251
      %v7079 = vunpack.c.l.b16 %v5252
      %v7080 = vunpack.c.h.b16 %v5252
      %v7081 = vunpack.c.l.b16 %v5253
      %v7082 = vunpack.c.h.b16 %v5253
      %v7083 = vunpack.c.l.b16 %v5254
      %v7084 = vunpack.c.h.b16 %v5254
      %v7085 = vunpack.c.l.b16 %v5255
      %v7086 = vunpack.c.h.b16 %v5255
      %v7087 = vunpack.c.l.b16 %v5256
      %v7088 = vunpack.c.h.b16 %v5256
      %v7089 = vpack.c.b16 %v7069, %v7067
      %v7090 = vpack.c.b16 %v7070, %v7068
      %v7091 = vpack.c.b16 %v7073, %v7071
      %v7092 = vpack.c.b16 %v7074, %v7072
      %v7093 = vpack.c.b16 %v7077, %v7075
      %v7094 = vpack.c.b16 %v7078, %v7076
      %v7095 = vpack.c.b16 %v7081, %v7079
      %v7096 = vpack.c.b16 %v7082, %v7080
      %v7097 = vpack.c.b16 %v7085, %v7083
      %v7098 = vpack.c.b16 %v7086, %v7084
      %v7099 = vpack.c.b16 %v7087, %v7087
      %v7100 = vpack.c.b16 %v7088, %v7088
      %v7112 = vsel %vm5451, %v5257, 0
      %v7115 = vsel %vm5451, %v5258, 0
      %v7118 = vsel %vm5451, %v5259, 0
      %v7121 = vsel %vm5451, %v5260, 0
      %v7124 = vsel %vm5451, %v5261, 0
      %v7127 = vsel %vm5451, %v5262, 0
      %v7130 = vsel %vm5451, %v5263, 0
      %v7133 = vsel %vm5451, %v5264, 0
      %v7136 = vsel %vm5451, %v5265, 0
      %v7139 = vsel %vm5451, %v5266, 0
      %v7142 = vsel %vm5451, %v5267, 0
      %v7145 = vsel %vm5451, %v5268, 0
      %v7148 = vsel %vm5451, %v5269, 0
      %v7151 = vsel %vm5451, %v5270, 0
      %v7154 = vsel %vm5451, %v5271, 0
      %v7157 = vsel %vm5451, %v5272, 0
      %v7160 = vsel %vm5451, %v5273, 0
      %v7163 = vsel %vm5451, %v5274, 0
      %v7166 = vsel %vm5451, %v5275, 0
      %v7169 = vsel %vm5451, %v5276, 0
      %v7172 = vsel %vm5451, %v5277, 0
      %v7175 = vsel %vm5451, %v5278, 0
      %v7178 = vsel %vm5451, %v5279, 0
      %v7181 = vsel %vm5451, %v5280, 0
      %v7184 = vsel %vm5451, %v5281, 0
      %v7187 = vsel %vm5451, %v5282, 0
      %v7190 = vsel %vm5451, %v5283, 0
      %v7193 = vsel %vm5451, %v5284, 0
      %v7196 = vsel %vm5451, %v5285, 0
      %v7199 = vsel %vm5451, %v5286, 0
      %v7202 = vsel %vm5451, %v5287, 0
      %v7205 = vsel %vm5451, %v5288, 0
      %v7208 = vsel %vm5548, %v7099, 0
      %v7211 = vsel %vm5548, %v7100, 0
      %7213 = vmatprep.subr.bf16.mxu0 %v7090
      %7214 = vmatpush1.bf16.msra.mxu0 %v7089
      %7215 = vmatprep.subr.bf16.mxu0 %v7092
      %7216 = vmatpush1.bf16.msra.mxu0 %v7091
      %7217 = vmatprep.subr.bf16.mxu0 %v7094
      %7218 = vmatpush1.bf16.msra.mxu0 %v7093
      %7219 = vmatprep.subr.bf16.mxu0 %v7096
      %7220 = vmatpush1.bf16.msra.mxu0 %v7095
      %7221 = vmatprep.subr.bf16.mxu0 %v7098
      %7222 = vmatpush1.bf16.msra.mxu0 %v7097
      %7223 = vmatprep.subr.bf16.mxu0 %v7211
      %7224 = vmatpush1.bf16.msra.mxu0 %v7208
      %7225 = vmatprep.subr.bf16.mxu0 0
      %7226 = vmatpush1.bf16.msra.mxu0 0
      %7227 = vmatprep.subr.bf16.mxu0 0
      %7228 = vmatpush1.bf16.msra.mxu0 0
      %7229 = vmatprep.subr.bf16.mxu0 0
      %7230 = vmatpush1.bf16.msra.mxu0 0
      %7231 = vmatprep.subr.bf16.mxu0 0
      %7232 = vmatpush1.bf16.msra.mxu0 0
      %7233 = vmatprep.subr.bf16.mxu0 0
      %7234 = vmatpush1.bf16.msra.mxu0 0
      %7235 = vmatprep.subr.bf16.mxu0 0
      %7236 = vmatpush1.bf16.msra.mxu0 0
      %7237 = vmatprep.subr.bf16.mxu0 0
      %7238 = vmatpush1.bf16.msra.mxu0 0
      %7239 = vmatprep.subr.bf16.mxu0 0
      %7240 = vmatpush1.bf16.msra.mxu0 0
      %7241 = vmatprep.subr.bf16.mxu0 0
      %7242 = vmatpush1.bf16.msra.mxu0 0
      %7243 = vmatprep.subr.bf16.mxu0 0
      %7244 = vmatpush1.bf16.msra.mxu0 0
      %7245 = vmatprep.mubr.bf16.mxu0 0
      %7246 = vmatmul.mubr.bf16.gmra.mrb[0].mxu0 %v7112
      %v7247 = vpop.f32.mrb[0].mxu0
      %v7248 = vadd.f32 %v5590, %v7247
      %v7249 = vpop.f32.mrb[0].mxu0
      %v7250 = vadd.f32 %v5592, %v7249
      %v7251 = vpop.f32.mrb[0].mxu0
      %v7252 = vadd.f32 %v5594, %v7251
      %v7253 = vpop.f32.mrb[0].mxu0
      %v7254 = vadd.f32 %v5596, %v7253
      %7255 = vmatprep.mubr.bf16.mxu0 0
      %7256 = vmatmul.mubr.bf16.gmra.mrb[0].mxu0 %v7115
      %v7257 = vpop.f32.mrb[0].mxu0
      %v7258 = vadd.f32 %v5600, %v7257
      %v7259 = vpop.f32.mrb[0].mxu0
      %v7260 = vadd.f32 %v5602, %v7259
      %v7261 = vpop.f32.mrb[0].mxu0
      %v7262 = vadd.f32 %v5604, %v7261
      %v7263 = vpop.f32.mrb[0].mxu0
      %v7264 = vadd.f32 %v5606, %v7263
      %7265 = vmatprep.mubr.bf16.mxu0 0
      %7266 = vmatmul.mubr.bf16.gmra.mrb[0].mxu0 %v7118
      %v7267 = vpop.f32.mrb[0].mxu0
      %v7268 = vadd.f32 %v5610, %v7267
      %v7269 = vpop.f32.mrb[0].mxu0
      %v7270 = vadd.f32 %v5612, %v7269
      %v7271 = vpop.f32.mrb[0].mxu0
      %v7272 = vadd.f32 %v5614, %v7271
      %v7273 = vpop.f32.mrb[0].mxu0
      %v7274 = vadd.f32 %v5616, %v7273
      %7275 = vmatprep.mubr.bf16.mxu0 0
      %7276 = vmatmul.mubr.bf16.gmra.mrb[0].mxu0 %v7121
      %v7277 = vpop.f32.mrb[0].mxu0
      %v7278 = vadd.f32 %v5620, %v7277
      %v7279 = vpop.f32.mrb[0].mxu0
      %v7280 = vadd.f32 %v5622, %v7279
      %v7281 = vpop.f32.mrb[0].mxu0
      %v7282 = vadd.f32 %v5624, %v7281
      %v7283 = vpop.f32.mrb[0].mxu0
      %v7284 = vadd.f32 %v5626, %v7283
      %7285 = vmatprep.mubr.bf16.mxu0 0
      %7286 = vmatmul.mubr.bf16.gmra.mrb[0].mxu0 %v7124
      %v7287 = vpop.f32.mrb[0].mxu0
      %v7288 = vadd.f32 %v5630, %v7287
      %v7289 = vpop.f32.mrb[0].mxu0
      %v7290 = vadd.f32 %v5632, %v7289
      %v7291 = vpop.f32.mrb[0].mxu0
      %v7292 = vadd.f32 %v5634, %v7291
      %v7293 = vpop.f32.mrb[0].mxu0
      %v7294 = vadd.f32 %v5636, %v7293
      %7295 = vmatprep.mubr.bf16.mxu0 0
      %7296 = vmatmul.mubr.bf16.gmra.mrb[0].mxu0 %v7127
      %v7297 = vpop.f32.mrb[0].mxu0
      %v7298 = vadd.f32 %v5640, %v7297
      %v7299 = vpop.f32.mrb[0].mxu0
      %v7300 = vadd.f32 %v5642, %v7299
      %v7301 = vpop.f32.mrb[0].mxu0
      %v7302 = vadd.f32 %v5644, %v7301
      %v7303 = vpop.f32.mrb[0].mxu0
      %v7304 = vadd.f32 %v5646, %v7303
      %7305 = vmatprep.mubr.bf16.mxu0 0
      %7306 = vmatmul.mubr.bf16.gmra.mrb[0].mxu0 %v7130
      %v7307 = vpop.f32.mrb[0].mxu0
      %v7308 = vadd.f32 %v5650, %v7307
      %v7309 = vpop.f32.mrb[0].mxu0
      %v7310 = vadd.f32 %v5652, %v7309
      %v7311 = vpop.f32.mrb[0].mxu0
      %v7312 = vadd.f32 %v5654, %v7311
      %v7313 = vpop.f32.mrb[0].mxu0
      %v7314 = vadd.f32 %v5656, %v7313
      %7315 = vmatprep.mubr.bf16.mxu0 0
      %7316 = vmatmul.mubr.bf16.gmra.mrb[0].mxu0 %v7133
      %v7317 = vpop.f32.mrb[0].mxu0
      %v7318 = vadd.f32 %v5660, %v7317
      %v7319 = vpop.f32.mrb[0].mxu0
      %v7320 = vadd.f32 %v5662, %v7319
      %v7321 = vpop.f32.mrb[0].mxu0
      %v7322 = vadd.f32 %v5664, %v7321
      %v7323 = vpop.f32.mrb[0].mxu0
      %v7324 = vadd.f32 %v5666, %v7323
      %7325 = vmatprep.mubr.bf16.mxu0 0
      %7326 = vmatmul.mubr.bf16.gmra.mrb[0].mxu0 %v7136
      %v7327 = vpop.f32.mrb[0].mxu0
      %v7328 = vadd.f32 %v5670, %v7327
      %v7329 = vpop.f32.mrb[0].mxu0
      %v7330 = vadd.f32 %v5672, %v7329
      %v7331 = vpop.f32.mrb[0].mxu0
      %v7332 = vadd.f32 %v5674, %v7331
      %v7333 = vpop.f32.mrb[0].mxu0
      %v7334 = vadd.f32 %v5676, %v7333
      %7335 = vmatprep.mubr.bf16.mxu0 0
      %7336 = vmatmul.mubr.bf16.gmra.mrb[0].mxu0 %v7139
      %v7337 = vpop.f32.mrb[0].mxu0
      %v7338 = vadd.f32 %v5680, %v7337
      %v7339 = vpop.f32.mrb[0].mxu0
      %v7340 = vadd.f32 %v5682, %v7339
      %v7341 = vpop.f32.mrb[0].mxu0
      %v7342 = vadd.f32 %v5684, %v7341
      %v7343 = vpop.f32.mrb[0].mxu0
      %v7344 = vadd.f32 %v5686, %v7343
      %7345 = vmatprep.mubr.bf16.mxu0 0
      %7346 = vmatmul.mubr.bf16.gmra.mrb[0].mxu0 %v7142
      %v7347 = vpop.f32.mrb[0].mxu0
      %v7348 = vadd.f32 %v5690, %v7347
      %v7349 = vpop.f32.mrb[0].mxu0
      %v7350 = vadd.f32 %v5692, %v7349
      %v7351 = vpop.f32.mrb[0].mxu0
      %v7352 = vadd.f32 %v5694, %v7351
      %v7353 = vpop.f32.mrb[0].mxu0
      %v7354 = vadd.f32 %v5696, %v7353
      %7355 = vmatprep.mubr.bf16.mxu0 0
      %7356 = vmatmul.mubr.bf16.gmra.mrb[0].mxu0 %v7145
      %v7357 = vpop.f32.mrb[0].mxu0
      %v7358 = vadd.f32 %v5700, %v7357
      %v7359 = vpop.f32.mrb[0].mxu0
      %v7360 = vadd.f32 %v5702, %v7359
      %v7361 = vpop.f32.mrb[0].mxu0
      %v7362 = vadd.f32 %v5704, %v7361
      %v7363 = vpop.f32.mrb[0].mxu0
      %v7364 = vadd.f32 %v5706, %v7363
      %7365 = vmatprep.mubr.bf16.mxu0 0
      %7366 = vmatmul.mubr.bf16.gmra.mrb[0].mxu0 %v7148
      %v7367 = vpop.f32.mrb[0].mxu0
      %v7368 = vadd.f32 %v5710, %v7367
      %v7369 = vpop.f32.mrb[0].mxu0
      %v7370 = vadd.f32 %v5712, %v7369
      %v7371 = vpop.f32.mrb[0].mxu0
      %v7372 = vadd.f32 %v5714, %v7371
      %v7373 = vpop.f32.mrb[0].mxu0
      %v7374 = vadd.f32 %v5716, %v7373
      %7375 = vmatprep.mubr.bf16.mxu0 0
      %7376 = vmatmul.mubr.bf16.gmra.mrb[0].mxu0 %v7151
      %v7377 = vpop.f32.mrb[0].mxu0
      %v7378 = vadd.f32 %v5720, %v7377
      %v7379 = vpop.f32.mrb[0].mxu0
      %v7380 = vadd.f32 %v5722, %v7379
      %v7381 = vpop.f32.mrb[0].mxu0
      %v7382 = vadd.f32 %v5724, %v7381
      %v7383 = vpop.f32.mrb[0].mxu0
      %v7384 = vadd.f32 %v5726, %v7383
      %7385 = vmatprep.mubr.bf16.mxu0 0
      %7386 = vmatmul.mubr.bf16.gmra.mrb[0].mxu0 %v7154
      %v7387 = vpop.f32.mrb[0].mxu0
      %v7388 = vadd.f32 %v5730, %v7387
      %v7389 = vpop.f32.mrb[0].mxu0
      %v7390 = vadd.f32 %v5732, %v7389
      %v7391 = vpop.f32.mrb[0].mxu0
      %v7392 = vadd.f32 %v5734, %v7391
      %v7393 = vpop.f32.mrb[0].mxu0
      %v7394 = vadd.f32 %v5736, %v7393
      %7395 = vmatprep.mubr.bf16.mxu0 0
      %7396 = vmatmul.mubr.bf16.gmra.mrb[0].mxu0 %v7157
      %v7397 = vpop.f32.mrb[0].mxu0
      %v7398 = vadd.f32 %v5740, %v7397
      %v7399 = vpop.f32.mrb[0].mxu0
      %v7400 = vadd.f32 %v5742, %v7399
      %v7401 = vpop.f32.mrb[0].mxu0
      %v7402 = vadd.f32 %v5744, %v7401
      %v7403 = vpop.f32.mrb[0].mxu0
      %v7404 = vadd.f32 %v5746, %v7403
      %7405 = vmatprep.mubr.bf16.mxu0 0
      %7406 = vmatmul.mubr.bf16.gmra.mrb[0].mxu0 %v7160
      %v7407 = vpop.f32.mrb[0].mxu0
      %v7408 = vadd.f32 %v5750, %v7407
      %v7409 = vpop.f32.mrb[0].mxu0
      %v7410 = vadd.f32 %v5752, %v7409
      %v7411 = vpop.f32.mrb[0].mxu0
      %v7412 = vadd.f32 %v5754, %v7411
      %v7413 = vpop.f32.mrb[0].mxu0
      %v7414 = vadd.f32 %v5756, %v7413
      %7415 = vmatprep.mubr.bf16.mxu0 0
      %7416 = vmatmul.mubr.bf16.gmra.mrb[0].mxu0 %v7163
      %v7417 = vpop.f32.mrb[0].mxu0
      %v7418 = vadd.f32 %v5760, %v7417
      %v7419 = vpop.f32.mrb[0].mxu0
      %v7420 = vadd.f32 %v5762, %v7419
      %v7421 = vpop.f32.mrb[0].mxu0
      %v7422 = vadd.f32 %v5764, %v7421
      %v7423 = vpop.f32.mrb[0].mxu0
      %v7424 = vadd.f32 %v5766, %v7423
      %7425 = vmatprep.mubr.bf16.mxu0 0
      %7426 = vmatmul.mubr.bf16.gmra.mrb[0].mxu0 %v7166
      %v7427 = vpop.f32.mrb[0].mxu0
      %v7428 = vadd.f32 %v5770, %v7427
      %v7429 = vpop.f32.mrb[0].mxu0
      %v7430 = vadd.f32 %v5772, %v7429
      %v7431 = vpop.f32.mrb[0].mxu0
      %v7432 = vadd.f32 %v5774, %v7431
      %v7433 = vpop.f32.mrb[0].mxu0
      %v7434 = vadd.f32 %v5776, %v7433
      %7435 = vmatprep.mubr.bf16.mxu0 0
      %7436 = vmatmul.mubr.bf16.gmra.mrb[0].mxu0 %v7169
      %v7437 = vpop.f32.mrb[0].mxu0
      %v7438 = vadd.f32 %v5780, %v7437
      %v7439 = vpop.f32.mrb[0].mxu0
      %v7440 = vadd.f32 %v5782, %v7439
      %v7441 = vpop.f32.mrb[0].mxu0
      %v7442 = vadd.f32 %v5784, %v7441
      %v7443 = vpop.f32.mrb[0].mxu0
      %v7444 = vadd.f32 %v5786, %v7443
      %7445 = vmatprep.mubr.bf16.mxu0 0
      %7446 = vmatmul.mubr.bf16.gmra.mrb[0].mxu0 %v7172
      %v7447 = vpop.f32.mrb[0].mxu0
      %v7448 = vadd.f32 %v5790, %v7447
      %v7449 = vpop.f32.mrb[0].mxu0
      %v7450 = vadd.f32 %v5792, %v7449
      %v7451 = vpop.f32.mrb[0].mxu0
      %v7452 = vadd.f32 %v5794, %v7451
      %v7453 = vpop.f32.mrb[0].mxu0
      %v7454 = vadd.f32 %v5796, %v7453
      %7455 = vmatprep.mubr.bf16.mxu0 0
      %7456 = vmatmul.mubr.bf16.gmra.mrb[0].mxu0 %v7175
      %v7457 = vpop.f32.mrb[0].mxu0
      %v7458 = vadd.f32 %v5800, %v7457
      %v7459 = vpop.f32.mrb[0].mxu0
      %v7460 = vadd.f32 %v5802, %v7459
      %v7461 = vpop.f32.mrb[0].mxu0
      %v7462 = vadd.f32 %v5804, %v7461
      %v7463 = vpop.f32.mrb[0].mxu0
      %v7464 = vadd.f32 %v5806, %v7463
      %7465 = vmatprep.mubr.bf16.mxu0 0
      %7466 = vmatmul.mubr.bf16.gmra.mrb[0].mxu0 %v7178
      %v7467 = vpop.f32.mrb[0].mxu0
      %v7468 = vadd.f32 %v5810, %v7467
      %v7469 = vpop.f32.mrb[0].mxu0
      %v7470 = vadd.f32 %v5812, %v7469
      %v7471 = vpop.f32.mrb[0].mxu0
      %v7472 = vadd.f32 %v5814, %v7471
      %v7473 = vpop.f32.mrb[0].mxu0
      %v7474 = vadd.f32 %v5816, %v7473
      %7475 = vmatprep.mubr.bf16.mxu0 0
      %7476 = vmatmul.mubr.bf16.gmra.mrb[0].mxu0 %v7181
      %v7477 = vpop.f32.mrb[0].mxu0
      %v7478 = vadd.f32 %v5820, %v7477
      %v7479 = vpop.f32.mrb[0].mxu0
      %v7480 = vadd.f32 %v5822, %v7479
      %v7481 = vpop.f32.mrb[0].mxu0
      %v7482 = vadd.f32 %v5824, %v7481
      %v7483 = vpop.f32.mrb[0].mxu0
      %v7484 = vadd.f32 %v5826, %v7483
      %7485 = vmatprep.mubr.bf16.mxu0 0
      %7486 = vmatmul.mubr.bf16.gmra.mrb[0].mxu0 %v7184
      %v7487 = vpop.f32.mrb[0].mxu0
      %v7488 = vadd.f32 %v5830, %v7487
      %v7489 = vpop.f32.mrb[0].mxu0
      %v7490 = vadd.f32 %v5832, %v7489
      %v7491 = vpop.f32.mrb[0].mxu0
      %v7492 = vadd.f32 %v5834, %v7491
      %v7493 = vpop.f32.mrb[0].mxu0
      %v7494 = vadd.f32 %v5836, %v7493
      %7495 = vmatprep.mubr.bf16.mxu0 0
      %7496 = vmatmul.mubr.bf16.gmra.mrb[0].mxu0 %v7187
      %v7497 = vpop.f32.mrb[0].mxu0
      %v7498 = vadd.f32 %v5840, %v7497
      %v7499 = vpop.f32.mrb[0].mxu0
      %v7500 = vadd.f32 %v5842, %v7499
      %v7501 = vpop.f32.mrb[0].mxu0
      %v7502 = vadd.f32 %v5844, %v7501
      %v7503 = vpop.f32.mrb[0].mxu0
      %v7504 = vadd.f32 %v5846, %v7503
      %7505 = vmatprep.mubr.bf16.mxu0 0
      %7506 = vmatmul.mubr.bf16.gmra.mrb[0].mxu0 %v7190
      %v7507 = vpop.f32.mrb[0].mxu0
      %v7508 = vadd.f32 %v5850, %v7507
      %v7509 = vpop.f32.mrb[0].mxu0
      %v7510 = vadd.f32 %v5852, %v7509
      %v7511 = vpop.f32.mrb[0].mxu0
      %v7512 = vadd.f32 %v5854, %v7511
      %v7513 = vpop.f32.mrb[0].mxu0
      %v7514 = vadd.f32 %v5856, %v7513
      %7515 = vmatprep.mubr.bf16.mxu0 0
      %7516 = vmatmul.mubr.bf16.gmra.mrb[0].mxu0 %v7193
      %v7517 = vpop.f32.mrb[0].mxu0
      %v7518 = vadd.f32 %v5860, %v7517
      %v7519 = vpop.f32.mrb[0].mxu0
      %v7520 = vadd.f32 %v5862, %v7519
      %v7521 = vpop.f32.mrb[0].mxu0
      %v7522 = vadd.f32 %v5864, %v7521
      %v7523 = vpop.f32.mrb[0].mxu0
      %v7524 = vadd.f32 %v5866, %v7523
      %7525 = vmatprep.mubr.bf16.mxu0 0
      %7526 = vmatmul.mubr.bf16.gmra.mrb[0].mxu0 %v7196
      %v7527 = vpop.f32.mrb[0].mxu0
      %v7528 = vadd.f32 %v5870, %v7527
      %v7529 = vpop.f32.mrb[0].mxu0
      %v7530 = vadd.f32 %v5872, %v7529
      %v7531 = vpop.f32.mrb[0].mxu0
      %v7532 = vadd.f32 %v5874, %v7531
      %v7533 = vpop.f32.mrb[0].mxu0
      %v7534 = vadd.f32 %v5876, %v7533
      %7535 = vmatprep.mubr.bf16.mxu0 0
      %7536 = vmatmul.mubr.bf16.gmra.mrb[0].mxu0 %v7199
      %v7537 = vpop.f32.mrb[0].mxu0
      %v7538 = vadd.f32 %v5880, %v7537
      %v7539 = vpop.f32.mrb[0].mxu0
      %v7540 = vadd.f32 %v5882, %v7539
      %v7541 = vpop.f32.mrb[0].mxu0
      %v7542 = vadd.f32 %v5884, %v7541
      %v7543 = vpop.f32.mrb[0].mxu0
      %v7544 = vadd.f32 %v5886, %v7543
      %7545 = vmatprep.mubr.bf16.mxu0 0
      %7546 = vmatmul.mubr.bf16.gmra.mrb[0].mxu0 %v7202
      %v7547 = vpop.f32.mrb[0].mxu0
      %v7548 = vadd.f32 %v5890, %v7547
      %v7549 = vpop.f32.mrb[0].mxu0
      %v7550 = vadd.f32 %v5892, %v7549
      %v7551 = vpop.f32.mrb[0].mxu0
      %v7552 = vadd.f32 %v5894, %v7551
      %v7553 = vpop.f32.mrb[0].mxu0
      %v7554 = vadd.f32 %v5896, %v7553
      %7555 = vmatprep.mubr.bf16.mxu0 0
      %7556 = vmatmul.mubr.bf16.gmra.mrb[0].mxu0 %v7205
      %v7557 = vpop.f32.mrb[0].mxu0
      %v7558 = vadd.f32 %v5900, %v7557
      %v7559 = vpop.f32.mrb[0].mxu0
      %v7560 = vadd.f32 %v5902, %v7559
      %v7561 = vpop.f32.mrb[0].mxu0
      %v7562 = vpop.f32.mrb[0].mxu0
      %7563 = vdwg.mxu0
      %v7564 = vrot.slane %v5257, 2
      %v7565 = vrot.slane %v5258, 2
      %v7566 = vsel %vm1920, %v7564, %v7565
      %v7567 = vrot.slane %v5259, 2
      %v7568 = vsel %vm1920, %v7565, %v7567
      %v7569 = vrot.slane %v5260, 2
      %v7570 = vsel %vm1920, %v7567, %v7569
      %v7571 = vrot.slane %v5261, 2
      %v7572 = vsel %vm1920, %v7569, %v7571
      %v7573 = vrot.slane %v5262, 2
      %v7574 = vsel %vm1920, %v7571, %v7573
      %v7575 = vrot.slane %v5263, 2
      %v7576 = vsel %vm1920, %v7573, %v7575
      %v7577 = vrot.slane %v5264, 2
      %v7578 = vsel %vm1920, %v7575, %v7577
      %v7579 = vrot.slane %v5265, 2
      %v7580 = vsel %vm1920, %v7577, %v7579
      %v7581 = vrot.slane %v5266, 2
      %v7582 = vsel %vm1920, %v7579, %v7581
      %v7583 = vrot.slane %v5267, 2
      %v7584 = vsel %vm1920, %v7581, %v7583
      %v7585 = vrot.slane %v5268, 2
      %v7586 = vsel %vm1920, %v7583, %v7585
      %v7587 = vrot.slane %v5269, 2
      %v7588 = vsel %vm1920, %v7585, %v7587
      %v7589 = vrot.slane %v5270, 2
      %v7590 = vsel %vm1920, %v7587, %v7589
      %v7591 = vrot.slane %v5271, 2
      %v7592 = vsel %vm1920, %v7589, %v7591
      %v7593 = vrot.slane %v5272, 2
      %v7594 = vsel %vm1920, %v7591, %v7593
      %v7595 = vrot.slane %v5273, 2
      %v7596 = vsel %vm1920, %v7593, %v7595
      %v7597 = vrot.slane %v5274, 2
      %v7598 = vsel %vm1920, %v7595, %v7597
      %v7599 = vrot.slane %v5275, 2
      %v7600 = vsel %vm1920, %v7597, %v7599
      %v7601 = vrot.slane %v5276, 2
      %v7602 = vsel %vm1920, %v7599, %v7601
      %v7603 = vrot.slane %v5277, 2
      %v7604 = vsel %vm1920, %v7601, %v7603
      %v7605 = vrot.slane %v5278, 2
      %v7606 = vsel %vm1920, %v7603, %v7605
      %v7607 = vrot.slane %v5279, 2
      %v7608 = vsel %vm1920, %v7605, %v7607
      %v7609 = vrot.slane %v5280, 2
      %v7610 = vsel %vm1920, %v7607, %v7609
      %v7611 = vrot.slane %v5281, 2
      %v7612 = vsel %vm1920, %v7609, %v7611
      %v7613 = vrot.slane %v5282, 2
      %v7614 = vsel %vm1920, %v7611, %v7613
      %v7615 = vrot.slane %v5283, 2
      %v7616 = vsel %vm1920, %v7613, %v7615
      %v7617 = vrot.slane %v5284, 2
      %v7618 = vsel %vm1920, %v7615, %v7617
      %v7619 = vrot.slane %v5285, 2
      %v7620 = vsel %vm1920, %v7617, %v7619
      %v7621 = vrot.slane %v5286, 2
      %v7622 = vsel %vm1920, %v7619, %v7621
      %v7623 = vrot.slane %v5287, 2
      %v7624 = vsel %vm1920, %v7621, %v7623
      %v7625 = vrot.slane %v5288, 2
      %v7626 = vsel %vm1920, %v7623, %v7625
      %v7638 = vunpack.c.l.b16 %v5907
      %v7639 = vunpack.c.h.b16 %v5907
      %v7640 = vunpack.c.l.b16 %v5908
      %v7641 = vunpack.c.h.b16 %v5908
      %v7642 = vunpack.c.l.b16 %v5909
      %v7643 = vunpack.c.h.b16 %v5909
      %v7644 = vunpack.c.l.b16 %v5910
      %v7645 = vunpack.c.h.b16 %v5910
      %v7646 = vunpack.c.l.b16 %v5911
      %v7647 = vunpack.c.h.b16 %v5911
      %v7648 = vunpack.c.l.b16 %v5912
      %v7649 = vunpack.c.h.b16 %v5912
      %v7650 = vunpack.c.l.b16 %v5913
      %v7651 = vunpack.c.h.b16 %v5913
      %v7652 = vunpack.c.l.b16 %v5914
      %v7653 = vunpack.c.h.b16 %v5914
      %v7654 = vunpack.c.l.b16 %v5915
      %v7655 = vunpack.c.h.b16 %v5915
      %v7656 = vunpack.c.l.b16 %v5916
      %v7657 = vunpack.c.h.b16 %v5916
      %v7658 = vunpack.c.l.b16 %v5917
      %v7659 = vunpack.c.h.b16 %v5917
      %v7660 = vpack.c.b16 %v7640, %v7638
      %v7661 = vpack.c.b16 %v7641, %v7639
      %v7662 = vpack.c.b16 %v7644, %v7642
      %v7663 = vpack.c.b16 %v7645, %v7643
      %v7664 = vpack.c.b16 %v7648, %v7646
      %v7665 = vpack.c.b16 %v7649, %v7647
      %v7666 = vpack.c.b16 %v7652, %v7650
      %v7667 = vpack.c.b16 %v7653, %v7651
      %v7668 = vpack.c.b16 %v7656, %v7654
      %v7669 = vpack.c.b16 %v7657, %v7655
      %v7670 = vpack.c.b16 %v7658, %v7658
      %v7671 = vpack.c.b16 %v7659, %v7659
      %v7683 = vsel %vm5451, %v7566, 0
      %v7686 = vsel %vm5451, %v7568, 0
      %v7689 = vsel %vm5451, %v7570, 0
      %v7692 = vsel %vm5451, %v7572, 0
      %v7695 = vsel %vm5451, %v7574, 0
      %v7698 = vsel %vm5451, %v7576, 0
      %v7701 = vsel %vm5451, %v7578, 0
      %v7704 = vsel %vm5451, %v7580, 0
      %v7707 = vsel %vm5451, %v7582, 0
      %v7710 = vsel %vm5451, %v7584, 0
      %v7713 = vsel %vm5451, %v7586, 0
      %v7716 = vsel %vm5451, %v7588, 0
      %v7719 = vsel %vm5451, %v7590, 0
      %v7722 = vsel %vm5451, %v7592, 0
      %v7725 = vsel %vm5451, %v7594, 0
      %v7728 = vsel %vm5451, %v7596, 0
      %v7731 = vsel %vm5451, %v7598, 0
      %v7734 = vsel %vm5451, %v7600, 0
      %v7737 = vsel %vm5451, %v7602, 0
      %v7740 = vsel %vm5451, %v7604, 0
      %v7743 = vsel %vm5451, %v7606, 0
      %v7746 = vsel %vm5451, %v7608, 0
      %v7749 = vsel %vm5451, %v7610, 0
      %v7752 = vsel %vm5451, %v7612, 0
      %v7755 = vsel %vm5451, %v7614, 0
      %v7758 = vsel %vm5451, %v7616, 0
      %v7761 = vsel %vm5451, %v7618, 0
      %v7764 = vsel %vm5451, %v7620, 0
      %v7767 = vsel %vm5451, %v7622, 0
      %v7770 = vsel %vm5451, %v7624, 0
      %v7773 = vsel %vm5451, %v7626, 0
      %v7776 = vsel %vm5451, %v7625, 0
      %v7779 = vsel %vm5548, %v7670, 0
      %v7782 = vsel %vm5548, %v7671, 0
      %7784 = vmatprep.subr.bf16.mxu0 %v7661
      %7785 = vmatpush1.bf16.msra.mxu0 %v7660
      %7786 = vmatprep.subr.bf16.mxu0 %v7663
      %7787 = vmatpush1.bf16.msra.mxu0 %v7662
      %7788 = vmatprep.subr.bf16.mxu0 %v7665
      %7789 = vmatpush1.bf16.msra.mxu0 %v7664
      %7790 = vmatprep.subr.bf16.mxu0 %v7667
      %7791 = vmatpush1.bf16.msra.mxu0 %v7666
      %7792 = vmatprep.subr.bf16.mxu0 %v7669
      %7793 = vmatpush1.bf16.msra.mxu0 %v7668
      %7794 = vmatprep.subr.bf16.mxu0 %v7782
      %7795 = vmatpush1.bf16.msra.mxu0 %v7779
      %7796 = vmatprep.subr.bf16.mxu0 0
      %7797 = vmatpush1.bf16.msra.mxu0 0
      %7798 = vmatprep.subr.bf16.mxu0 0
      %7799 = vmatpush1.bf16.msra.mxu0 0
      %7800 = vmatprep.subr.bf16.mxu0 0
      %7801 = vmatpush1.bf16.msra.mxu0 0
      %7802 = vmatprep.subr.bf16.mxu0 0
      %7803 = vmatpush1.bf16.msra.mxu0 0
      %7804 = vmatprep.subr.bf16.mxu0 0
      %7805 = vmatpush1.bf16.msra.mxu0 0
      %7806 = vmatprep.subr.bf16.mxu0 0
      %7807 = vmatpush1.bf16.msra.mxu0 0
      %7808 = vmatprep.subr.bf16.mxu0 0
      %7809 = vmatpush1.bf16.msra.mxu0 0
      %7810 = vmatprep.subr.bf16.mxu0 0
      %7811 = vmatpush1.bf16.msra.mxu0 0
      %7812 = vmatprep.subr.bf16.mxu0 0
      %7813 = vmatpush1.bf16.msra.mxu0 0
      %7814 = vmatprep.subr.bf16.mxu0 0
      %7815 = vmatpush1.bf16.msra.mxu0 0
      %7816 = vmatprep.mubr.bf16.mxu0 0
      %7817 = vmatmul.mubr.bf16.gmra.mrb[0].mxu0 %v7683
      %v7818 = vpop.f32.mrb[0].mxu0
      %v7819 = vadd.f32 %v6188, %v7818
      %v7820 = vpop.f32.mrb[0].mxu0
      %v7821 = vadd.f32 %v6190, %v7820
      %v7822 = vpop.f32.mrb[0].mxu0
      %v7823 = vadd.f32 %v6192, %v7822
      %v7824 = vpop.f32.mrb[0].mxu0
      %v7825 = vadd.f32 %v6194, %v7824
      %7826 = vmatprep.mubr.bf16.mxu0 0
      %7827 = vmatmul.mubr.bf16.gmra.mrb[0].mxu0 %v7686
      %v7828 = vpop.f32.mrb[0].mxu0
      %v7829 = vadd.f32 %v6198, %v7828
      %v7830 = vpop.f32.mrb[0].mxu0
      %v7831 = vadd.f32 %v6200, %v7830
      %v7832 = vpop.f32.mrb[0].mxu0
      %v7833 = vadd.f32 %v6202, %v7832
      %v7834 = vpop.f32.mrb[0].mxu0
      %v7835 = vadd.f32 %v6204, %v7834
      %7836 = vmatprep.mubr.bf16.mxu0 0
      %7837 = vmatmul.mubr.bf16.gmra.mrb[0].mxu0 %v7689
      %v7838 = vpop.f32.mrb[0].mxu0
      %v7839 = vadd.f32 %v6208, %v7838
      %v7840 = vpop.f32.mrb[0].mxu0
      %v7841 = vadd.f32 %v6210, %v7840
      %v7842 = vpop.f32.mrb[0].mxu0
      %v7843 = vadd.f32 %v6212, %v7842
      %v7844 = vpop.f32.mrb[0].mxu0
      %v7845 = vadd.f32 %v6214, %v7844
      %7846 = vmatprep.mubr.bf16.mxu0 0
      %7847 = vmatmul.mubr.bf16.gmra.mrb[0].mxu0 %v7692
      %v7848 = vpop.f32.mrb[0].mxu0
      %v7849 = vadd.f32 %v6218, %v7848
      %v7850 = vpop.f32.mrb[0].mxu0
      %v7851 = vadd.f32 %v6220, %v7850
      %v7852 = vpop.f32.mrb[0].mxu0
      %v7853 = vadd.f32 %v6222, %v7852
      %v7854 = vpop.f32.mrb[0].mxu0
      %v7855 = vadd.f32 %v6224, %v7854
      %7856 = vmatprep.mubr.bf16.mxu0 0
      %7857 = vmatmul.mubr.bf16.gmra.mrb[0].mxu0 %v7695
      %v7858 = vpop.f32.mrb[0].mxu0
      %v7859 = vadd.f32 %v6228, %v7858
      %v7860 = vpop.f32.mrb[0].mxu0
      %v7861 = vadd.f32 %v6230, %v7860
      %v7862 = vpop.f32.mrb[0].mxu0
      %v7863 = vadd.f32 %v6232, %v7862
      %v7864 = vpop.f32.mrb[0].mxu0
      %v7865 = vadd.f32 %v6234, %v7864
      %7866 = vmatprep.mubr.bf16.mxu0 0
      %7867 = vmatmul.mubr.bf16.gmra.mrb[0].mxu0 %v7698
      %v7868 = vpop.f32.mrb[0].mxu0
      %v7869 = vadd.f32 %v6238, %v7868
      %v7870 = vpop.f32.mrb[0].mxu0
      %v7871 = vadd.f32 %v6240, %v7870
      %v7872 = vpop.f32.mrb[0].mxu0
      %v7873 = vadd.f32 %v6242, %v7872
      %v7874 = vpop.f32.mrb[0].mxu0
      %v7875 = vadd.f32 %v6244, %v7874
      %7876 = vmatprep.mubr.bf16.mxu0 0
      %7877 = vmatmul.mubr.bf16.gmra.mrb[0].mxu0 %v7701
      %v7878 = vpop.f32.mrb[0].mxu0
      %v7879 = vadd.f32 %v6248, %v7878
      %v7880 = vpop.f32.mrb[0].mxu0
      %v7881 = vadd.f32 %v6250, %v7880
      %v7882 = vpop.f32.mrb[0].mxu0
      %v7883 = vadd.f32 %v6252, %v7882
      %v7884 = vpop.f32.mrb[0].mxu0
      %v7885 = vadd.f32 %v6254, %v7884
      %7886 = vmatprep.mubr.bf16.mxu0 0
      %7887 = vmatmul.mubr.bf16.gmra.mrb[0].mxu0 %v7704
      %v7888 = vpop.f32.mrb[0].mxu0
      %v7889 = vadd.f32 %v6258, %v7888
      %v7890 = vpop.f32.mrb[0].mxu0
      %v7891 = vadd.f32 %v6260, %v7890
      %v7892 = vpop.f32.mrb[0].mxu0
      %v7893 = vadd.f32 %v6262, %v7892
      %v7894 = vpop.f32.mrb[0].mxu0
      %v7895 = vadd.f32 %v6264, %v7894
      %7896 = vmatprep.mubr.bf16.mxu0 0
      %7897 = vmatmul.mubr.bf16.gmra.mrb[0].mxu0 %v7707
      %v7898 = vpop.f32.mrb[0].mxu0
      %v7899 = vadd.f32 %v6268, %v7898
      %v7900 = vpop.f32.mrb[0].mxu0
      %v7901 = vadd.f32 %v6270, %v7900
      %v7902 = vpop.f32.mrb[0].mxu0
      %v7903 = vadd.f32 %v6272, %v7902
      %v7904 = vpop.f32.mrb[0].mxu0
      %v7905 = vadd.f32 %v6274, %v7904
      %7906 = vmatprep.mubr.bf16.mxu0 0
      %7907 = vmatmul.mubr.bf16.gmra.mrb[0].mxu0 %v7710
      %v7908 = vpop.f32.mrb[0].mxu0
      %v7909 = vadd.f32 %v6278, %v7908
      %v7910 = vpop.f32.mrb[0].mxu0
      %v7911 = vadd.f32 %v6280, %v7910
      %v7912 = vpop.f32.mrb[0].mxu0
      %v7913 = vadd.f32 %v6282, %v7912
      %v7914 = vpop.f32.mrb[0].mxu0
      %v7915 = vadd.f32 %v6284, %v7914
      %7916 = vmatprep.mubr.bf16.mxu0 0
      %7917 = vmatmul.mubr.bf16.gmra.mrb[0].mxu0 %v7713
      %v7918 = vpop.f32.mrb[0].mxu0
      %v7919 = vadd.f32 %v6288, %v7918
      %v7920 = vpop.f32.mrb[0].mxu0
      %v7921 = vadd.f32 %v6290, %v7920
      %v7922 = vpop.f32.mrb[0].mxu0
      %v7923 = vadd.f32 %v6292, %v7922
      %v7924 = vpop.f32.mrb[0].mxu0
      %v7925 = vadd.f32 %v6294, %v7924
      %7926 = vmatprep.mubr.bf16.mxu0 0
      %7927 = vmatmul.mubr.bf16.gmra.mrb[0].mxu0 %v7716
      %v7928 = vpop.f32.mrb[0].mxu0
      %v7929 = vadd.f32 %v6298, %v7928
      %v7930 = vpop.f32.mrb[0].mxu0
      %v7931 = vadd.f32 %v6300, %v7930
      %v7932 = vpop.f32.mrb[0].mxu0
      %v7933 = vadd.f32 %v6302, %v7932
      %v7934 = vpop.f32.mrb[0].mxu0
      %v7935 = vadd.f32 %v6304, %v7934
      %7936 = vmatprep.mubr.bf16.mxu0 0
      %7937 = vmatmul.mubr.bf16.gmra.mrb[0].mxu0 %v7719
      %v7938 = vpop.f32.mrb[0].mxu0
      %v7939 = vadd.f32 %v6308, %v7938
      %v7940 = vpop.f32.mrb[0].mxu0
      %v7941 = vadd.f32 %v6310, %v7940
      %v7942 = vpop.f32.mrb[0].mxu0
      %v7943 = vadd.f32 %v6312, %v7942
      %v7944 = vpop.f32.mrb[0].mxu0
      %v7945 = vadd.f32 %v6314, %v7944
      %7946 = vmatprep.mubr.bf16.mxu0 0
      %7947 = vmatmul.mubr.bf16.gmra.mrb[0].mxu0 %v7722
      %v7948 = vpop.f32.mrb[0].mxu0
      %v7949 = vadd.f32 %v6318, %v7948
      %v7950 = vpop.f32.mrb[0].mxu0
      %v7951 = vadd.f32 %v6320, %v7950
      %v7952 = vpop.f32.mrb[0].mxu0
      %v7953 = vadd.f32 %v6322, %v7952
      %v7954 = vpop.f32.mrb[0].mxu0
      %v7955 = vadd.f32 %v6324, %v7954
      %7956 = vmatprep.mubr.bf16.mxu0 0
      %7957 = vmatmul.mubr.bf16.gmra.mrb[0].mxu0 %v7725
      %v7958 = vpop.f32.mrb[0].mxu0
      %v7959 = vadd.f32 %v6328, %v7958
      %v7960 = vpop.f32.mrb[0].mxu0
      %v7961 = vadd.f32 %v6330, %v7960
      %v7962 = vpop.f32.mrb[0].mxu0
      %v7963 = vadd.f32 %v6332, %v7962
      %v7964 = vpop.f32.mrb[0].mxu0
      %v7965 = vadd.f32 %v6334, %v7964
      %7966 = vmatprep.mubr.bf16.mxu0 0
      %7967 = vmatmul.mubr.bf16.gmra.mrb[0].mxu0 %v7728
      %v7968 = vpop.f32.mrb[0].mxu0
      %v7969 = vadd.f32 %v6338, %v7968
      %v7970 = vpop.f32.mrb[0].mxu0
      %v7971 = vadd.f32 %v6340, %v7970
      %v7972 = vpop.f32.mrb[0].mxu0
      %v7973 = vadd.f32 %v6342, %v7972
      %v7974 = vpop.f32.mrb[0].mxu0
      %v7975 = vadd.f32 %v6344, %v7974
      %7976 = vmatprep.mubr.bf16.mxu0 0
      %7977 = vmatmul.mubr.bf16.gmra.mrb[0].mxu0 %v7731
      %v7978 = vpop.f32.mrb[0].mxu0
      %v7979 = vadd.f32 %v6348, %v7978
      %v7980 = vpop.f32.mrb[0].mxu0
      %v7981 = vadd.f32 %v6350, %v7980
      %v7982 = vpop.f32.mrb[0].mxu0
      %v7983 = vadd.f32 %v6352, %v7982
      %v7984 = vpop.f32.mrb[0].mxu0
      %v7985 = vadd.f32 %v6354, %v7984
      %7986 = vmatprep.mubr.bf16.mxu0 0
      %7987 = vmatmul.mubr.bf16.gmra.mrb[0].mxu0 %v7734
      %v7988 = vpop.f32.mrb[0].mxu0
      %v7989 = vadd.f32 %v6358, %v7988
      %v7990 = vpop.f32.mrb[0].mxu0
      %v7991 = vadd.f32 %v6360, %v7990
      %v7992 = vpop.f32.mrb[0].mxu0
      %v7993 = vadd.f32 %v6362, %v7992
      %v7994 = vpop.f32.mrb[0].mxu0
      %v7995 = vadd.f32 %v6364, %v7994
      %7996 = vmatprep.mubr.bf16.mxu0 0
      %7997 = vmatmul.mubr.bf16.gmra.mrb[0].mxu0 %v7737
      %v7998 = vpop.f32.mrb[0].mxu0
      %v7999 = vadd.f32 %v6368, %v7998
      %v8000 = vpop.f32.mrb[0].mxu0
      %v8001 = vadd.f32 %v6370, %v8000
      %v8002 = vpop.f32.mrb[0].mxu0
      %v8003 = vadd.f32 %v6372, %v8002
      %v8004 = vpop.f32.mrb[0].mxu0
      %v8005 = vadd.f32 %v6374, %v8004
      %8006 = vmatprep.mubr.bf16.mxu0 0
      %8007 = vmatmul.mubr.bf16.gmra.mrb[0].mxu0 %v7740
      %v8008 = vpop.f32.mrb[0].mxu0
      %v8009 = vadd.f32 %v6378, %v8008
      %v8010 = vpop.f32.mrb[0].mxu0
      %v8011 = vadd.f32 %v6380, %v8010
      %v8012 = vpop.f32.mrb[0].mxu0
      %v8013 = vadd.f32 %v6382, %v8012
      %v8014 = vpop.f32.mrb[0].mxu0
      %v8015 = vadd.f32 %v6384, %v8014
      %8016 = vmatprep.mubr.bf16.mxu0 0
      %8017 = vmatmul.mubr.bf16.gmra.mrb[0].mxu0 %v7743
      %v8018 = vpop.f32.mrb[0].mxu0
      %v8019 = vadd.f32 %v6388, %v8018
      %v8020 = vpop.f32.mrb[0].mxu0
      %v8021 = vadd.f32 %v6390, %v8020
      %v8022 = vpop.f32.mrb[0].mxu0
      %v8023 = vadd.f32 %v6392, %v8022
      %v8024 = vpop.f32.mrb[0].mxu0
      %v8025 = vadd.f32 %v6394, %v8024
      %8026 = vmatprep.mubr.bf16.mxu0 0
      %8027 = vmatmul.mubr.bf16.gmra.mrb[0].mxu0 %v7746
      %v8028 = vpop.f32.mrb[0].mxu0
      %v8029 = vadd.f32 %v6398, %v8028
      %v8030 = vpop.f32.mrb[0].mxu0
      %v8031 = vadd.f32 %v6400, %v8030
      %v8032 = vpop.f32.mrb[0].mxu0
      %v8033 = vadd.f32 %v6402, %v8032
      %v8034 = vpop.f32.mrb[0].mxu0
      %v8035 = vadd.f32 %v6404, %v8034
      %8036 = vmatprep.mubr.bf16.mxu0 0
      %8037 = vmatmul.mubr.bf16.gmra.mrb[0].mxu0 %v7749
      %v8038 = vpop.f32.mrb[0].mxu0
      %v8039 = vadd.f32 %v6408, %v8038
      %v8040 = vpop.f32.mrb[0].mxu0
      %v8041 = vadd.f32 %v6410, %v8040
      %v8042 = vpop.f32.mrb[0].mxu0
      %v8043 = vadd.f32 %v6412, %v8042
      %v8044 = vpop.f32.mrb[0].mxu0
      %v8045 = vadd.f32 %v6414, %v8044
      %8046 = vmatprep.mubr.bf16.mxu0 0
      %8047 = vmatmul.mubr.bf16.gmra.mrb[0].mxu0 %v7752
      %v8048 = vpop.f32.mrb[0].mxu0
      %v8049 = vadd.f32 %v6418, %v8048
      %v8050 = vpop.f32.mrb[0].mxu0
      %v8051 = vadd.f32 %v6420, %v8050
      %v8052 = vpop.f32.mrb[0].mxu0
      %v8053 = vadd.f32 %v6422, %v8052
      %v8054 = vpop.f32.mrb[0].mxu0
      %v8055 = vadd.f32 %v6424, %v8054
      %8056 = vmatprep.mubr.bf16.mxu0 0
      %8057 = vmatmul.mubr.bf16.gmra.mrb[0].mxu0 %v7755
      %v8058 = vpop.f32.mrb[0].mxu0
      %v8059 = vadd.f32 %v6428, %v8058
      %v8060 = vpop.f32.mrb[0].mxu0
      %v8061 = vadd.f32 %v6430, %v8060
      %v8062 = vpop.f32.mrb[0].mxu0
      %v8063 = vadd.f32 %v6432, %v8062
      %v8064 = vpop.f32.mrb[0].mxu0
      %v8065 = vadd.f32 %v6434, %v8064
      %8066 = vmatprep.mubr.bf16.mxu0 0
      %8067 = vmatmul.mubr.bf16.gmra.mrb[0].mxu0 %v7758
      %v8068 = vpop.f32.mrb[0].mxu0
      %v8069 = vadd.f32 %v6438, %v8068
      %v8070 = vpop.f32.mrb[0].mxu0
      %v8071 = vadd.f32 %v6440, %v8070
      %v8072 = vpop.f32.mrb[0].mxu0
      %v8073 = vadd.f32 %v6442, %v8072
      %v8074 = vpop.f32.mrb[0].mxu0
      %v8075 = vadd.f32 %v6444, %v8074
      %8076 = vmatprep.mubr.bf16.mxu0 0
      %8077 = vmatmul.mubr.bf16.gmra.mrb[0].mxu0 %v7761
      %v8078 = vpop.f32.mrb[0].mxu0
      %v8079 = vadd.f32 %v6448, %v8078
      %v8080 = vpop.f32.mrb[0].mxu0
      %v8081 = vadd.f32 %v6450, %v8080
      %v8082 = vpop.f32.mrb[0].mxu0
      %v8083 = vadd.f32 %v6452, %v8082
      %v8084 = vpop.f32.mrb[0].mxu0
      %v8085 = vadd.f32 %v6454, %v8084
      %8086 = vmatprep.mubr.bf16.mxu0 0
      %8087 = vmatmul.mubr.bf16.gmra.mrb[0].mxu0 %v7764
      %v8088 = vpop.f32.mrb[0].mxu0
      %v8089 = vadd.f32 %v6458, %v8088
      %v8090 = vpop.f32.mrb[0].mxu0
      %v8091 = vadd.f32 %v6460, %v8090
      %v8092 = vpop.f32.mrb[0].mxu0
      %v8093 = vadd.f32 %v6462, %v8092
      %v8094 = vpop.f32.mrb[0].mxu0
      %v8095 = vadd.f32 %v6464, %v8094
      %8096 = vmatprep.mubr.bf16.mxu0 0
      %8097 = vmatmul.mubr.bf16.gmra.mrb[0].mxu0 %v7767
      %v8098 = vpop.f32.mrb[0].mxu0
      %v8099 = vadd.f32 %v6468, %v8098
      %v8100 = vpop.f32.mrb[0].mxu0
      %v8101 = vadd.f32 %v6470, %v8100
      %v8102 = vpop.f32.mrb[0].mxu0
      %v8103 = vadd.f32 %v6472, %v8102
      %v8104 = vpop.f32.mrb[0].mxu0
      %v8105 = vadd.f32 %v6474, %v8104
      %8106 = vmatprep.mubr.bf16.mxu0 0
      %8107 = vmatmul.mubr.bf16.gmra.mrb[0].mxu0 %v7770
      %v8108 = vpop.f32.mrb[0].mxu0
      %v8109 = vadd.f32 %v6478, %v8108
      %v8110 = vpop.f32.mrb[0].mxu0
      %v8111 = vadd.f32 %v6480, %v8110
      %v8112 = vpop.f32.mrb[0].mxu0
      %v8113 = vadd.f32 %v6482, %v8112
      %v8114 = vpop.f32.mrb[0].mxu0
      %v8115 = vadd.f32 %v6484, %v8114
      %8116 = vmatprep.mubr.bf16.mxu0 0
      %8117 = vmatmul.mubr.bf16.gmra.mrb[0].mxu0 %v7773
      %v8118 = vpop.f32.mrb[0].mxu0
      %v8119 = vadd.f32 %v6488, %v8118
      %v8120 = vpop.f32.mrb[0].mxu0
      %v8121 = vadd.f32 %v6490, %v8120
      %v8122 = vpop.f32.mrb[0].mxu0
      %v8123 = vadd.f32 %v6492, %v8122
      %v8124 = vpop.f32.mrb[0].mxu0
      %v8125 = vadd.f32 %v6494, %v8124
      %8126 = vmatprep.mubr.bf16.mxu0 0
      %8127 = vmatmul.mubr.bf16.gmra.mrb[0].mxu0 %v7776
      %v8128 = vpop.f32.mrb[0].mxu0
      %v8129 = vadd.f32 %v6498, %v8128
      %v8130 = vpop.f32.mrb[0].mxu0
      %v8131 = vadd.f32 %v6500, %v8130
      %v8132 = vpop.f32.mrb[0].mxu0
      %v8133 = vpop.f32.mrb[0].mxu0
      %8134 = vdwg.mxu0
      %v8135 = vadd.f32 %v7248, %v7819
      %v8136 = vadd.f32 %v7250, %v7821
      %v8137 = vadd.f32 %v7252, %v7823
      %v8138 = vadd.f32 %v7254, %v7825
      %v8139 = vadd.f32 %v7258, %v7829
      %v8140 = vadd.f32 %v7260, %v7831
      %v8141 = vadd.f32 %v7262, %v7833
      %v8142 = vadd.f32 %v7264, %v7835
      %v8143 = vadd.f32 %v7268, %v7839
      %v8144 = vadd.f32 %v7270, %v7841
      %v8145 = vadd.f32 %v7272, %v7843
      %v8146 = vadd.f32 %v7274, %v7845
      %v8147 = vadd.f32 %v7278, %v7849
      %v8148 = vadd.f32 %v7280, %v7851
      %v8149 = vadd.f32 %v7282, %v7853
      %v8150 = vadd.f32 %v7284, %v7855
      %v8151 = vadd.f32 %v7288, %v7859
      %v8152 = vadd.f32 %v7290, %v7861
      %v8153 = vadd.f32 %v7292, %v7863
      %v8154 = vadd.f32 %v7294, %v7865
      %v8155 = vadd.f32 %v7298, %v7869
      %v8156 = vadd.f32 %v7300, %v7871
      %v8157 = vadd.f32 %v7302, %v7873
      %v8158 = vadd.f32 %v7304, %v7875
      %v8159 = vadd.f32 %v7308, %v7879
      %v8160 = vadd.f32 %v7310, %v7881
      %v8161 = vadd.f32 %v7312, %v7883
      %v8162 = vadd.f32 %v7314, %v7885
      %v8163 = vadd.f32 %v7318, %v7889
      %v8164 = vadd.f32 %v7320, %v7891
      %v8165 = vadd.f32 %v7322, %v7893
      %v8166 = vadd.f32 %v7324, %v7895
      %v8167 = vadd.f32 %v7328, %v7899
      %v8168 = vadd.f32 %v7330, %v7901
      %v8169 = vadd.f32 %v7332, %v7903
      %v8170 = vadd.f32 %v7334, %v7905
      %v8171 = vadd.f32 %v7338, %v7909
      %v8172 = vadd.f32 %v7340, %v7911
      %v8173 = vadd.f32 %v7342, %v7913
      %v8174 = vadd.f32 %v7344, %v7915
      %v8175 = vadd.f32 %v7348, %v7919
      %v8176 = vadd.f32 %v7350, %v7921
      %v8177 = vadd.f32 %v7352, %v7923
      %v8178 = vadd.f32 %v7354, %v7925
      %v8179 = vadd.f32 %v7358, %v7929
      %v8180 = vadd.f32 %v7360, %v7931
      %v8181 = vadd.f32 %v7362, %v7933
      %v8182 = vadd.f32 %v7364, %v7935
      %v8183 = vadd.f32 %v7368, %v7939
      %v8184 = vadd.f32 %v7370, %v7941
      %v8185 = vadd.f32 %v7372, %v7943
      %v8186 = vadd.f32 %v7374, %v7945
      %v8187 = vadd.f32 %v7378, %v7949
      %v8188 = vadd.f32 %v7380, %v7951
      %v8189 = vadd.f32 %v7382, %v7953
      %v8190 = vadd.f32 %v7384, %v7955
      %v8191 = vadd.f32 %v7388, %v7959
      %v8192 = vadd.f32 %v7390, %v7961
      %v8193 = vadd.f32 %v7392, %v7963
      %v8194 = vadd.f32 %v7394, %v7965
      %v8195 = vadd.f32 %v7398, %v7969
      %v8196 = vadd.f32 %v7400, %v7971
      %v8197 = vadd.f32 %v7402, %v7973
      %v8198 = vadd.f32 %v7404, %v7975
      %v8199 = vadd.f32 %v7408, %v7979
      %v8200 = vadd.f32 %v7410, %v7981
      %v8201 = vadd.f32 %v7412, %v7983
      %v8202 = vadd.f32 %v7414, %v7985
      %v8203 = vadd.f32 %v7418, %v7989
      %v8204 = vadd.f32 %v7420, %v7991
      %v8205 = vadd.f32 %v7422, %v7993
      %v8206 = vadd.f32 %v7424, %v7995
      %v8207 = vadd.f32 %v7428, %v7999
      %v8208 = vadd.f32 %v7430, %v8001
      %v8209 = vadd.f32 %v7432, %v8003
      %v8210 = vadd.f32 %v7434, %v8005
      %v8211 = vadd.f32 %v7438, %v8009
      %v8212 = vadd.f32 %v7440, %v8011
      %v8213 = vadd.f32 %v7442, %v8013
      %v8214 = vadd.f32 %v7444, %v8015
      %v8215 = vadd.f32 %v7448, %v8019
      %v8216 = vadd.f32 %v7450, %v8021
      %v8217 = vadd.f32 %v7452, %v8023
      %v8218 = vadd.f32 %v7454, %v8025
      %v8219 = vadd.f32 %v7458, %v8029
      %v8220 = vadd.f32 %v7460, %v8031
      %v8221 = vadd.f32 %v7462, %v8033
      %v8222 = vadd.f32 %v7464, %v8035
      %v8223 = vadd.f32 %v7468, %v8039
      %v8224 = vadd.f32 %v7470, %v8041
      %v8225 = vadd.f32 %v7472, %v8043
      %v8226 = vadd.f32 %v7474, %v8045
      %v8227 = vadd.f32 %v7478, %v8049
      %v8228 = vadd.f32 %v7480, %v8051
      %v8229 = vadd.f32 %v7482, %v8053
      %v8230 = vadd.f32 %v7484, %v8055
      %v8231 = vadd.f32 %v7488, %v8059
      %v8232 = vadd.f32 %v7490, %v8061
      %v8233 = vadd.f32 %v7492, %v8063
      %v8234 = vadd.f32 %v7494, %v8065
      %v8235 = vadd.f32 %v7498, %v8069
      %v8236 = vadd.f32 %v7500, %v8071
      %v8237 = vadd.f32 %v7502, %v8073
      %v8238 = vadd.f32 %v7504, %v8075
      %v8239 = vadd.f32 %v7508, %v8079
      %v8240 = vadd.f32 %v7510, %v8081
      %v8241 = vadd.f32 %v7512, %v8083
      %v8242 = vadd.f32 %v7514, %v8085
      %v8243 = vadd.f32 %v7518, %v8089
      %v8244 = vadd.f32 %v7520, %v8091
      %v8245 = vadd.f32 %v7522, %v8093
      %v8246 = vadd.f32 %v7524, %v8095
      %v8247 = vadd.f32 %v7528, %v8099
      %v8248 = vadd.f32 %v7530, %v8101
      %v8249 = vadd.f32 %v7532, %v8103
      %v8250 = vadd.f32 %v7534, %v8105
      %v8251 = vadd.f32 %v7538, %v8109
      %v8252 = vadd.f32 %v7540, %v8111
      %v8253 = vadd.f32 %v7542, %v8113
      %v8254 = vadd.f32 %v7544, %v8115
      %v8255 = vadd.f32 %v7548, %v8119
      %v8256 = vadd.f32 %v7550, %v8121
      %v8257 = vadd.f32 %v7552, %v8123
      %v8258 = vadd.f32 %v7554, %v8125
      %v8259 = vadd.f32 %v7558, %v8129
      %v8260 = vadd.f32 %v7560, %v8131
      %v8261 = vadd.f32 %v8135, %v6740
      %v8262 = vadd.f32 %v8136, %v6742
      %v8263 = vadd.f32 %v8137, %v6744
      %v8264 = vadd.f32 %v8138, %v6746
      %v8265 = vadd.f32 %v8139, %v6750
      %v8266 = vadd.f32 %v8140, %v6752
      %v8267 = vadd.f32 %v8141, %v6754
      %v8268 = vadd.f32 %v8142, %v6756
      %v8269 = vadd.f32 %v8143, %v6760
      %v8270 = vadd.f32 %v8144, %v6762
      %v8271 = vadd.f32 %v8145, %v6764
      %v8272 = vadd.f32 %v8146, %v6766
      %v8273 = vadd.f32 %v8147, %v6770
      %v8274 = vadd.f32 %v8148, %v6772
      %v8275 = vadd.f32 %v8149, %v6774
      %v8276 = vadd.f32 %v8150, %v6776
      %v8277 = vadd.f32 %v8151, %v6780
      %v8278 = vadd.f32 %v8152, %v6782
      %v8279 = vadd.f32 %v8153, %v6784
      %v8280 = vadd.f32 %v8154, %v6786
      %v8281 = vadd.f32 %v8155, %v6790
      %v8282 = vadd.f32 %v8156, %v6792
      %v8283 = vadd.f32 %v8157, %v6794
      %v8284 = vadd.f32 %v8158, %v6796
      %v8285 = vadd.f32 %v8159, %v6800
      %v8286 = vadd.f32 %v8160, %v6802
      %v8287 = vadd.f32 %v8161, %v6804
      %v8288 = vadd.f32 %v8162, %v6806
      %v8289 = vadd.f32 %v8163, %v6810
      %v8290 = vadd.f32 %v8164, %v6812
      %v8291 = vadd.f32 %v8165, %v6814
      %v8292 = vadd.f32 %v8166, %v6816
      %v8293 = vadd.f32 %v8167, %v6820
      %v8294 = vadd.f32 %v8168, %v6822
      %v8295 = vadd.f32 %v8169, %v6824
      %v8296 = vadd.f32 %v8170, %v6826
      %v8297 = vadd.f32 %v8171, %v6830
      %v8298 = vadd.f32 %v8172, %v6832
      %v8299 = vadd.f32 %v8173, %v6834
      %v8300 = vadd.f32 %v8174, %v6836
      %v8301 = vadd.f32 %v8175, %v6840
      %v8302 = vadd.f32 %v8176, %v6842
      %v8303 = vadd.f32 %v8177, %v6844
      %v8304 = vadd.f32 %v8178, %v6846
      %v8305 = vadd.f32 %v8179, %v6850
      %v8306 = vadd.f32 %v8180, %v6852
      %v8307 = vadd.f32 %v8181, %v6854
      %v8308 = vadd.f32 %v8182, %v6856
      %v8309 = vadd.f32 %v8183, %v6860
      %v8310 = vadd.f32 %v8184, %v6862
      %v8311 = vadd.f32 %v8185, %v6864
      %v8312 = vadd.f32 %v8186, %v6866
      %v8313 = vadd.f32 %v8187, %v6870
      %v8314 = vadd.f32 %v8188, %v6872
      %v8315 = vadd.f32 %v8189, %v6874
      %v8316 = vadd.f32 %v8190, %v6876
      %v8317 = vadd.f32 %v8191, %v6880
      %v8318 = vadd.f32 %v8192, %v6882
      %v8319 = vadd.f32 %v8193, %v6884
      %v8320 = vadd.f32 %v8194, %v6886
      %v8321 = vadd.f32 %v8195, %v6890
      %v8322 = vadd.f32 %v8196, %v6892
      %v8323 = vadd.f32 %v8197, %v6894
      %v8324 = vadd.f32 %v8198, %v6896
      %v8325 = vadd.f32 %v8199, %v6900
      %v8326 = vadd.f32 %v8200, %v6902
      %v8327 = vadd.f32 %v8201, %v6904
      %v8328 = vadd.f32 %v8202, %v6906
      %v8329 = vadd.f32 %v8203, %v6910
      %v8330 = vadd.f32 %v8204, %v6912
      %v8331 = vadd.f32 %v8205, %v6914
      %v8332 = vadd.f32 %v8206, %v6916
      %v8333 = vadd.f32 %v8207, %v6920
      %v8334 = vadd.f32 %v8208, %v6922
      %v8335 = vadd.f32 %v8209, %v6924
      %v8336 = vadd.f32 %v8210, %v6926
      %v8337 = vadd.f32 %v8211, %v6930
      %v8338 = vadd.f32 %v8212, %v6932
      %v8339 = vadd.f32 %v8213, %v6934
      %v8340 = vadd.f32 %v8214, %v6936
      %v8341 = vadd.f32 %v8215, %v6940
      %v8342 = vadd.f32 %v8216, %v6942
      %v8343 = vadd.f32 %v8217, %v6944
      %v8344 = vadd.f32 %v8218, %v6946
      %v8345 = vadd.f32 %v8219, %v6950
      %v8346 = vadd.f32 %v8220, %v6952
      %v8347 = vadd.f32 %v8221, %v6954
      %v8348 = vadd.f32 %v8222, %v6956
      %v8349 = vadd.f32 %v8223, %v6960
      %v8350 = vadd.f32 %v8224, %v6962
      %v8351 = vadd.f32 %v8225, %v6964
      %v8352 = vadd.f32 %v8226, %v6966
      %v8353 = vadd.f32 %v8227, %v6970
      %v8354 = vadd.f32 %v8228, %v6972
      %v8355 = vadd.f32 %v8229, %v6974
      %v8356 = vadd.f32 %v8230, %v6976
      %v8357 = vadd.f32 %v8231, %v6980
      %v8358 = vadd.f32 %v8232, %v6982
      %v8359 = vadd.f32 %v8233, %v6984
      %v8360 = vadd.f32 %v8234, %v6986
      %v8361 = vadd.f32 %v8235, %v6990
      %v8362 = vadd.f32 %v8236, %v6992
      %v8363 = vadd.f32 %v8237, %v6994
      %v8364 = vadd.f32 %v8238, %v6996
      %v8365 = vadd.f32 %v8239, %v7000
      %v8366 = vadd.f32 %v8240, %v7002
      %v8367 = vadd.f32 %v8241, %v7004
      %v8368 = vadd.f32 %v8242, %v7006
      %v8369 = vadd.f32 %v8243, %v7010
      %v8370 = vadd.f32 %v8244, %v7012
      %v8371 = vadd.f32 %v8245, %v7014
      %v8372 = vadd.f32 %v8246, %v7016
      %v8373 = vadd.f32 %v8247, %v7020
      %v8374 = vadd.f32 %v8248, %v7022
      %v8375 = vadd.f32 %v8249, %v7024
      %v8376 = vadd.f32 %v8250, %v7026
      %v8377 = vadd.f32 %v8251, %v7030
      %v8378 = vadd.f32 %v8252, %v7032
      %v8379 = vadd.f32 %v8253, %v7034
      %v8380 = vadd.f32 %v8254, %v7036
      %v8381 = vadd.f32 %v8255, %v7040
      %v8382 = vadd.f32 %v8256, %v7042
      %v8383 = vadd.f32 %v8257, %v7044
      %v8384 = vadd.f32 %v8258, %v7046
      %v8385 = vadd.f32 %v8259, %v7050
      %v8386 = vadd.f32 %v8260, %v7052
      %v8387 = vld [vmem:[%s5] sm:$0x3]
      %v8389 = vlaneseq
      %v8390 = vshrl.u32 %v8389, 7
      %v8391 = vsub.s32 0, %v8390
      %v8392 = vrot.slane %v8387, %v8391
      %v8393 = vlaneseq
      %v8394 = vshrl.u32 %v8393, 7
      %v8395 = vsub.s32 1, %v8394
      %v8396 = vrot.slane %v8387, %v8395
      %v8399 = vadd.f32 %v8261, %v8392
      %v8400 = vadd.f32 %v8262, %v8396
      %v8401 = vadd.f32 %v8263, %v8392
      %v8402 = vadd.f32 %v8264, %v8396
      %v8403 = vadd.f32 %v8265, %v8392
      %v8404 = vadd.f32 %v8266, %v8396
      %v8405 = vadd.f32 %v8267, %v8392
      %v8406 = vadd.f32 %v8268, %v8396
      %v8407 = vadd.f32 %v8269, %v8392
      %v8408 = vadd.f32 %v8270, %v8396
      %v8409 = vadd.f32 %v8271, %v8392
      %v8410 = vadd.f32 %v8272, %v8396
      %v8411 = vadd.f32 %v8273, %v8392
      %v8412 = vadd.f32 %v8274, %v8396
      %v8413 = vadd.f32 %v8275, %v8392
      %v8414 = vadd.f32 %v8276, %v8396
      %v8415 = vadd.f32 %v8277, %v8392
      %v8416 = vadd.f32 %v8278, %v8396
      %v8417 = vadd.f32 %v8279, %v8392
      %v8418 = vadd.f32 %v8280, %v8396
      %v8419 = vadd.f32 %v8281, %v8392
      %v8420 = vadd.f32 %v8282, %v8396
      %v8421 = vadd.f32 %v8283, %v8392
      %v8422 = vadd.f32 %v8284, %v8396
      %v8423 = vadd.f32 %v8285, %v8392
      %v8424 = vadd.f32 %v8286, %v8396
      %v8425 = vadd.f32 %v8287, %v8392
      %v8426 = vadd.f32 %v8288, %v8396
      %v8427 = vadd.f32 %v8289, %v8392
      %v8428 = vadd.f32 %v8290, %v8396
      %v8429 = vadd.f32 %v8291, %v8392
      %v8430 = vadd.f32 %v8292, %v8396
      %v8431 = vadd.f32 %v8293, %v8392
      %v8432 = vadd.f32 %v8294, %v8396
      %v8433 = vadd.f32 %v8295, %v8392
      %v8434 = vadd.f32 %v8296, %v8396
      %v8435 = vadd.f32 %v8297, %v8392
      %v8436 = vadd.f32 %v8298, %v8396
      %v8437 = vadd.f32 %v8299, %v8392
      %v8438 = vadd.f32 %v8300, %v8396
      %v8439 = vadd.f32 %v8301, %v8392
      %v8440 = vadd.f32 %v8302, %v8396
      %v8441 = vadd.f32 %v8303, %v8392
      %v8442 = vadd.f32 %v8304, %v8396
      %v8443 = vadd.f32 %v8305, %v8392
      %v8444 = vadd.f32 %v8306, %v8396
      %v8445 = vadd.f32 %v8307, %v8392
      %v8446 = vadd.f32 %v8308, %v8396
      %v8447 = vadd.f32 %v8309, %v8392
      %v8448 = vadd.f32 %v8310, %v8396
      %v8449 = vadd.f32 %v8311, %v8392
      %v8450 = vadd.f32 %v8312, %v8396
      %v8451 = vadd.f32 %v8313, %v8392
      %v8452 = vadd.f32 %v8314, %v8396
      %v8453 = vadd.f32 %v8315, %v8392
      %v8454 = vadd.f32 %v8316, %v8396
      %v8455 = vadd.f32 %v8317, %v8392
      %v8456 = vadd.f32 %v8318, %v8396
      %v8457 = vadd.f32 %v8319, %v8392
      %v8458 = vadd.f32 %v8320, %v8396
      %v8459 = vadd.f32 %v8321, %v8392
      %v8460 = vadd.f32 %v8322, %v8396
      %v8461 = vadd.f32 %v8323, %v8392
      %v8462 = vadd.f32 %v8324, %v8396
      %v8463 = vadd.f32 %v8325, %v8392
      %v8464 = vadd.f32 %v8326, %v8396
      %v8465 = vadd.f32 %v8327, %v8392
      %v8466 = vadd.f32 %v8328, %v8396
      %v8467 = vadd.f32 %v8329, %v8392
      %v8468 = vadd.f32 %v8330, %v8396
      %v8469 = vadd.f32 %v8331, %v8392
      %v8470 = vadd.f32 %v8332, %v8396
      %v8471 = vadd.f32 %v8333, %v8392
      %v8472 = vadd.f32 %v8334, %v8396
      %v8473 = vadd.f32 %v8335, %v8392
      %v8474 = vadd.f32 %v8336, %v8396
      %v8475 = vadd.f32 %v8337, %v8392
      %v8476 = vadd.f32 %v8338, %v8396
      %v8477 = vadd.f32 %v8339, %v8392
      %v8478 = vadd.f32 %v8340, %v8396
      %v8479 = vadd.f32 %v8341, %v8392
      %v8480 = vadd.f32 %v8342, %v8396
      %v8481 = vadd.f32 %v8343, %v8392
      %v8482 = vadd.f32 %v8344, %v8396
      %v8483 = vadd.f32 %v8345, %v8392
      %v8484 = vadd.f32 %v8346, %v8396
      %v8485 = vadd.f32 %v8347, %v8392
      %v8486 = vadd.f32 %v8348, %v8396
      %v8487 = vadd.f32 %v8349, %v8392
      %v8488 = vadd.f32 %v8350, %v8396
      %v8489 = vadd.f32 %v8351, %v8392
      %v8490 = vadd.f32 %v8352, %v8396
      %v8491 = vadd.f32 %v8353, %v8392
      %v8492 = vadd.f32 %v8354, %v8396
      %v8493 = vadd.f32 %v8355, %v8392
      %v8494 = vadd.f32 %v8356, %v8396
      %v8495 = vadd.f32 %v8357, %v8392
      %v8496 = vadd.f32 %v8358, %v8396
      %v8497 = vadd.f32 %v8359, %v8392
      %v8498 = vadd.f32 %v8360, %v8396
      %v8499 = vadd.f32 %v8361, %v8392
      %v8500 = vadd.f32 %v8362, %v8396
      %v8501 = vadd.f32 %v8363, %v8392
      %v8502 = vadd.f32 %v8364, %v8396
      %v8503 = vadd.f32 %v8365, %v8392
      %v8504 = vadd.f32 %v8366, %v8396
      %v8505 = vadd.f32 %v8367, %v8392
      %v8506 = vadd.f32 %v8368, %v8396
      %v8507 = vadd.f32 %v8369, %v8392
      %v8508 = vadd.f32 %v8370, %v8396
      %v8509 = vadd.f32 %v8371, %v8392
      %v8510 = vadd.f32 %v8372, %v8396
      %v8511 = vadd.f32 %v8373, %v8392
      %v8512 = vadd.f32 %v8374, %v8396
      %v8513 = vadd.f32 %v8375, %v8392
      %v8514 = vadd.f32 %v8376, %v8396
      %v8515 = vadd.f32 %v8377, %v8392
      %v8516 = vadd.f32 %v8378, %v8396
      %v8517 = vadd.f32 %v8379, %v8392
      %v8518 = vadd.f32 %v8380, %v8396
      %v8519 = vadd.f32 %v8381, %v8392
      %v8520 = vadd.f32 %v8382, %v8396
      %v8521 = vadd.f32 %v8383, %v8392
      %v8522 = vadd.f32 %v8384, %v8396
      %v8523 = vadd.f32 %v8385, %v8392
      %v8524 = vadd.f32 %v8386, %v8396
      %v8525 = vmax.f32 %v8399, 0.0
      %v8526 = vmax.f32 %v8400, 0.0
      %v8527 = vmax.f32 %v8401, 0.0
      %v8528 = vmax.f32 %v8402, 0.0
      %v8529 = vmax.f32 %v8403, 0.0
      %v8530 = vmax.f32 %v8404, 0.0
      %v8531 = vmax.f32 %v8405, 0.0
      %v8532 = vmax.f32 %v8406, 0.0
      %v8533 = vmax.f32 %v8407, 0.0
      %v8534 = vmax.f32 %v8408, 0.0
      %v8535 = vmax.f32 %v8409, 0.0
      %v8536 = vmax.f32 %v8410, 0.0
      %v8537 = vmax.f32 %v8411, 0.0
      %v8538 = vmax.f32 %v8412, 0.0
      %v8539 = vmax.f32 %v8413, 0.0
      %v8540 = vmax.f32 %v8414, 0.0
      %v8541 = vmax.f32 %v8415, 0.0
      %v8542 = vmax.f32 %v8416, 0.0
      %v8543 = vmax.f32 %v8417, 0.0
      %v8544 = vmax.f32 %v8418, 0.0
      %v8545 = vmax.f32 %v8419, 0.0
      %v8546 = vmax.f32 %v8420, 0.0
      %v8547 = vmax.f32 %v8421, 0.0
      %v8548 = vmax.f32 %v8422, 0.0
      %v8549 = vmax.f32 %v8423, 0.0
      %v8550 = vmax.f32 %v8424, 0.0
      %v8551 = vmax.f32 %v8425, 0.0
      %v8552 = vmax.f32 %v8426, 0.0
      %v8553 = vmax.f32 %v8427, 0.0
      %v8554 = vmax.f32 %v8428, 0.0
      %v8555 = vmax.f32 %v8429, 0.0
      %v8556 = vmax.f32 %v8430, 0.0
      %v8557 = vmax.f32 %v8431, 0.0
      %v8558 = vmax.f32 %v8432, 0.0
      %v8559 = vmax.f32 %v8433, 0.0
      %v8560 = vmax.f32 %v8434, 0.0
      %v8561 = vmax.f32 %v8435, 0.0
      %v8562 = vmax.f32 %v8436, 0.0
      %v8563 = vmax.f32 %v8437, 0.0
      %v8564 = vmax.f32 %v8438, 0.0
      %v8565 = vmax.f32 %v8439, 0.0
      %v8566 = vmax.f32 %v8440, 0.0
      %v8567 = vmax.f32 %v8441, 0.0
      %v8568 = vmax.f32 %v8442, 0.0
      %v8569 = vmax.f32 %v8443, 0.0
      %v8570 = vmax.f32 %v8444, 0.0
      %v8571 = vmax.f32 %v8445, 0.0
      %v8572 = vmax.f32 %v8446, 0.0
      %v8573 = vmax.f32 %v8447, 0.0
      %v8574 = vmax.f32 %v8448, 0.0
      %v8575 = vmax.f32 %v8449, 0.0
      %v8576 = vmax.f32 %v8450, 0.0
      %v8577 = vmax.f32 %v8451, 0.0
      %v8578 = vmax.f32 %v8452, 0.0
      %v8579 = vmax.f32 %v8453, 0.0
      %v8580 = vmax.f32 %v8454, 0.0
      %v8581 = vmax.f32 %v8455, 0.0
      %v8582 = vmax.f32 %v8456, 0.0
      %v8583 = vmax.f32 %v8457, 0.0
      %v8584 = vmax.f32 %v8458, 0.0
      %v8585 = vmax.f32 %v8459, 0.0
      %v8586 = vmax.f32 %v8460, 0.0
      %v8587 = vmax.f32 %v8461, 0.0
      %v8588 = vmax.f32 %v8462, 0.0
      %v8589 = vmax.f32 %v8463, 0.0
      %v8590 = vmax.f32 %v8464, 0.0
      %v8591 = vmax.f32 %v8465, 0.0
      %v8592 = vmax.f32 %v8466, 0.0
      %v8593 = vmax.f32 %v8467, 0.0
      %v8594 = vmax.f32 %v8468, 0.0
      %v8595 = vmax.f32 %v8469, 0.0
      %v8596 = vmax.f32 %v8470, 0.0
      %v8597 = vmax.f32 %v8471, 0.0
      %v8598 = vmax.f32 %v8472, 0.0
      %v8599 = vmax.f32 %v8473, 0.0
      %v8600 = vmax.f32 %v8474, 0.0
      %v8601 = vmax.f32 %v8475, 0.0
      %v8602 = vmax.f32 %v8476, 0.0
      %v8603 = vmax.f32 %v8477, 0.0
      %v8604 = vmax.f32 %v8478, 0.0
      %v8605 = vmax.f32 %v8479, 0.0
      %v8606 = vmax.f32 %v8480, 0.0
      %v8607 = vmax.f32 %v8481, 0.0
      %v8608 = vmax.f32 %v8482, 0.0
      %v8609 = vmax.f32 %v8483, 0.0
      %v8610 = vmax.f32 %v8484, 0.0
      %v8611 = vmax.f32 %v8485, 0.0
      %v8612 = vmax.f32 %v8486, 0.0
      %v8613 = vmax.f32 %v8487, 0.0
      %v8614 = vmax.f32 %v8488, 0.0
      %v8615 = vmax.f32 %v8489, 0.0
      %v8616 = vmax.f32 %v8490, 0.0
      %v8617 = vmax.f32 %v8491, 0.0
      %v8618 = vmax.f32 %v8492, 0.0
      %v8619 = vmax.f32 %v8493, 0.0
      %v8620 = vmax.f32 %v8494, 0.0
      %v8621 = vmax.f32 %v8495, 0.0
      %v8622 = vmax.f32 %v8496, 0.0
      %v8623 = vmax.f32 %v8497, 0.0
      %v8624 = vmax.f32 %v8498, 0.0
      %v8625 = vmax.f32 %v8499, 0.0
      %v8626 = vmax.f32 %v8500, 0.0
      %v8627 = vmax.f32 %v8501, 0.0
      %v8628 = vmax.f32 %v8502, 0.0
      %v8629 = vmax.f32 %v8503, 0.0
      %v8630 = vmax.f32 %v8504, 0.0
      %v8631 = vmax.f32 %v8505, 0.0
      %v8632 = vmax.f32 %v8506, 0.0
      %v8633 = vmax.f32 %v8507, 0.0
      %v8634 = vmax.f32 %v8508, 0.0
      %v8635 = vmax.f32 %v8509, 0.0
      %v8636 = vmax.f32 %v8510, 0.0
      %v8637 = vmax.f32 %v8511, 0.0
      %v8638 = vmax.f32 %v8512, 0.0
      %v8639 = vmax.f32 %v8513, 0.0
      %v8640 = vmax.f32 %v8514, 0.0
      %v8641 = vmax.f32 %v8515, 0.0
      %v8642 = vmax.f32 %v8516, 0.0
      %v8643 = vmax.f32 %v8517, 0.0
      %v8644 = vmax.f32 %v8518, 0.0
      %v8645 = vmax.f32 %v8519, 0.0
      %v8646 = vmax.f32 %v8520, 0.0
      %v8647 = vmax.f32 %v8521, 0.0
      %v8648 = vmax.f32 %v8522, 0.0
      %v8649 = vmax.f32 %v8523, 0.0
      %v8650 = vmax.f32 %v8524, 0.0
      %v8651 = vld [vmem:[%s6] sm:$0xf]
      %v8652 = vld [vmem:[%s6 + $0x4] sm:$0xf]
      %v8653 = vld [vmem:[%s6 + $0x8] sm:$0xf]
      %v8654 = vld [vmem:[%s6 + $0xc] sm:$0xf]
      %v8655 = vld [vmem:[%s6 + $0x10] sm:$0xf]
      %v8656 = vld [vmem:[%s6 + $0x14] sm:$0xf]
      %v8657 = vld [vmem:[%s6 + $0x18] sm:$0xf]
      %v8658 = vld [vmem:[%s6 + $0x1c] sm:$0xf]
      %v8659 = vld [vmem:[%s6 + $0x20] sm:$0xf]
      %v8660 = vld [vmem:[%s6 + $0x24] sm:$0xf]
      %v8661 = vld [vmem:[%s6 + $0x28] sm:$0xf]
      %v8662 = vld [vmem:[%s6 + $0x2c] sm:$0xf]
      %v8663 = vld [vmem:[%s6 + $0x30] sm:$0xf]
      %v8664 = vld [vmem:[%s6 + $0x34] sm:$0xf]
      %v8665 = vld [vmem:[%s6 + $0x38] sm:$0xf]
      %v8666 = vld [vmem:[%s6 + $0x3c] sm:$0xf]
      %v8667 = vld [vmem:[%s6 + $0x40] sm:$0xf]
      %v8668 = vld [vmem:[%s6 + $0x44] sm:$0xf]
      %v8669 = vld [vmem:[%s6 + $0x48] sm:$0xf]
      %v8670 = vld [vmem:[%s6 + $0x4c] sm:$0xf]
      %v8671 = vpack.c.bf16 %v8527, %v8525
      %v8672 = vpack.c.bf16 %v8528, %v8526
      %v8673 = vpack.c.bf16 %v8531, %v8529
      %v8674 = vpack.c.bf16 %v8532, %v8530
      %v8675 = vpack.c.bf16 %v8535, %v8533
      %v8676 = vpack.c.bf16 %v8536, %v8534
      %v8677 = vpack.c.bf16 %v8539, %v8537
      %v8678 = vpack.c.bf16 %v8540, %v8538
      %v8679 = vpack.c.bf16 %v8543, %v8541
      %v8680 = vpack.c.bf16 %v8544, %v8542
      %v8681 = vpack.c.bf16 %v8547, %v8545
      %v8682 = vpack.c.bf16 %v8548, %v8546
      %v8683 = vpack.c.bf16 %v8551, %v8549
      %v8684 = vpack.c.bf16 %v8552, %v8550
      %v8685 = vpack.c.bf16 %v8555, %v8553
      %v8686 = vpack.c.bf16 %v8556, %v8554
      %v8687 = vpack.c.bf16 %v8559, %v8557
      %v8688 = vpack.c.bf16 %v8560, %v8558
      %v8689 = vpack.c.bf16 %v8563, %v8561
      %v8690 = vpack.c.bf16 %v8564, %v8562
      %v8691 = vpack.c.bf16 %v8567, %v8565
      %v8692 = vpack.c.bf16 %v8568, %v8566
      %v8693 = vpack.c.bf16 %v8571, %v8569
      %v8694 = vpack.c.bf16 %v8572, %v8570
      %v8695 = vpack.c.bf16 %v8575, %v8573
      %v8696 = vpack.c.bf16 %v8576, %v8574
      %v8697 = vpack.c.bf16 %v8579, %v8577
      %v8698 = vpack.c.bf16 %v8580, %v8578
      %v8699 = vpack.c.bf16 %v8583, %v8581
      %v8700 = vpack.c.bf16 %v8584, %v8582
      %v8701 = vpack.c.bf16 %v8587, %v8585
      %v8702 = vpack.c.bf16 %v8588, %v8586
      %v8703 = vpack.c.bf16 %v8591, %v8589
      %v8704 = vpack.c.bf16 %v8592, %v8590
      %v8705 = vpack.c.bf16 %v8595, %v8593
      %v8706 = vpack.c.bf16 %v8596, %v8594
      %v8707 = vpack.c.bf16 %v8599, %v8597
      %v8708 = vpack.c.bf16 %v8600, %v8598
      %v8709 = vpack.c.bf16 %v8603, %v8601
      %v8710 = vpack.c.bf16 %v8604, %v8602
      %v8711 = vpack.c.bf16 %v8607, %v8605
      %v8712 = vpack.c.bf16 %v8608, %v8606
      %v8713 = vpack.c.bf16 %v8611, %v8609
      %v8714 = vpack.c.bf16 %v8612, %v8610
      %v8715 = vpack.c.bf16 %v8615, %v8613
      %v8716 = vpack.c.bf16 %v8616, %v8614
      %v8717 = vpack.c.bf16 %v8619, %v8617
      %v8718 = vpack.c.bf16 %v8620, %v8618
      %v8719 = vpack.c.bf16 %v8623, %v8621
      %v8720 = vpack.c.bf16 %v8624, %v8622
      %v8721 = vpack.c.bf16 %v8627, %v8625
      %v8722 = vpack.c.bf16 %v8628, %v8626
      %v8723 = vpack.c.bf16 %v8631, %v8629
      %v8724 = vpack.c.bf16 %v8632, %v8630
      %v8725 = vpack.c.bf16 %v8635, %v8633
      %v8726 = vpack.c.bf16 %v8636, %v8634
      %v8727 = vpack.c.bf16 %v8639, %v8637
      %v8728 = vpack.c.bf16 %v8640, %v8638
      %v8729 = vpack.c.bf16 %v8643, %v8641
      %v8730 = vpack.c.bf16 %v8644, %v8642
      %v8731 = vpack.c.bf16 %v8647, %v8645
      %v8732 = vpack.c.bf16 %v8648, %v8646
      %v8733 = vpack.c.bf16 %v8649, %v8649
      %v8734 = vpack.c.bf16 %v8650, %v8650
      %v8755 = vunpack.c.l.b16 %v8651
      %v8756 = vunpack.c.l.b16 %v8652
      %v8757 = vunpack.c.l.b16 %v8653
      %v8758 = vunpack.c.l.b16 %v8654
      %v8759 = vunpack.c.l.b16 %v8655
      %v8760 = vunpack.c.l.b16 %v8656
      %v8761 = vunpack.c.l.b16 %v8657
      %v8762 = vunpack.c.l.b16 %v8658
      %v8763 = vunpack.c.l.b16 %v8659
      %v8764 = vunpack.c.l.b16 %v8660
      %v8765 = vunpack.c.l.b16 %v8661
      %v8766 = vunpack.c.l.b16 %v8662
      %v8767 = vunpack.c.l.b16 %v8663
      %v8768 = vunpack.c.l.b16 %v8664
      %v8769 = vunpack.c.l.b16 %v8665
      %v8770 = vunpack.c.l.b16 %v8666
      %v8771 = vunpack.c.l.b16 %v8667
      %v8772 = vunpack.c.l.b16 %v8668
      %v8773 = vunpack.c.l.b16 %v8669
      %v8774 = vunpack.c.l.b16 %v8670
      %v8775 = vpack.c.b16 %v8756, %v8755
      %v8776 = vpack.c.b16 %v8758, %v8757
      %v8777 = vpack.c.b16 %v8760, %v8759
      %v8778 = vpack.c.b16 %v8762, %v8761
      %v8779 = vpack.c.b16 %v8764, %v8763
      %v8780 = vpack.c.b16 %v8766, %v8765
      %v8781 = vpack.c.b16 %v8768, %v8767
      %v8782 = vpack.c.b16 %v8770, %v8769
      %v8783 = vpack.c.b16 %v8772, %v8771
      %v8784 = vpack.c.b16 %v8774, %v8773
      %v8796 = vsel %vm826, %v8672, 0
      %v8799 = vsel %vm826, %v8674, 0
      %v8802 = vsel %vm826, %v8676, 0
      %v8805 = vsel %vm826, %v8678, 0
      %v8808 = vsel %vm826, %v8680, 0
      %v8811 = vsel %vm826, %v8682, 0
      %v8814 = vsel %vm826, %v8684, 0
      %v8817 = vsel %vm826, %v8686, 0
      %v8820 = vsel %vm826, %v8688, 0
      %v8823 = vsel %vm826, %v8690, 0
      %v8826 = vsel %vm826, %v8692, 0
      %v8829 = vsel %vm826, %v8694, 0
      %v8832 = vsel %vm826, %v8696, 0
      %v8835 = vsel %vm826, %v8698, 0
      %v8838 = vsel %vm826, %v8700, 0
      %v8841 = vsel %vm826, %v8702, 0
      %v8844 = vsel %vm826, %v8704, 0
      %v8847 = vsel %vm826, %v8706, 0
      %v8850 = vsel %vm826, %v8708, 0
      %v8853 = vsel %vm826, %v8710, 0
      %v8856 = vsel %vm826, %v8712, 0
      %v8859 = vsel %vm826, %v8714, 0
      %v8862 = vsel %vm826, %v8716, 0
      %v8865 = vsel %vm826, %v8718, 0
      %v8868 = vsel %vm826, %v8720, 0
      %v8871 = vsel %vm826, %v8722, 0
      %v8874 = vsel %vm826, %v8724, 0
      %v8877 = vsel %vm826, %v8726, 0
      %v8880 = vsel %vm826, %v8728, 0
      %v8883 = vsel %vm826, %v8730, 0
      %v8886 = vsel %vm826, %v8732, 0
      %v8889 = vsel %vm826, %v8734, 0
      %8891 = vmatprep.subr.bf16.mxu0 0
      %8892 = vmatpush1.bf16.msra.mxu0 %v8775
      %8893 = vmatprep.subr.bf16.mxu0 0
      %8894 = vmatpush1.bf16.msra.mxu0 %v8776
      %8895 = vmatprep.subr.bf16.mxu0 0
      %8896 = vmatpush1.bf16.msra.mxu0 %v8777
      %8897 = vmatprep.subr.bf16.mxu0 0
      %8898 = vmatpush1.bf16.msra.mxu0 %v8778
      %8899 = vmatprep.subr.bf16.mxu0 0
      %8900 = vmatpush1.bf16.msra.mxu0 %v8779
      %8901 = vmatprep.subr.bf16.mxu0 0
      %8902 = vmatpush1.bf16.msra.mxu0 %v8780
      %8903 = vmatprep.subr.bf16.mxu0 0
      %8904 = vmatpush1.bf16.msra.mxu0 %v8781
      %8905 = vmatprep.subr.bf16.mxu0 0
      %8906 = vmatpush1.bf16.msra.mxu0 %v8782
      %8907 = vmatprep.subr.bf16.mxu0 0
      %8908 = vmatpush1.bf16.msra.mxu0 %v8783
      %8909 = vmatprep.subr.bf16.mxu0 0
      %8910 = vmatpush1.bf16.msra.mxu0 %v8784
      %8911 = vmatprep.subr.bf16.mxu0 0
      %8912 = vmatpush1.bf16.msra.mxu0 0
      %8913 = vmatprep.subr.bf16.mxu0 0
      %8914 = vmatpush1.bf16.msra.mxu0 0
      %8915 = vmatprep.subr.bf16.mxu0 0
      %8916 = vmatpush1.bf16.msra.mxu0 0
      %8917 = vmatprep.subr.bf16.mxu0 0
      %8918 = vmatpush1.bf16.msra.mxu0 0
      %8919 = vmatprep.subr.bf16.mxu0 0
      %8920 = vmatpush1.bf16.msra.mxu0 0
      %8921 = vmatprep.subr.bf16.mxu0 0
      %8922 = vmatpush1.bf16.msra.mxu0 0
      %8923 = vmatprep.mubr.bf16.mxu0 %v8796
      %8924 = vmatmul.mubr.bf16.gmra.mrb[0].mxu0 %v8671
      %v8925 = vpop.f32.mrb[0].mxu0
      %v8926 = vadd.f32 0.0, %v8925
      %v8927 = vpop.f32.mrb[0].mxu0
      %v8928 = vpop.f32.mrb[0].mxu0
      %v8929 = vadd.f32 0.0, %v8928
      %v8930 = vpop.f32.mrb[0].mxu0
      %8931 = vmatprep.mubr.bf16.mxu0 %v8799
      %8932 = vmatmul.mubr.bf16.gmra.mrb[0].mxu0 %v8673
      %v8933 = vpop.f32.mrb[0].mxu0
      %v8934 = vadd.f32 0.0, %v8933
      %v8935 = vpop.f32.mrb[0].mxu0
      %v8936 = vpop.f32.mrb[0].mxu0
      %v8937 = vadd.f32 0.0, %v8936
      %v8938 = vpop.f32.mrb[0].mxu0
      %8939 = vmatprep.mubr.bf16.mxu0 %v8802
      %8940 = vmatmul.mubr.bf16.gmra.mrb[0].mxu0 %v8675
      %v8941 = vpop.f32.mrb[0].mxu0
      %v8942 = vadd.f32 0.0, %v8941
      %v8943 = vpop.f32.mrb[0].mxu0
      %v8944 = vpop.f32.mrb[0].mxu0
      %v8945 = vadd.f32 0.0, %v8944
      %v8946 = vpop.f32.mrb[0].mxu0
      %8947 = vmatprep.mubr.bf16.mxu0 %v8805
      %8948 = vmatmul.mubr.bf16.gmra.mrb[0].mxu0 %v8677
      %v8949 = vpop.f32.mrb[0].mxu0
      %v8950 = vadd.f32 0.0, %v8949
      %v8951 = vpop.f32.mrb[0].mxu0
      %v8952 = vpop.f32.mrb[0].mxu0
      %v8953 = vadd.f32 0.0, %v8952
      %v8954 = vpop.f32.mrb[0].mxu0
      %8955 = vmatprep.mubr.bf16.mxu0 %v8808
      %8956 = vmatmul.mubr.bf16.gmra.mrb[0].mxu0 %v8679
      %v8957 = vpop.f32.mrb[0].mxu0
      %v8958 = vadd.f32 0.0, %v8957
      %v8959 = vpop.f32.mrb[0].mxu0
      %v8960 = vpop.f32.mrb[0].mxu0
      %v8961 = vadd.f32 0.0, %v8960
      %v8962 = vpop.f32.mrb[0].mxu0
      %8963 = vmatprep.mubr.bf16.mxu0 %v8811
      %8964 = vmatmul.mubr.bf16.gmra.mrb[0].mxu0 %v8681
      %v8965 = vpop.f32.mrb[0].mxu0
      %v8966 = vadd.f32 0.0, %v8965
      %v8967 = vpop.f32.mrb[0].mxu0
      %v8968 = vpop.f32.mrb[0].mxu0
      %v8969 = vadd.f32 0.0, %v8968
      %v8970 = vpop.f32.mrb[0].mxu0
      %8971 = vmatprep.mubr.bf16.mxu0 %v8814
      %8972 = vmatmul.mubr.bf16.gmra.mrb[0].mxu0 %v8683
      %v8973 = vpop.f32.mrb[0].mxu0
      %v8974 = vadd.f32 0.0, %v8973
      %v8975 = vpop.f32.mrb[0].mxu0
      %v8976 = vpop.f32.mrb[0].mxu0
      %v8977 = vadd.f32 0.0, %v8976
      %v8978 = vpop.f32.mrb[0].mxu0
      %8979 = vmatprep.mubr.bf16.mxu0 %v8817
      %8980 = vmatmul.mubr.bf16.gmra.mrb[0].mxu0 %v8685
      %v8981 = vpop.f32.mrb[0].mxu0
      %v8982 = vadd.f32 0.0, %v8981
      %v8983 = vpop.f32.mrb[0].mxu0
      %v8984 = vpop.f32.mrb[0].mxu0
      %v8985 = vadd.f32 0.0, %v8984
      %v8986 = vpop.f32.mrb[0].mxu0
      %8987 = vmatprep.mubr.bf16.mxu0 %v8820
      %8988 = vmatmul.mubr.bf16.gmra.mrb[0].mxu0 %v8687
      %v8989 = vpop.f32.mrb[0].mxu0
      %v8990 = vadd.f32 0.0, %v8989
      %v8991 = vpop.f32.mrb[0].mxu0
      %v8992 = vpop.f32.mrb[0].mxu0
      %v8993 = vadd.f32 0.0, %v8992
      %v8994 = vpop.f32.mrb[0].mxu0
      %8995 = vmatprep.mubr.bf16.mxu0 %v8823
      %8996 = vmatmul.mubr.bf16.gmra.mrb[0].mxu0 %v8689
      %v8997 = vpop.f32.mrb[0].mxu0
      %v8998 = vadd.f32 0.0, %v8997
      %v8999 = vpop.f32.mrb[0].mxu0
      %v9000 = vpop.f32.mrb[0].mxu0
      %v9001 = vadd.f32 0.0, %v9000
      %v9002 = vpop.f32.mrb[0].mxu0
      %9003 = vmatprep.mubr.bf16.mxu0 %v8826
      %9004 = vmatmul.mubr.bf16.gmra.mrb[0].mxu0 %v8691
      %v9005 = vpop.f32.mrb[0].mxu0
      %v9006 = vadd.f32 0.0, %v9005
      %v9007 = vpop.f32.mrb[0].mxu0
      %v9008 = vpop.f32.mrb[0].mxu0
      %v9009 = vadd.f32 0.0, %v9008
      %v9010 = vpop.f32.mrb[0].mxu0
      %9011 = vmatprep.mubr.bf16.mxu0 %v8829
      %9012 = vmatmul.mubr.bf16.gmra.mrb[0].mxu0 %v8693
      %v9013 = vpop.f32.mrb[0].mxu0
      %v9014 = vadd.f32 0.0, %v9013
      %v9015 = vpop.f32.mrb[0].mxu0
      %v9016 = vpop.f32.mrb[0].mxu0
      %v9017 = vadd.f32 0.0, %v9016
      %v9018 = vpop.f32.mrb[0].mxu0
      %9019 = vmatprep.mubr.bf16.mxu0 %v8832
      %9020 = vmatmul.mubr.bf16.gmra.mrb[0].mxu0 %v8695
      %v9021 = vpop.f32.mrb[0].mxu0
      %v9022 = vadd.f32 0.0, %v9021
      %v9023 = vpop.f32.mrb[0].mxu0
      %v9024 = vpop.f32.mrb[0].mxu0
      %v9025 = vadd.f32 0.0, %v9024
      %v9026 = vpop.f32.mrb[0].mxu0
      %9027 = vmatprep.mubr.bf16.mxu0 %v8835
      %9028 = vmatmul.mubr.bf16.gmra.mrb[0].mxu0 %v8697
      %v9029 = vpop.f32.mrb[0].mxu0
      %v9030 = vadd.f32 0.0, %v9029
      %v9031 = vpop.f32.mrb[0].mxu0
      %v9032 = vpop.f32.mrb[0].mxu0
      %v9033 = vadd.f32 0.0, %v9032
      %v9034 = vpop.f32.mrb[0].mxu0
      %9035 = vmatprep.mubr.bf16.mxu0 %v8838
      %9036 = vmatmul.mubr.bf16.gmra.mrb[0].mxu0 %v8699
      %v9037 = vpop.f32.mrb[0].mxu0
      %v9038 = vadd.f32 0.0, %v9037
      %v9039 = vpop.f32.mrb[0].mxu0
      %v9040 = vpop.f32.mrb[0].mxu0
      %v9041 = vadd.f32 0.0, %v9040
      %v9042 = vpop.f32.mrb[0].mxu0
      %9043 = vmatprep.mubr.bf16.mxu0 %v8841
      %9044 = vmatmul.mubr.bf16.gmra.mrb[0].mxu0 %v8701
      %v9045 = vpop.f32.mrb[0].mxu0
      %v9046 = vadd.f32 0.0, %v9045
      %v9047 = vpop.f32.mrb[0].mxu0
      %v9048 = vpop.f32.mrb[0].mxu0
      %v9049 = vadd.f32 0.0, %v9048
      %v9050 = vpop.f32.mrb[0].mxu0
      %9051 = vmatprep.mubr.bf16.mxu0 %v8844
      %9052 = vmatmul.mubr.bf16.gmra.mrb[0].mxu0 %v8703
      %v9053 = vpop.f32.mrb[0].mxu0
      %v9054 = vadd.f32 0.0, %v9053
      %v9055 = vpop.f32.mrb[0].mxu0
      %v9056 = vpop.f32.mrb[0].mxu0
      %v9057 = vadd.f32 0.0, %v9056
      %v9058 = vpop.f32.mrb[0].mxu0
      %9059 = vmatprep.mubr.bf16.mxu0 %v8847
      %9060 = vmatmul.mubr.bf16.gmra.mrb[0].mxu0 %v8705
      %v9061 = vpop.f32.mrb[0].mxu0
      %v9062 = vadd.f32 0.0, %v9061
      %v9063 = vpop.f32.mrb[0].mxu0
      %v9064 = vpop.f32.mrb[0].mxu0
      %v9065 = vadd.f32 0.0, %v9064
      %v9066 = vpop.f32.mrb[0].mxu0
      %9067 = vmatprep.mubr.bf16.mxu0 %v8850
      %9068 = vmatmul.mubr.bf16.gmra.mrb[0].mxu0 %v8707
      %v9069 = vpop.f32.mrb[0].mxu0
      %v9070 = vadd.f32 0.0, %v9069
      %v9071 = vpop.f32.mrb[0].mxu0
      %v9072 = vpop.f32.mrb[0].mxu0
      %v9073 = vadd.f32 0.0, %v9072
      %v9074 = vpop.f32.mrb[0].mxu0
      %9075 = vmatprep.mubr.bf16.mxu0 %v8853
      %9076 = vmatmul.mubr.bf16.gmra.mrb[0].mxu0 %v8709
      %v9077 = vpop.f32.mrb[0].mxu0
      %v9078 = vadd.f32 0.0, %v9077
      %v9079 = vpop.f32.mrb[0].mxu0
      %v9080 = vpop.f32.mrb[0].mxu0
      %v9081 = vadd.f32 0.0, %v9080
      %v9082 = vpop.f32.mrb[0].mxu0
      %9083 = vmatprep.mubr.bf16.mxu0 %v8856
      %9084 = vmatmul.mubr.bf16.gmra.mrb[0].mxu0 %v8711
      %v9085 = vpop.f32.mrb[0].mxu0
      %v9086 = vadd.f32 0.0, %v9085
      %v9087 = vpop.f32.mrb[0].mxu0
      %v9088 = vpop.f32.mrb[0].mxu0
      %v9089 = vadd.f32 0.0, %v9088
      %v9090 = vpop.f32.mrb[0].mxu0
      %9091 = vmatprep.mubr.bf16.mxu0 %v8859
      %9092 = vmatmul.mubr.bf16.gmra.mrb[0].mxu0 %v8713
      %v9093 = vpop.f32.mrb[0].mxu0
      %v9094 = vadd.f32 0.0, %v9093
      %v9095 = vpop.f32.mrb[0].mxu0
      %v9096 = vpop.f32.mrb[0].mxu0
      %v9097 = vadd.f32 0.0, %v9096
      %v9098 = vpop.f32.mrb[0].mxu0
      %9099 = vmatprep.mubr.bf16.mxu0 %v8862
      %9100 = vmatmul.mubr.bf16.gmra.mrb[0].mxu0 %v8715
      %v9101 = vpop.f32.mrb[0].mxu0
      %v9102 = vadd.f32 0.0, %v9101
      %v9103 = vpop.f32.mrb[0].mxu0
      %v9104 = vpop.f32.mrb[0].mxu0
      %v9105 = vadd.f32 0.0, %v9104
      %v9106 = vpop.f32.mrb[0].mxu0
      %9107 = vmatprep.mubr.bf16.mxu0 %v8865
      %9108 = vmatmul.mubr.bf16.gmra.mrb[0].mxu0 %v8717
      %v9109 = vpop.f32.mrb[0].mxu0
      %v9110 = vadd.f32 0.0, %v9109
      %v9111 = vpop.f32.mrb[0].mxu0
      %v9112 = vpop.f32.mrb[0].mxu0
      %v9113 = vadd.f32 0.0, %v9112
      %v9114 = vpop.f32.mrb[0].mxu0
      %9115 = vmatprep.mubr.bf16.mxu0 %v8868
      %9116 = vmatmul.mubr.bf16.gmra.mrb[0].mxu0 %v8719
      %v9117 = vpop.f32.mrb[0].mxu0
      %v9118 = vadd.f32 0.0, %v9117
      %v9119 = vpop.f32.mrb[0].mxu0
      %v9120 = vpop.f32.mrb[0].mxu0
      %v9121 = vadd.f32 0.0, %v9120
      %v9122 = vpop.f32.mrb[0].mxu0
      %9123 = vmatprep.mubr.bf16.mxu0 %v8871
      %9124 = vmatmul.mubr.bf16.gmra.mrb[0].mxu0 %v8721
      %v9125 = vpop.f32.mrb[0].mxu0
      %v9126 = vadd.f32 0.0, %v9125
      %v9127 = vpop.f32.mrb[0].mxu0
      %v9128 = vpop.f32.mrb[0].mxu0
      %v9129 = vadd.f32 0.0, %v9128
      %v9130 = vpop.f32.mrb[0].mxu0
      %9131 = vmatprep.mubr.bf16.mxu0 %v8874
      %9132 = vmatmul.mubr.bf16.gmra.mrb[0].mxu0 %v8723
      %v9133 = vpop.f32.mrb[0].mxu0
      %v9134 = vadd.f32 0.0, %v9133
      %v9135 = vpop.f32.mrb[0].mxu0
      %v9136 = vpop.f32.mrb[0].mxu0
      %v9137 = vadd.f32 0.0, %v9136
      %v9138 = vpop.f32.mrb[0].mxu0
      %9139 = vmatprep.mubr.bf16.mxu0 %v8877
      %9140 = vmatmul.mubr.bf16.gmra.mrb[0].mxu0 %v8725
      %v9141 = vpop.f32.mrb[0].mxu0
      %v9142 = vadd.f32 0.0, %v9141
      %v9143 = vpop.f32.mrb[0].mxu0
      %v9144 = vpop.f32.mrb[0].mxu0
      %v9145 = vadd.f32 0.0, %v9144
      %v9146 = vpop.f32.mrb[0].mxu0
      %9147 = vmatprep.mubr.bf16.mxu0 %v8880
      %9148 = vmatmul.mubr.bf16.gmra.mrb[0].mxu0 %v8727
      %v9149 = vpop.f32.mrb[0].mxu0
      %v9150 = vadd.f32 0.0, %v9149
      %v9151 = vpop.f32.mrb[0].mxu0
      %v9152 = vpop.f32.mrb[0].mxu0
      %v9153 = vadd.f32 0.0, %v9152
      %v9154 = vpop.f32.mrb[0].mxu0
      %9155 = vmatprep.mubr.bf16.mxu0 %v8883
      %9156 = vmatmul.mubr.bf16.gmra.mrb[0].mxu0 %v8729
      %v9157 = vpop.f32.mrb[0].mxu0
      %v9158 = vadd.f32 0.0, %v9157
      %v9159 = vpop.f32.mrb[0].mxu0
      %v9160 = vpop.f32.mrb[0].mxu0
      %v9161 = vadd.f32 0.0, %v9160
      %v9162 = vpop.f32.mrb[0].mxu0
      %9163 = vmatprep.mubr.bf16.mxu0 %v8886
      %9164 = vmatmul.mubr.bf16.gmra.mrb[0].mxu0 %v8731
      %v9165 = vpop.f32.mrb[0].mxu0
      %v9166 = vadd.f32 0.0, %v9165
      %v9167 = vpop.f32.mrb[0].mxu0
      %v9168 = vpop.f32.mrb[0].mxu0
      %v9169 = vadd.f32 0.0, %v9168
      %v9170 = vpop.f32.mrb[0].mxu0
      %9171 = vmatprep.mubr.bf16.mxu0 %v8889
      %9172 = vmatmul.mubr.bf16.gmra.mrb[0].mxu0 %v8733
      %v9173 = vpop.f32.mrb[0].mxu0
      %v9174 = vadd.f32 0.0, %v9173
      %v9175 = vpop.f32.mrb[0].mxu0
      %v9176 = vpop.f32.mrb[0].mxu0
      %v9177 = vpop.f32.mrb[0].mxu0
      %9178 = vdwg.mxu0
      %s9179 = scalar_lea.vmem %s6, 80
      %v9180 = vld [vmem:[%s9179] sm:$0xf]
      %v9181 = vld [vmem:[%s9179 + $0x4] sm:$0xf]
      %v9182 = vld [vmem:[%s9179 + $0x8] sm:$0xf]
      %v9183 = vld [vmem:[%s9179 + $0xc] sm:$0xf]
      %v9184 = vld [vmem:[%s9179 + $0x10] sm:$0xf]
      %v9185 = vld [vmem:[%s9179 + $0x14] sm:$0xf]
      %v9186 = vld [vmem:[%s9179 + $0x18] sm:$0xf]
      %v9187 = vld [vmem:[%s9179 + $0x1c] sm:$0xf]
      %v9188 = vld [vmem:[%s9179 + $0x20] sm:$0xf]
      %v9189 = vld [vmem:[%s9179 + $0x24] sm:$0xf]
      %v9190 = vld [vmem:[%s9179 + $0x28] sm:$0xf]
      %v9191 = vld [vmem:[%s9179 + $0x2c] sm:$0xf]
      %v9192 = vld [vmem:[%s9179 + $0x30] sm:$0xf]
      %v9193 = vld [vmem:[%s9179 + $0x34] sm:$0xf]
      %v9194 = vld [vmem:[%s9179 + $0x38] sm:$0xf]
      %v9195 = vld [vmem:[%s9179 + $0x3c] sm:$0xf]
      %v9196 = vld [vmem:[%s9179 + $0x40] sm:$0xf]
      %v9197 = vld [vmem:[%s9179 + $0x44] sm:$0xf]
      %v9198 = vld [vmem:[%s9179 + $0x48] sm:$0xf]
      %v9199 = vld [vmem:[%s9179 + $0x4c] sm:$0xf]
      %v9220 = vunpack.c.l.b16 %v9180
      %v9221 = vunpack.c.l.b16 %v9181
      %v9222 = vunpack.c.l.b16 %v9182
      %v9223 = vunpack.c.l.b16 %v9183
      %v9224 = vunpack.c.l.b16 %v9184
      %v9225 = vunpack.c.l.b16 %v9185
      %v9226 = vunpack.c.l.b16 %v9186
      %v9227 = vunpack.c.l.b16 %v9187
      %v9228 = vunpack.c.l.b16 %v9188
      %v9229 = vunpack.c.l.b16 %v9189
      %v9230 = vunpack.c.l.b16 %v9190
      %v9231 = vunpack.c.l.b16 %v9191
      %v9232 = vunpack.c.l.b16 %v9192
      %v9233 = vunpack.c.l.b16 %v9193
      %v9234 = vunpack.c.l.b16 %v9194
      %v9235 = vunpack.c.l.b16 %v9195
      %v9236 = vunpack.c.l.b16 %v9196
      %v9237 = vunpack.c.l.b16 %v9197
      %v9238 = vunpack.c.l.b16 %v9198
      %v9239 = vunpack.c.l.b16 %v9199
      %v9240 = vpack.c.b16 %v9221, %v9220
      %v9241 = vpack.c.b16 %v9223, %v9222
      %v9242 = vpack.c.b16 %v9225, %v9224
      %v9243 = vpack.c.b16 %v9227, %v9226
      %v9244 = vpack.c.b16 %v9229, %v9228
      %v9245 = vpack.c.b16 %v9231, %v9230
      %v9246 = vpack.c.b16 %v9233, %v9232
      %v9247 = vpack.c.b16 %v9235, %v9234
      %v9248 = vpack.c.b16 %v9237, %v9236
      %v9249 = vpack.c.b16 %v9239, %v9238
      %9260 = vmatprep.subr.bf16.mxu0 0
      %9261 = vmatpush1.bf16.msra.mxu0 %v9240
      %9262 = vmatprep.subr.bf16.mxu0 0
      %9263 = vmatpush1.bf16.msra.mxu0 %v9241
      %9264 = vmatprep.subr.bf16.mxu0 0
      %9265 = vmatpush1.bf16.msra.mxu0 %v9242
      %9266 = vmatprep.subr.bf16.mxu0 0
      %9267 = vmatpush1.bf16.msra.mxu0 %v9243
      %9268 = vmatprep.subr.bf16.mxu0 0
      %9269 = vmatpush1.bf16.msra.mxu0 %v9244
      %9270 = vmatprep.subr.bf16.mxu0 0
      %9271 = vmatpush1.bf16.msra.mxu0 %v9245
      %9272 = vmatprep.subr.bf16.mxu0 0
      %9273 = vmatpush1.bf16.msra.mxu0 %v9246
      %9274 = vmatprep.subr.bf16.mxu0 0
      %9275 = vmatpush1.bf16.msra.mxu0 %v9247
      %9276 = vmatprep.subr.bf16.mxu0 0
      %9277 = vmatpush1.bf16.msra.mxu0 %v9248
      %9278 = vmatprep.subr.bf16.mxu0 0
      %9279 = vmatpush1.bf16.msra.mxu0 %v9249
      %9280 = vmatprep.subr.bf16.mxu0 0
      %9281 = vmatpush1.bf16.msra.mxu0 0
      %9282 = vmatprep.subr.bf16.mxu0 0
      %9283 = vmatpush1.bf16.msra.mxu0 0
      %9284 = vmatprep.subr.bf16.mxu0 0
      %9285 = vmatpush1.bf16.msra.mxu0 0
      %9286 = vmatprep.subr.bf16.mxu0 0
      %9287 = vmatpush1.bf16.msra.mxu0 0
      %9288 = vmatprep.subr.bf16.mxu0 0
      %9289 = vmatpush1.bf16.msra.mxu0 0
      %9290 = vmatprep.subr.bf16.mxu0 0
      %9291 = vmatpush1.bf16.msra.mxu0 0
      %9292 = vmatprep.mubr.bf16.mxu0 %v8796
      %9293 = vmatmul.mubr.bf16.gmra.mrb[0].mxu0 %v8671
      %v9294 = vpop.f32.mrb[0].mxu0
      %v9295 = vadd.f32 0.0, %v9294
      %v9296 = vpop.f32.mrb[0].mxu0
      %v9297 = vpop.f32.mrb[0].mxu0
      %v9298 = vadd.f32 0.0, %v9297
      %v9299 = vpop.f32.mrb[0].mxu0
      %9300 = vmatprep.mubr.bf16.mxu0 %v8799
      %9301 = vmatmul.mubr.bf16.gmra.mrb[0].mxu0 %v8673
      %v9302 = vpop.f32.mrb[0].mxu0
      %v9303 = vadd.f32 0.0, %v9302
      %v9304 = vpop.f32.mrb[0].mxu0
      %v9305 = vpop.f32.mrb[0].mxu0
      %v9306 = vadd.f32 0.0, %v9305
      %v9307 = vpop.f32.mrb[0].mxu0
      %9308 = vmatprep.mubr.bf16.mxu0 %v8802
      %9309 = vmatmul.mubr.bf16.gmra.mrb[0].mxu0 %v8675
      %v9310 = vpop.f32.mrb[0].mxu0
      %v9311 = vadd.f32 0.0, %v9310
      %v9312 = vpop.f32.mrb[0].mxu0
      %v9313 = vpop.f32.mrb[0].mxu0
      %v9314 = vadd.f32 0.0, %v9313
      %v9315 = vpop.f32.mrb[0].mxu0
      %9316 = vmatprep.mubr.bf16.mxu0 %v8805
      %9317 = vmatmul.mubr.bf16.gmra.mrb[0].mxu0 %v8677
      %v9318 = vpop.f32.mrb[0].mxu0
      %v9319 = vadd.f32 0.0, %v9318
      %v9320 = vpop.f32.mrb[0].mxu0
      %v9321 = vpop.f32.mrb[0].mxu0
      %v9322 = vadd.f32 0.0, %v9321
      %v9323 = vpop.f32.mrb[0].mxu0
      %9324 = vmatprep.mubr.bf16.mxu0 %v8808
      %9325 = vmatmul.mubr.bf16.gmra.mrb[0].mxu0 %v8679
      %v9326 = vpop.f32.mrb[0].mxu0
      %v9327 = vadd.f32 0.0, %v9326
      %v9328 = vpop.f32.mrb[0].mxu0
      %v9329 = vpop.f32.mrb[0].mxu0
      %v9330 = vadd.f32 0.0, %v9329
      %v9331 = vpop.f32.mrb[0].mxu0
      %9332 = vmatprep.mubr.bf16.mxu0 %v8811
      %9333 = vmatmul.mubr.bf16.gmra.mrb[0].mxu0 %v8681
      %v9334 = vpop.f32.mrb[0].mxu0
      %v9335 = vadd.f32 0.0, %v9334
      %v9336 = vpop.f32.mrb[0].mxu0
      %v9337 = vpop.f32.mrb[0].mxu0
      %v9338 = vadd.f32 0.0, %v9337
      %v9339 = vpop.f32.mrb[0].mxu0
      %9340 = vmatprep.mubr.bf16.mxu0 %v8814
      %9341 = vmatmul.mubr.bf16.gmra.mrb[0].mxu0 %v8683
      %v9342 = vpop.f32.mrb[0].mxu0
      %v9343 = vadd.f32 0.0, %v9342
      %v9344 = vpop.f32.mrb[0].mxu0
      %v9345 = vpop.f32.mrb[0].mxu0
      %v9346 = vadd.f32 0.0, %v9345
      %v9347 = vpop.f32.mrb[0].mxu0
      %9348 = vmatprep.mubr.bf16.mxu0 %v8817
      %9349 = vmatmul.mubr.bf16.gmra.mrb[0].mxu0 %v8685
      %v9350 = vpop.f32.mrb[0].mxu0
      %v9351 = vadd.f32 0.0, %v9350
      %v9352 = vpop.f32.mrb[0].mxu0
      %v9353 = vpop.f32.mrb[0].mxu0
      %v9354 = vadd.f32 0.0, %v9353
      %v9355 = vpop.f32.mrb[0].mxu0
      %9356 = vmatprep.mubr.bf16.mxu0 %v8820
      %9357 = vmatmul.mubr.bf16.gmra.mrb[0].mxu0 %v8687
      %v9358 = vpop.f32.mrb[0].mxu0
      %v9359 = vadd.f32 0.0, %v9358
      %v9360 = vpop.f32.mrb[0].mxu0
      %v9361 = vpop.f32.mrb[0].mxu0
      %v9362 = vadd.f32 0.0, %v9361
      %v9363 = vpop.f32.mrb[0].mxu0
      %9364 = vmatprep.mubr.bf16.mxu0 %v8823
      %9365 = vmatmul.mubr.bf16.gmra.mrb[0].mxu0 %v8689
      %v9366 = vpop.f32.mrb[0].mxu0
      %v9367 = vadd.f32 0.0, %v9366
      %v9368 = vpop.f32.mrb[0].mxu0
      %v9369 = vpop.f32.mrb[0].mxu0
      %v9370 = vadd.f32 0.0, %v9369
      %v9371 = vpop.f32.mrb[0].mxu0
      %9372 = vmatprep.mubr.bf16.mxu0 %v8826
      %9373 = vmatmul.mubr.bf16.gmra.mrb[0].mxu0 %v8691
      %v9374 = vpop.f32.mrb[0].mxu0
      %v9375 = vadd.f32 0.0, %v9374
      %v9376 = vpop.f32.mrb[0].mxu0
      %v9377 = vpop.f32.mrb[0].mxu0
      %v9378 = vadd.f32 0.0, %v9377
      %v9379 = vpop.f32.mrb[0].mxu0
      %9380 = vmatprep.mubr.bf16.mxu0 %v8829
      %9381 = vmatmul.mubr.bf16.gmra.mrb[0].mxu0 %v8693
      %v9382 = vpop.f32.mrb[0].mxu0
      %v9383 = vadd.f32 0.0, %v9382
      %v9384 = vpop.f32.mrb[0].mxu0
      %v9385 = vpop.f32.mrb[0].mxu0
      %v9386 = vadd.f32 0.0, %v9385
      %v9387 = vpop.f32.mrb[0].mxu0
      %9388 = vmatprep.mubr.bf16.mxu0 %v8832
      %9389 = vmatmul.mubr.bf16.gmra.mrb[0].mxu0 %v8695
      %v9390 = vpop.f32.mrb[0].mxu0
      %v9391 = vadd.f32 0.0, %v9390
      %v9392 = vpop.f32.mrb[0].mxu0
      %v9393 = vpop.f32.mrb[0].mxu0
      %v9394 = vadd.f32 0.0, %v9393
      %v9395 = vpop.f32.mrb[0].mxu0
      %9396 = vmatprep.mubr.bf16.mxu0 %v8835
      %9397 = vmatmul.mubr.bf16.gmra.mrb[0].mxu0 %v8697
      %v9398 = vpop.f32.mrb[0].mxu0
      %v9399 = vadd.f32 0.0, %v9398
      %v9400 = vpop.f32.mrb[0].mxu0
      %v9401 = vpop.f32.mrb[0].mxu0
      %v9402 = vadd.f32 0.0, %v9401
      %v9403 = vpop.f32.mrb[0].mxu0
      %9404 = vmatprep.mubr.bf16.mxu0 %v8838
      %9405 = vmatmul.mubr.bf16.gmra.mrb[0].mxu0 %v8699
      %v9406 = vpop.f32.mrb[0].mxu0
      %v9407 = vadd.f32 0.0, %v9406
      %v9408 = vpop.f32.mrb[0].mxu0
      %v9409 = vpop.f32.mrb[0].mxu0
      %v9410 = vadd.f32 0.0, %v9409
      %v9411 = vpop.f32.mrb[0].mxu0
      %9412 = vmatprep.mubr.bf16.mxu0 %v8841
      %9413 = vmatmul.mubr.bf16.gmra.mrb[0].mxu0 %v8701
      %v9414 = vpop.f32.mrb[0].mxu0
      %v9415 = vadd.f32 0.0, %v9414
      %v9416 = vpop.f32.mrb[0].mxu0
      %v9417 = vpop.f32.mrb[0].mxu0
      %v9418 = vadd.f32 0.0, %v9417
      %v9419 = vpop.f32.mrb[0].mxu0
      %9420 = vmatprep.mubr.bf16.mxu0 %v8844
      %9421 = vmatmul.mubr.bf16.gmra.mrb[0].mxu0 %v8703
      %v9422 = vpop.f32.mrb[0].mxu0
      %v9423 = vadd.f32 0.0, %v9422
      %v9424 = vpop.f32.mrb[0].mxu0
      %v9425 = vpop.f32.mrb[0].mxu0
      %v9426 = vadd.f32 0.0, %v9425
      %v9427 = vpop.f32.mrb[0].mxu0
      %9428 = vmatprep.mubr.bf16.mxu0 %v8847
      %9429 = vmatmul.mubr.bf16.gmra.mrb[0].mxu0 %v8705
      %v9430 = vpop.f32.mrb[0].mxu0
      %v9431 = vadd.f32 0.0, %v9430
      %v9432 = vpop.f32.mrb[0].mxu0
      %v9433 = vpop.f32.mrb[0].mxu0
      %v9434 = vadd.f32 0.0, %v9433
      %v9435 = vpop.f32.mrb[0].mxu0
      %9436 = vmatprep.mubr.bf16.mxu0 %v8850
      %9437 = vmatmul.mubr.bf16.gmra.mrb[0].mxu0 %v8707
      %v9438 = vpop.f32.mrb[0].mxu0
      %v9439 = vadd.f32 0.0, %v9438
      %v9440 = vpop.f32.mrb[0].mxu0
      %v9441 = vpop.f32.mrb[0].mxu0
      %v9442 = vadd.f32 0.0, %v9441
      %v9443 = vpop.f32.mrb[0].mxu0
      %9444 = vmatprep.mubr.bf16.mxu0 %v8853
      %9445 = vmatmul.mubr.bf16.gmra.mrb[0].mxu0 %v8709
      %v9446 = vpop.f32.mrb[0].mxu0
      %v9447 = vadd.f32 0.0, %v9446
      %v9448 = vpop.f32.mrb[0].mxu0
      %v9449 = vpop.f32.mrb[0].mxu0
      %v9450 = vadd.f32 0.0, %v9449
      %v9451 = vpop.f32.mrb[0].mxu0
      %9452 = vmatprep.mubr.bf16.mxu0 %v8856
      %9453 = vmatmul.mubr.bf16.gmra.mrb[0].mxu0 %v8711
      %v9454 = vpop.f32.mrb[0].mxu0
      %v9455 = vadd.f32 0.0, %v9454
      %v9456 = vpop.f32.mrb[0].mxu0
      %v9457 = vpop.f32.mrb[0].mxu0
      %v9458 = vadd.f32 0.0, %v9457
      %v9459 = vpop.f32.mrb[0].mxu0
      %9460 = vmatprep.mubr.bf16.mxu0 %v8859
      %9461 = vmatmul.mubr.bf16.gmra.mrb[0].mxu0 %v8713
      %v9462 = vpop.f32.mrb[0].mxu0
      %v9463 = vadd.f32 0.0, %v9462
      %v9464 = vpop.f32.mrb[0].mxu0
      %v9465 = vpop.f32.mrb[0].mxu0
      %v9466 = vadd.f32 0.0, %v9465
      %v9467 = vpop.f32.mrb[0].mxu0
      %9468 = vmatprep.mubr.bf16.mxu0 %v8862
      %9469 = vmatmul.mubr.bf16.gmra.mrb[0].mxu0 %v8715
      %v9470 = vpop.f32.mrb[0].mxu0
      %v9471 = vadd.f32 0.0, %v9470
      %v9472 = vpop.f32.mrb[0].mxu0
      %v9473 = vpop.f32.mrb[0].mxu0
      %v9474 = vadd.f32 0.0, %v9473
      %v9475 = vpop.f32.mrb[0].mxu0
      %9476 = vmatprep.mubr.bf16.mxu0 %v8865
      %9477 = vmatmul.mubr.bf16.gmra.mrb[0].mxu0 %v8717
      %v9478 = vpop.f32.mrb[0].mxu0
      %v9479 = vadd.f32 0.0, %v9478
      %v9480 = vpop.f32.mrb[0].mxu0
      %v9481 = vpop.f32.mrb[0].mxu0
      %v9482 = vadd.f32 0.0, %v9481
      %v9483 = vpop.f32.mrb[0].mxu0
      %9484 = vmatprep.mubr.bf16.mxu0 %v8868
      %9485 = vmatmul.mubr.bf16.gmra.mrb[0].mxu0 %v8719
      %v9486 = vpop.f32.mrb[0].mxu0
      %v9487 = vadd.f32 0.0, %v9486
      %v9488 = vpop.f32.mrb[0].mxu0
      %v9489 = vpop.f32.mrb[0].mxu0
      %v9490 = vadd.f32 0.0, %v9489
      %v9491 = vpop.f32.mrb[0].mxu0
      %9492 = vmatprep.mubr.bf16.mxu0 %v8871
      %9493 = vmatmul.mubr.bf16.gmra.mrb[0].mxu0 %v8721
      %v9494 = vpop.f32.mrb[0].mxu0
      %v9495 = vadd.f32 0.0, %v9494
      %v9496 = vpop.f32.mrb[0].mxu0
      %v9497 = vpop.f32.mrb[0].mxu0
      %v9498 = vadd.f32 0.0, %v9497
      %v9499 = vpop.f32.mrb[0].mxu0
      %9500 = vmatprep.mubr.bf16.mxu0 %v8874
      %9501 = vmatmul.mubr.bf16.gmra.mrb[0].mxu0 %v8723
      %v9502 = vpop.f32.mrb[0].mxu0
      %v9503 = vadd.f32 0.0, %v9502
      %v9504 = vpop.f32.mrb[0].mxu0
      %v9505 = vpop.f32.mrb[0].mxu0
      %v9506 = vadd.f32 0.0, %v9505
      %v9507 = vpop.f32.mrb[0].mxu0
      %9508 = vmatprep.mubr.bf16.mxu0 %v8877
      %9509 = vmatmul.mubr.bf16.gmra.mrb[0].mxu0 %v8725
      %v9510 = vpop.f32.mrb[0].mxu0
      %v9511 = vadd.f32 0.0, %v9510
      %v9512 = vpop.f32.mrb[0].mxu0
      %v9513 = vpop.f32.mrb[0].mxu0
      %v9514 = vadd.f32 0.0, %v9513
      %v9515 = vpop.f32.mrb[0].mxu0
      %9516 = vmatprep.mubr.bf16.mxu0 %v8880
      %9517 = vmatmul.mubr.bf16.gmra.mrb[0].mxu0 %v8727
      %v9518 = vpop.f32.mrb[0].mxu0
      %v9519 = vadd.f32 0.0, %v9518
      %v9520 = vpop.f32.mrb[0].mxu0
      %v9521 = vpop.f32.mrb[0].mxu0
      %v9522 = vadd.f32 0.0, %v9521
      %v9523 = vpop.f32.mrb[0].mxu0
      %9524 = vmatprep.mubr.bf16.mxu0 %v8883
      %9525 = vmatmul.mubr.bf16.gmra.mrb[0].mxu0 %v8729
      %v9526 = vpop.f32.mrb[0].mxu0
      %v9527 = vadd.f32 0.0, %v9526
      %v9528 = vpop.f32.mrb[0].mxu0
      %v9529 = vpop.f32.mrb[0].mxu0
      %v9530 = vadd.f32 0.0, %v9529
      %v9531 = vpop.f32.mrb[0].mxu0
      %9532 = vmatprep.mubr.bf16.mxu0 %v8886
      %9533 = vmatmul.mubr.bf16.gmra.mrb[0].mxu0 %v8731
      %v9534 = vpop.f32.mrb[0].mxu0
      %v9535 = vadd.f32 0.0, %v9534
      %v9536 = vpop.f32.mrb[0].mxu0
      %v9537 = vpop.f32.mrb[0].mxu0
      %v9538 = vadd.f32 0.0, %v9537
      %v9539 = vpop.f32.mrb[0].mxu0
      %9540 = vmatprep.mubr.bf16.mxu0 %v8889
      %9541 = vmatmul.mubr.bf16.gmra.mrb[0].mxu0 %v8733
      %v9542 = vpop.f32.mrb[0].mxu0
      %v9543 = vadd.f32 0.0, %v9542
      %v9544 = vpop.f32.mrb[0].mxu0
      %v9545 = vpop.f32.mrb[0].mxu0
      %v9546 = vpop.f32.mrb[0].mxu0
      %9547 = vdwg.mxu0
      %v9548 = vmax.f32 %v8926, %v9295
      %v9549 = vmax.f32 %v8929, %v9298
      %v9550 = vmax.f32 %v8934, %v9303
      %v9551 = vmax.f32 %v8937, %v9306
      %v9552 = vmax.f32 %v8942, %v9311
      %v9553 = vmax.f32 %v8945, %v9314
      %v9554 = vmax.f32 %v8950, %v9319
      %v9555 = vmax.f32 %v8953, %v9322
      %v9556 = vmax.f32 %v8958, %v9327
      %v9557 = vmax.f32 %v8961, %v9330
      %v9558 = vmax.f32 %v8966, %v9335
      %v9559 = vmax.f32 %v8969, %v9338
      %v9560 = vmax.f32 %v8974, %v9343
      %v9561 = vmax.f32 %v8977, %v9346
      %v9562 = vmax.f32 %v8982, %v9351
      %v9563 = vmax.f32 %v8985, %v9354
      %v9564 = vmax.f32 %v8990, %v9359
      %v9565 = vmax.f32 %v8993, %v9362
      %v9566 = vmax.f32 %v8998, %v9367
      %v9567 = vmax.f32 %v9001, %v9370
      %v9568 = vmax.f32 %v9006, %v9375
      %v9569 = vmax.f32 %v9009, %v9378
      %v9570 = vmax.f32 %v9014, %v9383
      %v9571 = vmax.f32 %v9017, %v9386
      %v9572 = vmax.f32 %v9022, %v9391
      %v9573 = vmax.f32 %v9025, %v9394
      %v9574 = vmax.f32 %v9030, %v9399
      %v9575 = vmax.f32 %v9033, %v9402
      %v9576 = vmax.f32 %v9038, %v9407
      %v9577 = vmax.f32 %v9041, %v9410
      %v9578 = vmax.f32 %v9046, %v9415
      %v9579 = vmax.f32 %v9049, %v9418
      %v9580 = vmax.f32 %v9054, %v9423
      %v9581 = vmax.f32 %v9057, %v9426
      %v9582 = vmax.f32 %v9062, %v9431
      %v9583 = vmax.f32 %v9065, %v9434
      %v9584 = vmax.f32 %v9070, %v9439
      %v9585 = vmax.f32 %v9073, %v9442
      %v9586 = vmax.f32 %v9078, %v9447
      %v9587 = vmax.f32 %v9081, %v9450
      %v9588 = vmax.f32 %v9086, %v9455
      %v9589 = vmax.f32 %v9089, %v9458
      %v9590 = vmax.f32 %v9094, %v9463
      %v9591 = vmax.f32 %v9097, %v9466
      %v9592 = vmax.f32 %v9102, %v9471
      %v9593 = vmax.f32 %v9105, %v9474
      %v9594 = vmax.f32 %v9110, %v9479
      %v9595 = vmax.f32 %v9113, %v9482
      %v9596 = vmax.f32 %v9118, %v9487
      %v9597 = vmax.f32 %v9121, %v9490
      %v9598 = vmax.f32 %v9126, %v9495
      %v9599 = vmax.f32 %v9129, %v9498
      %v9600 = vmax.f32 %v9134, %v9503
      %v9601 = vmax.f32 %v9137, %v9506
      %v9602 = vmax.f32 %v9142, %v9511
      %v9603 = vmax.f32 %v9145, %v9514
      %v9604 = vmax.f32 %v9150, %v9519
      %v9605 = vmax.f32 %v9153, %v9522
      %v9606 = vmax.f32 %v9158, %v9527
      %v9607 = vmax.f32 %v9161, %v9530
      %v9608 = vmax.f32 %v9166, %v9535
      %v9609 = vmax.f32 %v9169, %v9538
      %v9610 = vmax.f32 %v9174, %v9543
      %vm9674 = vcmask 1045504
      %v9675 = vrot.slane %v9548, 2
      %v9676 = vrot.slane %v9549, 2
      %v9677 = vsel %vm9674, %v9675, %v9676
      %v9678 = vrot.slane %v9550, 2
      %v9679 = vsel %vm9674, %v9676, %v9678
      %v9680 = vrot.slane %v9551, 2
      %v9681 = vsel %vm9674, %v9678, %v9680
      %v9682 = vrot.slane %v9552, 2
      %v9683 = vsel %vm9674, %v9680, %v9682
      %v9684 = vrot.slane %v9553, 2
      %v9685 = vsel %vm9674, %v9682, %v9684
      %v9686 = vrot.slane %v9554, 2
      %v9687 = vsel %vm9674, %v9684, %v9686
      %v9688 = vrot.slane %v9555, 2
      %v9689 = vsel %vm9674, %v9686, %v9688
      %v9690 = vrot.slane %v9556, 2
      %v9691 = vsel %vm9674, %v9688, %v9690
      %v9692 = vrot.slane %v9557, 2
      %v9693 = vsel %vm9674, %v9690, %v9692
      %v9694 = vrot.slane %v9558, 2
      %v9695 = vsel %vm9674, %v9692, %v9694
      %v9696 = vrot.slane %v9559, 2
      %v9697 = vsel %vm9674, %v9694, %v9696
      %v9698 = vrot.slane %v9560, 2
      %v9699 = vsel %vm9674, %v9696, %v9698
      %v9700 = vrot.slane %v9561, 2
      %v9701 = vsel %vm9674, %v9698, %v9700
      %v9702 = vrot.slane %v9562, 2
      %v9703 = vsel %vm9674, %v9700, %v9702
      %v9704 = vrot.slane %v9563, 2
      %v9705 = vsel %vm9674, %v9702, %v9704
      %v9706 = vrot.slane %v9564, 2
      %v9707 = vsel %vm9674, %v9704, %v9706
      %v9708 = vrot.slane %v9565, 2
      %v9709 = vsel %vm9674, %v9706, %v9708
      %v9710 = vrot.slane %v9566, 2
      %v9711 = vsel %vm9674, %v9708, %v9710
      %v9712 = vrot.slane %v9567, 2
      %v9713 = vsel %vm9674, %v9710, %v9712
      %v9714 = vrot.slane %v9568, 2
      %v9715 = vsel %vm9674, %v9712, %v9714
      %v9716 = vrot.slane %v9569, 2
      %v9717 = vsel %vm9674, %v9714, %v9716
      %v9718 = vrot.slane %v9570, 2
      %v9719 = vsel %vm9674, %v9716, %v9718
      %v9720 = vrot.slane %v9571, 2
      %v9721 = vsel %vm9674, %v9718, %v9720
      %v9722 = vrot.slane %v9572, 2
      %v9723 = vsel %vm9674, %v9720, %v9722
      %v9724 = vrot.slane %v9573, 2
      %v9725 = vsel %vm9674, %v9722, %v9724
      %v9726 = vrot.slane %v9574, 2
      %v9727 = vsel %vm9674, %v9724, %v9726
      %v9728 = vrot.slane %v9575, 2
      %v9729 = vsel %vm9674, %v9726, %v9728
      %v9730 = vrot.slane %v9576, 2
      %v9731 = vsel %vm9674, %v9728, %v9730
      %v9732 = vrot.slane %v9577, 2
      %v9733 = vsel %vm9674, %v9730, %v9732
      %v9734 = vrot.slane %v9578, 2
      %v9735 = vsel %vm9674, %v9732, %v9734
      %v9736 = vrot.slane %v9579, 2
      %v9737 = vsel %vm9674, %v9734, %v9736
      %v9738 = vrot.slane %v9580, 2
      %v9739 = vsel %vm9674, %v9736, %v9738
      %v9740 = vrot.slane %v9581, 2
      %v9741 = vsel %vm9674, %v9738, %v9740
      %v9742 = vrot.slane %v9582, 2
      %v9743 = vsel %vm9674, %v9740, %v9742
      %v9744 = vrot.slane %v9583, 2
      %v9745 = vsel %vm9674, %v9742, %v9744
      %v9746 = vrot.slane %v9584, 2
      %v9747 = vsel %vm9674, %v9744, %v9746
      %v9748 = vrot.slane %v9585, 2
      %v9749 = vsel %vm9674, %v9746, %v9748
      %v9750 = vrot.slane %v9586, 2
      %v9751 = vsel %vm9674, %v9748, %v9750
      %v9752 = vrot.slane %v9587, 2
      %v9753 = vsel %vm9674, %v9750, %v9752
      %v9754 = vrot.slane %v9588, 2
      %v9755 = vsel %vm9674, %v9752, %v9754
      %v9756 = vrot.slane %v9589, 2
      %v9757 = vsel %vm9674, %v9754, %v9756
      %v9758 = vrot.slane %v9590, 2
      %v9759 = vsel %vm9674, %v9756, %v9758
      %v9760 = vrot.slane %v9591, 2
      %v9761 = vsel %vm9674, %v9758, %v9760
      %v9762 = vrot.slane %v9592, 2
      %v9763 = vsel %vm9674, %v9760, %v9762
      %v9764 = vrot.slane %v9593, 2
      %v9765 = vsel %vm9674, %v9762, %v9764
      %v9766 = vrot.slane %v9594, 2
      %v9767 = vsel %vm9674, %v9764, %v9766
      %v9768 = vrot.slane %v9595, 2
      %v9769 = vsel %vm9674, %v9766, %v9768
      %v9770 = vrot.slane %v9596, 2
      %v9771 = vsel %vm9674, %v9768, %v9770
      %v9772 = vrot.slane %v9597, 2
      %v9773 = vsel %vm9674, %v9770, %v9772
      %v9774 = vrot.slane %v9598, 2
      %v9775 = vsel %vm9674, %v9772, %v9774
      %v9776 = vrot.slane %v9599, 2
      %v9777 = vsel %vm9674, %v9774, %v9776
      %v9778 = vrot.slane %v9600, 2
      %v9779 = vsel %vm9674, %v9776, %v9778
      %v9780 = vrot.slane %v9601, 2
      %v9781 = vsel %vm9674, %v9778, %v9780
      %v9782 = vrot.slane %v9602, 2
      %v9783 = vsel %vm9674, %v9780, %v9782
      %v9784 = vrot.slane %v9603, 2
      %v9785 = vsel %vm9674, %v9782, %v9784
      %v9786 = vrot.slane %v9604, 2
      %v9787 = vsel %vm9674, %v9784, %v9786
      %v9788 = vrot.slane %v9605, 2
      %v9789 = vsel %vm9674, %v9786, %v9788
      %v9790 = vrot.slane %v9606, 2
      %v9791 = vsel %vm9674, %v9788, %v9790
      %v9792 = vrot.slane %v9607, 2
      %v9793 = vsel %vm9674, %v9790, %v9792
      %v9794 = vrot.slane %v9608, 2
      %v9795 = vsel %vm9674, %v9792, %v9794
      %v9796 = vrot.slane %v9609, 2
      %v9797 = vsel %vm9674, %v9794, %v9796
      %v9798 = vrot.slane %v9610, 2
      %v9799 = vsel %vm9674, %v9796, %v9798
      %v9863 = vmax.f32 %v9548, %v9677
      %v9864 = vmax.f32 %v9549, %v9679
      %v9865 = vmax.f32 %v9550, %v9681
      %v9866 = vmax.f32 %v9551, %v9683
      %v9867 = vmax.f32 %v9552, %v9685
      %v9868 = vmax.f32 %v9553, %v9687
      %v9869 = vmax.f32 %v9554, %v9689
      %v9870 = vmax.f32 %v9555, %v9691
      %v9871 = vmax.f32 %v9556, %v9693
      %v9872 = vmax.f32 %v9557, %v9695
      %v9873 = vmax.f32 %v9558, %v9697
      %v9874 = vmax.f32 %v9559, %v9699
      %v9875 = vmax.f32 %v9560, %v9701
      %v9876 = vmax.f32 %v9561, %v9703
      %v9877 = vmax.f32 %v9562, %v9705
      %v9878 = vmax.f32 %v9563, %v9707
      %v9879 = vmax.f32 %v9564, %v9709
      %v9880 = vmax.f32 %v9565, %v9711
      %v9881 = vmax.f32 %v9566, %v9713
      %v9882 = vmax.f32 %v9567, %v9715
      %v9883 = vmax.f32 %v9568, %v9717
      %v9884 = vmax.f32 %v9569, %v9719
      %v9885 = vmax.f32 %v9570, %v9721
      %v9886 = vmax.f32 %v9571, %v9723
      %v9887 = vmax.f32 %v9572, %v9725
      %v9888 = vmax.f32 %v9573, %v9727
      %v9889 = vmax.f32 %v9574, %v9729
      %v9890 = vmax.f32 %v9575, %v9731
      %v9891 = vmax.f32 %v9576, %v9733
      %v9892 = vmax.f32 %v9577, %v9735
      %v9893 = vmax.f32 %v9578, %v9737
      %v9894 = vmax.f32 %v9579, %v9739
      %v9895 = vmax.f32 %v9580, %v9741
      %v9896 = vmax.f32 %v9581, %v9743
      %v9897 = vmax.f32 %v9582, %v9745
      %v9898 = vmax.f32 %v9583, %v9747
      %v9899 = vmax.f32 %v9584, %v9749
      %v9900 = vmax.f32 %v9585, %v9751
      %v9901 = vmax.f32 %v9586, %v9753
      %v9902 = vmax.f32 %v9587, %v9755
      %v9903 = vmax.f32 %v9588, %v9757
      %v9904 = vmax.f32 %v9589, %v9759
      %v9905 = vmax.f32 %v9590, %v9761
      %v9906 = vmax.f32 %v9591, %v9763
      %v9907 = vmax.f32 %v9592, %v9765
      %v9908 = vmax.f32 %v9593, %v9767
      %v9909 = vmax.f32 %v9594, %v9769
      %v9910 = vmax.f32 %v9595, %v9771
      %v9911 = vmax.f32 %v9596, %v9773
      %v9912 = vmax.f32 %v9597, %v9775
      %v9913 = vmax.f32 %v9598, %v9777
      %v9914 = vmax.f32 %v9599, %v9779
      %v9915 = vmax.f32 %v9600, %v9781
      %v9916 = vmax.f32 %v9601, %v9783
      %v9917 = vmax.f32 %v9602, %v9785
      %v9918 = vmax.f32 %v9603, %v9787
      %v9919 = vmax.f32 %v9604, %v9789
      %v9920 = vmax.f32 %v9605, %v9791
      %v9921 = vmax.f32 %v9606, %v9793
      %v9922 = vmax.f32 %v9607, %v9795
      %v9923 = vmax.f32 %v9608, %v9797
      %v9924 = vmax.f32 %v9609, %v9799
      %v9925 = vmax.f32 %v9610, %v9798
      %v9926 = vlaneseq
      %v9927 = vshrl.u32 %v9926, 7
      %v9928 = vadd.s32 %v9927, 8
      %v9929 = vlaneseq
      %v9930 = vand.u32 %v9929, 127
      %v9931 = vadd.s32 %v9930, 128
      %v9932 = vadd.s32 %v9930, 256
      %v9933 = vadd.s32 %v9930, 384
      %v9934 = vpack.c.bf16 %v9864, %v9863
      %v9935 = vpack.c.bf16 %v9866, %v9865
      %v9936 = vpack.c.bf16 %v9868, %v9867
      %v9937 = vpack.c.bf16 %v9870, %v9869
      %v9938 = vpack.c.bf16 %v9872, %v9871
      %v9939 = vpack.c.bf16 %v9874, %v9873
      %v9940 = vpack.c.bf16 %v9876, %v9875
      %v9941 = vpack.c.bf16 %v9878, %v9877
      %v9942 = vpack.c.bf16 %v9880, %v9879
      %v9943 = vpack.c.bf16 %v9882, %v9881
      %v9944 = vpack.c.bf16 %v9884, %v9883
      %v9945 = vpack.c.bf16 %v9886, %v9885
      %v9946 = vpack.c.bf16 %v9888, %v9887
      %v9947 = vpack.c.bf16 %v9890, %v9889
      %v9948 = vpack.c.bf16 %v9892, %v9891
      %v9949 = vpack.c.bf16 %v9894, %v9893
      %v9950 = vpack.c.bf16 %v9896, %v9895
      %v9951 = vpack.c.bf16 %v9898, %v9897
      %v9952 = vpack.c.bf16 %v9900, %v9899
      %v9953 = vpack.c.bf16 %v9902, %v9901
      %v9954 = vpack.c.bf16 %v9904, %v9903
      %v9955 = vpack.c.bf16 %v9906, %v9905
      %v9956 = vpack.c.bf16 %v9908, %v9907
      %v9957 = vpack.c.bf16 %v9910, %v9909
      %v9958 = vpack.c.bf16 %v9912, %v9911
      %v9959 = vpack.c.bf16 %v9914, %v9913
      %v9960 = vpack.c.bf16 %v9916, %v9915
      %v9961 = vpack.c.bf16 %v9918, %v9917
      %v9962 = vpack.c.bf16 %v9920, %v9919
      %v9963 = vpack.c.bf16 %v9922, %v9921
      %v9964 = vpack.c.bf16 %v9924, %v9923
      %v9965 = vpack.c.bf16 %v9925, %v9925
      %v9966 = vmul.u32 %v9927, 32
      %v9967 = vmul.u32 %v9928, 32
      %vm9968 = vcmp.eq.s32.totalorder %v9930, %v9966
      %vm9969 = vcmp.eq.s32.totalorder %v9931, %v9966
      %vm9970 = vcmp.eq.s32.totalorder %v9932, %v9966
      %vm9971 = vcmp.eq.s32.totalorder %v9933, %v9966
      %vm9972 = vcmp.eq.s32.totalorder %v9930, %v9967
      %vm9973 = vcmp.eq.s32.totalorder %v9931, %v9967
      %vm9974 = vcmp.eq.s32.totalorder %v9932, %v9967
      %vm9975 = vcmp.eq.s32.totalorder %v9933, %v9967
      %v9976 = vsel %vm9968, 1, 0
      %v9977 = vsel %vm9969, 1, 0
      %v9978 = vsel %vm9970, 1, 0
      %v9979 = vsel %vm9971, 1, 0
      %v9980 = vsel %vm9972, 1, 0
      %v9981 = vsel %vm9973, 1, 0
      %v9982 = vsel %vm9974, 1, 0
      %v9983 = vsel %vm9975, 1, 0
      %v9984 = vcvt.s32.f32 %v9976
      %v9985 = vcvt.s32.f32 %v9977
      %v9986 = vcvt.s32.f32 %v9978
      %v9987 = vcvt.s32.f32 %v9979
      %v9988 = vcvt.s32.f32 %v9980
      %v9989 = vcvt.s32.f32 %v9981
      %v9990 = vcvt.s32.f32 %v9982
      %v9991 = vcvt.s32.f32 %v9983
      %v9992 = vpack.c.bf16 %v9988, %v9984
      %v9993 = vpack.c.bf16 %v9989, %v9985
      %v9994 = vpack.c.bf16 %v9990, %v9986
      %v9995 = vpack.c.bf16 %v9991, %v9987
      %vm9996 = vcmask 924672
      %v9998 = vsel %vm9996, %v9995, 0
      %vm10000 = vcmask 1040384
      %v10001 = vsel 0, 4294967295, 65535
      %v10002 = vsel %vm10000, %v10001, 0
      %v10004 = vand.u32 %v9965, %v10002
      %10006 = vmatprep.subr.bf16.mxu0 0
      %10007 = vmatpush1.bf16.msra.mxu0 %v9934
      %10008 = vmatprep.subr.bf16.mxu0 0
      %10009 = vmatpush1.bf16.msra.mxu0 %v9935
      %10010 = vmatprep.subr.bf16.mxu0 0
      %10011 = vmatpush1.bf16.msra.mxu0 %v9936
      %10012 = vmatprep.subr.bf16.mxu0 0
      %10013 = vmatpush1.bf16.msra.mxu0 %v9937
      %10014 = vmatprep.subr.bf16.mxu0 0
      %10015 = vmatpush1.bf16.msra.mxu0 %v9938
      %10016 = vmatprep.subr.bf16.mxu0 0
      %10017 = vmatpush1.bf16.msra.mxu0 %v9939
      %10018 = vmatprep.subr.bf16.mxu0 0
      %10019 = vmatpush1.bf16.msra.mxu0 %v9940
      %10020 = vmatprep.subr.bf16.mxu0 0
      %10021 = vmatpush1.bf16.msra.mxu0 %v9941
      %10022 = vmatprep.subr.bf16.mxu0 0
      %10023 = vmatpush1.bf16.msra.mxu0 %v9942
      %10024 = vmatprep.subr.bf16.mxu0 0
      %10025 = vmatpush1.bf16.msra.mxu0 %v9943
      %10026 = vmatprep.subr.bf16.mxu0 0
      %10027 = vmatpush1.bf16.msra.mxu0 %v9944
      %10028 = vmatprep.subr.bf16.mxu0 0
      %10029 = vmatpush1.bf16.msra.mxu0 %v9945
      %10030 = vmatprep.subr.bf16.mxu0 0
      %10031 = vmatpush1.bf16.msra.mxu0 %v9946
      %10032 = vmatprep.subr.bf16.mxu0 0
      %10033 = vmatpush1.bf16.msra.mxu0 %v9947
      %10034 = vmatprep.subr.bf16.mxu0 0
      %10035 = vmatpush1.bf16.msra.mxu0 %v9948
      %10036 = vmatprep.subr.bf16.mxu0 0
      %10037 = vmatpush1.bf16.msra.mxu0 %v9949
      %10038 = vmatprep.mubr.bf16.mxu0 %v9993
      %10039 = vmatmul.mubr.bf16.gmra.mrb[0].mxu0 %v9992
      %v10040 = vpop.f32.mrb[0].mxu0
      %v10041 = vadd.f32 0.0, %v10040
      %v10042 = vpop.f32.mrb[0].mxu0
      %v10043 = vpop.f32.mrb[0].mxu0
      %v10044 = vadd.f32 0.0, %v10043
      %v10045 = vpop.f32.mrb[0].mxu0
      %10046 = vdwg.mxu0
      %10047 = vmatprep.subr.bf16.mxu0 0
      %10048 = vmatpush1.bf16.msra.mxu0 %v9950
      %10049 = vmatprep.subr.bf16.mxu0 0
      %10050 = vmatpush1.bf16.msra.mxu0 %v9951
      %10051 = vmatprep.subr.bf16.mxu0 0
      %10052 = vmatpush1.bf16.msra.mxu0 %v9952
      %10053 = vmatprep.subr.bf16.mxu0 0
      %10054 = vmatpush1.bf16.msra.mxu0 %v9953
      %10055 = vmatprep.subr.bf16.mxu0 0
      %10056 = vmatpush1.bf16.msra.mxu0 %v9954
      %10057 = vmatprep.subr.bf16.mxu0 0
      %10058 = vmatpush1.bf16.msra.mxu0 %v9955
      %10059 = vmatprep.subr.bf16.mxu0 0
      %10060 = vmatpush1.bf16.msra.mxu0 %v9956
      %10061 = vmatprep.subr.bf16.mxu0 0
      %10062 = vmatpush1.bf16.msra.mxu0 %v9957
      %10063 = vmatprep.subr.bf16.mxu0 0
      %10064 = vmatpush1.bf16.msra.mxu0 %v9958
      %10065 = vmatprep.subr.bf16.mxu0 0
      %10066 = vmatpush1.bf16.msra.mxu0 %v9959
      %10067 = vmatprep.subr.bf16.mxu0 0
      %10068 = vmatpush1.bf16.msra.mxu0 %v9960
      %10069 = vmatprep.subr.bf16.mxu0 0
      %10070 = vmatpush1.bf16.msra.mxu0 %v9961
      %10071 = vmatprep.subr.bf16.mxu0 0
      %10072 = vmatpush1.bf16.msra.mxu0 %v9962
      %10073 = vmatprep.subr.bf16.mxu0 0
      %10074 = vmatpush1.bf16.msra.mxu0 %v9963
      %10075 = vmatprep.subr.bf16.mxu0 0
      %10076 = vmatpush1.bf16.msra.mxu0 %v9964
      %10077 = vmatprep.subr.bf16.mxu0 0
      %10078 = vmatpush1.bf16.msra.mxu0 %v10004
      %10079 = vmatprep.mubr.bf16.mxu0 %v9998
      %10080 = vmatmul.mubr.bf16.gmra.mrb[0].mxu0 %v9994
      %v10081 = vpop.f32.mrb[0].mxu0
      %v10082 = vadd.f32 %v10041, %v10081
      %v10083 = vpop.f32.mrb[0].mxu0
      %v10084 = vpop.f32.mrb[0].mxu0
      %v10085 = vadd.f32 %v10044, %v10084
      %v10086 = vpop.f32.mrb[0].mxu0
      %10087 = vdwg.mxu0
      %v10088 = vld [vmem:[%s7] sm:$0xf]
      %v10089 = vld [vmem:[%s7 + $0x4] sm:$0xf]
      %v10090 = vld [vmem:[%s7 + $0x8] sm:$0xf]
      %v10091 = vld [vmem:[%s7 + $0xc] sm:$0xf]
      %v10092 = vld [vmem:[%s7 + $0x10] sm:$0xf]
      %v10093 = vld [vmem:[%s7 + $0x14] sm:$0xf]
      %v10094 = vld [vmem:[%s7 + $0x18] sm:$0xf]
      %v10095 = vld [vmem:[%s7 + $0x1c] sm:$0xf]
      %v10096 = vld [vmem:[%s7 + $0x20] sm:$0xf]
      %v10097 = vld [vmem:[%s7 + $0x24] sm:$0xf]
      %v10098 = vpack.c.bf16 %v10085, %v10082
      %v10099 = vadd.s32 %v9966, 4
      %v10100 = vadd.s32 %v9967, 4
      %vm10101 = vcmp.eq.s32.totalorder %v9930, %v10099
      %vm10102 = vcmp.eq.s32.totalorder %v9931, %v10099
      %vm10103 = vcmp.eq.s32.totalorder %v9932, %v10099
      %vm10104 = vcmp.eq.s32.totalorder %v9933, %v10099
      %vm10105 = vcmp.eq.s32.totalorder %v9930, %v10100
      %vm10106 = vcmp.eq.s32.totalorder %v9931, %v10100
      %vm10107 = vcmp.eq.s32.totalorder %v9932, %v10100
      %vm10108 = vcmp.eq.s32.totalorder %v9933, %v10100
      %v10109 = vsel %vm10101, 1, 0
      %v10110 = vsel %vm10102, 1, 0
      %v10111 = vsel %vm10103, 1, 0
      %v10112 = vsel %vm10104, 1, 0
      %v10113 = vsel %vm10105, 1, 0
      %v10114 = vsel %vm10106, 1, 0
      %v10115 = vsel %vm10107, 1, 0
      %v10116 = vsel %vm10108, 1, 0
      %v10117 = vcvt.s32.f32 %v10109
      %v10118 = vcvt.s32.f32 %v10110
      %v10119 = vcvt.s32.f32 %v10111
      %v10120 = vcvt.s32.f32 %v10112
      %v10121 = vcvt.s32.f32 %v10113
      %v10122 = vcvt.s32.f32 %v10114
      %v10123 = vcvt.s32.f32 %v10115
      %v10124 = vcvt.s32.f32 %v10116
      %v10125 = vpack.c.bf16 %v10121, %v10117
      %v10126 = vpack.c.bf16 %v10122, %v10118
      %v10127 = vpack.c.bf16 %v10123, %v10119
      %v10128 = vpack.c.bf16 %v10124, %v10120
      %v10130 = vsel %vm9996, %v10128, 0
      %10132 = vmatprep.subr.bf16.mxu0 0
      %10133 = vmatpush1.bf16.msra.mxu0 %v9934
      %10134 = vmatprep.subr.bf16.mxu0 0
      %10135 = vmatpush1.bf16.msra.mxu0 %v9935
      %10136 = vmatprep.subr.bf16.mxu0 0
      %10137 = vmatpush1.bf16.msra.mxu0 %v9936
      %10138 = vmatprep.subr.bf16.mxu0 0
      %10139 = vmatpush1.bf16.msra.mxu0 %v9937
      %10140 = vmatprep.subr.bf16.mxu0 0
      %10141 = vmatpush1.bf16.msra.mxu0 %v9938
      %10142 = vmatprep.subr.bf16.mxu0 0
      %10143 = vmatpush1.bf16.msra.mxu0 %v9939
      %10144 = vmatprep.subr.bf16.mxu0 0
      %10145 = vmatpush1.bf16.msra.mxu0 %v9940
      %10146 = vmatprep.subr.bf16.mxu0 0
      %10147 = vmatpush1.bf16.msra.mxu0 %v9941
      %10148 = vmatprep.subr.bf16.mxu0 0
      %10149 = vmatpush1.bf16.msra.mxu0 %v9942
      %10150 = vmatprep.subr.bf16.mxu0 0
      %10151 = vmatpush1.bf16.msra.mxu0 %v9943
      %10152 = vmatprep.subr.bf16.mxu0 0
      %10153 = vmatpush1.bf16.msra.mxu0 %v9944
      %10154 = vmatprep.subr.bf16.mxu0 0
      %10155 = vmatpush1.bf16.msra.mxu0 %v9945
      %10156 = vmatprep.subr.bf16.mxu0 0
      %10157 = vmatpush1.bf16.msra.mxu0 %v9946
      %10158 = vmatprep.subr.bf16.mxu0 0
      %10159 = vmatpush1.bf16.msra.mxu0 %v9947
      %10160 = vmatprep.subr.bf16.mxu0 0
      %10161 = vmatpush1.bf16.msra.mxu0 %v9948
      %10162 = vmatprep.subr.bf16.mxu0 0
      %10163 = vmatpush1.bf16.msra.mxu0 %v9949
      %10164 = vmatprep.mubr.bf16.mxu0 %v10126
      %10165 = vmatmul.mubr.bf16.gmra.mrb[0].mxu0 %v10125
      %v10166 = vpop.f32.mrb[0].mxu0
      %v10167 = vadd.f32 0.0, %v10166
      %v10168 = vpop.f32.mrb[0].mxu0
      %v10169 = vpop.f32.mrb[0].mxu0
      %v10170 = vadd.f32 0.0, %v10169
      %v10171 = vpop.f32.mrb[0].mxu0
      %10172 = vdwg.mxu0
      %10173 = vmatprep.subr.bf16.mxu0 0
      %10174 = vmatpush1.bf16.msra.mxu0 %v9950
      %10175 = vmatprep.subr.bf16.mxu0 0
      %10176 = vmatpush1.bf16.msra.mxu0 %v9951
      %10177 = vmatprep.subr.bf16.mxu0 0
      %10178 = vmatpush1.bf16.msra.mxu0 %v9952
      %10179 = vmatprep.subr.bf16.mxu0 0
      %10180 = vmatpush1.bf16.msra.mxu0 %v9953
      %10181 = vmatprep.subr.bf16.mxu0 0
      %10182 = vmatpush1.bf16.msra.mxu0 %v9954
      %10183 = vmatprep.subr.bf16.mxu0 0
      %10184 = vmatpush1.bf16.msra.mxu0 %v9955
      %10185 = vmatprep.subr.bf16.mxu0 0
      %10186 = vmatpush1.bf16.msra.mxu0 %v9956
      %10187 = vmatprep.subr.bf16.mxu0 0
      %10188 = vmatpush1.bf16.msra.mxu0 %v9957
      %10189 = vmatprep.subr.bf16.mxu0 0
      %10190 = vmatpush1.bf16.msra.mxu0 %v9958
      %10191 = vmatprep.subr.bf16.mxu0 0
      %10192 = vmatpush1.bf16.msra.mxu0 %v9959
      %10193 = vmatprep.subr.bf16.mxu0 0
      %10194 = vmatpush1.bf16.msra.mxu0 %v9960
      %10195 = vmatprep.subr.bf16.mxu0 0
      %10196 = vmatpush1.bf16.msra.mxu0 %v9961
      %10197 = vmatprep.subr.bf16.mxu0 0
      %10198 = vmatpush1.bf16.msra.mxu0 %v9962
      %10199 = vmatprep.subr.bf16.mxu0 0
      %10200 = vmatpush1.bf16.msra.mxu0 %v9963
      %10201 = vmatprep.subr.bf16.mxu0 0
      %10202 = vmatpush1.bf16.msra.mxu0 %v9964
      %10203 = vmatprep.subr.bf16.mxu0 0
      %10204 = vmatpush1.bf16.msra.mxu0 %v10004
      %10205 = vmatprep.mubr.bf16.mxu0 %v10130
      %10206 = vmatmul.mubr.bf16.gmra.mrb[0].mxu0 %v10127
      %v10207 = vpop.f32.mrb[0].mxu0
      %v10208 = vadd.f32 %v10167, %v10207
      %v10209 = vpop.f32.mrb[0].mxu0
      %v10210 = vpop.f32.mrb[0].mxu0
      %v10211 = vadd.f32 %v10170, %v10210
      %v10212 = vpop.f32.mrb[0].mxu0
      %10213 = vdwg.mxu0
      %s10214 = scalar_lea.vmem %s7, 40
      %v10215 = vld [vmem:[%s10214] sm:$0xf]
      %v10216 = vld [vmem:[%s10214 + $0x4] sm:$0xf]
      %v10217 = vld [vmem:[%s10214 + $0x8] sm:$0xf]
      %v10218 = vld [vmem:[%s10214 + $0xc] sm:$0xf]
      %v10219 = vld [vmem:[%s10214 + $0x10] sm:$0xf]
      %v10220 = vld [vmem:[%s10214 + $0x14] sm:$0xf]
      %v10221 = vld [vmem:[%s10214 + $0x18] sm:$0xf]
      %v10222 = vld [vmem:[%s10214 + $0x1c] sm:$0xf]
      %v10223 = vld [vmem:[%s10214 + $0x20] sm:$0xf]
      %v10224 = vld [vmem:[%s10214 + $0x24] sm:$0xf]
      %v10225 = vpack.c.bf16 %v10211, %v10208
      %v10236 = vunpack.c.l.b16 %v10215
      %v10237 = vunpack.c.l.b16 %v10216
      %v10238 = vunpack.c.l.b16 %v10217
      %v10239 = vunpack.c.l.b16 %v10218
      %v10240 = vunpack.c.l.b16 %v10219
      %v10241 = vunpack.c.l.b16 %v10220
      %v10242 = vunpack.c.l.b16 %v10221
      %v10243 = vunpack.c.l.b16 %v10222
      %v10244 = vunpack.c.l.b16 %v10223
      %v10245 = vunpack.c.l.b16 %v10224
      %v10246 = vpack.c.b16 %v10237, %v10236
      %v10247 = vpack.c.b16 %v10239, %v10238
      %v10248 = vpack.c.b16 %v10241, %v10240
      %v10249 = vpack.c.b16 %v10243, %v10242
      %v10250 = vpack.c.b16 %v10245, %v10244
      %vm10256 = vcmask 654336
      %v10258 = vsel %vm10256, %v10225, 0
      %10260 = vmatprep.subr.bf16.mxu0 0
      %10261 = vmatpush1.bf16.msra.mxu0 %v10246
      %10262 = vmatprep.subr.bf16.mxu0 0
      %10263 = vmatpush1.bf16.msra.mxu0 %v10247
      %10264 = vmatprep.subr.bf16.mxu0 0
      %10265 = vmatpush1.bf16.msra.mxu0 %v10248
      %10266 = vmatprep.subr.bf16.mxu0 0
      %10267 = vmatpush1.bf16.msra.mxu0 %v10249
      %10268 = vmatprep.subr.bf16.mxu0 0
      %10269 = vmatpush1.bf16.msra.mxu0 %v10250
      %10270 = vmatprep.subr.bf16.mxu0 0
      %10271 = vmatpush1.bf16.msra.mxu0 0
      %10272 = vmatprep.subr.bf16.mxu0 0
      %10273 = vmatpush1.bf16.msra.mxu0 0
      %10274 = vmatprep.subr.bf16.mxu0 0
      %10275 = vmatpush1.bf16.msra.mxu0 0
      %10276 = vmatprep.subr.bf16.mxu0 0
      %10277 = vmatpush1.bf16.msra.mxu0 0
      %10278 = vmatprep.subr.bf16.mxu0 0
      %10279 = vmatpush1.bf16.msra.mxu0 0
      %10280 = vmatprep.subr.bf16.mxu0 0
      %10281 = vmatpush1.bf16.msra.mxu0 0
      %10282 = vmatprep.subr.bf16.mxu0 0
      %10283 = vmatpush1.bf16.msra.mxu0 0
      %10284 = vmatprep.subr.bf16.mxu0 0
      %10285 = vmatpush1.bf16.msra.mxu0 0
      %10286 = vmatprep.subr.bf16.mxu0 0
      %10287 = vmatpush1.bf16.msra.mxu0 0
      %10288 = vmatprep.subr.bf16.mxu0 0
      %10289 = vmatpush1.bf16.msra.mxu0 0
      %10290 = vmatprep.subr.bf16.mxu0 0
      %10291 = vmatpush1.bf16.msra.mxu0 0
      %10292 = vmatprep.mubr.bf16.mxu0 0
      %10293 = vmatmul.mubr.bf16.gmra.mrb[0].mxu0 %v10258
      %v10294 = vpop.f32.mrb[0].mxu0
      %v10295 = vadd.f32 0.0, %v10294
      %v10296 = vpop.f32.mrb[0].mxu0
      %v10297 = vpop.f32.mrb[0].mxu0
      %v10298 = vadd.f32 0.0, %v10297
      %v10299 = vpop.f32.mrb[0].mxu0
      %10300 = vdwg.mxu0
      %v10311 = vunpack.c.l.b16 %v10088
      %v10312 = vunpack.c.l.b16 %v10089
      %v10313 = vunpack.c.l.b16 %v10090
      %v10314 = vunpack.c.l.b16 %v10091
      %v10315 = vunpack.c.l.b16 %v10092
      %v10316 = vunpack.c.l.b16 %v10093
      %v10317 = vunpack.c.l.b16 %v10094
      %v10318 = vunpack.c.l.b16 %v10095
      %v10319 = vunpack.c.l.b16 %v10096
      %v10320 = vunpack.c.l.b16 %v10097
      %v10321 = vpack.c.b16 %v10312, %v10311
      %v10322 = vpack.c.b16 %v10314, %v10313
      %v10323 = vpack.c.b16 %v10316, %v10315
      %v10324 = vpack.c.b16 %v10318, %v10317
      %v10325 = vpack.c.b16 %v10320, %v10319
      %v10332 = vsel %vm10256, %v10098, 0
      %10334 = vmatprep.subr.bf16.mxu0 0
      %10335 = vmatpush1.bf16.msra.mxu0 %v10321
      %10336 = vmatprep.subr.bf16.mxu0 0
      %10337 = vmatpush1.bf16.msra.mxu0 %v10322
      %10338 = vmatprep.subr.bf16.mxu0 0
      %10339 = vmatpush1.bf16.msra.mxu0 %v10323
      %10340 = vmatprep.subr.bf16.mxu0 0
      %10341 = vmatpush1.bf16.msra.mxu0 %v10324
      %10342 = vmatprep.subr.bf16.mxu0 0
      %10343 = vmatpush1.bf16.msra.mxu0 %v10325
      %10344 = vmatprep.subr.bf16.mxu0 0
      %10345 = vmatpush1.bf16.msra.mxu0 0
      %10346 = vmatprep.subr.bf16.mxu0 0
      %10347 = vmatpush1.bf16.msra.mxu0 0
      %10348 = vmatprep.subr.bf16.mxu0 0
      %10349 = vmatpush1.bf16.msra.mxu0 0
      %10350 = vmatprep.subr.bf16.mxu0 0
      %10351 = vmatpush1.bf16.msra.mxu0 0
      %10352 = vmatprep.subr.bf16.mxu0 0
      %10353 = vmatpush1.bf16.msra.mxu0 0
      %10354 = vmatprep.subr.bf16.mxu0 0
      %10355 = vmatpush1.bf16.msra.mxu0 0
      %10356 = vmatprep.subr.bf16.mxu0 0
      %10357 = vmatpush1.bf16.msra.mxu0 0
      %10358 = vmatprep.subr.bf16.mxu0 0
      %10359 = vmatpush1.bf16.msra.mxu0 0
      %10360 = vmatprep.subr.bf16.mxu0 0
      %10361 = vmatpush1.bf16.msra.mxu0 0
      %10362 = vmatprep.subr.bf16.mxu0 0
      %10363 = vmatpush1.bf16.msra.mxu0 0
      %10364 = vmatprep.subr.bf16.mxu0 0
      %10365 = vmatpush1.bf16.msra.mxu0 0
      %10366 = vmatprep.mubr.bf16.mxu0 0
      %10367 = vmatmul.mubr.bf16.gmra.mrb[0].mxu0 %v10332
      %v10368 = vpop.f32.mrb[0].mxu0
      %v10369 = vadd.f32 %v10295, %v10368
      %v10370 = vpop.f32.mrb[0].mxu0
      %v10371 = vpop.f32.mrb[0].mxu0
      %v10372 = vadd.f32 %v10298, %v10371
      %v10373 = vpop.f32.mrb[0].mxu0
      %10374 = vdwg.mxu0
      %v10375 = vadd.s32 %v9966, 8
      %v10376 = vadd.s32 %v9967, 8
      %vm10377 = vcmp.eq.s32.totalorder %v9930, %v10375
      %vm10378 = vcmp.eq.s32.totalorder %v9931, %v10375
      %vm10379 = vcmp.eq.s32.totalorder %v9932, %v10375
      %vm10380 = vcmp.eq.s32.totalorder %v9933, %v10375
      %vm10381 = vcmp.eq.s32.totalorder %v9930, %v10376
      %vm10382 = vcmp.eq.s32.totalorder %v9931, %v10376
      %vm10383 = vcmp.eq.s32.totalorder %v9932, %v10376
      %vm10384 = vcmp.eq.s32.totalorder %v9933, %v10376
      %v10385 = vsel %vm10377, 1, 0
      %v10386 = vsel %vm10378, 1, 0
      %v10387 = vsel %vm10379, 1, 0
      %v10388 = vsel %vm10380, 1, 0
      %v10389 = vsel %vm10381, 1, 0
      %v10390 = vsel %vm10382, 1, 0
      %v10391 = vsel %vm10383, 1, 0
      %v10392 = vsel %vm10384, 1, 0
      %v10393 = vcvt.s32.f32 %v10385
      %v10394 = vcvt.s32.f32 %v10386
      %v10395 = vcvt.s32.f32 %v10387
      %v10396 = vcvt.s32.f32 %v10388
      %v10397 = vcvt.s32.f32 %v10389
      %v10398 = vcvt.s32.f32 %v10390
      %v10399 = vcvt.s32.f32 %v10391
      %v10400 = vcvt.s32.f32 %v10392
      %v10401 = vpack.c.bf16 %v10397, %v10393
      %v10402 = vpack.c.bf16 %v10398, %v10394
      %v10403 = vpack.c.bf16 %v10399, %v10395
      %v10404 = vpack.c.bf16 %v10400, %v10396
      %v10406 = vsel %vm9996, %v10404, 0
      %10408 = vmatprep.subr.bf16.mxu0 0
      %10409 = vmatpush1.bf16.msra.mxu0 %v9934
      %10410 = vmatprep.subr.bf16.mxu0 0
      %10411 = vmatpush1.bf16.msra.mxu0 %v9935
      %10412 = vmatprep.subr.bf16.mxu0 0
      %10413 = vmatpush1.bf16.msra.mxu0 %v9936
      %10414 = vmatprep.subr.bf16.mxu0 0
      %10415 = vmatpush1.bf16.msra.mxu0 %v9937
      %10416 = vmatprep.subr.bf16.mxu0 0
      %10417 = vmatpush1.bf16.msra.mxu0 %v9938
      %10418 = vmatprep.subr.bf16.mxu0 0
      %10419 = vmatpush1.bf16.msra.mxu0 %v9939
      %10420 = vmatprep.subr.bf16.mxu0 0
      %10421 = vmatpush1.bf16.msra.mxu0 %v9940
      %10422 = vmatprep.subr.bf16.mxu0 0
      %10423 = vmatpush1.bf16.msra.mxu0 %v9941
      %10424 = vmatprep.subr.bf16.mxu0 0
      %10425 = vmatpush1.bf16.msra.mxu0 %v9942
      %10426 = vmatprep.subr.bf16.mxu0 0
      %10427 = vmatpush1.bf16.msra.mxu0 %v9943
      %10428 = vmatprep.subr.bf16.mxu0 0
      %10429 = vmatpush1.bf16.msra.mxu0 %v9944
      %10430 = vmatprep.subr.bf16.mxu0 0
      %10431 = vmatpush1.bf16.msra.mxu0 %v9945
      %10432 = vmatprep.subr.bf16.mxu0 0
      %10433 = vmatpush1.bf16.msra.mxu0 %v9946
      %10434 = vmatprep.subr.bf16.mxu0 0
      %10435 = vmatpush1.bf16.msra.mxu0 %v9947
      %10436 = vmatprep.subr.bf16.mxu0 0
      %10437 = vmatpush1.bf16.msra.mxu0 %v9948
      %10438 = vmatprep.subr.bf16.mxu0 0
      %10439 = vmatpush1.bf16.msra.mxu0 %v9949
      %10440 = vmatprep.mubr.bf16.mxu0 %v10402
      %10441 = vmatmul.mubr.bf16.gmra.mrb[0].mxu0 %v10401
      %v10442 = vpop.f32.mrb[0].mxu0
      %v10443 = vadd.f32 0.0, %v10442
      %v10444 = vpop.f32.mrb[0].mxu0
      %v10445 = vpop.f32.mrb[0].mxu0
      %v10446 = vadd.f32 0.0, %v10445
      %v10447 = vpop.f32.mrb[0].mxu0
      %10448 = vdwg.mxu0
      %10449 = vmatprep.subr.bf16.mxu0 0
      %10450 = vmatpush1.bf16.msra.mxu0 %v9950
      %10451 = vmatprep.subr.bf16.mxu0 0
      %10452 = vmatpush1.bf16.msra.mxu0 %v9951
      %10453 = vmatprep.subr.bf16.mxu0 0
      %10454 = vmatpush1.bf16.msra.mxu0 %v9952
      %10455 = vmatprep.subr.bf16.mxu0 0
      %10456 = vmatpush1.bf16.msra.mxu0 %v9953
      %10457 = vmatprep.subr.bf16.mxu0 0
      %10458 = vmatpush1.bf16.msra.mxu0 %v9954
      %10459 = vmatprep.subr.bf16.mxu0 0
      %10460 = vmatpush1.bf16.msra.mxu0 %v9955
      %10461 = vmatprep.subr.bf16.mxu0 0
      %10462 = vmatpush1.bf16.msra.mxu0 %v9956
      %10463 = vmatprep.subr.bf16.mxu0 0
      %10464 = vmatpush1.bf16.msra.mxu0 %v9957
      %10465 = vmatprep.subr.bf16.mxu0 0
      %10466 = vmatpush1.bf16.msra.mxu0 %v9958
      %10467 = vmatprep.subr.bf16.mxu0 0
      %10468 = vmatpush1.bf16.msra.mxu0 %v9959
      %10469 = vmatprep.subr.bf16.mxu0 0
      %10470 = vmatpush1.bf16.msra.mxu0 %v9960
      %10471 = vmatprep.subr.bf16.mxu0 0
      %10472 = vmatpush1.bf16.msra.mxu0 %v9961
      %10473 = vmatprep.subr.bf16.mxu0 0
      %10474 = vmatpush1.bf16.msra.mxu0 %v9962
      %10475 = vmatprep.subr.bf16.mxu0 0
      %10476 = vmatpush1.bf16.msra.mxu0 %v9963
      %10477 = vmatprep.subr.bf16.mxu0 0
      %10478 = vmatpush1.bf16.msra.mxu0 %v9964
      %10479 = vmatprep.subr.bf16.mxu0 0
      %10480 = vmatpush1.bf16.msra.mxu0 %v10004
      %10481 = vmatprep.mubr.bf16.mxu0 %v10406
      %10482 = vmatmul.mubr.bf16.gmra.mrb[0].mxu0 %v10403
      %v10483 = vpop.f32.mrb[0].mxu0
      %v10484 = vadd.f32 %v10443, %v10483
      %v10485 = vpop.f32.mrb[0].mxu0
      %v10486 = vpop.f32.mrb[0].mxu0
      %v10487 = vadd.f32 %v10446, %v10486
      %v10488 = vpop.f32.mrb[0].mxu0
      %10489 = vdwg.mxu0
      %s10490 = scalar_lea.vmem %s7, 80
      %v10491 = vld [vmem:[%s10490] sm:$0xf]
      %v10492 = vld [vmem:[%s10490 + $0x4] sm:$0xf]
      %v10493 = vld [vmem:[%s10490 + $0x8] sm:$0xf]
      %v10494 = vld [vmem:[%s10490 + $0xc] sm:$0xf]
      %v10495 = vld [vmem:[%s10490 + $0x10] sm:$0xf]
      %v10496 = vld [vmem:[%s10490 + $0x14] sm:$0xf]
      %v10497 = vld [vmem:[%s10490 + $0x18] sm:$0xf]
      %v10498 = vld [vmem:[%s10490 + $0x1c] sm:$0xf]
      %v10499 = vld [vmem:[%s10490 + $0x20] sm:$0xf]
      %v10500 = vld [vmem:[%s10490 + $0x24] sm:$0xf]
      %v10501 = vpack.c.bf16 %v10487, %v10484
      %v10512 = vunpack.c.l.b16 %v10491
      %v10513 = vunpack.c.l.b16 %v10492
      %v10514 = vunpack.c.l.b16 %v10493
      %v10515 = vunpack.c.l.b16 %v10494
      %v10516 = vunpack.c.l.b16 %v10495
      %v10517 = vunpack.c.l.b16 %v10496
      %v10518 = vunpack.c.l.b16 %v10497
      %v10519 = vunpack.c.l.b16 %v10498
      %v10520 = vunpack.c.l.b16 %v10499
      %v10521 = vunpack.c.l.b16 %v10500
      %v10522 = vpack.c.b16 %v10513, %v10512
      %v10523 = vpack.c.b16 %v10515, %v10514
      %v10524 = vpack.c.b16 %v10517, %v10516
      %v10525 = vpack.c.b16 %v10519, %v10518
      %v10526 = vpack.c.b16 %v10521, %v10520
      %v10533 = vsel %vm10256, %v10501, 0
      %10535 = vmatprep.subr.bf16.mxu0 0
      %10536 = vmatpush1.bf16.msra.mxu0 %v10522
      %10537 = vmatprep.subr.bf16.mxu0 0
      %10538 = vmatpush1.bf16.msra.mxu0 %v10523
      %10539 = vmatprep.subr.bf16.mxu0 0
      %10540 = vmatpush1.bf16.msra.mxu0 %v10524
      %10541 = vmatprep.subr.bf16.mxu0 0
      %10542 = vmatpush1.bf16.msra.mxu0 %v10525
      %10543 = vmatprep.subr.bf16.mxu0 0
      %10544 = vmatpush1.bf16.msra.mxu0 %v10526
      %10545 = vmatprep.subr.bf16.mxu0 0
      %10546 = vmatpush1.bf16.msra.mxu0 0
      %10547 = vmatprep.subr.bf16.mxu0 0
      %10548 = vmatpush1.bf16.msra.mxu0 0
      %10549 = vmatprep.subr.bf16.mxu0 0
      %10550 = vmatpush1.bf16.msra.mxu0 0
      %10551 = vmatprep.subr.bf16.mxu0 0
      %10552 = vmatpush1.bf16.msra.mxu0 0
      %10553 = vmatprep.subr.bf16.mxu0 0
      %10554 = vmatpush1.bf16.msra.mxu0 0
      %10555 = vmatprep.subr.bf16.mxu0 0
      %10556 = vmatpush1.bf16.msra.mxu0 0
      %10557 = vmatprep.subr.bf16.mxu0 0
      %10558 = vmatpush1.bf16.msra.mxu0 0
      %10559 = vmatprep.subr.bf16.mxu0 0
      %10560 = vmatpush1.bf16.msra.mxu0 0
      %10561 = vmatprep.subr.bf16.mxu0 0
      %10562 = vmatpush1.bf16.msra.mxu0 0
      %10563 = vmatprep.subr.bf16.mxu0 0
      %10564 = vmatpush1.bf16.msra.mxu0 0
      %10565 = vmatprep.subr.bf16.mxu0 0
      %10566 = vmatpush1.bf16.msra.mxu0 0
      %10567 = vmatprep.mubr.bf16.mxu0 0
      %10568 = vmatmul.mubr.bf16.gmra.mrb[0].mxu0 %v10533
      %v10569 = vpop.f32.mrb[0].mxu0
      %v10570 = vadd.f32 0.0, %v10569
      %v10571 = vpop.f32.mrb[0].mxu0
      %v10572 = vpop.f32.mrb[0].mxu0
      %v10573 = vadd.f32 0.0, %v10572
      %v10574 = vpop.f32.mrb[0].mxu0
      %10575 = vdwg.mxu0
      %v10576 = vadd.f32 %v10369, %v10570
      %v10577 = vadd.f32 %v10372, %v10573
      %v10578 = vadd.s32 %v9966, 12
      %v10579 = vadd.s32 %v9967, 12
      %vm10580 = vcmp.eq.s32.totalorder %v9930, %v10578
      %vm10581 = vcmp.eq.s32.totalorder %v9931, %v10578
      %vm10582 = vcmp.eq.s32.totalorder %v9932, %v10578
      %vm10583 = vcmp.eq.s32.totalorder %v9933, %v10578
      %vm10584 = vcmp.eq.s32.totalorder %v9930, %v10579
      %vm10585 = vcmp.eq.s32.totalorder %v9931, %v10579
      %vm10586 = vcmp.eq.s32.totalorder %v9932, %v10579
      %vm10587 = vcmp.eq.s32.totalorder %v9933, %v10579
      %v10588 = vsel %vm10580, 1, 0
      %v10589 = vsel %vm10581, 1, 0
      %v10590 = vsel %vm10582, 1, 0
      %v10591 = vsel %vm10583, 1, 0
      %v10592 = vsel %vm10584, 1, 0
      %v10593 = vsel %vm10585, 1, 0
      %v10594 = vsel %vm10586, 1, 0
      %v10595 = vsel %vm10587, 1, 0
      %v10596 = vcvt.s32.f32 %v10588
      %v10597 = vcvt.s32.f32 %v10589
      %v10598 = vcvt.s32.f32 %v10590
      %v10599 = vcvt.s32.f32 %v10591
      %v10600 = vcvt.s32.f32 %v10592
      %v10601 = vcvt.s32.f32 %v10593
      %v10602 = vcvt.s32.f32 %v10594
      %v10603 = vcvt.s32.f32 %v10595
      %v10604 = vpack.c.bf16 %v10600, %v10596
      %v10605 = vpack.c.bf16 %v10601, %v10597
      %v10606 = vpack.c.bf16 %v10602, %v10598
      %v10607 = vpack.c.bf16 %v10603, %v10599
      %v10609 = vsel %vm9996, %v10607, 0
      %10611 = vmatprep.subr.bf16.mxu0 0
      %10612 = vmatpush1.bf16.msra.mxu0 %v9934
      %10613 = vmatprep.subr.bf16.mxu0 0
      %10614 = vmatpush1.bf16.msra.mxu0 %v9935
      %10615 = vmatprep.subr.bf16.mxu0 0
      %10616 = vmatpush1.bf16.msra.mxu0 %v9936
      %10617 = vmatprep.subr.bf16.mxu0 0
      %10618 = vmatpush1.bf16.msra.mxu0 %v9937
      %10619 = vmatprep.subr.bf16.mxu0 0
      %10620 = vmatpush1.bf16.msra.mxu0 %v9938
      %10621 = vmatprep.subr.bf16.mxu0 0
      %10622 = vmatpush1.bf16.msra.mxu0 %v9939
      %10623 = vmatprep.subr.bf16.mxu0 0
      %10624 = vmatpush1.bf16.msra.mxu0 %v9940
      %10625 = vmatprep.subr.bf16.mxu0 0
      %10626 = vmatpush1.bf16.msra.mxu0 %v9941
      %10627 = vmatprep.subr.bf16.mxu0 0
      %10628 = vmatpush1.bf16.msra.mxu0 %v9942
      %10629 = vmatprep.subr.bf16.mxu0 0
      %10630 = vmatpush1.bf16.msra.mxu0 %v9943
      %10631 = vmatprep.subr.bf16.mxu0 0
      %10632 = vmatpush1.bf16.msra.mxu0 %v9944
      %10633 = vmatprep.subr.bf16.mxu0 0
      %10634 = vmatpush1.bf16.msra.mxu0 %v9945
      %10635 = vmatprep.subr.bf16.mxu0 0
      %10636 = vmatpush1.bf16.msra.mxu0 %v9946
      %10637 = vmatprep.subr.bf16.mxu0 0
      %10638 = vmatpush1.bf16.msra.mxu0 %v9947
      %10639 = vmatprep.subr.bf16.mxu0 0
      %10640 = vmatpush1.bf16.msra.mxu0 %v9948
      %10641 = vmatprep.subr.bf16.mxu0 0
      %10642 = vmatpush1.bf16.msra.mxu0 %v9949
      %10643 = vmatprep.mubr.bf16.mxu0 %v10605
      %10644 = vmatmul.mubr.bf16.gmra.mrb[0].mxu0 %v10604
      %v10645 = vpop.f32.mrb[0].mxu0
      %v10646 = vadd.f32 0.0, %v10645
      %v10647 = vpop.f32.mrb[0].mxu0
      %v10648 = vpop.f32.mrb[0].mxu0
      %v10649 = vadd.f32 0.0, %v10648
      %v10650 = vpop.f32.mrb[0].mxu0
      %10651 = vdwg.mxu0
      %10652 = vmatprep.subr.bf16.mxu0 0
      %10653 = vmatpush1.bf16.msra.mxu0 %v9950
      %10654 = vmatprep.subr.bf16.mxu0 0
      %10655 = vmatpush1.bf16.msra.mxu0 %v9951
      %10656 = vmatprep.subr.bf16.mxu0 0
      %10657 = vmatpush1.bf16.msra.mxu0 %v9952
      %10658 = vmatprep.subr.bf16.mxu0 0
      %10659 = vmatpush1.bf16.msra.mxu0 %v9953
      %10660 = vmatprep.subr.bf16.mxu0 0
      %10661 = vmatpush1.bf16.msra.mxu0 %v9954
      %10662 = vmatprep.subr.bf16.mxu0 0
      %10663 = vmatpush1.bf16.msra.mxu0 %v9955
      %10664 = vmatprep.subr.bf16.mxu0 0
      %10665 = vmatpush1.bf16.msra.mxu0 %v9956
      %10666 = vmatprep.subr.bf16.mxu0 0
      %10667 = vmatpush1.bf16.msra.mxu0 %v9957
      %10668 = vmatprep.subr.bf16.mxu0 0
      %10669 = vmatpush1.bf16.msra.mxu0 %v9958
      %10670 = vmatprep.subr.bf16.mxu0 0
      %10671 = vmatpush1.bf16.msra.mxu0 %v9959
      %10672 = vmatprep.subr.bf16.mxu0 0
      %10673 = vmatpush1.bf16.msra.mxu0 %v9960
      %10674 = vmatprep.subr.bf16.mxu0 0
      %10675 = vmatpush1.bf16.msra.mxu0 %v9961
      %10676 = vmatprep.subr.bf16.mxu0 0
      %10677 = vmatpush1.bf16.msra.mxu0 %v9962
      %10678 = vmatprep.subr.bf16.mxu0 0
      %10679 = vmatpush1.bf16.msra.mxu0 %v9963
      %10680 = vmatprep.subr.bf16.mxu0 0
      %10681 = vmatpush1.bf16.msra.mxu0 %v9964
      %10682 = vmatprep.subr.bf16.mxu0 0
      %10683 = vmatpush1.bf16.msra.mxu0 %v10004
      %10684 = vmatprep.mubr.bf16.mxu0 %v10609
      %10685 = vmatmul.mubr.bf16.gmra.mrb[0].mxu0 %v10606
      %v10686 = vpop.f32.mrb[0].mxu0
      %v10687 = vadd.f32 %v10646, %v10686
      %v10688 = vpop.f32.mrb[0].mxu0
      %v10689 = vpop.f32.mrb[0].mxu0
      %v10690 = vadd.f32 %v10649, %v10689
      %v10691 = vpop.f32.mrb[0].mxu0
      %10692 = vdwg.mxu0
      %s10693 = scalar_lea.vmem %s7, 120
      %v10694 = vld [vmem:[%s10693] sm:$0xf]
      %v10695 = vld [vmem:[%s10693 + $0x4] sm:$0xf]
      %v10696 = vld [vmem:[%s10693 + $0x8] sm:$0xf]
      %v10697 = vld [vmem:[%s10693 + $0xc] sm:$0xf]
      %v10698 = vld [vmem:[%s10693 + $0x10] sm:$0xf]
      %v10699 = vld [vmem:[%s10693 + $0x14] sm:$0xf]
      %v10700 = vld [vmem:[%s10693 + $0x18] sm:$0xf]
      %v10701 = vld [vmem:[%s10693 + $0x1c] sm:$0xf]
      %v10702 = vld [vmem:[%s10693 + $0x20] sm:$0xf]
      %v10703 = vld [vmem:[%s10693 + $0x24] sm:$0xf]
      %v10704 = vpack.c.bf16 %v10690, %v10687
      %v10715 = vunpack.c.l.b16 %v10694
      %v10716 = vunpack.c.l.b16 %v10695
      %v10717 = vunpack.c.l.b16 %v10696
      %v10718 = vunpack.c.l.b16 %v10697
      %v10719 = vunpack.c.l.b16 %v10698
      %v10720 = vunpack.c.l.b16 %v10699
      %v10721 = vunpack.c.l.b16 %v10700
      %v10722 = vunpack.c.l.b16 %v10701
      %v10723 = vunpack.c.l.b16 %v10702
      %v10724 = vunpack.c.l.b16 %v10703
      %v10725 = vpack.c.b16 %v10716, %v10715
      %v10726 = vpack.c.b16 %v10718, %v10717
      %v10727 = vpack.c.b16 %v10720, %v10719
      %v10728 = vpack.c.b16 %v10722, %v10721
      %v10729 = vpack.c.b16 %v10724, %v10723
      %v10736 = vsel %vm10256, %v10704, 0
      %10738 = vmatprep.subr.bf16.mxu0 0
      %10739 = vmatpush1.bf16.msra.mxu0 %v10725
      %10740 = vmatprep.subr.bf16.mxu0 0
      %10741 = vmatpush1.bf16.msra.mxu0 %v10726
      %10742 = vmatprep.subr.bf16.mxu0 0
      %10743 = vmatpush1.bf16.msra.mxu0 %v10727
      %10744 = vmatprep.subr.bf16.mxu0 0
      %10745 = vmatpush1.bf16.msra.mxu0 %v10728
      %10746 = vmatprep.subr.bf16.mxu0 0
      %10747 = vmatpush1.bf16.msra.mxu0 %v10729
      %10748 = vmatprep.subr.bf16.mxu0 0
      %10749 = vmatpush1.bf16.msra.mxu0 0
      %10750 = vmatprep.subr.bf16.mxu0 0
      %10751 = vmatpush1.bf16.msra.mxu0 0
      %10752 = vmatprep.subr.bf16.mxu0 0
      %10753 = vmatpush1.bf16.msra.mxu0 0
      %10754 = vmatprep.subr.bf16.mxu0 0
      %10755 = vmatpush1.bf16.msra.mxu0 0
      %10756 = vmatprep.subr.bf16.mxu0 0
      %10757 = vmatpush1.bf16.msra.mxu0 0
      %10758 = vmatprep.subr.bf16.mxu0 0
      %10759 = vmatpush1.bf16.msra.mxu0 0
      %10760 = vmatprep.subr.bf16.mxu0 0
      %10761 = vmatpush1.bf16.msra.mxu0 0
      %10762 = vmatprep.subr.bf16.mxu0 0
      %10763 = vmatpush1.bf16.msra.mxu0 0
      %10764 = vmatprep.subr.bf16.mxu0 0
      %10765 = vmatpush1.bf16.msra.mxu0 0
      %10766 = vmatprep.subr.bf16.mxu0 0
      %10767 = vmatpush1.bf16.msra.mxu0 0
      %10768 = vmatprep.subr.bf16.mxu0 0
      %10769 = vmatpush1.bf16.msra.mxu0 0
      %10770 = vmatprep.mubr.bf16.mxu0 0
      %10771 = vmatmul.mubr.bf16.gmra.mrb[0].mxu0 %v10736
      %v10772 = vpop.f32.mrb[0].mxu0
      %v10773 = vadd.f32 0.0, %v10772
      %v10774 = vpop.f32.mrb[0].mxu0
      %v10775 = vpop.f32.mrb[0].mxu0
      %v10776 = vadd.f32 0.0, %v10775
      %v10777 = vpop.f32.mrb[0].mxu0
      %10778 = vdwg.mxu0
      %v10779 = vadd.f32 %v10576, %v10773
      %v10780 = vadd.f32 %v10577, %v10776
      %v10781 = vadd.s32 %v9966, 16
      %v10782 = vadd.s32 %v9967, 16
      %vm10783 = vcmp.eq.s32.totalorder %v9930, %v10781
      %vm10784 = vcmp.eq.s32.totalorder %v9931, %v10781
      %vm10785 = vcmp.eq.s32.totalorder %v9932, %v10781
      %vm10786 = vcmp.eq.s32.totalorder %v9933, %v10781
      %vm10787 = vcmp.eq.s32.totalorder %v9930, %v10782
      %vm10788 = vcmp.eq.s32.totalorder %v9931, %v10782
      %vm10789 = vcmp.eq.s32.totalorder %v9932, %v10782
      %vm10790 = vcmp.eq.s32.totalorder %v9933, %v10782
      %v10791 = vsel %vm10783, 1, 0
      %v10792 = vsel %vm10784, 1, 0
      %v10793 = vsel %vm10785, 1, 0
      %v10794 = vsel %vm10786, 1, 0
      %v10795 = vsel %vm10787, 1, 0
      %v10796 = vsel %vm10788, 1, 0
      %v10797 = vsel %vm10789, 1, 0
      %v10798 = vsel %vm10790, 1, 0
      %v10799 = vcvt.s32.f32 %v10791
      %v10800 = vcvt.s32.f32 %v10792
      %v10801 = vcvt.s32.f32 %v10793
      %v10802 = vcvt.s32.f32 %v10794
      %v10803 = vcvt.s32.f32 %v10795
      %v10804 = vcvt.s32.f32 %v10796
      %v10805 = vcvt.s32.f32 %v10797
      %v10806 = vcvt.s32.f32 %v10798
      %v10807 = vpack.c.bf16 %v10803, %v10799
      %v10808 = vpack.c.bf16 %v10804, %v10800
      %v10809 = vpack.c.bf16 %v10805, %v10801
      %v10810 = vpack.c.bf16 %v10806, %v10802
      %v10812 = vsel %vm9996, %v10810, 0
      %10814 = vmatprep.subr.bf16.mxu0 0
      %10815 = vmatpush1.bf16.msra.mxu0 %v9934
      %10816 = vmatprep.subr.bf16.mxu0 0
      %10817 = vmatpush1.bf16.msra.mxu0 %v9935
      %10818 = vmatprep.subr.bf16.mxu0 0
      %10819 = vmatpush1.bf16.msra.mxu0 %v9936
      %10820 = vmatprep.subr.bf16.mxu0 0
      %10821 = vmatpush1.bf16.msra.mxu0 %v9937
      %10822 = vmatprep.subr.bf16.mxu0 0
      %10823 = vmatpush1.bf16.msra.mxu0 %v9938
      %10824 = vmatprep.subr.bf16.mxu0 0
      %10825 = vmatpush1.bf16.msra.mxu0 %v9939
      %10826 = vmatprep.subr.bf16.mxu0 0
      %10827 = vmatpush1.bf16.msra.mxu0 %v9940
      %10828 = vmatprep.subr.bf16.mxu0 0
      %10829 = vmatpush1.bf16.msra.mxu0 %v9941
      %10830 = vmatprep.subr.bf16.mxu0 0
      %10831 = vmatpush1.bf16.msra.mxu0 %v9942
      %10832 = vmatprep.subr.bf16.mxu0 0
      %10833 = vmatpush1.bf16.msra.mxu0 %v9943
      %10834 = vmatprep.subr.bf16.mxu0 0
      %10835 = vmatpush1.bf16.msra.mxu0 %v9944
      %10836 = vmatprep.subr.bf16.mxu0 0
      %10837 = vmatpush1.bf16.msra.mxu0 %v9945
      %10838 = vmatprep.subr.bf16.mxu0 0
      %10839 = vmatpush1.bf16.msra.mxu0 %v9946
      %10840 = vmatprep.subr.bf16.mxu0 0
      %10841 = vmatpush1.bf16.msra.mxu0 %v9947
      %10842 = vmatprep.subr.bf16.mxu0 0
      %10843 = vmatpush1.bf16.msra.mxu0 %v9948
      %10844 = vmatprep.subr.bf16.mxu0 0
      %10845 = vmatpush1.bf16.msra.mxu0 %v9949
      %10846 = vmatprep.mubr.bf16.mxu0 %v10808
      %10847 = vmatmul.mubr.bf16.gmra.mrb[0].mxu0 %v10807
      %v10848 = vpop.f32.mrb[0].mxu0
      %v10849 = vadd.f32 0.0, %v10848
      %v10850 = vpop.f32.mrb[0].mxu0
      %v10851 = vpop.f32.mrb[0].mxu0
      %v10852 = vadd.f32 0.0, %v10851
      %v10853 = vpop.f32.mrb[0].mxu0
      %10854 = vdwg.mxu0
      %10855 = vmatprep.subr.bf16.mxu0 0
      %10856 = vmatpush1.bf16.msra.mxu0 %v9950
      %10857 = vmatprep.subr.bf16.mxu0 0
      %10858 = vmatpush1.bf16.msra.mxu0 %v9951
      %10859 = vmatprep.subr.bf16.mxu0 0
      %10860 = vmatpush1.bf16.msra.mxu0 %v9952
      %10861 = vmatprep.subr.bf16.mxu0 0
      %10862 = vmatpush1.bf16.msra.mxu0 %v9953
      %10863 = vmatprep.subr.bf16.mxu0 0
      %10864 = vmatpush1.bf16.msra.mxu0 %v9954
      %10865 = vmatprep.subr.bf16.mxu0 0
      %10866 = vmatpush1.bf16.msra.mxu0 %v9955
      %10867 = vmatprep.subr.bf16.mxu0 0
      %10868 = vmatpush1.bf16.msra.mxu0 %v9956
      %10869 = vmatprep.subr.bf16.mxu0 0
      %10870 = vmatpush1.bf16.msra.mxu0 %v9957
      %10871 = vmatprep.subr.bf16.mxu0 0
      %10872 = vmatpush1.bf16.msra.mxu0 %v9958
      %10873 = vmatprep.subr.bf16.mxu0 0
      %10874 = vmatpush1.bf16.msra.mxu0 %v9959
      %10875 = vmatprep.subr.bf16.mxu0 0
      %10876 = vmatpush1.bf16.msra.mxu0 %v9960
      %10877 = vmatprep.subr.bf16.mxu0 0
      %10878 = vmatpush1.bf16.msra.mxu0 %v9961
      %10879 = vmatprep.subr.bf16.mxu0 0
      %10880 = vmatpush1.bf16.msra.mxu0 %v9962
      %10881 = vmatprep.subr.bf16.mxu0 0
      %10882 = vmatpush1.bf16.msra.mxu0 %v9963
      %10883 = vmatprep.subr.bf16.mxu0 0
      %10884 = vmatpush1.bf16.msra.mxu0 %v9964
      %10885 = vmatprep.subr.bf16.mxu0 0
      %10886 = vmatpush1.bf16.msra.mxu0 %v10004
      %10887 = vmatprep.mubr.bf16.mxu0 %v10812
      %10888 = vmatmul.mubr.bf16.gmra.mrb[0].mxu0 %v10809
      %v10889 = vpop.f32.mrb[0].mxu0
      %v10890 = vadd.f32 %v10849, %v10889
      %v10891 = vpop.f32.mrb[0].mxu0
      %v10892 = vpop.f32.mrb[0].mxu0
      %v10893 = vadd.f32 %v10852, %v10892
      %v10894 = vpop.f32.mrb[0].mxu0
      %10895 = vdwg.mxu0
      %s10896 = scalar_lea.vmem %s7, 160
      %v10897 = vld [vmem:[%s10896] sm:$0xf]
      %v10898 = vld [vmem:[%s10896 + $0x4] sm:$0xf]
      %v10899 = vld [vmem:[%s10896 + $0x8] sm:$0xf]
      %v10900 = vld [vmem:[%s10896 + $0xc] sm:$0xf]
      %v10901 = vld [vmem:[%s10896 + $0x10] sm:$0xf]
      %v10902 = vld [vmem:[%s10896 + $0x14] sm:$0xf]
      %v10903 = vld [vmem:[%s10896 + $0x18] sm:$0xf]
      %v10904 = vld [vmem:[%s10896 + $0x1c] sm:$0xf]
      %v10905 = vld [vmem:[%s10896 + $0x20] sm:$0xf]
      %v10906 = vld [vmem:[%s10896 + $0x24] sm:$0xf]
      %v10907 = vpack.c.bf16 %v10893, %v10890
      %v10918 = vunpack.c.l.b16 %v10897
      %v10919 = vunpack.c.l.b16 %v10898
      %v10920 = vunpack.c.l.b16 %v10899
      %v10921 = vunpack.c.l.b16 %v10900
      %v10922 = vunpack.c.l.b16 %v10901
      %v10923 = vunpack.c.l.b16 %v10902
      %v10924 = vunpack.c.l.b16 %v10903
      %v10925 = vunpack.c.l.b16 %v10904
      %v10926 = vunpack.c.l.b16 %v10905
      %v10927 = vunpack.c.l.b16 %v10906
      %v10928 = vpack.c.b16 %v10919, %v10918
      %v10929 = vpack.c.b16 %v10921, %v10920
      %v10930 = vpack.c.b16 %v10923, %v10922
      %v10931 = vpack.c.b16 %v10925, %v10924
      %v10932 = vpack.c.b16 %v10927, %v10926
      %v10939 = vsel %vm10256, %v10907, 0
      %10941 = vmatprep.subr.bf16.mxu0 0
      %10942 = vmatpush1.bf16.msra.mxu0 %v10928
      %10943 = vmatprep.subr.bf16.mxu0 0
      %10944 = vmatpush1.bf16.msra.mxu0 %v10929
      %10945 = vmatprep.subr.bf16.mxu0 0
      %10946 = vmatpush1.bf16.msra.mxu0 %v10930
      %10947 = vmatprep.subr.bf16.mxu0 0
      %10948 = vmatpush1.bf16.msra.mxu0 %v10931
      %10949 = vmatprep.subr.bf16.mxu0 0
      %10950 = vmatpush1.bf16.msra.mxu0 %v10932
      %10951 = vmatprep.subr.bf16.mxu0 0
      %10952 = vmatpush1.bf16.msra.mxu0 0
      %10953 = vmatprep.subr.bf16.mxu0 0
      %10954 = vmatpush1.bf16.msra.mxu0 0
      %10955 = vmatprep.subr.bf16.mxu0 0
      %10956 = vmatpush1.bf16.msra.mxu0 0
      %10957 = vmatprep.subr.bf16.mxu0 0
      %10958 = vmatpush1.bf16.msra.mxu0 0
      %10959 = vmatprep.subr.bf16.mxu0 0
      %10960 = vmatpush1.bf16.msra.mxu0 0
      %10961 = vmatprep.subr.bf16.mxu0 0
      %10962 = vmatpush1.bf16.msra.mxu0 0
      %10963 = vmatprep.subr.bf16.mxu0 0
      %10964 = vmatpush1.bf16.msra.mxu0 0
      %10965 = vmatprep.subr.bf16.mxu0 0
      %10966 = vmatpush1.bf16.msra.mxu0 0
      %10967 = vmatprep.subr.bf16.mxu0 0
      %10968 = vmatpush1.bf16.msra.mxu0 0
      %10969 = vmatprep.subr.bf16.mxu0 0
      %10970 = vmatpush1.bf16.msra.mxu0 0
      %10971 = vmatprep.subr.bf16.mxu0 0
      %10972 = vmatpush1.bf16.msra.mxu0 0
      %10973 = vmatprep.mubr.bf16.mxu0 0
      %10974 = vmatmul.mubr.bf16.gmra.mrb[0].mxu0 %v10939
      %v10975 = vpop.f32.mrb[0].mxu0
      %v10976 = vadd.f32 0.0, %v10975
      %v10977 = vpop.f32.mrb[0].mxu0
      %v10978 = vpop.f32.mrb[0].mxu0
      %v10979 = vadd.f32 0.0, %v10978
      %v10980 = vpop.f32.mrb[0].mxu0
      %10981 = vdwg.mxu0
      %v10982 = vadd.f32 %v10779, %v10976
      %v10983 = vadd.f32 %v10780, %v10979
      %v10984 = vld [vmem:[%s8] sm:$0x1]
      %v10986 = vlaneseq
      %v10987 = vshrl.u32 %v10986, 7
      %v10988 = vsub.s32 0, %v10987
      %v10989 = vrot.slane %v10984, %v10988
      %v10991 = vadd.f32 %v10982, %v10989
      %v10992 = vadd.f32 %v10983, %v10989
      %v10993 = vmax.f32 %v10991, 0.0
      %v10994 = vmax.f32 %v10992, 0.0
      %v10995 = vld [vmem:[%s9] sm:$0xf]
      %v10996 = vld [vmem:[%s9 + $0x4] sm:$0xf]
      %v10997 = vld [vmem:[%s9 + $0x8] sm:$0xf]
      %v10998 = vld [vmem:[%s9 + $0xc] sm:$0xf]
      %v10999 = vld [vmem:[%s9 + $0x10] sm:$0xf]
      %v11000 = vld [vmem:[%s9 + $0x14] sm:$0xf]
      %v11001 = vld [vmem:[%s9 + $0x18] sm:$0xf]
      %v11002 = vld [vmem:[%s9 + $0x1c] sm:$0xf]
      %v11003 = vld [vmem:[%s9 + $0x20] sm:$0xf]
      %v11004 = vld [vmem:[%s9 + $0x24] sm:$0xf]
      %v11005 = vld [vmem:[%s9 + $0x28] sm:$0xf]
      %v11006 = vld [vmem:[%s9 + $0x2c] sm:$0xf]
      %v11007 = vld [vmem:[%s9 + $0x30] sm:$0xf]
      %v11008 = vld [vmem:[%s9 + $0x34] sm:$0xf]
      %v11009 = vld [vmem:[%s9 + $0x38] sm:$0xf]
      %v11010 = vpack.c.bf16 %v10994, %v10993
      %v11011 = vld [vmem:[%s10] sm:$0x1]
      %v11013 = vlaneseq
      %v11014 = vshrl.u32 %v11013, 7
      %v11015 = vsub.s32 0, %v11014
      %v11016 = vrot.slane %v11011, %v11015
      %v11033 = vunpack.c.l.b16 %v10995
      %v11034 = vunpack.c.l.b16 %v10996
      %v11035 = vunpack.c.l.b16 %v10997
      %v11036 = vunpack.c.l.b16 %v10998
      %v11037 = vunpack.c.l.b16 %v10999
      %v11038 = vunpack.c.l.b16 %v11000
      %v11039 = vunpack.c.l.b16 %v11001
      %v11040 = vunpack.c.l.b16 %v11002
      %v11041 = vunpack.c.l.b16 %v11003
      %v11042 = vunpack.c.l.b16 %v11004
      %v11043 = vunpack.c.l.b16 %v11005
      %v11044 = vunpack.c.l.b16 %v11006
      %v11045 = vunpack.c.l.b16 %v11007
      %v11046 = vunpack.c.l.b16 %v11008
      %v11047 = vunpack.c.l.b16 %v11009
      %v11048 = vpack.c.b16 %v11034, %v11033
      %v11049 = vpack.c.b16 %v11036, %v11035
      %v11050 = vpack.c.b16 %v11038, %v11037
      %v11051 = vpack.c.b16 %v11040, %v11039
      %v11052 = vpack.c.b16 %v11042, %v11041
      %v11053 = vpack.c.b16 %v11044, %v11043
      %v11054 = vpack.c.b16 %v11046, %v11045
      %v11055 = vpack.c.b16 %v11047, %v11047
      %vm11063 = vcmask 982016
      %v11065 = vsel %vm11063, %v11010, 0
      %v11068 = vsel %vm4192, %v11055, 0
      %11070 = vmatprep.subr.bf16.mxu0 0
      %11071 = vmatpush1.bf16.msra.mxu0 %v11048
      %11072 = vmatprep.subr.bf16.mxu0 0
      %11073 = vmatpush1.bf16.msra.mxu0 %v11049
      %11074 = vmatprep.subr.bf16.mxu0 0
      %11075 = vmatpush1.bf16.msra.mxu0 %v11050
      %11076 = vmatprep.subr.bf16.mxu0 0
      %11077 = vmatpush1.bf16.msra.mxu0 %v11051
      %11078 = vmatprep.subr.bf16.mxu0 0
      %11079 = vmatpush1.bf16.msra.mxu0 %v11052
      %11080 = vmatprep.subr.bf16.mxu0 0
      %11081 = vmatpush1.bf16.msra.mxu0 %v11053
      %11082 = vmatprep.subr.bf16.mxu0 0
      %11083 = vmatpush1.bf16.msra.mxu0 %v11054
      %11084 = vmatprep.subr.bf16.mxu0 0
      %11085 = vmatpush1.bf16.msra.mxu0 %v11068
      %11086 = vmatprep.subr.bf16.mxu0 0
      %11087 = vmatpush1.bf16.msra.mxu0 0
      %11088 = vmatprep.subr.bf16.mxu0 0
      %11089 = vmatpush1.bf16.msra.mxu0 0
      %11090 = vmatprep.subr.bf16.mxu0 0
      %11091 = vmatpush1.bf16.msra.mxu0 0
      %11092 = vmatprep.subr.bf16.mxu0 0
      %11093 = vmatpush1.bf16.msra.mxu0 0
      %11094 = vmatprep.subr.bf16.mxu0 0
      %11095 = vmatpush1.bf16.msra.mxu0 0
      %11096 = vmatprep.subr.bf16.mxu0 0
      %11097 = vmatpush1.bf16.msra.mxu0 0
      %11098 = vmatprep.subr.bf16.mxu0 0
      %11099 = vmatpush1.bf16.msra.mxu0 0
      %11100 = vmatprep.subr.bf16.mxu0 0
      %11101 = vmatpush1.bf16.msra.mxu0 0
      %11102 = vmatprep.mubr.bf16.mxu0 0
      %11103 = vmatmul.mubr.bf16.gmra.mrb[0].mxu0 %v11065
      %v11104 = vpop.f32.mrb[0].mxu0
      %v11105 = vadd.f32 %v11016, %v11104
      %v11106 = vpop.f32.mrb[0].mxu0
      %v11107 = vpop.f32.mrb[0].mxu0
      %v11108 = vadd.f32 %v11016, %v11107
      %v11109 = vpop.f32.mrb[0].mxu0
      %11110 = vdwg.mxu0
      %v11111 = vmax.f32 %v11105, 0.0
      %v11112 = vmax.f32 %v11108, 0.0
      %v11113 = vld [vmem:[%s11] sm:$0xf]
      %v11114 = vld [vmem:[%s11 + $0x4] sm:$0xf]
      %v11115 = vld [vmem:[%s11 + $0x8] sm:$0xf]
      %v11116 = vld [vmem:[%s11 + $0xc] sm:$0xf]
      %v11117 = vld [vmem:[%s11 + $0x10] sm:$0xf]
      %v11118 = vld [vmem:[%s11 + $0x14] sm:$0xf]
      %v11119 = vld [vmem:[%s11 + $0x18] sm:$0xf]
      %v11120 = vld [vmem:[%s11 + $0x1c] sm:$0xf]
      %v11121 = vld [vmem:[%s11 + $0x20] sm:$0xf]
      %v11122 = vld [vmem:[%s11 + $0x24] sm:$0xf]
      %v11123 = vld [vmem:[%s11 + $0x28] sm:$0x3]
      %v11124 = vpack.c.bf16 %v11112, %v11111
      %v11125 = vld [vmem:[%s12] sm:$0x1]
      %v11127 = vlaneseq
      %v11128 = vshrl.u32 %v11127, 7
      %v11129 = vsub.s32 0, %v11128
      %v11130 = vrot.slane %v11125, %v11129
      %v11143 = vunpack.c.l.b16 %v11113
      %v11144 = vunpack.c.l.b16 %v11114
      %v11145 = vunpack.c.l.b16 %v11115
      %v11146 = vunpack.c.l.b16 %v11116
      %v11147 = vunpack.c.l.b16 %v11117
      %v11148 = vunpack.c.l.b16 %v11118
      %v11149 = vunpack.c.l.b16 %v11119
      %v11150 = vunpack.c.l.b16 %v11120
      %v11151 = vunpack.c.l.b16 %v11121
      %v11152 = vunpack.c.l.b16 %v11122
      %v11153 = vunpack.c.l.b16 %v11123
      %v11154 = vpack.c.b16 %v11144, %v11143
      %v11155 = vpack.c.b16 %v11146, %v11145
      %v11156 = vpack.c.b16 %v11148, %v11147
      %v11157 = vpack.c.b16 %v11150, %v11149
      %v11158 = vpack.c.b16 %v11152, %v11151
      %v11159 = vpack.c.b16 %v11153, %v11153
      %v11166 = vsel %vm5451, %v11124, 0
      %v11169 = vsel %vm5548, %v11159, 0
      %11171 = vmatprep.subr.bf16.mxu0 0
      %11172 = vmatpush1.bf16.msra.mxu0 %v11154
      %11173 = vmatprep.subr.bf16.mxu0 0
      %11174 = vmatpush1.bf16.msra.mxu0 %v11155
      %11175 = vmatprep.subr.bf16.mxu0 0
      %11176 = vmatpush1.bf16.msra.mxu0 %v11156
      %11177 = vmatprep.subr.bf16.mxu0 0
      %11178 = vmatpush1.bf16.msra.mxu0 %v11157
      %11179 = vmatprep.subr.bf16.mxu0 0
      %11180 = vmatpush1.bf16.msra.mxu0 %v11158
      %11181 = vmatprep.subr.bf16.mxu0 0
      %11182 = vmatpush1.bf16.msra.mxu0 %v11169
      %11183 = vmatprep.subr.bf16.mxu0 0
      %11184 = vmatpush1.bf16.msra.mxu0 0
      %11185 = vmatprep.subr.bf16.mxu0 0
      %11186 = vmatpush1.bf16.msra.mxu0 0
      %11187 = vmatprep.subr.bf16.mxu0 0
      %11188 = vmatpush1.bf16.msra.mxu0 0
      %11189 = vmatprep.subr.bf16.mxu0 0
      %11190 = vmatpush1.bf16.msra.mxu0 0
      %11191 = vmatprep.subr.bf16.mxu0 0
      %11192 = vmatpush1.bf16.msra.mxu0 0
      %11193 = vmatprep.subr.bf16.mxu0 0
      %11194 = vmatpush1.bf16.msra.mxu0 0
      %11195 = vmatprep.subr.bf16.mxu0 0
      %11196 = vmatpush1.bf16.msra.mxu0 0
      %11197 = vmatprep.subr.bf16.mxu0 0
      %11198 = vmatpush1.bf16.msra.mxu0 0
      %11199 = vmatprep.subr.bf16.mxu0 0
      %11200 = vmatpush1.bf16.msra.mxu0 0
      %11201 = vmatprep.subr.bf16.mxu0 0
      %11202 = vmatpush1.bf16.msra.mxu0 0
      %11203 = vmatprep.mubr.bf16.mxu0 0
      %11204 = vmatmul.mubr.bf16.gmra.mrb[0].mxu0 %v11166
      %v11205 = vpop.f32.mrb[0].mxu0
      %v11206 = vadd.f32 %v11130, %v11205
      %v11207 = vpop.f32.mrb[0].mxu0
      %v11208 = vpop.f32.mrb[0].mxu0
      %v11209 = vadd.f32 %v11130, %v11208
      %v11210 = vpop.f32.mrb[0].mxu0
      %11211 = vdwg.mxu0
      %vm11212 = vcmask 80896
      %11213 = vst.msk [vmem:[%s442] sm:$0xff] %vm11212, %v11206
      %11214 = vst.msk [vmem:[%s442 + $0x8] sm:$0xff] %vm11212, %v11209
      %s11215 = smul.u32 2, %s24
      %p11216 = scmp.lt.s32.totalorder %s11215, 5
      %s11217 = scalar_select %p11216, %s11215, 5
      %s11218 = smul.addr %s11217, 8
      %s11219 = scalar_lea.vmem %s13, %s11218
      // Predicated region
      $region73: #{net_forward.1} parent=71 // pred_check
        %p11220 = pneg %p320
      $region74: #{net_forward.1} parent=71 // pred_check_branch
        %11222 = sbr.rel (%p11220) target = $region76
      $region75: #{net_forward.1} parent=71 // pred_region
        %s11223 = smul.u32 2, %s24
      $region76: #{net_forward.1} parent=71 // pred_fallthru
        _
    $region72: #{net_forward.1} parent=5 // pred_fallthru
      _
    %p11224 = scmp.le.s32.totalorder 2, %s19
    // Predicated region
    $region77: #{net_forward.1} parent=5 // pred_check
      %p11225 = pneg %p11224
    $region78: #{net_forward.1} parent=5 // pred_check_branch
      %11227 = sbr.rel (%p11225) target = $region80
    $region79: #{net_forward.1} parent=5 // pred_region
      %s11228 = ssub.s32 %s19, 2
      // Predicated region
      $region81: #{net_forward.1} parent=79 // pred_check
        %p11229 = pneg %p326
      $region82: #{net_forward.1} parent=79 // pred_check_branch
        %11231 = sbr.rel (%p11229) target = $region84
      $region83: #{net_forward.1} parent=79 // pred_region
        %s11232 = smul.u32 2, %s25
        %p11233 = scmp.lt.s32.totalorder %s11232, 5
        %s11234 = scalar_select %p11233, %s11232, 5
        %s11235 = smul.addr %s11234, 8
        %s11236 = scalar_lea.vmem %s13, %s11235
      $region84: #{net_forward.1} parent=79 // pred_fallthru
        _
    $region80: #{net_forward.1} parent=5 // pred_fallthru
      _
  $region6: #{net_forward.1} parent=0 // loop_footer
    %s23 = sadd.s32 1, %s19
  $region7: #{net_forward.1} parent=0 // loop_footer_branch
    %18 = sbr.rel target = $region3
  $region8: #{net_forward.1} parent=0 // loop_exit
    _

</llo_original>
